<compile_context>
chip_gen: v7x
topology: tpu7x:2x2x1
jax: 0.10.0
libtpu: 0.0.40
codegen_flags: <defaults>
</compile_context>

<pallas_src>
import math

import jax
import jax.numpy as jnp
from jax.experimental import pallas as pl
from jax.experimental.pallas import tpu as pltpu


# ---------------------------------------------------------------------------
# Fused Pallas kernel: the entire MLP in one call
# ---------------------------------------------------------------------------

def _mlp_fused_kernel(x_ref, w1_ref, s1_ref, wh_ref, sh_ref, wl_ref, bl_ref,
                      o_ref):
    """One batch tile (TM rows) through the whole network.

    x_ref : (TM, F_pad)   bf16  input (features zero-padded to 128 lanes)
    w1_ref: (F_pad, H)    bf16  fc1 weight, transposed, BN scale pre-folded
    s1_ref: (1, H)        f32   fc1 shift (BN beta/mean + bias folded)
    wh_ref: (NH, H, H)    bf16  hidden weights, transposed, BN scale pre-folded
    sh_ref: (NH, 1, H)    f32   per-layer shift
    wl_ref: (H, N_pad)    bf16  fc_last weight (transposed, zero-padded)
    bl_ref: (1, N_pad)    f32   fc_last bias (zero-padded)
    o_ref : (TM, N_pad)   f32   output
    """
    # fc1 -> BN -> ReLU   (scale folded into w1, only the shift remains)
    h = jnp.dot(x_ref[...], w1_ref[...],
                preferred_element_type=jnp.float32)            # (TM, H) f32
    h = jnp.maximum(h + s1_ref[...], 0.0)

    # residual hidden layers: x = relu(BN(W x + b)) + x   (dropout = identity)
    num_hidden = wh_ref.shape[0]
    for i in range(num_hidden):
        y = jnp.dot(h.astype(jnp.bfloat16), wh_ref[i],
                    preferred_element_type=jnp.float32)        # (TM, H) f32
        y = jnp.maximum(y + sh_ref[i], 0.0)                    # shift-only epilogue
        h = h + y

    # fc_last (lane-dense, zero-padded output columns -> unmasked vst)
    o_ref[...] = jnp.dot(h.astype(jnp.bfloat16), wl_ref[...],
                         preferred_element_type=jnp.float32) + bl_ref[...]


# ---------------------------------------------------------------------------
# Plain-JAX glue: time embedding / input assembly
# ---------------------------------------------------------------------------

def _time_to_pos_emb(t, dim, add_original=True):
    # t: (B, 1) -> (B, dim)
    half = dim // 2
    freqs = jnp.exp(jnp.arange(half, dtype=jnp.float32)
                    * -(math.log(10000.0) / max(half, 1)))
    args = t * freqs[None, :]
    emb = jnp.concatenate([jnp.sin(args), jnp.cos(args)], axis=-1)
    if add_original:
        emb = emb.at[:, 0].set(t[:, 0])
    return emb


def _prepare_input(data, t, time_dim):
    data = jnp.asarray(data, jnp.float32)
    if data.ndim == 1:
        data = data[None, :]
    B = data.shape[0]
    if jnp.ndim(t) == 0:
        t_tensor = jnp.full((B, 1), t, jnp.float32)
    else:
        t_tensor = jnp.asarray(t, jnp.float32).reshape(-1, 1)
    if time_dim > 1:
        t_tensor = _time_to_pos_emb(t_tensor, time_dim, add_original=True)
    return jnp.concatenate([data, t_tensor], axis=1)   # (B, nfd + time_dim)


# ---------------------------------------------------------------------------
# Forward wrapper
# ---------------------------------------------------------------------------

def vector_denoiser_forward(packed, data, t, node_feature_dim=1, time_dim=32):
    x = _prepare_input(data, t, time_dim)
    B, F = x.shape

    F_pad, H = packed['w1'].shape
    NH = packed['wh'].shape[0]
    N_pad = packed['wl'].shape[1]
    assert F <= F_pad

    # ---- batch tiling --------------------------------------------------
    # bf16 LHS wants >=16 sublanes; large tiles amortize MXU fill/drain and
    # the ~0.35us/step pipeline overhead.  For big batches keep the grid
    # length >= 2 so v7x can shard the "parallel" axis across its two TCs.
    B16 = max(16, ((B + 15) // 16) * 16)
    if B16 >= 512:
        TM = 256                       # grid >= 2 -> both v7x TensorCores
    else:
        TM = min(256, B16)             # single biggest tile (v5e/v6e, small B)
    B_pad = ((B16 + TM - 1) // TM) * TM

    # padded bf16 input: halves x DMA and removes the in-kernel cast pass
    x = jnp.pad(x, ((0, B_pad - B), (0, F_pad - F))).astype(jnp.bfloat16)

    # constant-index weights: fetched once, single buffer (saves ~4.5 MiB VMEM)
    const = dict(pipeline_mode=pl.Buffered(1))

    out = pl.pallas_call(
        _mlp_fused_kernel,
        out_shape=jax.ShapeDtypeStruct((B_pad, N_pad), jnp.float32),
        grid=(B_pad // TM,),
        in_specs=[
            pl.BlockSpec((TM, F_pad), lambda i: (i, 0)),                # x tile
            pl.BlockSpec((F_pad, H), lambda i: (0, 0), **const),        # w1
            pl.BlockSpec((1, H), lambda i: (0, 0), **const),            # fc1 shift
            pl.BlockSpec((NH, H, H), lambda i: (0, 0, 0), **const),     # hidden w
            pl.BlockSpec((NH, 1, H), lambda i: (0, 0, 0), **const),     # hidden shift
            pl.BlockSpec((H, N_pad), lambda i: (0, 0), **const),        # fc_last w
            pl.BlockSpec((1, N_pad), lambda i: (0, 0), **const),        # fc_last b
        ],
        out_specs=pl.BlockSpec((TM, N_pad), lambda i: (i, 0)),
        compiler_params=pltpu.CompilerParams(
            dimension_semantics=("parallel",),
            # 48 MiB: ample for TM=256 + resident weights; below v7x's 64 MiB
            # physical VMEM, comfortably inside v5e/v6e's 128 MiB.
            vmem_limit_bytes=48 * 1024 * 1024),
    )(x, packed['w1'], packed['s1'], packed['wh'], packed['sh'],
      packed['wl'], packed['bl'])

    return out[:B, :node_feature_dim]


# ---------------------------------------------------------------------------
# Parameter init (PyTorch-like) and packing into the kernel layout
# ---------------------------------------------------------------------------

class KeyGen:
    def __init__(self, seed):
        self.key = jax.random.PRNGKey(seed)

    def __call__(self):
        self.key, sub = jax.random.split(self.key)
        return sub


def _uniform(kg, shape, bound):
    return jax.random.uniform(kg(), shape, jnp.float32, minval=-bound, maxval=bound)


def init_vector_denoiser(seed=0, node_feature_dim=1, hidden_dim=512,
                         num_layers=10, time_dim=32):
    kg = KeyGen(seed)

    def linear(fan_in, fan_out):
        b = 1.0 / math.sqrt(fan_in)
        return {'w': _uniform(kg, (fan_out, fan_in), b),
                'b': _uniform(kg, (fan_out,), b)}

    def batchnorm(c):
        return {'gamma': jnp.ones((c,), jnp.float32),
                'beta': jnp.zeros((c,), jnp.float32),
                'mean': jnp.zeros((c,), jnp.float32),
                'var': jnp.ones((c,), jnp.float32)}

    nh = num_layers - 2
    return {'fc1': linear(node_feature_dim + time_dim, hidden_dim),
            'bn1': batchnorm(hidden_dim),
            'hidden': [linear(hidden_dim, hidden_dim) for _ in range(nh)],
            'bn_hidden': [batchnorm(hidden_dim) for _ in range(nh)],
            'fc_last': linear(hidden_dim, node_feature_dim)}


def pack_params(p):
    """Transpose / pad / fold the PyTorch-layout params into the kernel layout.

    The BatchNorm scale is folded into the (f32) transposed weight columns and
    only then cast to bf16 (single rounding); only the per-channel shift stays
    as an f32 matmul epilogue.
    """
    eps = 1e-5
    H = p['fc1']['w'].shape[0]
    assert H % 128 == 0, "hidden_dim must be a multiple of 128 for this kernel"

    def scale_shift(bn, bias):
        scale = bn['gamma'] * jax.lax.rsqrt(bn['var'] + eps)
        shift = bn['beta'] + (bias - bn['mean']) * scale
        return scale, shift

    # fc1: fold scale into columns of W^T, pad fan-in to 128 lanes
    fin = p['fc1']['w'].shape[1]
    f_pad = ((fin + 127) // 128) * 128
    sc1, sh1 = scale_shift(p['bn1'], p['fc1']['b'])
    w1 = p['fc1']['w'].T * sc1[None, :]                       # f32 fold
    w1 = jnp.pad(w1, ((0, f_pad - fin), (0, 0))).astype(jnp.bfloat16)
    s1 = sh1.reshape(1, H).astype(jnp.float32)

    # hidden layers
    wh_list, sh_list = [], []
    for lw, bn in zip(p['hidden'], p['bn_hidden']):
        sc, sh = scale_shift(bn, lw['b'])
        wh_list.append((lw['w'].T * sc[None, :]).astype(jnp.bfloat16))
        sh_list.append(sh.reshape(1, H))
    wh = jnp.stack(wh_list)                                    # (NH, H, H) bf16
    shs = jnp.stack(sh_list).astype(jnp.float32)               # (NH, 1, H) f32

    # fc_last: pad output channels to 128 lanes (unmasked stores)
    nout = p['fc_last']['w'].shape[0]
    n_pad = ((nout + 127) // 128) * 128
    wl = jnp.pad(p['fc_last']['w'].T,
                 ((0, 0), (0, n_pad - nout))).astype(jnp.bfloat16)
    bl = jnp.pad(p['fc_last']['b'],
                 (0, n_pad - nout)).reshape(1, n_pad).astype(jnp.float32)

    return {'w1': w1, 's1': s1, 'wh': wh, 'sh': shs, 'wl': wl, 'bl': bl}


# ---------------------------------------------------------------------------
# Pure-JAX f32 reference (for a sanity check)
# ---------------------------------------------------------------------------

def reference_forward(p, data, t, time_dim=32):
    x = _prepare_input(data, t, time_dim)

    def bn(v, q):
        return (v - q['mean']) * jax.lax.rsqrt(q['var'] + 1e-5) * q['gamma'] + q['beta']

    h = jax.nn.relu(bn(x @ p['fc1']['w'].T + p['fc1']['b'], p['bn1']))
    for lw, q in zip(p['hidden'], p['bn_hidden']):
        y = jax.nn.relu(bn(h @ lw['w'].T + lw['b'], q))
        h = h + y
    return h @ p['fc_last']['w'].T + p['fc_last']['b']


# ---------------------------------------------------------------------------

if __name__ == "__main__":
    # Default module config: node_feature_dim=1, hidden_dim=512, num_layers=10,
    # time_dim=32.
    params = init_vector_denoiser(seed=0)
    packed = pack_params(params)

    key = jax.random.PRNGKey(0)
    kx, kt = jax.random.split(key)
    data = jax.random.normal(kx, (128, 1), jnp.float32)    # (B, node_feature_dim)
    t = jax.random.uniform(kt, (128,), jnp.float32)        # per-sample times

    fwd = jax.jit(vector_denoiser_forward)
    out = jax.block_until_ready(fwd(packed, data, t))

    assert out.shape == (128, 1), out.shape
    assert bool(jnp.all(jnp.isfinite(out)))

    # bf16-matmul kernel vs f32 reference (generous tolerance for bf16 weights/inputs)
    ref = reference_forward(params, data, t)
    err = float(jnp.max(jnp.abs(out - ref)))
    scale = float(jnp.max(jnp.abs(ref))) + 1.0
    assert err < 0.1 * scale, f"max abs diff vs f32 reference too large: {err}"

    print("KERNEL_OK")
</pallas_src>

<mosaic_0001>
module attributes {stable_mosaic.version = 11 : i64} {
  func.func @_mlp_fused_kernel(%arg0: i32, %arg1: memref<128x128xbf16, #tpu.memory_space<vmem>>, %arg2: memref<128x512xbf16, #tpu.memory_space<vmem>>, %arg3: memref<1x512xf32, #tpu.memory_space<vmem>>, %arg4: memref<8x512x512xbf16, #tpu.memory_space<vmem>>, %arg5: memref<8x1x512xf32, #tpu.memory_space<vmem>>, %arg6: memref<512x128xbf16, #tpu.memory_space<vmem>>, %arg7: memref<1x128xf32, #tpu.memory_space<vmem>>, %arg8: memref<128x128xf32, #tpu.memory_space<vmem>>) attributes {dimension_semantics = [#tpu.dimension_semantics<parallel>], iteration_bounds = array<i64: 1>, scalar_prefetch = 0 : i64, scratch_operands = 0 : i64, tpu.core_type = #tpu.core_type<tc>, window_params = [{transform_indices = @transform_0, window_bounds = array<i64: 128, 128>}, {pipeline_mode = #tpu.pipeline_mode<synchronous>, transform_indices = @transform_1, window_bounds = array<i64: 128, 512>}, {pipeline_mode = #tpu.pipeline_mode<synchronous>, transform_indices = @transform_2, window_bounds = array<i64: 1, 512>}, {pipeline_mode = #tpu.pipeline_mode<synchronous>, transform_indices = @transform_3, window_bounds = array<i64: 8, 512, 512>}, {pipeline_mode = #tpu.pipeline_mode<synchronous>, transform_indices = @transform_4, window_bounds = array<i64: 8, 1, 512>}, {pipeline_mode = #tpu.pipeline_mode<synchronous>, transform_indices = @transform_5, window_bounds = array<i64: 512, 128>}, {pipeline_mode = #tpu.pipeline_mode<synchronous>, transform_indices = @transform_6, window_bounds = array<i64: 1, 128>}, {transform_indices = @transform_7, window_bounds = array<i64: 128, 128>}]} {
    %c0 = arith.constant 0 : index
    %c0_0 = arith.constant 0 : index
    %0 = vector.load %arg1[%c0, %c0_0] : memref<128x128xbf16, #tpu.memory_space<vmem>>, vector<128x128xbf16>
    %c0_1 = arith.constant 0 : index
    %c0_2 = arith.constant 0 : index
    %1 = vector.load %arg2[%c0_1, %c0_2] : memref<128x512xbf16, #tpu.memory_space<vmem>>, vector<128x512xbf16>
    %cst = arith.constant dense<0.000000e+00> : vector<128x512xf32>
    %2 = tpu.matmul %0, %1, %cst {dimension_numbers = #tpu.dot_dimension_numbers<[1], [0], [0], [1], [0, 0, 1, 1], [], []>} : vector<128x128xbf16>, vector<128x512xbf16>, vector<128x512xf32> -> vector<128x512xf32>
    %c0_3 = arith.constant 0 : index
    %c0_4 = arith.constant 0 : index
    %3 = vector.load %arg3[%c0_3, %c0_4] : memref<1x512xf32, #tpu.memory_space<vmem>>, vector<1x512xf32>
    %4 = vector.broadcast %3 : vector<1x512xf32> to vector<128x512xf32>
    %5 = arith.addf %2, %4 : vector<128x512xf32>
    %cst_5 = arith.constant 0.000000e+00 : f32
    %6 = vector.broadcast %cst_5 : f32 to vector<128x512xf32>
    %7 = arith.maximumf %5, %6 : vector<128x512xf32>
    %8 = arith.truncf %7 : vector<128x512xf32> to vector<128x512xbf16>
    %c0_6 = arith.constant 0 : index
    %c0_7 = arith.constant 0 : index
    %c0_8 = arith.constant 0 : index
    %9 = vector.load %arg4[%c0_6, %c0_7, %c0_8] : memref<8x512x512xbf16, #tpu.memory_space<vmem>>, vector<1x512x512xbf16>
    %10 = vector.shape_cast %9 : vector<1x512x512xbf16> to vector<512x512xbf16>
    %cst_9 = arith.constant dense<0.000000e+00> : vector<128x512xf32>
    %11 = tpu.matmul %8, %10, %cst_9 {dimension_numbers = #tpu.dot_dimension_numbers<[1], [0], [0], [1], [0, 0, 1, 1], [], []>} : vector<128x512xbf16>, vector<512x512xbf16>, vector<128x512xf32> -> vector<128x512xf32>
    %c0_10 = arith.constant 0 : index
    %c0_11 = arith.constant 0 : index
    %c0_12 = arith.constant 0 : index
    %12 = vector.load %arg5[%c0_10, %c0_11, %c0_12] : memref<8x1x512xf32, #tpu.memory_space<vmem>>, vector<1x1x512xf32>
    %13 = vector.shape_cast %12 : vector<1x1x512xf32> to vector<1x512xf32>
    %14 = vector.broadcast %13 : vector<1x512xf32> to vector<128x512xf32>
    %15 = arith.addf %11, %14 : vector<128x512xf32>
    %cst_13 = arith.constant 0.000000e+00 : f32
    %16 = vector.broadcast %cst_13 : f32 to vector<128x512xf32>
    %17 = arith.maximumf %15, %16 : vector<128x512xf32>
    %18 = arith.addf %7, %17 : vector<128x512xf32>
    %19 = arith.truncf %18 : vector<128x512xf32> to vector<128x512xbf16>
    %c1 = arith.constant 1 : index
    %c0_14 = arith.constant 0 : index
    %c0_15 = arith.constant 0 : index
    %20 = vector.load %arg4[%c1, %c0_14, %c0_15] : memref<8x512x512xbf16, #tpu.memory_space<vmem>>, vector<1x512x512xbf16>
    %21 = vector.shape_cast %20 : vector<1x512x512xbf16> to vector<512x512xbf16>
    %cst_16 = arith.constant dense<0.000000e+00> : vector<128x512xf32>
    %22 = tpu.matmul %19, %21, %cst_16 {dimension_numbers = #tpu.dot_dimension_numbers<[1], [0], [0], [1], [0, 0, 1, 1], [], []>} : vector<128x512xbf16>, vector<512x512xbf16>, vector<128x512xf32> -> vector<128x512xf32>
    %c1_17 = arith.constant 1 : index
    %c0_18 = arith.constant 0 : index
    %c0_19 = arith.constant 0 : index
    %23 = vector.load %arg5[%c1_17, %c0_18, %c0_19] : memref<8x1x512xf32, #tpu.memory_space<vmem>>, vector<1x1x512xf32>
    %24 = vector.shape_cast %23 : vector<1x1x512xf32> to vector<1x512xf32>
    %25 = vector.broadcast %24 : vector<1x512xf32> to vector<128x512xf32>
    %26 = arith.addf %22, %25 : vector<128x512xf32>
    %cst_20 = arith.constant 0.000000e+00 : f32
    %27 = vector.broadcast %cst_20 : f32 to vector<128x512xf32>
    %28 = arith.maximumf %26, %27 : vector<128x512xf32>
    %29 = arith.addf %18, %28 : vector<128x512xf32>
    %30 = arith.truncf %29 : vector<128x512xf32> to vector<128x512xbf16>
    %c2 = arith.constant 2 : index
    %c0_21 = arith.constant 0 : index
    %c0_22 = arith.constant 0 : index
    %31 = vector.load %arg4[%c2, %c0_21, %c0_22] : memref<8x512x512xbf16, #tpu.memory_space<vmem>>, vector<1x512x512xbf16>
    %32 = vector.shape_cast %31 : vector<1x512x512xbf16> to vector<512x512xbf16>
    %cst_23 = arith.constant dense<0.000000e+00> : vector<128x512xf32>
    %33 = tpu.matmul %30, %32, %cst_23 {dimension_numbers = #tpu.dot_dimension_numbers<[1], [0], [0], [1], [0, 0, 1, 1], [], []>} : vector<128x512xbf16>, vector<512x512xbf16>, vector<128x512xf32> -> vector<128x512xf32>
    %c2_24 = arith.constant 2 : index
    %c0_25 = arith.constant 0 : index
    %c0_26 = arith.constant 0 : index
    %34 = vector.load %arg5[%c2_24, %c0_25, %c0_26] : memref<8x1x512xf32, #tpu.memory_space<vmem>>, vector<1x1x512xf32>
    %35 = vector.shape_cast %34 : vector<1x1x512xf32> to vector<1x512xf32>
    %36 = vector.broadcast %35 : vector<1x512xf32> to vector<128x512xf32>
    %37 = arith.addf %33, %36 : vector<128x512xf32>
    %cst_27 = arith.constant 0.000000e+00 : f32
    %38 = vector.broadcast %cst_27 : f32 to vector<128x512xf32>
    %39 = arith.maximumf %37, %38 : vector<128x512xf32>
    %40 = arith.addf %29, %39 : vector<128x512xf32>
    %41 = arith.truncf %40 : vector<128x512xf32> to vector<128x512xbf16>
    %c3 = arith.constant 3 : index
    %c0_28 = arith.constant 0 : index
    %c0_29 = arith.constant 0 : index
    %42 = vector.load %arg4[%c3, %c0_28, %c0_29] : memref<8x512x512xbf16, #tpu.memory_space<vmem>>, vector<1x512x512xbf16>
    %43 = vector.shape_cast %42 : vector<1x512x512xbf16> to vector<512x512xbf16>
    %cst_30 = arith.constant dense<0.000000e+00> : vector<128x512xf32>
    %44 = tpu.matmul %41, %43, %cst_30 {dimension_numbers = #tpu.dot_dimension_numbers<[1], [0], [0], [1], [0, 0, 1, 1], [], []>} : vector<128x512xbf16>, vector<512x512xbf16>, vector<128x512xf32> -> vector<128x512xf32>
    %c3_31 = arith.constant 3 : index
    %c0_32 = arith.constant 0 : index
    %c0_33 = arith.constant 0 : index
    %45 = vector.load %arg5[%c3_31, %c0_32, %c0_33] : memref<8x1x512xf32, #tpu.memory_space<vmem>>, vector<1x1x512xf32>
    %46 = vector.shape_cast %45 : vector<1x1x512xf32> to vector<1x512xf32>
    %47 = vector.broadcast %46 : vector<1x512xf32> to vector<128x512xf32>
    %48 = arith.addf %44, %47 : vector<128x512xf32>
    %cst_34 = arith.constant 0.000000e+00 : f32
    %49 = vector.broadcast %cst_34 : f32 to vector<128x512xf32>
    %50 = arith.maximumf %48, %49 : vector<128x512xf32>
    %51 = arith.addf %40, %50 : vector<128x512xf32>
    %52 = arith.truncf %51 : vector<128x512xf32> to vector<128x512xbf16>
    %c4 = arith.constant 4 : index
    %c0_35 = arith.constant 0 : index
    %c0_36 = arith.constant 0 : index
    %53 = vector.load %arg4[%c4, %c0_35, %c0_36] : memref<8x512x512xbf16, #tpu.memory_space<vmem>>, vector<1x512x512xbf16>
    %54 = vector.shape_cast %53 : vector<1x512x512xbf16> to vector<512x512xbf16>
    %cst_37 = arith.constant dense<0.000000e+00> : vector<128x512xf32>
    %55 = tpu.matmul %52, %54, %cst_37 {dimension_numbers = #tpu.dot_dimension_numbers<[1], [0], [0], [1], [0, 0, 1, 1], [], []>} : vector<128x512xbf16>, vector<512x512xbf16>, vector<128x512xf32> -> vector<128x512xf32>
    %c4_38 = arith.constant 4 : index
    %c0_39 = arith.constant 0 : index
    %c0_40 = arith.constant 0 : index
    %56 = vector.load %arg5[%c4_38, %c0_39, %c0_40] : memref<8x1x512xf32, #tpu.memory_space<vmem>>, vector<1x1x512xf32>
    %57 = vector.shape_cast %56 : vector<1x1x512xf32> to vector<1x512xf32>
    %58 = vector.broadcast %57 : vector<1x512xf32> to vector<128x512xf32>
    %59 = arith.addf %55, %58 : vector<128x512xf32>
    %cst_41 = arith.constant 0.000000e+00 : f32
    %60 = vector.broadcast %cst_41 : f32 to vector<128x512xf32>
    %61 = arith.maximumf %59, %60 : vector<128x512xf32>
    %62 = arith.addf %51, %61 : vector<128x512xf32>
    %63 = arith.truncf %62 : vector<128x512xf32> to vector<128x512xbf16>
    %c5 = arith.constant 5 : index
    %c0_42 = arith.constant 0 : index
    %c0_43 = arith.constant 0 : index
    %64 = vector.load %arg4[%c5, %c0_42, %c0_43] : memref<8x512x512xbf16, #tpu.memory_space<vmem>>, vector<1x512x512xbf16>
    %65 = vector.shape_cast %64 : vector<1x512x512xbf16> to vector<512x512xbf16>
    %cst_44 = arith.constant dense<0.000000e+00> : vector<128x512xf32>
    %66 = tpu.matmul %63, %65, %cst_44 {dimension_numbers = #tpu.dot_dimension_numbers<[1], [0], [0], [1], [0, 0, 1, 1], [], []>} : vector<128x512xbf16>, vector<512x512xbf16>, vector<128x512xf32> -> vector<128x512xf32>
    %c5_45 = arith.constant 5 : index
    %c0_46 = arith.constant 0 : index
    %c0_47 = arith.constant 0 : index
    %67 = vector.load %arg5[%c5_45, %c0_46, %c0_47] : memref<8x1x512xf32, #tpu.memory_space<vmem>>, vector<1x1x512xf32>
    %68 = vector.shape_cast %67 : vector<1x1x512xf32> to vector<1x512xf32>
    %69 = vector.broadcast %68 : vector<1x512xf32> to vector<128x512xf32>
    %70 = arith.addf %66, %69 : vector<128x512xf32>
    %cst_48 = arith.constant 0.000000e+00 : f32
    %71 = vector.broadcast %cst_48 : f32 to vector<128x512xf32>
    %72 = arith.maximumf %70, %71 : vector<128x512xf32>
    %73 = arith.addf %62, %72 : vector<128x512xf32>
    %74 = arith.truncf %73 : vector<128x512xf32> to vector<128x512xbf16>
    %c6 = arith.constant 6 : index
    %c0_49 = arith.constant 0 : index
    %c0_50 = arith.constant 0 : index
    %75 = vector.load %arg4[%c6, %c0_49, %c0_50] : memref<8x512x512xbf16, #tpu.memory_space<vmem>>, vector<1x512x512xbf16>
    %76 = vector.shape_cast %75 : vector<1x512x512xbf16> to vector<512x512xbf16>
    %cst_51 = arith.constant dense<0.000000e+00> : vector<128x512xf32>
    %77 = tpu.matmul %74, %76, %cst_51 {dimension_numbers = #tpu.dot_dimension_numbers<[1], [0], [0], [1], [0, 0, 1, 1], [], []>} : vector<128x512xbf16>, vector<512x512xbf16>, vector<128x512xf32> -> vector<128x512xf32>
    %c6_52 = arith.constant 6 : index
    %c0_53 = arith.constant 0 : index
    %c0_54 = arith.constant 0 : index
    %78 = vector.load %arg5[%c6_52, %c0_53, %c0_54] : memref<8x1x512xf32, #tpu.memory_space<vmem>>, vector<1x1x512xf32>
    %79 = vector.shape_cast %78 : vector<1x1x512xf32> to vector<1x512xf32>
    %80 = vector.broadcast %79 : vector<1x512xf32> to vector<128x512xf32>
    %81 = arith.addf %77, %80 : vector<128x512xf32>
    %cst_55 = arith.constant 0.000000e+00 : f32
    %82 = vector.broadcast %cst_55 : f32 to vector<128x512xf32>
    %83 = arith.maximumf %81, %82 : vector<128x512xf32>
    %84 = arith.addf %73, %83 : vector<128x512xf32>
    %85 = arith.truncf %84 : vector<128x512xf32> to vector<128x512xbf16>
    %c7 = arith.constant 7 : index
    %c0_56 = arith.constant 0 : index
    %c0_57 = arith.constant 0 : index
    %86 = vector.load %arg4[%c7, %c0_56, %c0_57] : memref<8x512x512xbf16, #tpu.memory_space<vmem>>, vector<1x512x512xbf16>
    %87 = vector.shape_cast %86 : vector<1x512x512xbf16> to vector<512x512xbf16>
    %cst_58 = arith.constant dense<0.000000e+00> : vector<128x512xf32>
    %88 = tpu.matmul %85, %87, %cst_58 {dimension_numbers = #tpu.dot_dimension_numbers<[1], [0], [0], [1], [0, 0, 1, 1], [], []>} : vector<128x512xbf16>, vector<512x512xbf16>, vector<128x512xf32> -> vector<128x512xf32>
    %c7_59 = arith.constant 7 : index
    %c0_60 = arith.constant 0 : index
    %c0_61 = arith.constant 0 : index
    %89 = vector.load %arg5[%c7_59, %c0_60, %c0_61] : memref<8x1x512xf32, #tpu.memory_space<vmem>>, vector<1x1x512xf32>
    %90 = vector.shape_cast %89 : vector<1x1x512xf32> to vector<1x512xf32>
    %91 = vector.broadcast %90 : vector<1x512xf32> to vector<128x512xf32>
    %92 = arith.addf %88, %91 : vector<128x512xf32>
    %cst_62 = arith.constant 0.000000e+00 : f32
    %93 = vector.broadcast %cst_62 : f32 to vector<128x512xf32>
    %94 = arith.maximumf %92, %93 : vector<128x512xf32>
    %95 = arith.addf %84, %94 : vector<128x512xf32>
    %96 = arith.truncf %95 : vector<128x512xf32> to vector<128x512xbf16>
    %c0_63 = arith.constant 0 : index
    %c0_64 = arith.constant 0 : index
    %97 = vector.load %arg6[%c0_63, %c0_64] : memref<512x128xbf16, #tpu.memory_space<vmem>>, vector<512x128xbf16>
    %cst_65 = arith.constant dense<0.000000e+00> : vector<128x128xf32>
    %98 = tpu.matmul %96, %97, %cst_65 {dimension_numbers = #tpu.dot_dimension_numbers<[1], [0], [0], [1], [0, 0, 1, 1], [], []>} : vector<128x512xbf16>, vector<512x128xbf16>, vector<128x128xf32> -> vector<128x128xf32>
    %c0_66 = arith.constant 0 : index
    %c0_67 = arith.constant 0 : index
    %99 = vector.load %arg7[%c0_66, %c0_67] : memref<1x128xf32, #tpu.memory_space<vmem>>, vector<1x128xf32>
    %100 = vector.broadcast %99 : vector<1x128xf32> to vector<128x128xf32>
    %101 = arith.addf %98, %100 : vector<128x128xf32>
    %c0_68 = arith.constant 0 : index
    %c0_69 = arith.constant 0 : index
    %102 = vector.load %arg8[%c0_68, %c0_69] : memref<128x128xf32, #tpu.memory_space<vmem>>, vector<128x128xf32>
    tpu.vector_store %arg8[%c0_68, %c0_69], %101 {strides = array<i32>} : memref<128x128xf32, #tpu.memory_space<vmem>>, vector<128x128xf32>,
    return
  }
  func.func @transform_0(%arg0: i32) -> (i32, i32) {
    %c0_i32 = arith.constant 0 : i32
    %c0_i32_0 = arith.constant 0 : i32
    return %arg0, %c0_i32 : i32, i32
  }
  func.func @transform_1(%arg0: i32) -> (i32, i32) {
    %c0_i32 = arith.constant 0 : i32
    %c0_i32_0 = arith.constant 0 : i32
    %c0_i32_1 = arith.constant 0 : i32
    return %c0_i32, %c0_i32_0 : i32, i32
  }
  func.func @transform_2(%arg0: i32) -> (i32, i32) {
    %c0_i32 = arith.constant 0 : i32
    %c0_i32_0 = arith.constant 0 : i32
    %c0_i32_1 = arith.constant 0 : i32
    return %c0_i32, %c0_i32_0 : i32, i32
  }
  func.func @transform_3(%arg0: i32) -> (i32, i32, i32) {
    %c0_i32 = arith.constant 0 : i32
    %c0_i32_0 = arith.constant 0 : i32
    %c0_i32_1 = arith.constant 0 : i32
    %c0_i32_2 = arith.constant 0 : i32
    return %c0_i32, %c0_i32_0, %c0_i32_1 : i32, i32, i32
  }
  func.func @transform_4(%arg0: i32) -> (i32, i32, i32) {
    %c0_i32 = arith.constant 0 : i32
    %c0_i32_0 = arith.constant 0 : i32
    %c0_i32_1 = arith.constant 0 : i32
    %c0_i32_2 = arith.constant 0 : i32
    return %c0_i32, %c0_i32_0, %c0_i32_1 : i32, i32, i32
  }
  func.func @transform_5(%arg0: i32) -> (i32, i32) {
    %c0_i32 = arith.constant 0 : i32
    %c0_i32_0 = arith.constant 0 : i32
    %c0_i32_1 = arith.constant 0 : i32
    return %c0_i32, %c0_i32_0 : i32, i32
  }
  func.func @transform_6(%arg0: i32) -> (i32, i32) {
    %c0_i32 = arith.constant 0 : i32
    %c0_i32_0 = arith.constant 0 : i32
    %c0_i32_1 = arith.constant 0 : i32
    return %c0_i32, %c0_i32_0 : i32, i32
  }
  func.func @transform_7(%arg0: i32) -> (i32, i32) {
    %c0_i32 = arith.constant 0 : i32
    %c0_i32_0 = arith.constant 0 : i32
    return %arg0, %c0_i32 : i32, i32
  }
}

</mosaic_0001>

<llo_original>
// kernel: vector_denoiser_forward.1
$region0: #{vector_denoiser_forward.1}
  #allocation0 [shape = 'u32[]', space=smem, size = 0x4, offset = 0x4, fixed_abs, tag = 'smem constant byte address 0x4 - core index']
  #allocation1 [shape = 'u32[144,128]{1,0:T(1,128)}', space=vmem, size = 0x12000, scoped, tag = 'internal scratch']
  %s0 = inlined_call_operand.vmem [shape: bf16[128,128], index: 0, kind: input, shape index: {}]
  %s1 = inlined_call_operand.hbm [shape: bf16[128,512], index: 1, kind: input, shape index: {}]
  %s2 = inlined_call_operand.hbm [shape: f32[1,512], index: 2, kind: input, shape index: {}]
  %s3 = inlined_call_operand.hbm [shape: bf16[8,512,512], index: 3, kind: input, shape index: {}]
  %s4 = inlined_call_operand.hbm [shape: f32[8,1,512], index: 4, kind: input, shape index: {}]
  %s5 = inlined_call_operand.hbm [shape: bf16[512,128], index: 5, kind: input, shape index: {}]
  %s6 = inlined_call_operand.hbm [shape: f32[1,128], index: 6, kind: input, shape index: {}]
  %s7 = inlined_call_operand.vmem [shape: f32[128,128], index: 7, kind: output, shape index: {}]
  %s8 = sld [smem:[#allocation0]]
  $region62: #{vector_denoiser_forward.1} parent=0
    _
  %s10 = ssub.s32 1, %s8
  %s11 = scalar_select 0, %s10, %s8
  $region1: #{vector_denoiser_forward.1} parent=0
    #allocation2 [shape = 'u8[131072]{0}', space=vmem, size = 0x20000, scoped, tag = 'input window, operand 1, single buffered']
    #allocation3 [shape = 's32[1]{0}', space=sflag, size = 0x4, scoped, tag = 'scoped memory for vector_denoiser_forward.1']
    #allocation4 [shape = 'u8[2048]{0}', space=vmem, size = 0x800, scoped, tag = 'input window, operand 2, single buffered']
    #allocation5 [shape = 's32[1]{0}', space=sflag, size = 0x4, scoped, tag = 'scoped memory for vector_denoiser_forward.1']
    #allocation6 [shape = 'u8[4194304]{0}', space=vmem, size = 0x400000, scoped, tag = 'input window, operand 3, single buffered']
    #allocation7 [shape = 'u8[16384]{0}', space=vmem, size = 0x4000, scoped, tag = 'input window, operand 4, single buffered']
    #allocation8 [shape = 's32[1]{0}', space=sflag, size = 0x4, scoped, tag = 'scoped memory for vector_denoiser_forward.1']
    #allocation9 [shape = 'u8[131072]{0}', space=vmem, size = 0x20000, scoped, tag = 'input window, operand 5, single buffered']
    #allocation10 [shape = 'u8[512]{0}', space=vmem, size = 0x400, scoped, tag = 'input window, operand 6, single buffered']
    #allocation11 [shape = 's32[1]{0}', space=sflag, size = 0x4, scoped, tag = 'scoped memory for vector_denoiser_forward.1']
    %12 = vsyncpa [#allocation3], 0
    %13 = vsyncpa [#allocation5], 0
    %14 = vsyncpa [#allocation8], 0
    %15 = vsyncpa [#allocation11], 0
    // Predicated region
    $region2: #{vector_denoiser_forward.1} parent=1 // pred_check
      _
    $region3: #{vector_denoiser_forward.1} parent=1 // pred_check_branch
      %17 = sbr.rel (0) target = $region5
    $region4: #{vector_denoiser_forward.1} parent=1 // pred_region
      _
    $region5: #{vector_denoiser_forward.1} parent=1 // pred_fallthru
      _
    // Predicated region
    $region6: #{vector_denoiser_forward.1} parent=1 // pred_check
      _
    $region7: #{vector_denoiser_forward.1} parent=1 // pred_check_branch
      %19 = sbr.rel (0) target = $region9
    $region8: #{vector_denoiser_forward.1} parent=1 // pred_region
      %s21 = ssub.s32 4096, 4096
      %22 = vsyncadd [#allocation3], %s21
      %s23 = sshll.u32 [#allocation2], 4
      %s24 = int_to_ptr.vmem [resolvable:$true] %s23
      %29 = dma.hbm_to_vmem [thread:$0]  %s1, 4096, %s24, [#allocation3], 256, 256, 16
    $region9: #{vector_denoiser_forward.1} parent=1 // pred_fallthru
      _
    // Predicated region
    $region10: #{vector_denoiser_forward.1} parent=1 // pred_check
      _
    $region11: #{vector_denoiser_forward.1} parent=1 // pred_check_branch
      %31 = sbr.rel (0) target = $region13
    $region12: #{vector_denoiser_forward.1} parent=1 // pred_region
      %s33 = ssub.s32 64, 64
      %34 = vsyncadd [#allocation5], %s33
      %s36 = sshll.u32 [#allocation4], 4
      %s37 = int_to_ptr.vmem [resolvable:$true] %s36
      %39 = dma.hbm_to_vmem [thread:$0]  %s2, 64, %s37, [#allocation5]
    $region13: #{vector_denoiser_forward.1} parent=1 // pred_fallthru
      _
    // Predicated region
    $region14: #{vector_denoiser_forward.1} parent=1 // pred_check
      _
    $region15: #{vector_denoiser_forward.1} parent=1 // pred_check_branch
      %41 = sbr.rel (0) target = $region17
    $region16: #{vector_denoiser_forward.1} parent=1 // pred_region
      %s43 = ssub.s32 131072, 131072
      %44 = vsyncadd [#allocation5], %s43
      %s45 = sshll.u32 [#allocation6], 4
      %s46 = int_to_ptr.vmem [resolvable:$true] %s45
      %51 = dma.hbm_to_vmem [thread:$0]  %s3, 131072, %s46, [#allocation5], 256, 256, 16
    $region17: #{vector_denoiser_forward.1} parent=1 // pred_fallthru
      _
    // Predicated region
    $region18: #{vector_denoiser_forward.1} parent=1 // pred_check
      _
    $region19: #{vector_denoiser_forward.1} parent=1 // pred_check_branch
      %53 = sbr.rel (0) target = $region21
    $region20: #{vector_denoiser_forward.1} parent=1 // pred_region
      %s55 = ssub.s32 512, 512
      %56 = vsyncadd [#allocation8], %s55
      %s57 = sshll.u32 [#allocation7], 4
      %s58 = int_to_ptr.vmem [resolvable:$true] %s57
      %63 = dma.hbm_to_vmem [thread:$0]  %s4, 512, %s58, [#allocation8], 64, 64, 4
    $region21: #{vector_denoiser_forward.1} parent=1 // pred_fallthru
      _
    // Predicated region
    $region22: #{vector_denoiser_forward.1} parent=1 // pred_check
      _
    $region23: #{vector_denoiser_forward.1} parent=1 // pred_check_branch
      %65 = sbr.rel (0) target = $region25
    $region24: #{vector_denoiser_forward.1} parent=1 // pred_region
      %s67 = ssub.s32 4096, 4096
      %68 = vsyncadd [#allocation8], %s67
      %s69 = sshll.u32 [#allocation9], 4
      %s70 = int_to_ptr.vmem [resolvable:$true] %s69
      %75 = dma.hbm_to_vmem [thread:$0]  %s5, 4096, %s70, [#allocation8], 64, 64, 4
    $region25: #{vector_denoiser_forward.1} parent=1 // pred_fallthru
      _
    // Predicated region
    $region26: #{vector_denoiser_forward.1} parent=1 // pred_check
      _
    $region27: #{vector_denoiser_forward.1} parent=1 // pred_check_branch
      %77 = sbr.rel (0) target = $region29
    $region28: #{vector_denoiser_forward.1} parent=1 // pred_region
      %s79 = ssub.s32 16, 16
      %80 = vsyncadd [#allocation11], %s79
      %s82 = sshll.u32 [#allocation10], 4
      %s83 = int_to_ptr.vmem [resolvable:$true] %s82
      %85 = dma.hbm_to_vmem [thread:$0]  %s6, 16, %s83, [#allocation11]
    $region29: #{vector_denoiser_forward.1} parent=1 // pred_fallthru
      _
    // Predicated region
    $region30: #{vector_denoiser_forward.1} parent=1 // pred_check
      _
    $region31: #{vector_denoiser_forward.1} parent=1 // pred_check_branch
      %87 = sbr.rel (0) target = $region33
    $region32: #{vector_denoiser_forward.1} parent=1 // pred_region
      %88 = dma.done [#allocation3], 4096
    $region33: #{vector_denoiser_forward.1} parent=1 // pred_fallthru
      _
    // Predicated region
    $region34: #{vector_denoiser_forward.1} parent=1 // pred_check
      _
    $region35: #{vector_denoiser_forward.1} parent=1 // pred_check_branch
      %90 = sbr.rel (0) target = $region37
    $region36: #{vector_denoiser_forward.1} parent=1 // pred_region
      %91 = dma.done [#allocation5], 64
    $region37: #{vector_denoiser_forward.1} parent=1 // pred_fallthru
      _
    // Predicated region
    $region38: #{vector_denoiser_forward.1} parent=1 // pred_check
      _
    $region39: #{vector_denoiser_forward.1} parent=1 // pred_check_branch
      %93 = sbr.rel (0) target = $region41
    $region40: #{vector_denoiser_forward.1} parent=1 // pred_region
      %94 = dma.done [#allocation5], 131072
    $region41: #{vector_denoiser_forward.1} parent=1 // pred_fallthru
      _
    // Predicated region
    $region42: #{vector_denoiser_forward.1} parent=1 // pred_check
      _
    $region43: #{vector_denoiser_forward.1} parent=1 // pred_check_branch
      %96 = sbr.rel (0) target = $region45
    $region44: #{vector_denoiser_forward.1} parent=1 // pred_region
      %97 = dma.done [#allocation8], 512
    $region45: #{vector_denoiser_forward.1} parent=1 // pred_fallthru
      _
    // Predicated region
    $region46: #{vector_denoiser_forward.1} parent=1 // pred_check
      _
    $region47: #{vector_denoiser_forward.1} parent=1 // pred_check_branch
      %99 = sbr.rel (0) target = $region49
    $region48: #{vector_denoiser_forward.1} parent=1 // pred_region
      %100 = dma.done [#allocation8], 4096
    $region49: #{vector_denoiser_forward.1} parent=1 // pred_fallthru
      _
    // Predicated region
    $region50: #{vector_denoiser_forward.1} parent=1 // pred_check
      _
    $region51: #{vector_denoiser_forward.1} parent=1 // pred_check_branch
      %102 = sbr.rel (0) target = $region53
    $region52: #{vector_denoiser_forward.1} parent=1 // pred_region
      %103 = dma.done [#allocation11], 16
    $region53: #{vector_denoiser_forward.1} parent=1 // pred_fallthru
      _
    %v105 = vld [vmem:[%s0] sm:$0xf]
    %v106 = vld [vmem:[%s0 + $0x4] sm:$0xf]
    %v107 = vld [vmem:[%s0 + $0x8] sm:$0xf]
    %v108 = vld [vmem:[%s0 + $0xc] sm:$0xf]
    %v109 = vld [vmem:[%s0 + $0x10] sm:$0xf]
    %v110 = vld [vmem:[%s0 + $0x14] sm:$0xf]
    %v111 = vld [vmem:[%s0 + $0x18] sm:$0xf]
    %v112 = vld [vmem:[%s0 + $0x1c] sm:$0xf]
    %v113 = vld [vmem:[%s0 + $0x20] sm:$0xf]
    %v114 = vld [vmem:[%s0 + $0x24] sm:$0xf]
    %v115 = vld [vmem:[%s0 + $0x28] sm:$0xf]
    %v116 = vld [vmem:[%s0 + $0x2c] sm:$0xf]
    %v117 = vld [vmem:[%s0 + $0x30] sm:$0xf]
    %v118 = vld [vmem:[%s0 + $0x34] sm:$0xf]
    %v119 = vld [vmem:[%s0 + $0x38] sm:$0xf]
    %v120 = vld [vmem:[%s0 + $0x3c] sm:$0xf]
    %v121 = vld [vmem:[#allocation2] sm:$0xff]
    %v122 = vld [vmem:[#allocation2 + $0x8] sm:$0xff]
    %v123 = vld [vmem:[#allocation2 + $0x10] sm:$0xff]
    %v124 = vld [vmem:[#allocation2 + $0x18] sm:$0xff]
    %v125 = vld [vmem:[#allocation2 + $0x20] sm:$0xff]
    %v126 = vld [vmem:[#allocation2 + $0x28] sm:$0xff]
    %v127 = vld [vmem:[#allocation2 + $0x30] sm:$0xff]
    %v128 = vld [vmem:[#allocation2 + $0x38] sm:$0xff]
    %v129 = vld [vmem:[#allocation2 + $0x40] sm:$0xff]
    %v130 = vld [vmem:[#allocation2 + $0x48] sm:$0xff]
    %v131 = vld [vmem:[#allocation2 + $0x50] sm:$0xff]
    %v132 = vld [vmem:[#allocation2 + $0x58] sm:$0xff]
    %v133 = vld [vmem:[#allocation2 + $0x60] sm:$0xff]
    %v134 = vld [vmem:[#allocation2 + $0x68] sm:$0xff]
    %v135 = vld [vmem:[#allocation2 + $0x70] sm:$0xff]
    %v136 = vld [vmem:[#allocation2 + $0x78] sm:$0xff]
    %v137 = vld [vmem:[#allocation2 + $0x80] sm:$0xff]
    %v138 = vld [vmem:[#allocation2 + $0x88] sm:$0xff]
    %v139 = vld [vmem:[#allocation2 + $0x90] sm:$0xff]
    %v140 = vld [vmem:[#allocation2 + $0x98] sm:$0xff]
    %v141 = vld [vmem:[#allocation2 + $0xa0] sm:$0xff]
    %v142 = vld [vmem:[#allocation2 + $0xa8] sm:$0xff]
    %v143 = vld [vmem:[#allocation2 + $0xb0] sm:$0xff]
    %v144 = vld [vmem:[#allocation2 + $0xb8] sm:$0xff]
    %v145 = vld [vmem:[#allocation2 + $0xc0] sm:$0xff]
    %v146 = vld [vmem:[#allocation2 + $0xc8] sm:$0xff]
    %v147 = vld [vmem:[#allocation2 + $0xd0] sm:$0xff]
    %v148 = vld [vmem:[#allocation2 + $0xd8] sm:$0xff]
    %v149 = vld [vmem:[#allocation2 + $0xe0] sm:$0xff]
    %v150 = vld [vmem:[#allocation2 + $0xe8] sm:$0xff]
    %v151 = vld [vmem:[#allocation2 + $0xf0] sm:$0xff]
    %v152 = vld [vmem:[#allocation2 + $0xf8] sm:$0xff]
    %v153 = vld [vmem:[#allocation4] sm:$0xf]
    %v155 = vlaneseq
    %v156 = vshrl.u32 %v155, 7
    %v157 = vsub.s32 0, %v156
    %v158 = vrot.slane %v153, %v157
    %v159 = vlaneseq
    %v160 = vshrl.u32 %v159, 7
    %v161 = vsub.s32 1, %v160
    %v162 = vrot.slane %v153, %v161
    %v163 = vlaneseq
    %v164 = vshrl.u32 %v163, 7
    %v165 = vsub.s32 2, %v164
    %v166 = vrot.slane %v153, %v165
    %v167 = vlaneseq
    %v168 = vshrl.u32 %v167, 7
    %v169 = vsub.s32 3, %v168
    %v170 = vrot.slane %v153, %v169
    %v191 = vunpack.c.l.b16 %v105
    %v192 = vunpack.c.l.b16 %v106
    %v193 = vunpack.c.l.b16 %v107
    %v194 = vunpack.c.l.b16 %v108
    %v195 = vunpack.c.l.b16 %v109
    %v196 = vunpack.c.l.b16 %v110
    %v197 = vunpack.c.l.b16 %v111
    %v198 = vunpack.c.l.b16 %v112
    %v199 = vunpack.c.l.b16 %v113
    %v200 = vunpack.c.l.b16 %v114
    %v201 = vunpack.c.l.b16 %v115
    %v202 = vunpack.c.l.b16 %v116
    %v203 = vunpack.c.l.b16 %v117
    %v204 = vunpack.c.l.b16 %v118
    %v205 = vunpack.c.l.b16 %v119
    %v206 = vunpack.c.l.b16 %v120
    %v207 = vpack.c.b16 %v192, %v191
    %v208 = vpack.c.b16 %v194, %v193
    %v209 = vpack.c.b16 %v196, %v195
    %v210 = vpack.c.b16 %v198, %v197
    %v211 = vpack.c.b16 %v200, %v199
    %v212 = vpack.c.b16 %v202, %v201
    %v213 = vpack.c.b16 %v204, %v203
    %v214 = vpack.c.b16 %v206, %v205
    %v255 = vunpack.c.l.b16 %v121
    %v256 = vunpack.c.h.b16 %v121
    %v257 = vunpack.c.l.b16 %v122
    %v258 = vunpack.c.h.b16 %v122
    %v259 = vunpack.c.l.b16 %v123
    %v260 = vunpack.c.h.b16 %v123
    %v261 = vunpack.c.l.b16 %v124
    %v262 = vunpack.c.h.b16 %v124
    %v263 = vunpack.c.l.b16 %v125
    %v264 = vunpack.c.h.b16 %v125
    %v265 = vunpack.c.l.b16 %v126
    %v266 = vunpack.c.h.b16 %v126
    %v267 = vunpack.c.l.b16 %v127
    %v268 = vunpack.c.h.b16 %v127
    %v269 = vunpack.c.l.b16 %v128
    %v270 = vunpack.c.h.b16 %v128
    %v271 = vunpack.c.l.b16 %v129
    %v272 = vunpack.c.h.b16 %v129
    %v273 = vunpack.c.l.b16 %v130
    %v274 = vunpack.c.h.b16 %v130
    %v275 = vunpack.c.l.b16 %v131
    %v276 = vunpack.c.h.b16 %v131
    %v277 = vunpack.c.l.b16 %v132
    %v278 = vunpack.c.h.b16 %v132
    %v279 = vunpack.c.l.b16 %v133
    %v280 = vunpack.c.h.b16 %v133
    %v281 = vunpack.c.l.b16 %v134
    %v282 = vunpack.c.h.b16 %v134
    %v283 = vunpack.c.l.b16 %v135
    %v284 = vunpack.c.h.b16 %v135
    %v285 = vunpack.c.l.b16 %v136
    %v286 = vunpack.c.h.b16 %v136
    %v287 = vunpack.c.l.b16 %v137
    %v288 = vunpack.c.h.b16 %v137
    %v289 = vunpack.c.l.b16 %v138
    %v290 = vunpack.c.h.b16 %v138
    %v291 = vunpack.c.l.b16 %v139
    %v292 = vunpack.c.h.b16 %v139
    %v293 = vunpack.c.l.b16 %v140
    %v294 = vunpack.c.h.b16 %v140
    %v295 = vunpack.c.l.b16 %v141
    %v296 = vunpack.c.h.b16 %v141
    %v297 = vunpack.c.l.b16 %v142
    %v298 = vunpack.c.h.b16 %v142
    %v299 = vunpack.c.l.b16 %v143
    %v300 = vunpack.c.h.b16 %v143
    %v301 = vunpack.c.l.b16 %v144
    %v302 = vunpack.c.h.b16 %v144
    %v303 = vunpack.c.l.b16 %v145
    %v304 = vunpack.c.h.b16 %v145
    %v305 = vunpack.c.l.b16 %v146
    %v306 = vunpack.c.h.b16 %v146
    %v307 = vunpack.c.l.b16 %v147
    %v308 = vunpack.c.h.b16 %v147
    %v309 = vunpack.c.l.b16 %v148
    %v310 = vunpack.c.h.b16 %v148
    %v311 = vunpack.c.l.b16 %v149
    %v312 = vunpack.c.h.b16 %v149
    %v313 = vunpack.c.l.b16 %v150
    %v314 = vunpack.c.h.b16 %v150
    %v315 = vunpack.c.l.b16 %v151
    %v316 = vunpack.c.h.b16 %v151
    %v317 = vunpack.c.l.b16 %v152
    %v318 = vunpack.c.h.b16 %v152
    %v319 = vpack.c.b16 %v259, %v255
    %v320 = vpack.c.b16 %v260, %v256
    %v321 = vpack.c.b16 %v261, %v257
    %v322 = vpack.c.b16 %v262, %v258
    %v323 = vpack.c.b16 %v267, %v263
    %v324 = vpack.c.b16 %v268, %v264
    %v325 = vpack.c.b16 %v269, %v265
    %v326 = vpack.c.b16 %v270, %v266
    %v327 = vpack.c.b16 %v275, %v271
    %v328 = vpack.c.b16 %v276, %v272
    %v329 = vpack.c.b16 %v277, %v273
    %v330 = vpack.c.b16 %v278, %v274
    %v331 = vpack.c.b16 %v283, %v279
    %v332 = vpack.c.b16 %v284, %v280
    %v333 = vpack.c.b16 %v285, %v281
    %v334 = vpack.c.b16 %v286, %v282
    %v335 = vpack.c.b16 %v291, %v287
    %v336 = vpack.c.b16 %v292, %v288
    %v337 = vpack.c.b16 %v293, %v289
    %v338 = vpack.c.b16 %v294, %v290
    %v339 = vpack.c.b16 %v299, %v295
    %v340 = vpack.c.b16 %v300, %v296
    %v341 = vpack.c.b16 %v301, %v297
    %v342 = vpack.c.b16 %v302, %v298
    %v343 = vpack.c.b16 %v307, %v303
    %v344 = vpack.c.b16 %v308, %v304
    %v345 = vpack.c.b16 %v309, %v305
    %v346 = vpack.c.b16 %v310, %v306
    %v347 = vpack.c.b16 %v315, %v311
    %v348 = vpack.c.b16 %v316, %v312
    %v349 = vpack.c.b16 %v317, %v313
    %v350 = vpack.c.b16 %v318, %v314
    %383 = vmatprep.subr.bf16.mxu0 %v320
    %384 = vmatpush1.bf16.msra.mxu0 %v319
    %385 = vmatprep.subr.bf16.mxu0 %v324
    %386 = vmatpush1.bf16.msra.mxu0 %v323
    %387 = vmatprep.subr.bf16.mxu0 %v328
    %388 = vmatpush1.bf16.msra.mxu0 %v327
    %389 = vmatprep.subr.bf16.mxu0 %v332
    %390 = vmatpush1.bf16.msra.mxu0 %v331
    %391 = vmatprep.subr.bf16.mxu0 %v336
    %392 = vmatpush1.bf16.msra.mxu0 %v335
    %393 = vmatprep.subr.bf16.mxu0 %v340
    %394 = vmatpush1.bf16.msra.mxu0 %v339
    %395 = vmatprep.subr.bf16.mxu0 %v344
    %396 = vmatpush1.bf16.msra.mxu0 %v343
    %397 = vmatprep.subr.bf16.mxu0 %v348
    %398 = vmatpush1.bf16.msra.mxu0 %v347
    %399 = vmatprep.subr.bf16.mxu0 0
    %400 = vmatpush1.bf16.msra.mxu0 0
    %401 = vmatprep.subr.bf16.mxu0 0
    %402 = vmatpush1.bf16.msra.mxu0 0
    %403 = vmatprep.subr.bf16.mxu0 0
    %404 = vmatpush1.bf16.msra.mxu0 0
    %405 = vmatprep.subr.bf16.mxu0 0
    %406 = vmatpush1.bf16.msra.mxu0 0
    %407 = vmatprep.subr.bf16.mxu0 0
    %408 = vmatpush1.bf16.msra.mxu0 0
    %409 = vmatprep.subr.bf16.mxu0 0
    %410 = vmatpush1.bf16.msra.mxu0 0
    %411 = vmatprep.subr.bf16.mxu0 0
    %412 = vmatpush1.bf16.msra.mxu0 0
    %413 = vmatprep.subr.bf16.mxu0 0
    %414 = vmatpush1.bf16.msra.mxu0 0
    %415 = vmatprep.mubr.bf16.mxu0 0
    %416 = vmatmul.mubr.bf16.gmra.mrb[0].mxu0 %v207
    %v417 = vpop.f32.mrb[0].mxu0
    %v418 = vadd.f32 %v158, %v417
    %v419 = vpop.f32.mrb[0].mxu0
    %v420 = vadd.f32 %v162, %v419
    %v421 = vpop.f32.mrb[0].mxu0
    %v422 = vadd.f32 %v158, %v421
    %v423 = vpop.f32.mrb[0].mxu0
    %v424 = vadd.f32 %v162, %v423
    %425 = vmatprep.mubr.bf16.mxu0 0
    %426 = vmatmul.mubr.bf16.gmra.mrb[0].mxu0 %v208
    %v427 = vpop.f32.mrb[0].mxu0
    %v428 = vadd.f32 %v158, %v427
    %v429 = vpop.f32.mrb[0].mxu0
    %v430 = vadd.f32 %v162, %v429
    %v431 = vpop.f32.mrb[0].mxu0
    %v432 = vadd.f32 %v158, %v431
    %v433 = vpop.f32.mrb[0].mxu0
    %v434 = vadd.f32 %v162, %v433
    %435 = vmatprep.mubr.bf16.mxu0 0
    %436 = vmatmul.mubr.bf16.gmra.mrb[0].mxu0 %v209
    %v437 = vpop.f32.mrb[0].mxu0
    %v438 = vadd.f32 %v158, %v437
    %v439 = vpop.f32.mrb[0].mxu0
    %v440 = vadd.f32 %v162, %v439
    %v441 = vpop.f32.mrb[0].mxu0
    %v442 = vadd.f32 %v158, %v441
    %v443 = vpop.f32.mrb[0].mxu0
    %v444 = vadd.f32 %v162, %v443
    %445 = vmatprep.mubr.bf16.mxu0 0
    %446 = vmatmul.mubr.bf16.gmra.mrb[0].mxu0 %v210
    %v447 = vpop.f32.mrb[0].mxu0
    %v448 = vadd.f32 %v158, %v447
    %v449 = vpop.f32.mrb[0].mxu0
    %v450 = vadd.f32 %v162, %v449
    %v451 = vpop.f32.mrb[0].mxu0
    %v452 = vadd.f32 %v158, %v451
    %v453 = vpop.f32.mrb[0].mxu0
    %v454 = vadd.f32 %v162, %v453
    %455 = vmatprep.mubr.bf16.mxu0 0
    %456 = vmatmul.mubr.bf16.gmra.mrb[0].mxu0 %v211
    %v457 = vpop.f32.mrb[0].mxu0
    %v458 = vadd.f32 %v158, %v457
    %v459 = vpop.f32.mrb[0].mxu0
    %v460 = vadd.f32 %v162, %v459
    %v461 = vpop.f32.mrb[0].mxu0
    %v462 = vadd.f32 %v158, %v461
    %v463 = vpop.f32.mrb[0].mxu0
    %v464 = vadd.f32 %v162, %v463
    %465 = vmatprep.mubr.bf16.mxu0 0
    %466 = vmatmul.mubr.bf16.gmra.mrb[0].mxu0 %v212
    %v467 = vpop.f32.mrb[0].mxu0
    %v468 = vadd.f32 %v158, %v467
    %v469 = vpop.f32.mrb[0].mxu0
    %v470 = vadd.f32 %v162, %v469
    %v471 = vpop.f32.mrb[0].mxu0
    %v472 = vadd.f32 %v158, %v471
    %v473 = vpop.f32.mrb[0].mxu0
    %v474 = vadd.f32 %v162, %v473
    %475 = vmatprep.mubr.bf16.mxu0 0
    %476 = vmatmul.mubr.bf16.gmra.mrb[0].mxu0 %v213
    %v477 = vpop.f32.mrb[0].mxu0
    %v478 = vadd.f32 %v158, %v477
    %v479 = vpop.f32.mrb[0].mxu0
    %v480 = vadd.f32 %v162, %v479
    %v481 = vpop.f32.mrb[0].mxu0
    %v482 = vadd.f32 %v158, %v481
    %v483 = vpop.f32.mrb[0].mxu0
    %v484 = vadd.f32 %v162, %v483
    %485 = vmatprep.mubr.bf16.mxu0 0
    %486 = vmatmul.mubr.bf16.gmra.mrb[0].mxu0 %v214
    %v487 = vpop.f32.mrb[0].mxu0
    %v488 = vadd.f32 %v158, %v487
    %v489 = vpop.f32.mrb[0].mxu0
    %v490 = vadd.f32 %v162, %v489
    %v491 = vpop.f32.mrb[0].mxu0
    %v492 = vadd.f32 %v158, %v491
    %v493 = vpop.f32.mrb[0].mxu0
    %v494 = vadd.f32 %v162, %v493
    %495 = vdwg.mxu0
    %496 = vmatprep.subr.bf16.mxu0 %v322
    %497 = vmatpush1.bf16.msra.mxu0 %v321
    %498 = vmatprep.subr.bf16.mxu0 %v326
    %499 = vmatpush1.bf16.msra.mxu0 %v325
    %500 = vmatprep.subr.bf16.mxu0 %v330
    %501 = vmatpush1.bf16.msra.mxu0 %v329
    %502 = vmatprep.subr.bf16.mxu0 %v334
    %503 = vmatpush1.bf16.msra.mxu0 %v333
    %504 = vmatprep.subr.bf16.mxu0 %v338
    %505 = vmatpush1.bf16.msra.mxu0 %v337
    %506 = vmatprep.subr.bf16.mxu0 %v342
    %507 = vmatpush1.bf16.msra.mxu0 %v341
    %508 = vmatprep.subr.bf16.mxu0 %v346
    %509 = vmatpush1.bf16.msra.mxu0 %v345
    %510 = vmatprep.subr.bf16.mxu0 %v350
    %511 = vmatpush1.bf16.msra.mxu0 %v349
    %512 = vmatprep.subr.bf16.mxu0 0
    %513 = vmatpush1.bf16.msra.mxu0 0
    %514 = vmatprep.subr.bf16.mxu0 0
    %515 = vmatpush1.bf16.msra.mxu0 0
    %516 = vmatprep.subr.bf16.mxu0 0
    %517 = vmatpush1.bf16.msra.mxu0 0
    %518 = vmatprep.subr.bf16.mxu0 0
    %519 = vmatpush1.bf16.msra.mxu0 0
    %520 = vmatprep.subr.bf16.mxu0 0
    %521 = vmatpush1.bf16.msra.mxu0 0
    %522 = vmatprep.subr.bf16.mxu0 0
    %523 = vmatpush1.bf16.msra.mxu0 0
    %524 = vmatprep.subr.bf16.mxu0 0
    %525 = vmatpush1.bf16.msra.mxu0 0
    %526 = vmatprep.subr.bf16.mxu0 0
    %527 = vmatpush1.bf16.msra.mxu0 0
    %528 = vmatprep.mubr.bf16.mxu0 0
    %529 = vmatmul.mubr.bf16.gmra.mrb[0].mxu0 %v207
    %v530 = vpop.f32.mrb[0].mxu0
    %v531 = vadd.f32 %v166, %v530
    %v532 = vpop.f32.mrb[0].mxu0
    %v533 = vadd.f32 %v170, %v532
    %v534 = vpop.f32.mrb[0].mxu0
    %v535 = vadd.f32 %v166, %v534
    %v536 = vpop.f32.mrb[0].mxu0
    %v537 = vadd.f32 %v170, %v536
    %538 = vmatprep.mubr.bf16.mxu0 0
    %539 = vmatmul.mubr.bf16.gmra.mrb[0].mxu0 %v208
    %v540 = vpop.f32.mrb[0].mxu0
    %v541 = vadd.f32 %v166, %v540
    %v542 = vpop.f32.mrb[0].mxu0
    %v543 = vadd.f32 %v170, %v542
    %v544 = vpop.f32.mrb[0].mxu0
    %v545 = vadd.f32 %v166, %v544
    %v546 = vpop.f32.mrb[0].mxu0
    %v547 = vadd.f32 %v170, %v546
    %548 = vmatprep.mubr.bf16.mxu0 0
    %549 = vmatmul.mubr.bf16.gmra.mrb[0].mxu0 %v209
    %v550 = vpop.f32.mrb[0].mxu0
    %v551 = vadd.f32 %v166, %v550
    %v552 = vpop.f32.mrb[0].mxu0
    %v553 = vadd.f32 %v170, %v552
    %v554 = vpop.f32.mrb[0].mxu0
    %v555 = vadd.f32 %v166, %v554
    %v556 = vpop.f32.mrb[0].mxu0
    %v557 = vadd.f32 %v170, %v556
    %558 = vmatprep.mubr.bf16.mxu0 0
    %559 = vmatmul.mubr.bf16.gmra.mrb[0].mxu0 %v210
    %v560 = vpop.f32.mrb[0].mxu0
    %v561 = vadd.f32 %v166, %v560
    %v562 = vpop.f32.mrb[0].mxu0
    %v563 = vadd.f32 %v170, %v562
    %v564 = vpop.f32.mrb[0].mxu0
    %v565 = vadd.f32 %v166, %v564
    %v566 = vpop.f32.mrb[0].mxu0
    %v567 = vadd.f32 %v170, %v566
    %568 = vmatprep.mubr.bf16.mxu0 0
    %569 = vmatmul.mubr.bf16.gmra.mrb[0].mxu0 %v211
    %v570 = vpop.f32.mrb[0].mxu0
    %v571 = vadd.f32 %v166, %v570
    %v572 = vpop.f32.mrb[0].mxu0
    %v573 = vadd.f32 %v170, %v572
    %v574 = vpop.f32.mrb[0].mxu0
    %v575 = vadd.f32 %v166, %v574
    %v576 = vpop.f32.mrb[0].mxu0
    %v577 = vadd.f32 %v170, %v576
    %578 = vmatprep.mubr.bf16.mxu0 0
    %579 = vmatmul.mubr.bf16.gmra.mrb[0].mxu0 %v212
    %v580 = vpop.f32.mrb[0].mxu0
    %v581 = vadd.f32 %v166, %v580
    %v582 = vpop.f32.mrb[0].mxu0
    %v583 = vadd.f32 %v170, %v582
    %v584 = vpop.f32.mrb[0].mxu0
    %v585 = vadd.f32 %v166, %v584
    %v586 = vpop.f32.mrb[0].mxu0
    %v587 = vadd.f32 %v170, %v586
    %588 = vmatprep.mubr.bf16.mxu0 0
    %589 = vmatmul.mubr.bf16.gmra.mrb[0].mxu0 %v213
    %v590 = vpop.f32.mrb[0].mxu0
    %v591 = vadd.f32 %v166, %v590
    %v592 = vpop.f32.mrb[0].mxu0
    %v593 = vadd.f32 %v170, %v592
    %v594 = vpop.f32.mrb[0].mxu0
    %v595 = vadd.f32 %v166, %v594
    %v596 = vpop.f32.mrb[0].mxu0
    %v597 = vadd.f32 %v170, %v596
    %598 = vmatprep.mubr.bf16.mxu0 0
    %599 = vmatmul.mubr.bf16.gmra.mrb[0].mxu0 %v214
    %v600 = vpop.f32.mrb[0].mxu0
    %v601 = vadd.f32 %v166, %v600
    %v602 = vpop.f32.mrb[0].mxu0
    %v603 = vadd.f32 %v170, %v602
    %v604 = vpop.f32.mrb[0].mxu0
    %v605 = vadd.f32 %v166, %v604
    %v606 = vpop.f32.mrb[0].mxu0
    %v607 = vadd.f32 %v170, %v606
    %608 = vdwg.mxu0
    %v609 = vmax.f32 %v418, 0.0
    %v610 = vmax.f32 %v420, 0.0
    %v611 = vmax.f32 %v531, 0.0
    %v612 = vmax.f32 %v533, 0.0
    %v613 = vmax.f32 %v422, 0.0
    %v614 = vmax.f32 %v424, 0.0
    %v615 = vmax.f32 %v535, 0.0
    %v616 = vmax.f32 %v537, 0.0
    %v617 = vmax.f32 %v428, 0.0
    %v618 = vmax.f32 %v430, 0.0
    %v619 = vmax.f32 %v541, 0.0
    %v620 = vmax.f32 %v543, 0.0
    %v621 = vmax.f32 %v432, 0.0
    %v622 = vmax.f32 %v434, 0.0
    %v623 = vmax.f32 %v545, 0.0
    %v624 = vmax.f32 %v547, 0.0
    %v625 = vmax.f32 %v438, 0.0
    %v626 = vmax.f32 %v440, 0.0
    %v627 = vmax.f32 %v551, 0.0
    %v628 = vmax.f32 %v553, 0.0
    %v629 = vmax.f32 %v442, 0.0
    %v630 = vmax.f32 %v444, 0.0
    %v631 = vmax.f32 %v555, 0.0
    %v632 = vmax.f32 %v557, 0.0
    %v633 = vmax.f32 %v448, 0.0
    %v634 = vmax.f32 %v450, 0.0
    %v635 = vmax.f32 %v561, 0.0
    %v636 = vmax.f32 %v563, 0.0
    %v637 = vmax.f32 %v452, 0.0
    %v638 = vmax.f32 %v454, 0.0
    %v639 = vmax.f32 %v565, 0.0
    %v640 = vmax.f32 %v567, 0.0
    %v641 = vmax.f32 %v458, 0.0
    %v642 = vmax.f32 %v460, 0.0
    %v643 = vmax.f32 %v571, 0.0
    %v644 = vmax.f32 %v573, 0.0
    %v645 = vmax.f32 %v462, 0.0
    %v646 = vmax.f32 %v464, 0.0
    %v647 = vmax.f32 %v575, 0.0
    %v648 = vmax.f32 %v577, 0.0
    %v649 = vmax.f32 %v468, 0.0
    %v650 = vmax.f32 %v470, 0.0
    %v651 = vmax.f32 %v581, 0.0
    %v652 = vmax.f32 %v583, 0.0
    %v653 = vmax.f32 %v472, 0.0
    %v654 = vmax.f32 %v474, 0.0
    %v655 = vmax.f32 %v585, 0.0
    %v656 = vmax.f32 %v587, 0.0
    %v657 = vmax.f32 %v478, 0.0
    %v658 = vmax.f32 %v480, 0.0
    %v659 = vmax.f32 %v591, 0.0
    %v660 = vmax.f32 %v593, 0.0
    %v661 = vmax.f32 %v482, 0.0
    %v662 = vmax.f32 %v484, 0.0
    %v663 = vmax.f32 %v595, 0.0
    %v664 = vmax.f32 %v597, 0.0
    %v665 = vmax.f32 %v488, 0.0
    %v666 = vmax.f32 %v490, 0.0
    %v667 = vmax.f32 %v601, 0.0
    %v668 = vmax.f32 %v603, 0.0
    %v669 = vmax.f32 %v492, 0.0
    %v670 = vmax.f32 %v494, 0.0
    %v671 = vmax.f32 %v605, 0.0
    %v672 = vmax.f32 %v607, 0.0
    %v673 = vpack.c.bf16 %v613, %v609
    %v674 = vpack.c.bf16 %v614, %v610
    %v675 = vpack.c.bf16 %v615, %v611
    %v676 = vpack.c.bf16 %v616, %v612
    %v677 = vpack.c.bf16 %v621, %v617
    %v678 = vpack.c.bf16 %v622, %v618
    %v679 = vpack.c.bf16 %v623, %v619
    %v680 = vpack.c.bf16 %v624, %v620
    %v681 = vpack.c.bf16 %v629, %v625
    %v682 = vpack.c.bf16 %v630, %v626
    %v683 = vpack.c.bf16 %v631, %v627
    %v684 = vpack.c.bf16 %v632, %v628
    %v685 = vpack.c.bf16 %v637, %v633
    %v686 = vpack.c.bf16 %v638, %v634
    %v687 = vpack.c.bf16 %v639, %v635
    %v688 = vpack.c.bf16 %v640, %v636
    %v689 = vpack.c.bf16 %v645, %v641
    %v690 = vpack.c.bf16 %v646, %v642
    %v691 = vpack.c.bf16 %v647, %v643
    %v692 = vpack.c.bf16 %v648, %v644
    %v693 = vpack.c.bf16 %v653, %v649
    %v694 = vpack.c.bf16 %v654, %v650
    %v695 = vpack.c.bf16 %v655, %v651
    %v696 = vpack.c.bf16 %v656, %v652
    %v697 = vpack.c.bf16 %v661, %v657
    %v698 = vpack.c.bf16 %v662, %v658
    %v699 = vpack.c.bf16 %v663, %v659
    %v700 = vpack.c.bf16 %v664, %v660
    %v701 = vpack.c.bf16 %v669, %v665
    %v702 = vpack.c.bf16 %v670, %v666
    %v703 = vpack.c.bf16 %v671, %v667
    %v704 = vpack.c.bf16 %v672, %v668
    %v705 = vld [vmem:[#allocation6] sm:$0xff]
    %v706 = vld [vmem:[#allocation6 + $0x8] sm:$0xff]
    %v707 = vld [vmem:[#allocation6 + $0x10] sm:$0xff]
    %v708 = vld [vmem:[#allocation6 + $0x18] sm:$0xff]
    %v709 = vld [vmem:[#allocation6 + $0x20] sm:$0xff]
    %v710 = vld [vmem:[#allocation6 + $0x28] sm:$0xff]
    %v711 = vld [vmem:[#allocation6 + $0x30] sm:$0xff]
    %v712 = vld [vmem:[#allocation6 + $0x38] sm:$0xff]
    %v713 = vld [vmem:[#allocation6 + $0x40] sm:$0xff]
    %v714 = vld [vmem:[#allocation6 + $0x48] sm:$0xff]
    %v715 = vld [vmem:[#allocation6 + $0x50] sm:$0xff]
    %v716 = vld [vmem:[#allocation6 + $0x58] sm:$0xff]
    %v717 = vld [vmem:[#allocation6 + $0x60] sm:$0xff]
    %v718 = vld [vmem:[#allocation6 + $0x68] sm:$0xff]
    %v719 = vld [vmem:[#allocation6 + $0x70] sm:$0xff]
    %v720 = vld [vmem:[#allocation6 + $0x78] sm:$0xff]
    %v721 = vld [vmem:[#allocation6 + $0x80] sm:$0xff]
    %v722 = vld [vmem:[#allocation6 + $0x88] sm:$0xff]
    %v723 = vld [vmem:[#allocation6 + $0x90] sm:$0xff]
    %v724 = vld [vmem:[#allocation6 + $0x98] sm:$0xff]
    %v725 = vld [vmem:[#allocation6 + $0xa0] sm:$0xff]
    %v726 = vld [vmem:[#allocation6 + $0xa8] sm:$0xff]
    %v727 = vld [vmem:[#allocation6 + $0xb0] sm:$0xff]
    %v728 = vld [vmem:[#allocation6 + $0xb8] sm:$0xff]
    %v729 = vld [vmem:[#allocation6 + $0xc0] sm:$0xff]
    %v730 = vld [vmem:[#allocation6 + $0xc8] sm:$0xff]
    %v731 = vld [vmem:[#allocation6 + $0xd0] sm:$0xff]
    %v732 = vld [vmem:[#allocation6 + $0xd8] sm:$0xff]
    %v733 = vld [vmem:[#allocation6 + $0xe0] sm:$0xff]
    %v734 = vld [vmem:[#allocation6 + $0xe8] sm:$0xff]
    %v735 = vld [vmem:[#allocation6 + $0xf0] sm:$0xff]
    %v736 = vld [vmem:[#allocation6 + $0xf8] sm:$0xff]
    %v737 = vld [vmem:[#allocation6 + $0x100] sm:$0xff]
    %v738 = vld [vmem:[#allocation6 + $0x108] sm:$0xff]
    %v739 = vld [vmem:[#allocation6 + $0x110] sm:$0xff]
    %v740 = vld [vmem:[#allocation6 + $0x118] sm:$0xff]
    %v741 = vld [vmem:[#allocation6 + $0x120] sm:$0xff]
    %v742 = vld [vmem:[#allocation6 + $0x128] sm:$0xff]
    %v743 = vld [vmem:[#allocation6 + $0x130] sm:$0xff]
    %v744 = vld [vmem:[#allocation6 + $0x138] sm:$0xff]
    %v745 = vld [vmem:[#allocation6 + $0x140] sm:$0xff]
    %v746 = vld [vmem:[#allocation6 + $0x148] sm:$0xff]
    %v747 = vld [vmem:[#allocation6 + $0x150] sm:$0xff]
    %v748 = vld [vmem:[#allocation6 + $0x158] sm:$0xff]
    %v749 = vld [vmem:[#allocation6 + $0x160] sm:$0xff]
    %v750 = vld [vmem:[#allocation6 + $0x168] sm:$0xff]
    %v751 = vld [vmem:[#allocation6 + $0x170] sm:$0xff]
    %v752 = vld [vmem:[#allocation6 + $0x178] sm:$0xff]
    %v753 = vld [vmem:[#allocation6 + $0x180] sm:$0xff]
    %v754 = vld [vmem:[#allocation6 + $0x188] sm:$0xff]
    %v755 = vld [vmem:[#allocation6 + $0x190] sm:$0xff]
    %v756 = vld [vmem:[#allocation6 + $0x198] sm:$0xff]
    %v757 = vld [vmem:[#allocation6 + $0x1a0] sm:$0xff]
    %v758 = vld [vmem:[#allocation6 + $0x1a8] sm:$0xff]
    %v759 = vld [vmem:[#allocation6 + $0x1b0] sm:$0xff]
    %v760 = vld [vmem:[#allocation6 + $0x1b8] sm:$0xff]
    %v761 = vld [vmem:[#allocation6 + $0x1c0] sm:$0xff]
    %v762 = vld [vmem:[#allocation6 + $0x1c8] sm:$0xff]
    %v763 = vld [vmem:[#allocation6 + $0x1d0] sm:$0xff]
    %v764 = vld [vmem:[#allocation6 + $0x1d8] sm:$0xff]
    %v765 = vld [vmem:[#allocation6 + $0x1e0] sm:$0xff]
    %v766 = vld [vmem:[#allocation6 + $0x1e8] sm:$0xff]
    %v767 = vld [vmem:[#allocation6 + $0x1f0] sm:$0xff]
    %v768 = vld [vmem:[#allocation6 + $0x1f8] sm:$0xff]
    %v769 = vld [vmem:[#allocation6 + $0x200] sm:$0xff]
    %v770 = vld [vmem:[#allocation6 + $0x208] sm:$0xff]
    %v771 = vld [vmem:[#allocation6 + $0x210] sm:$0xff]
    %v772 = vld [vmem:[#allocation6 + $0x218] sm:$0xff]
    %v773 = vld [vmem:[#allocation6 + $0x220] sm:$0xff]
    %v774 = vld [vmem:[#allocation6 + $0x228] sm:$0xff]
    %v775 = vld [vmem:[#allocation6 + $0x230] sm:$0xff]
    %v776 = vld [vmem:[#allocation6 + $0x238] sm:$0xff]
    %v777 = vld [vmem:[#allocation6 + $0x240] sm:$0xff]
    %v778 = vld [vmem:[#allocation6 + $0x248] sm:$0xff]
    %v779 = vld [vmem:[#allocation6 + $0x250] sm:$0xff]
    %v780 = vld [vmem:[#allocation6 + $0x258] sm:$0xff]
    %v781 = vld [vmem:[#allocation6 + $0x260] sm:$0xff]
    %v782 = vld [vmem:[#allocation6 + $0x268] sm:$0xff]
    %v783 = vld [vmem:[#allocation6 + $0x270] sm:$0xff]
    %v784 = vld [vmem:[#allocation6 + $0x278] sm:$0xff]
    %v785 = vld [vmem:[#allocation6 + $0x280] sm:$0xff]
    %v786 = vld [vmem:[#allocation6 + $0x288] sm:$0xff]
    %v787 = vld [vmem:[#allocation6 + $0x290] sm:$0xff]
    %v788 = vld [vmem:[#allocation6 + $0x298] sm:$0xff]
    %v789 = vld [vmem:[#allocation6 + $0x2a0] sm:$0xff]
    %v790 = vld [vmem:[#allocation6 + $0x2a8] sm:$0xff]
    %v791 = vld [vmem:[#allocation6 + $0x2b0] sm:$0xff]
    %v792 = vld [vmem:[#allocation6 + $0x2b8] sm:$0xff]
    %v793 = vld [vmem:[#allocation6 + $0x2c0] sm:$0xff]
    %v794 = vld [vmem:[#allocation6 + $0x2c8] sm:$0xff]
    %v795 = vld [vmem:[#allocation6 + $0x2d0] sm:$0xff]
    %v796 = vld [vmem:[#allocation6 + $0x2d8] sm:$0xff]
    %v797 = vld [vmem:[#allocation6 + $0x2e0] sm:$0xff]
    %v798 = vld [vmem:[#allocation6 + $0x2e8] sm:$0xff]
    %v799 = vld [vmem:[#allocation6 + $0x2f0] sm:$0xff]
    %v800 = vld [vmem:[#allocation6 + $0x2f8] sm:$0xff]
    %v801 = vld [vmem:[#allocation6 + $0x300] sm:$0xff]
    %v802 = vld [vmem:[#allocation6 + $0x308] sm:$0xff]
    %v803 = vld [vmem:[#allocation6 + $0x310] sm:$0xff]
    %v804 = vld [vmem:[#allocation6 + $0x318] sm:$0xff]
    %v805 = vld [vmem:[#allocation6 + $0x320] sm:$0xff]
    %v806 = vld [vmem:[#allocation6 + $0x328] sm:$0xff]
    %v807 = vld [vmem:[#allocation6 + $0x330] sm:$0xff]
    %v808 = vld [vmem:[#allocation6 + $0x338] sm:$0xff]
    %v809 = vld [vmem:[#allocation6 + $0x340] sm:$0xff]
    %v810 = vld [vmem:[#allocation6 + $0x348] sm:$0xff]
    %v811 = vld [vmem:[#allocation6 + $0x350] sm:$0xff]
    %v812 = vld [vmem:[#allocation6 + $0x358] sm:$0xff]
    %v813 = vld [vmem:[#allocation6 + $0x360] sm:$0xff]
    %v814 = vld [vmem:[#allocation6 + $0x368] sm:$0xff]
    %v815 = vld [vmem:[#allocation6 + $0x370] sm:$0xff]
    %v816 = vld [vmem:[#allocation6 + $0x378] sm:$0xff]
    %v817 = vld [vmem:[#allocation6 + $0x380] sm:$0xff]
    %v818 = vld [vmem:[#allocation6 + $0x388] sm:$0xff]
    %v819 = vld [vmem:[#allocation6 + $0x390] sm:$0xff]
    %v820 = vld [vmem:[#allocation6 + $0x398] sm:$0xff]
    %v821 = vld [vmem:[#allocation6 + $0x3a0] sm:$0xff]
    %v822 = vld [vmem:[#allocation6 + $0x3a8] sm:$0xff]
    %v823 = vld [vmem:[#allocation6 + $0x3b0] sm:$0xff]
    %v824 = vld [vmem:[#allocation6 + $0x3b8] sm:$0xff]
    %v825 = vld [vmem:[#allocation6 + $0x3c0] sm:$0xff]
    %v826 = vld [vmem:[#allocation6 + $0x3c8] sm:$0xff]
    %v827 = vld [vmem:[#allocation6 + $0x3d0] sm:$0xff]
    %v828 = vld [vmem:[#allocation6 + $0x3d8] sm:$0xff]
    %v829 = vld [vmem:[#allocation6 + $0x3e0] sm:$0xff]
    %v830 = vld [vmem:[#allocation6 + $0x3e8] sm:$0xff]
    %v831 = vld [vmem:[#allocation6 + $0x3f0] sm:$0xff]
    %v832 = vld [vmem:[#allocation6 + $0x3f8] sm:$0xff]
    %v833 = vld [vmem:[#allocation7] sm:$0xf]
    %v835 = vlaneseq
    %v836 = vshrl.u32 %v835, 7
    %v837 = vsub.s32 0, %v836
    %v838 = vrot.slane %v833, %v837
    %v839 = vlaneseq
    %v840 = vshrl.u32 %v839, 7
    %v841 = vsub.s32 1, %v840
    %v842 = vrot.slane %v833, %v841
    %v843 = vlaneseq
    %v844 = vshrl.u32 %v843, 7
    %v845 = vsub.s32 2, %v844
    %v846 = vrot.slane %v833, %v845
    %v847 = vlaneseq
    %v848 = vshrl.u32 %v847, 7
    %v849 = vsub.s32 3, %v848
    %v850 = vrot.slane %v833, %v849
    %v983 = vunpack.c.l.b16 %v705
    %v984 = vunpack.c.h.b16 %v705
    %v985 = vunpack.c.l.b16 %v706
    %v986 = vunpack.c.h.b16 %v706
    %v987 = vunpack.c.l.b16 %v707
    %v988 = vunpack.c.h.b16 %v707
    %v989 = vunpack.c.l.b16 %v708
    %v990 = vunpack.c.h.b16 %v708
    %v991 = vunpack.c.l.b16 %v709
    %v992 = vunpack.c.h.b16 %v709
    %v993 = vunpack.c.l.b16 %v710
    %v994 = vunpack.c.h.b16 %v710
    %v995 = vunpack.c.l.b16 %v711
    %v996 = vunpack.c.h.b16 %v711
    %v997 = vunpack.c.l.b16 %v712
    %v998 = vunpack.c.h.b16 %v712
    %v999 = vunpack.c.l.b16 %v713
    %v1000 = vunpack.c.h.b16 %v713
    %v1001 = vunpack.c.l.b16 %v714
    %v1002 = vunpack.c.h.b16 %v714
    %v1003 = vunpack.c.l.b16 %v715
    %v1004 = vunpack.c.h.b16 %v715
    %v1005 = vunpack.c.l.b16 %v716
    %v1006 = vunpack.c.h.b16 %v716
    %v1007 = vunpack.c.l.b16 %v717
    %v1008 = vunpack.c.h.b16 %v717
    %v1009 = vunpack.c.l.b16 %v718
    %v1010 = vunpack.c.h.b16 %v718
    %v1011 = vunpack.c.l.b16 %v719
    %v1012 = vunpack.c.h.b16 %v719
    %v1013 = vunpack.c.l.b16 %v720
    %v1014 = vunpack.c.h.b16 %v720
    %v1015 = vunpack.c.l.b16 %v721
    %v1016 = vunpack.c.h.b16 %v721
    %v1017 = vunpack.c.l.b16 %v722
    %v1018 = vunpack.c.h.b16 %v722
    %v1019 = vunpack.c.l.b16 %v723
    %v1020 = vunpack.c.h.b16 %v723
    %v1021 = vunpack.c.l.b16 %v724
    %v1022 = vunpack.c.h.b16 %v724
    %v1023 = vunpack.c.l.b16 %v725
    %v1024 = vunpack.c.h.b16 %v725
    %v1025 = vunpack.c.l.b16 %v726
    %v1026 = vunpack.c.h.b16 %v726
    %v1027 = vunpack.c.l.b16 %v727
    %v1028 = vunpack.c.h.b16 %v727
    %v1029 = vunpack.c.l.b16 %v728
    %v1030 = vunpack.c.h.b16 %v728
    %v1031 = vunpack.c.l.b16 %v729
    %v1032 = vunpack.c.h.b16 %v729
    %v1033 = vunpack.c.l.b16 %v730
    %v1034 = vunpack.c.h.b16 %v730
    %v1035 = vunpack.c.l.b16 %v731
    %v1036 = vunpack.c.h.b16 %v731
    %v1037 = vunpack.c.l.b16 %v732
    %v1038 = vunpack.c.h.b16 %v732
    %v1039 = vunpack.c.l.b16 %v733
    %v1040 = vunpack.c.h.b16 %v733
    %v1041 = vunpack.c.l.b16 %v734
    %v1042 = vunpack.c.h.b16 %v734
    %v1043 = vunpack.c.l.b16 %v735
    %v1044 = vunpack.c.h.b16 %v735
    %v1045 = vunpack.c.l.b16 %v736
    %v1046 = vunpack.c.h.b16 %v736
    %v1047 = vunpack.c.l.b16 %v737
    %v1048 = vunpack.c.h.b16 %v737
    %v1049 = vunpack.c.l.b16 %v738
    %v1050 = vunpack.c.h.b16 %v738
    %v1051 = vunpack.c.l.b16 %v739
    %v1052 = vunpack.c.h.b16 %v739
    %v1053 = vunpack.c.l.b16 %v740
    %v1054 = vunpack.c.h.b16 %v740
    %v1055 = vunpack.c.l.b16 %v741
    %v1056 = vunpack.c.h.b16 %v741
    %v1057 = vunpack.c.l.b16 %v742
    %v1058 = vunpack.c.h.b16 %v742
    %v1059 = vunpack.c.l.b16 %v743
    %v1060 = vunpack.c.h.b16 %v743
    %v1061 = vunpack.c.l.b16 %v744
    %v1062 = vunpack.c.h.b16 %v744
    %v1063 = vunpack.c.l.b16 %v745
    %v1064 = vunpack.c.h.b16 %v745
    %v1065 = vunpack.c.l.b16 %v746
    %v1066 = vunpack.c.h.b16 %v746
    %v1067 = vunpack.c.l.b16 %v747
    %v1068 = vunpack.c.h.b16 %v747
    %v1069 = vunpack.c.l.b16 %v748
    %v1070 = vunpack.c.h.b16 %v748
    %v1071 = vunpack.c.l.b16 %v749
    %v1072 = vunpack.c.h.b16 %v749
    %v1073 = vunpack.c.l.b16 %v750
    %v1074 = vunpack.c.h.b16 %v750
    %v1075 = vunpack.c.l.b16 %v751
    %v1076 = vunpack.c.h.b16 %v751
    %v1077 = vunpack.c.l.b16 %v752
    %v1078 = vunpack.c.h.b16 %v752
    %v1079 = vunpack.c.l.b16 %v753
    %v1080 = vunpack.c.h.b16 %v753
    %v1081 = vunpack.c.l.b16 %v754
    %v1082 = vunpack.c.h.b16 %v754
    %v1083 = vunpack.c.l.b16 %v755
    %v1084 = vunpack.c.h.b16 %v755
    %v1085 = vunpack.c.l.b16 %v756
    %v1086 = vunpack.c.h.b16 %v756
    %v1087 = vunpack.c.l.b16 %v757
    %v1088 = vunpack.c.h.b16 %v757
    %v1089 = vunpack.c.l.b16 %v758
    %v1090 = vunpack.c.h.b16 %v758
    %v1091 = vunpack.c.l.b16 %v759
    %v1092 = vunpack.c.h.b16 %v759
    %v1093 = vunpack.c.l.b16 %v760
    %v1094 = vunpack.c.h.b16 %v760
    %v1095 = vunpack.c.l.b16 %v761
    %v1096 = vunpack.c.h.b16 %v761
    %v1097 = vunpack.c.l.b16 %v762
    %v1098 = vunpack.c.h.b16 %v762
    %v1099 = vunpack.c.l.b16 %v763
    %v1100 = vunpack.c.h.b16 %v763
    %v1101 = vunpack.c.l.b16 %v764
    %v1102 = vunpack.c.h.b16 %v764
    %v1103 = vunpack.c.l.b16 %v765
    %v1104 = vunpack.c.h.b16 %v765
    %v1105 = vunpack.c.l.b16 %v766
    %v1106 = vunpack.c.h.b16 %v766
    %v1107 = vunpack.c.l.b16 %v767
    %v1108 = vunpack.c.h.b16 %v767
    %v1109 = vunpack.c.l.b16 %v768
    %v1110 = vunpack.c.h.b16 %v768
    %v1111 = vunpack.c.l.b16 %v769
    %v1112 = vunpack.c.h.b16 %v769
    %v1113 = vunpack.c.l.b16 %v770
    %v1114 = vunpack.c.h.b16 %v770
    %v1115 = vunpack.c.l.b16 %v771
    %v1116 = vunpack.c.h.b16 %v771
    %v1117 = vunpack.c.l.b16 %v772
    %v1118 = vunpack.c.h.b16 %v772
    %v1119 = vunpack.c.l.b16 %v773
    %v1120 = vunpack.c.h.b16 %v773
    %v1121 = vunpack.c.l.b16 %v774
    %v1122 = vunpack.c.h.b16 %v774
    %v1123 = vunpack.c.l.b16 %v775
    %v1124 = vunpack.c.h.b16 %v775
    %v1125 = vunpack.c.l.b16 %v776
    %v1126 = vunpack.c.h.b16 %v776
    %v1127 = vunpack.c.l.b16 %v777
    %v1128 = vunpack.c.h.b16 %v777
    %v1129 = vunpack.c.l.b16 %v778
    %v1130 = vunpack.c.h.b16 %v778
    %v1131 = vunpack.c.l.b16 %v779
    %v1132 = vunpack.c.h.b16 %v779
    %v1133 = vunpack.c.l.b16 %v780
    %v1134 = vunpack.c.h.b16 %v780
    %v1135 = vunpack.c.l.b16 %v781
    %v1136 = vunpack.c.h.b16 %v781
    %v1137 = vunpack.c.l.b16 %v782
    %v1138 = vunpack.c.h.b16 %v782
    %v1139 = vunpack.c.l.b16 %v783
    %v1140 = vunpack.c.h.b16 %v783
    %v1141 = vunpack.c.l.b16 %v784
    %v1142 = vunpack.c.h.b16 %v784
    %v1143 = vunpack.c.l.b16 %v785
    %v1144 = vunpack.c.h.b16 %v785
    %v1145 = vunpack.c.l.b16 %v786
    %v1146 = vunpack.c.h.b16 %v786
    %v1147 = vunpack.c.l.b16 %v787
    %v1148 = vunpack.c.h.b16 %v787
    %v1149 = vunpack.c.l.b16 %v788
    %v1150 = vunpack.c.h.b16 %v788
    %v1151 = vunpack.c.l.b16 %v789
    %v1152 = vunpack.c.h.b16 %v789
    %v1153 = vunpack.c.l.b16 %v790
    %v1154 = vunpack.c.h.b16 %v790
    %v1155 = vunpack.c.l.b16 %v791
    %v1156 = vunpack.c.h.b16 %v791
    %v1157 = vunpack.c.l.b16 %v792
    %v1158 = vunpack.c.h.b16 %v792
    %v1159 = vunpack.c.l.b16 %v793
    %v1160 = vunpack.c.h.b16 %v793
    %v1161 = vunpack.c.l.b16 %v794
    %v1162 = vunpack.c.h.b16 %v794
    %v1163 = vunpack.c.l.b16 %v795
    %v1164 = vunpack.c.h.b16 %v795
    %v1165 = vunpack.c.l.b16 %v796
    %v1166 = vunpack.c.h.b16 %v796
    %v1167 = vunpack.c.l.b16 %v797
    %v1168 = vunpack.c.h.b16 %v797
    %v1169 = vunpack.c.l.b16 %v798
    %v1170 = vunpack.c.h.b16 %v798
    %v1171 = vunpack.c.l.b16 %v799
    %v1172 = vunpack.c.h.b16 %v799
    %v1173 = vunpack.c.l.b16 %v800
    %v1174 = vunpack.c.h.b16 %v800
    %v1175 = vunpack.c.l.b16 %v801
    %v1176 = vunpack.c.h.b16 %v801
    %v1177 = vunpack.c.l.b16 %v802
    %v1178 = vunpack.c.h.b16 %v802
    %v1179 = vunpack.c.l.b16 %v803
    %v1180 = vunpack.c.h.b16 %v803
    %v1181 = vunpack.c.l.b16 %v804
    %v1182 = vunpack.c.h.b16 %v804
    %v1183 = vunpack.c.l.b16 %v805
    %v1184 = vunpack.c.h.b16 %v805
    %v1185 = vunpack.c.l.b16 %v806
    %v1186 = vunpack.c.h.b16 %v806
    %v1187 = vunpack.c.l.b16 %v807
    %v1188 = vunpack.c.h.b16 %v807
    %v1189 = vunpack.c.l.b16 %v808
    %v1190 = vunpack.c.h.b16 %v808
    %v1191 = vunpack.c.l.b16 %v809
    %v1192 = vunpack.c.h.b16 %v809
    %v1193 = vunpack.c.l.b16 %v810
    %v1194 = vunpack.c.h.b16 %v810
    %v1195 = vunpack.c.l.b16 %v811
    %v1196 = vunpack.c.h.b16 %v811
    %v1197 = vunpack.c.l.b16 %v812
    %v1198 = vunpack.c.h.b16 %v812
    %v1199 = vunpack.c.l.b16 %v813
    %v1200 = vunpack.c.h.b16 %v813
    %v1201 = vunpack.c.l.b16 %v814
    %v1202 = vunpack.c.h.b16 %v814
    %v1203 = vunpack.c.l.b16 %v815
    %v1204 = vunpack.c.h.b16 %v815
    %v1205 = vunpack.c.l.b16 %v816
    %v1206 = vunpack.c.h.b16 %v816
    %v1207 = vunpack.c.l.b16 %v817
    %v1208 = vunpack.c.h.b16 %v817
    %v1209 = vunpack.c.l.b16 %v818
    %v1210 = vunpack.c.h.b16 %v818
    %v1211 = vunpack.c.l.b16 %v819
    %v1212 = vunpack.c.h.b16 %v819
    %v1213 = vunpack.c.l.b16 %v820
    %v1214 = vunpack.c.h.b16 %v820
    %v1215 = vunpack.c.l.b16 %v821
    %v1216 = vunpack.c.h.b16 %v821
    %v1217 = vunpack.c.l.b16 %v822
    %v1218 = vunpack.c.h.b16 %v822
    %v1219 = vunpack.c.l.b16 %v823
    %v1220 = vunpack.c.h.b16 %v823
    %v1221 = vunpack.c.l.b16 %v824
    %v1222 = vunpack.c.h.b16 %v824
    %v1223 = vunpack.c.l.b16 %v825
    %v1224 = vunpack.c.h.b16 %v825
    %v1225 = vunpack.c.l.b16 %v826
    %v1226 = vunpack.c.h.b16 %v826
    %v1227 = vunpack.c.l.b16 %v827
    %v1228 = vunpack.c.h.b16 %v827
    %v1229 = vunpack.c.l.b16 %v828
    %v1230 = vunpack.c.h.b16 %v828
    %v1231 = vunpack.c.l.b16 %v829
    %v1232 = vunpack.c.h.b16 %v829
    %v1233 = vunpack.c.l.b16 %v830
    %v1234 = vunpack.c.h.b16 %v830
    %v1235 = vunpack.c.l.b16 %v831
    %v1236 = vunpack.c.h.b16 %v831
    %v1237 = vunpack.c.l.b16 %v832
    %v1238 = vunpack.c.h.b16 %v832
    %v1239 = vpack.c.b16 %v987, %v983
    %v1240 = vpack.c.b16 %v988, %v984
    %v1241 = vpack.c.b16 %v989, %v985
    %v1242 = vpack.c.b16 %v990, %v986
    %v1243 = vpack.c.b16 %v995, %v991
    %v1244 = vpack.c.b16 %v996, %v992
    %v1245 = vpack.c.b16 %v997, %v993
    %v1246 = vpack.c.b16 %v998, %v994
    %v1247 = vpack.c.b16 %v1003, %v999
    %v1248 = vpack.c.b16 %v1004, %v1000
    %v1249 = vpack.c.b16 %v1005, %v1001
    %v1250 = vpack.c.b16 %v1006, %v1002
    %v1251 = vpack.c.b16 %v1011, %v1007
    %v1252 = vpack.c.b16 %v1012, %v1008
    %v1253 = vpack.c.b16 %v1013, %v1009
    %v1254 = vpack.c.b16 %v1014, %v1010
    %v1255 = vpack.c.b16 %v1019, %v1015
    %v1256 = vpack.c.b16 %v1020, %v1016
    %v1257 = vpack.c.b16 %v1021, %v1017
    %v1258 = vpack.c.b16 %v1022, %v1018
    %v1259 = vpack.c.b16 %v1027, %v1023
    %v1260 = vpack.c.b16 %v1028, %v1024
    %v1261 = vpack.c.b16 %v1029, %v1025
    %v1262 = vpack.c.b16 %v1030, %v1026
    %v1263 = vpack.c.b16 %v1035, %v1031
    %v1264 = vpack.c.b16 %v1036, %v1032
    %v1265 = vpack.c.b16 %v1037, %v1033
    %v1266 = vpack.c.b16 %v1038, %v1034
    %v1267 = vpack.c.b16 %v1043, %v1039
    %v1268 = vpack.c.b16 %v1044, %v1040
    %v1269 = vpack.c.b16 %v1045, %v1041
    %v1270 = vpack.c.b16 %v1046, %v1042
    %v1271 = vpack.c.b16 %v1051, %v1047
    %v1272 = vpack.c.b16 %v1052, %v1048
    %v1273 = vpack.c.b16 %v1053, %v1049
    %v1274 = vpack.c.b16 %v1054, %v1050
    %v1275 = vpack.c.b16 %v1059, %v1055
    %v1276 = vpack.c.b16 %v1060, %v1056
    %v1277 = vpack.c.b16 %v1061, %v1057
    %v1278 = vpack.c.b16 %v1062, %v1058
    %v1279 = vpack.c.b16 %v1067, %v1063
    %v1280 = vpack.c.b16 %v1068, %v1064
    %v1281 = vpack.c.b16 %v1069, %v1065
    %v1282 = vpack.c.b16 %v1070, %v1066
    %v1283 = vpack.c.b16 %v1075, %v1071
    %v1284 = vpack.c.b16 %v1076, %v1072
    %v1285 = vpack.c.b16 %v1077, %v1073
    %v1286 = vpack.c.b16 %v1078, %v1074
    %v1287 = vpack.c.b16 %v1083, %v1079
    %v1288 = vpack.c.b16 %v1084, %v1080
    %v1289 = vpack.c.b16 %v1085, %v1081
    %v1290 = vpack.c.b16 %v1086, %v1082
    %v1291 = vpack.c.b16 %v1091, %v1087
    %v1292 = vpack.c.b16 %v1092, %v1088
    %v1293 = vpack.c.b16 %v1093, %v1089
    %v1294 = vpack.c.b16 %v1094, %v1090
    %v1295 = vpack.c.b16 %v1099, %v1095
    %v1296 = vpack.c.b16 %v1100, %v1096
    %v1297 = vpack.c.b16 %v1101, %v1097
    %v1298 = vpack.c.b16 %v1102, %v1098
    %v1299 = vpack.c.b16 %v1107, %v1103
    %v1300 = vpack.c.b16 %v1108, %v1104
    %v1301 = vpack.c.b16 %v1109, %v1105
    %v1302 = vpack.c.b16 %v1110, %v1106
    %v1303 = vpack.c.b16 %v1115, %v1111
    %v1304 = vpack.c.b16 %v1116, %v1112
    %v1305 = vpack.c.b16 %v1117, %v1113
    %v1306 = vpack.c.b16 %v1118, %v1114
    %v1307 = vpack.c.b16 %v1123, %v1119
    %v1308 = vpack.c.b16 %v1124, %v1120
    %v1309 = vpack.c.b16 %v1125, %v1121
    %v1310 = vpack.c.b16 %v1126, %v1122
    %v1311 = vpack.c.b16 %v1131, %v1127
    %v1312 = vpack.c.b16 %v1132, %v1128
    %v1313 = vpack.c.b16 %v1133, %v1129
    %v1314 = vpack.c.b16 %v1134, %v1130
    %v1315 = vpack.c.b16 %v1139, %v1135
    %v1316 = vpack.c.b16 %v1140, %v1136
    %v1317 = vpack.c.b16 %v1141, %v1137
    %v1318 = vpack.c.b16 %v1142, %v1138
    %v1319 = vpack.c.b16 %v1147, %v1143
    %v1320 = vpack.c.b16 %v1148, %v1144
    %v1321 = vpack.c.b16 %v1149, %v1145
    %v1322 = vpack.c.b16 %v1150, %v1146
    %v1323 = vpack.c.b16 %v1155, %v1151
    %v1324 = vpack.c.b16 %v1156, %v1152
    %v1325 = vpack.c.b16 %v1157, %v1153
    %v1326 = vpack.c.b16 %v1158, %v1154
    %v1327 = vpack.c.b16 %v1163, %v1159
    %v1328 = vpack.c.b16 %v1164, %v1160
    %v1329 = vpack.c.b16 %v1165, %v1161
    %v1330 = vpack.c.b16 %v1166, %v1162
    %v1331 = vpack.c.b16 %v1171, %v1167
    %v1332 = vpack.c.b16 %v1172, %v1168
    %v1333 = vpack.c.b16 %v1173, %v1169
    %v1334 = vpack.c.b16 %v1174, %v1170
    %v1335 = vpack.c.b16 %v1179, %v1175
    %v1336 = vpack.c.b16 %v1180, %v1176
    %v1337 = vpack.c.b16 %v1181, %v1177
    %v1338 = vpack.c.b16 %v1182, %v1178
    %v1339 = vpack.c.b16 %v1187, %v1183
    %v1340 = vpack.c.b16 %v1188, %v1184
    %v1341 = vpack.c.b16 %v1189, %v1185
    %v1342 = vpack.c.b16 %v1190, %v1186
    %v1343 = vpack.c.b16 %v1195, %v1191
    %v1344 = vpack.c.b16 %v1196, %v1192
    %v1345 = vpack.c.b16 %v1197, %v1193
    %v1346 = vpack.c.b16 %v1198, %v1194
    %v1347 = vpack.c.b16 %v1203, %v1199
    %v1348 = vpack.c.b16 %v1204, %v1200
    %v1349 = vpack.c.b16 %v1205, %v1201
    %v1350 = vpack.c.b16 %v1206, %v1202
    %v1351 = vpack.c.b16 %v1211, %v1207
    %v1352 = vpack.c.b16 %v1212, %v1208
    %v1353 = vpack.c.b16 %v1213, %v1209
    %v1354 = vpack.c.b16 %v1214, %v1210
    %v1355 = vpack.c.b16 %v1219, %v1215
    %v1356 = vpack.c.b16 %v1220, %v1216
    %v1357 = vpack.c.b16 %v1221, %v1217
    %v1358 = vpack.c.b16 %v1222, %v1218
    %v1359 = vpack.c.b16 %v1227, %v1223
    %v1360 = vpack.c.b16 %v1228, %v1224
    %v1361 = vpack.c.b16 %v1229, %v1225
    %v1362 = vpack.c.b16 %v1230, %v1226
    %v1363 = vpack.c.b16 %v1235, %v1231
    %v1364 = vpack.c.b16 %v1236, %v1232
    %v1365 = vpack.c.b16 %v1237, %v1233
    %v1366 = vpack.c.b16 %v1238, %v1234
    %1495 = vmatprep.subr.bf16.mxu0 %v1240
    %1496 = vmatpush1.bf16.msra.mxu0 %v1239
    %1497 = vmatprep.subr.bf16.mxu0 %v1244
    %1498 = vmatpush1.bf16.msra.mxu0 %v1243
    %1499 = vmatprep.subr.bf16.mxu0 %v1248
    %1500 = vmatpush1.bf16.msra.mxu0 %v1247
    %1501 = vmatprep.subr.bf16.mxu0 %v1252
    %1502 = vmatpush1.bf16.msra.mxu0 %v1251
    %1503 = vmatprep.subr.bf16.mxu0 %v1256
    %1504 = vmatpush1.bf16.msra.mxu0 %v1255
    %1505 = vmatprep.subr.bf16.mxu0 %v1260
    %1506 = vmatpush1.bf16.msra.mxu0 %v1259
    %1507 = vmatprep.subr.bf16.mxu0 %v1264
    %1508 = vmatpush1.bf16.msra.mxu0 %v1263
    %1509 = vmatprep.subr.bf16.mxu0 %v1268
    %1510 = vmatpush1.bf16.msra.mxu0 %v1267
    %1511 = vmatprep.subr.bf16.mxu0 %v1272
    %1512 = vmatpush1.bf16.msra.mxu0 %v1271
    %1513 = vmatprep.subr.bf16.mxu0 %v1276
    %1514 = vmatpush1.bf16.msra.mxu0 %v1275
    %1515 = vmatprep.subr.bf16.mxu0 %v1280
    %1516 = vmatpush1.bf16.msra.mxu0 %v1279
    %1517 = vmatprep.subr.bf16.mxu0 %v1284
    %1518 = vmatpush1.bf16.msra.mxu0 %v1283
    %1519 = vmatprep.subr.bf16.mxu0 %v1288
    %1520 = vmatpush1.bf16.msra.mxu0 %v1287
    %1521 = vmatprep.subr.bf16.mxu0 %v1292
    %1522 = vmatpush1.bf16.msra.mxu0 %v1291
    %1523 = vmatprep.subr.bf16.mxu0 %v1296
    %1524 = vmatpush1.bf16.msra.mxu0 %v1295
    %1525 = vmatprep.subr.bf16.mxu0 %v1300
    %1526 = vmatpush1.bf16.msra.mxu0 %v1299
    %1527 = vmatprep.mubr.bf16.mxu0 %v674
    %1528 = vmatmul.mubr.bf16.gmra.mrb[0].mxu0 %v673
    %v1529 = vpop.f32.mrb[0].mxu0
    %v1530 = vadd.f32 %v838, %v1529
    %v1531 = vpop.f32.mrb[0].mxu0
    %v1532 = vadd.f32 %v842, %v1531
    %v1533 = vpop.f32.mrb[0].mxu0
    %v1534 = vadd.f32 %v838, %v1533
    %v1535 = vpop.f32.mrb[0].mxu0
    %v1536 = vadd.f32 %v842, %v1535
    %1537 = vmatprep.mubr.bf16.mxu0 %v678
    %1538 = vmatmul.mubr.bf16.gmra.mrb[0].mxu0 %v677
    %v1539 = vpop.f32.mrb[0].mxu0
    %v1540 = vadd.f32 %v838, %v1539
    %v1541 = vpop.f32.mrb[0].mxu0
    %v1542 = vadd.f32 %v842, %v1541
    %v1543 = vpop.f32.mrb[0].mxu0
    %v1544 = vadd.f32 %v838, %v1543
    %v1545 = vpop.f32.mrb[0].mxu0
    %v1546 = vadd.f32 %v842, %v1545
    %1547 = vmatprep.mubr.bf16.mxu0 %v682
    %1548 = vmatmul.mubr.bf16.gmra.mrb[0].mxu0 %v681
    %v1549 = vpop.f32.mrb[0].mxu0
    %v1550 = vadd.f32 %v838, %v1549
    %v1551 = vpop.f32.mrb[0].mxu0
    %v1552 = vadd.f32 %v842, %v1551
    %v1553 = vpop.f32.mrb[0].mxu0
    %v1554 = vadd.f32 %v838, %v1553
    %v1555 = vpop.f32.mrb[0].mxu0
    %v1556 = vadd.f32 %v842, %v1555
    %1557 = vmatprep.mubr.bf16.mxu0 %v686
    %1558 = vmatmul.mubr.bf16.gmra.mrb[0].mxu0 %v685
    %v1559 = vpop.f32.mrb[0].mxu0
    %v1560 = vadd.f32 %v838, %v1559
    %v1561 = vpop.f32.mrb[0].mxu0
    %v1562 = vadd.f32 %v842, %v1561
    %v1563 = vpop.f32.mrb[0].mxu0
    %v1564 = vadd.f32 %v838, %v1563
    %v1565 = vpop.f32.mrb[0].mxu0
    %v1566 = vadd.f32 %v842, %v1565
    %1567 = vmatprep.mubr.bf16.mxu0 %v690
    %1568 = vmatmul.mubr.bf16.gmra.mrb[0].mxu0 %v689
    %v1569 = vpop.f32.mrb[0].mxu0
    %v1570 = vadd.f32 %v838, %v1569
    %v1571 = vpop.f32.mrb[0].mxu0
    %v1572 = vadd.f32 %v842, %v1571
    %v1573 = vpop.f32.mrb[0].mxu0
    %v1574 = vadd.f32 %v838, %v1573
    %v1575 = vpop.f32.mrb[0].mxu0
    %v1576 = vadd.f32 %v842, %v1575
    %1577 = vmatprep.mubr.bf16.mxu0 %v694
    %1578 = vmatmul.mubr.bf16.gmra.mrb[0].mxu0 %v693
    %v1579 = vpop.f32.mrb[0].mxu0
    %v1580 = vadd.f32 %v838, %v1579
    %v1581 = vpop.f32.mrb[0].mxu0
    %v1582 = vadd.f32 %v842, %v1581
    %v1583 = vpop.f32.mrb[0].mxu0
    %v1584 = vadd.f32 %v838, %v1583
    %v1585 = vpop.f32.mrb[0].mxu0
    %v1586 = vadd.f32 %v842, %v1585
    %1587 = vmatprep.mubr.bf16.mxu0 %v698
    %1588 = vmatmul.mubr.bf16.gmra.mrb[0].mxu0 %v697
    %v1589 = vpop.f32.mrb[0].mxu0
    %v1590 = vadd.f32 %v838, %v1589
    %v1591 = vpop.f32.mrb[0].mxu0
    %v1592 = vadd.f32 %v842, %v1591
    %v1593 = vpop.f32.mrb[0].mxu0
    %v1594 = vadd.f32 %v838, %v1593
    %v1595 = vpop.f32.mrb[0].mxu0
    %v1596 = vadd.f32 %v842, %v1595
    %1597 = vmatprep.mubr.bf16.mxu0 %v702
    %1598 = vmatmul.mubr.bf16.gmra.mrb[0].mxu0 %v701
    %v1599 = vpop.f32.mrb[0].mxu0
    %v1600 = vadd.f32 %v838, %v1599
    %v1601 = vpop.f32.mrb[0].mxu0
    %v1602 = vadd.f32 %v842, %v1601
    %v1603 = vpop.f32.mrb[0].mxu0
    %v1604 = vadd.f32 %v838, %v1603
    %v1605 = vpop.f32.mrb[0].mxu0
    %v1606 = vadd.f32 %v842, %v1605
    %1607 = vdwg.mxu0
    %1608 = vmatprep.subr.bf16.mxu0 %v1304
    %1609 = vmatpush1.bf16.msra.mxu0 %v1303
    %1610 = vmatprep.subr.bf16.mxu0 %v1308
    %1611 = vmatpush1.bf16.msra.mxu0 %v1307
    %1612 = vmatprep.subr.bf16.mxu0 %v1312
    %1613 = vmatpush1.bf16.msra.mxu0 %v1311
    %1614 = vmatprep.subr.bf16.mxu0 %v1316
    %1615 = vmatpush1.bf16.msra.mxu0 %v1315
    %1616 = vmatprep.subr.bf16.mxu0 %v1320
    %1617 = vmatpush1.bf16.msra.mxu0 %v1319
    %1618 = vmatprep.subr.bf16.mxu0 %v1324
    %1619 = vmatpush1.bf16.msra.mxu0 %v1323
    %1620 = vmatprep.subr.bf16.mxu0 %v1328
    %1621 = vmatpush1.bf16.msra.mxu0 %v1327
    %1622 = vmatprep.subr.bf16.mxu0 %v1332
    %1623 = vmatpush1.bf16.msra.mxu0 %v1331
    %1624 = vmatprep.subr.bf16.mxu0 %v1336
    %1625 = vmatpush1.bf16.msra.mxu0 %v1335
    %1626 = vmatprep.subr.bf16.mxu0 %v1340
    %1627 = vmatpush1.bf16.msra.mxu0 %v1339
    %1628 = vmatprep.subr.bf16.mxu0 %v1344
    %1629 = vmatpush1.bf16.msra.mxu0 %v1343
    %1630 = vmatprep.subr.bf16.mxu0 %v1348
    %1631 = vmatpush1.bf16.msra.mxu0 %v1347
    %1632 = vmatprep.subr.bf16.mxu0 %v1352
    %1633 = vmatpush1.bf16.msra.mxu0 %v1351
    %1634 = vmatprep.subr.bf16.mxu0 %v1356
    %1635 = vmatpush1.bf16.msra.mxu0 %v1355
    %1636 = vmatprep.subr.bf16.mxu0 %v1360
    %1637 = vmatpush1.bf16.msra.mxu0 %v1359
    %1638 = vmatprep.subr.bf16.mxu0 %v1364
    %1639 = vmatpush1.bf16.msra.mxu0 %v1363
    %1640 = vmatprep.mubr.bf16.mxu0 %v676
    %1641 = vmatmul.mubr.bf16.gmra.mrb[0].mxu0 %v675
    %v1642 = vpop.f32.mrb[0].mxu0
    %v1643 = vadd.f32 %v1530, %v1642
    %v1644 = vpop.f32.mrb[0].mxu0
    %v1645 = vadd.f32 %v1532, %v1644
    %v1646 = vpop.f32.mrb[0].mxu0
    %v1647 = vadd.f32 %v1534, %v1646
    %v1648 = vpop.f32.mrb[0].mxu0
    %v1649 = vadd.f32 %v1536, %v1648
    %1650 = vmatprep.mubr.bf16.mxu0 %v680
    %1651 = vmatmul.mubr.bf16.gmra.mrb[0].mxu0 %v679
    %v1652 = vpop.f32.mrb[0].mxu0
    %v1653 = vadd.f32 %v1540, %v1652
    %v1654 = vpop.f32.mrb[0].mxu0
    %v1655 = vadd.f32 %v1542, %v1654
    %v1656 = vpop.f32.mrb[0].mxu0
    %v1657 = vadd.f32 %v1544, %v1656
    %v1658 = vpop.f32.mrb[0].mxu0
    %v1659 = vadd.f32 %v1546, %v1658
    %1660 = vmatprep.mubr.bf16.mxu0 %v684
    %1661 = vmatmul.mubr.bf16.gmra.mrb[0].mxu0 %v683
    %v1662 = vpop.f32.mrb[0].mxu0
    %v1663 = vadd.f32 %v1550, %v1662
    %v1664 = vpop.f32.mrb[0].mxu0
    %v1665 = vadd.f32 %v1552, %v1664
    %v1666 = vpop.f32.mrb[0].mxu0
    %v1667 = vadd.f32 %v1554, %v1666
    %v1668 = vpop.f32.mrb[0].mxu0
    %v1669 = vadd.f32 %v1556, %v1668
    %1670 = vmatprep.mubr.bf16.mxu0 %v688
    %1671 = vmatmul.mubr.bf16.gmra.mrb[0].mxu0 %v687
    %v1672 = vpop.f32.mrb[0].mxu0
    %v1673 = vadd.f32 %v1560, %v1672
    %v1674 = vpop.f32.mrb[0].mxu0
    %v1675 = vadd.f32 %v1562, %v1674
    %v1676 = vpop.f32.mrb[0].mxu0
    %v1677 = vadd.f32 %v1564, %v1676
    %v1678 = vpop.f32.mrb[0].mxu0
    %v1679 = vadd.f32 %v1566, %v1678
    %1680 = vmatprep.mubr.bf16.mxu0 %v692
    %1681 = vmatmul.mubr.bf16.gmra.mrb[0].mxu0 %v691
    %v1682 = vpop.f32.mrb[0].mxu0
    %v1683 = vadd.f32 %v1570, %v1682
    %v1684 = vpop.f32.mrb[0].mxu0
    %v1685 = vadd.f32 %v1572, %v1684
    %v1686 = vpop.f32.mrb[0].mxu0
    %v1687 = vadd.f32 %v1574, %v1686
    %v1688 = vpop.f32.mrb[0].mxu0
    %v1689 = vadd.f32 %v1576, %v1688
    %1690 = vmatprep.mubr.bf16.mxu0 %v696
    %1691 = vmatmul.mubr.bf16.gmra.mrb[0].mxu0 %v695
    %v1692 = vpop.f32.mrb[0].mxu0
    %v1693 = vadd.f32 %v1580, %v1692
    %v1694 = vpop.f32.mrb[0].mxu0
    %v1695 = vadd.f32 %v1582, %v1694
    %v1696 = vpop.f32.mrb[0].mxu0
    %v1697 = vadd.f32 %v1584, %v1696
    %v1698 = vpop.f32.mrb[0].mxu0
    %v1699 = vadd.f32 %v1586, %v1698
    %1700 = vmatprep.mubr.bf16.mxu0 %v700
    %1701 = vmatmul.mubr.bf16.gmra.mrb[0].mxu0 %v699
    %v1702 = vpop.f32.mrb[0].mxu0
    %v1703 = vadd.f32 %v1590, %v1702
    %v1704 = vpop.f32.mrb[0].mxu0
    %v1705 = vadd.f32 %v1592, %v1704
    %v1706 = vpop.f32.mrb[0].mxu0
    %v1707 = vadd.f32 %v1594, %v1706
    %v1708 = vpop.f32.mrb[0].mxu0
    %v1709 = vadd.f32 %v1596, %v1708
    %1710 = vmatprep.mubr.bf16.mxu0 %v704
    %1711 = vmatmul.mubr.bf16.gmra.mrb[0].mxu0 %v703
    %v1712 = vpop.f32.mrb[0].mxu0
    %v1713 = vadd.f32 %v1600, %v1712
    %v1714 = vpop.f32.mrb[0].mxu0
    %v1715 = vadd.f32 %v1602, %v1714
    %v1716 = vpop.f32.mrb[0].mxu0
    %v1717 = vadd.f32 %v1604, %v1716
    %v1718 = vpop.f32.mrb[0].mxu0
    %v1719 = vadd.f32 %v1606, %v1718
    %1720 = vdwg.mxu0
    %1721 = vmatprep.subr.bf16.mxu0 %v1242
    %1722 = vmatpush1.bf16.msra.mxu0 %v1241
    %1723 = vmatprep.subr.bf16.mxu0 %v1246
    %1724 = vmatpush1.bf16.msra.mxu0 %v1245
    %1725 = vmatprep.subr.bf16.mxu0 %v1250
    %1726 = vmatpush1.bf16.msra.mxu0 %v1249
    %1727 = vmatprep.subr.bf16.mxu0 %v1254
    %1728 = vmatpush1.bf16.msra.mxu0 %v1253
    %1729 = vmatprep.subr.bf16.mxu0 %v1258
    %1730 = vmatpush1.bf16.msra.mxu0 %v1257
    %1731 = vmatprep.subr.bf16.mxu0 %v1262
    %1732 = vmatpush1.bf16.msra.mxu0 %v1261
    %1733 = vmatprep.subr.bf16.mxu0 %v1266
    %1734 = vmatpush1.bf16.msra.mxu0 %v1265
    %1735 = vmatprep.subr.bf16.mxu0 %v1270
    %1736 = vmatpush1.bf16.msra.mxu0 %v1269
    %1737 = vmatprep.subr.bf16.mxu0 %v1274
    %1738 = vmatpush1.bf16.msra.mxu0 %v1273
    %1739 = vmatprep.subr.bf16.mxu0 %v1278
    %1740 = vmatpush1.bf16.msra.mxu0 %v1277
    %1741 = vmatprep.subr.bf16.mxu0 %v1282
    %1742 = vmatpush1.bf16.msra.mxu0 %v1281
    %1743 = vmatprep.subr.bf16.mxu0 %v1286
    %1744 = vmatpush1.bf16.msra.mxu0 %v1285
    %1745 = vmatprep.subr.bf16.mxu0 %v1290
    %1746 = vmatpush1.bf16.msra.mxu0 %v1289
    %1747 = vmatprep.subr.bf16.mxu0 %v1294
    %1748 = vmatpush1.bf16.msra.mxu0 %v1293
    %1749 = vmatprep.subr.bf16.mxu0 %v1298
    %1750 = vmatpush1.bf16.msra.mxu0 %v1297
    %1751 = vmatprep.subr.bf16.mxu0 %v1302
    %1752 = vmatpush1.bf16.msra.mxu0 %v1301
    %1753 = vmatprep.mubr.bf16.mxu0 %v674
    %1754 = vmatmul.mubr.bf16.gmra.mrb[0].mxu0 %v673
    %v1755 = vpop.f32.mrb[0].mxu0
    %v1756 = vadd.f32 %v846, %v1755
    %v1757 = vpop.f32.mrb[0].mxu0
    %v1758 = vadd.f32 %v850, %v1757
    %v1759 = vpop.f32.mrb[0].mxu0
    %v1760 = vadd.f32 %v846, %v1759
    %v1761 = vpop.f32.mrb[0].mxu0
    %v1762 = vadd.f32 %v850, %v1761
    %1763 = vmatprep.mubr.bf16.mxu0 %v678
    %1764 = vmatmul.mubr.bf16.gmra.mrb[0].mxu0 %v677
    %v1765 = vpop.f32.mrb[0].mxu0
    %v1766 = vadd.f32 %v846, %v1765
    %v1767 = vpop.f32.mrb[0].mxu0
    %v1768 = vadd.f32 %v850, %v1767
    %v1769 = vpop.f32.mrb[0].mxu0
    %v1770 = vadd.f32 %v846, %v1769
    %v1771 = vpop.f32.mrb[0].mxu0
    %v1772 = vadd.f32 %v850, %v1771
    %1773 = vmatprep.mubr.bf16.mxu0 %v682
    %1774 = vmatmul.mubr.bf16.gmra.mrb[0].mxu0 %v681
    %v1775 = vpop.f32.mrb[0].mxu0
    %v1776 = vadd.f32 %v846, %v1775
    %v1777 = vpop.f32.mrb[0].mxu0
    %v1778 = vadd.f32 %v850, %v1777
    %v1779 = vpop.f32.mrb[0].mxu0
    %v1780 = vadd.f32 %v846, %v1779
    %v1781 = vpop.f32.mrb[0].mxu0
    %v1782 = vadd.f32 %v850, %v1781
    %1783 = vmatprep.mubr.bf16.mxu0 %v686
    %1784 = vmatmul.mubr.bf16.gmra.mrb[0].mxu0 %v685
    %v1785 = vpop.f32.mrb[0].mxu0
    %v1786 = vadd.f32 %v846, %v1785
    %v1787 = vpop.f32.mrb[0].mxu0
    %v1788 = vadd.f32 %v850, %v1787
    %v1789 = vpop.f32.mrb[0].mxu0
    %v1790 = vadd.f32 %v846, %v1789
    %v1791 = vpop.f32.mrb[0].mxu0
    %v1792 = vadd.f32 %v850, %v1791
    %1793 = vmatprep.mubr.bf16.mxu0 %v690
    %1794 = vmatmul.mubr.bf16.gmra.mrb[0].mxu0 %v689
    %v1795 = vpop.f32.mrb[0].mxu0
    %v1796 = vadd.f32 %v846, %v1795
    %v1797 = vpop.f32.mrb[0].mxu0
    %v1798 = vadd.f32 %v850, %v1797
    %v1799 = vpop.f32.mrb[0].mxu0
    %v1800 = vadd.f32 %v846, %v1799
    %v1801 = vpop.f32.mrb[0].mxu0
    %v1802 = vadd.f32 %v850, %v1801
    %1803 = vmatprep.mubr.bf16.mxu0 %v694
    %1804 = vmatmul.mubr.bf16.gmra.mrb[0].mxu0 %v693
    %v1805 = vpop.f32.mrb[0].mxu0
    %v1806 = vadd.f32 %v846, %v1805
    %v1807 = vpop.f32.mrb[0].mxu0
    %v1808 = vadd.f32 %v850, %v1807
    %v1809 = vpop.f32.mrb[0].mxu0
    %v1810 = vadd.f32 %v846, %v1809
    %v1811 = vpop.f32.mrb[0].mxu0
    %v1812 = vadd.f32 %v850, %v1811
    %1813 = vmatprep.mubr.bf16.mxu0 %v698
    %1814 = vmatmul.mubr.bf16.gmra.mrb[0].mxu0 %v697
    %v1815 = vpop.f32.mrb[0].mxu0
    %v1816 = vadd.f32 %v846, %v1815
    %v1817 = vpop.f32.mrb[0].mxu0
    %v1818 = vadd.f32 %v850, %v1817
    %v1819 = vpop.f32.mrb[0].mxu0
    %v1820 = vadd.f32 %v846, %v1819
    %v1821 = vpop.f32.mrb[0].mxu0
    %v1822 = vadd.f32 %v850, %v1821
    %1823 = vmatprep.mubr.bf16.mxu0 %v702
    %1824 = vmatmul.mubr.bf16.gmra.mrb[0].mxu0 %v701
    %v1825 = vpop.f32.mrb[0].mxu0
    %v1826 = vadd.f32 %v846, %v1825
    %v1827 = vpop.f32.mrb[0].mxu0
    %v1828 = vadd.f32 %v850, %v1827
    %v1829 = vpop.f32.mrb[0].mxu0
    %v1830 = vadd.f32 %v846, %v1829
    %v1831 = vpop.f32.mrb[0].mxu0
    %v1832 = vadd.f32 %v850, %v1831
    %1833 = vdwg.mxu0
    %1834 = vmatprep.subr.bf16.mxu0 %v1306
    %1835 = vmatpush1.bf16.msra.mxu0 %v1305
    %1836 = vmatprep.subr.bf16.mxu0 %v1310
    %1837 = vmatpush1.bf16.msra.mxu0 %v1309
    %1838 = vmatprep.subr.bf16.mxu0 %v1314
    %1839 = vmatpush1.bf16.msra.mxu0 %v1313
    %1840 = vmatprep.subr.bf16.mxu0 %v1318
    %1841 = vmatpush1.bf16.msra.mxu0 %v1317
    %1842 = vmatprep.subr.bf16.mxu0 %v1322
    %1843 = vmatpush1.bf16.msra.mxu0 %v1321
    %1844 = vmatprep.subr.bf16.mxu0 %v1326
    %1845 = vmatpush1.bf16.msra.mxu0 %v1325
    %1846 = vmatprep.subr.bf16.mxu0 %v1330
    %1847 = vmatpush1.bf16.msra.mxu0 %v1329
    %1848 = vmatprep.subr.bf16.mxu0 %v1334
    %1849 = vmatpush1.bf16.msra.mxu0 %v1333
    %1850 = vmatprep.subr.bf16.mxu0 %v1338
    %1851 = vmatpush1.bf16.msra.mxu0 %v1337
    %1852 = vmatprep.subr.bf16.mxu0 %v1342
    %1853 = vmatpush1.bf16.msra.mxu0 %v1341
    %1854 = vmatprep.subr.bf16.mxu0 %v1346
    %1855 = vmatpush1.bf16.msra.mxu0 %v1345
    %1856 = vmatprep.subr.bf16.mxu0 %v1350
    %1857 = vmatpush1.bf16.msra.mxu0 %v1349
    %1858 = vmatprep.subr.bf16.mxu0 %v1354
    %1859 = vmatpush1.bf16.msra.mxu0 %v1353
    %1860 = vmatprep.subr.bf16.mxu0 %v1358
    %1861 = vmatpush1.bf16.msra.mxu0 %v1357
    %1862 = vmatprep.subr.bf16.mxu0 %v1362
    %1863 = vmatpush1.bf16.msra.mxu0 %v1361
    %1864 = vmatprep.subr.bf16.mxu0 %v1366
    %1865 = vmatpush1.bf16.msra.mxu0 %v1365
    %1866 = vmatprep.mubr.bf16.mxu0 %v676
    %1867 = vmatmul.mubr.bf16.gmra.mrb[0].mxu0 %v675
    %v1868 = vpop.f32.mrb[0].mxu0
    %v1869 = vadd.f32 %v1756, %v1868
    %v1870 = vpop.f32.mrb[0].mxu0
    %v1871 = vadd.f32 %v1758, %v1870
    %v1872 = vpop.f32.mrb[0].mxu0
    %v1873 = vadd.f32 %v1760, %v1872
    %v1874 = vpop.f32.mrb[0].mxu0
    %v1875 = vadd.f32 %v1762, %v1874
    %1876 = vmatprep.mubr.bf16.mxu0 %v680
    %1877 = vmatmul.mubr.bf16.gmra.mrb[0].mxu0 %v679
    %v1878 = vpop.f32.mrb[0].mxu0
    %v1879 = vadd.f32 %v1766, %v1878
    %v1880 = vpop.f32.mrb[0].mxu0
    %v1881 = vadd.f32 %v1768, %v1880
    %v1882 = vpop.f32.mrb[0].mxu0
    %v1883 = vadd.f32 %v1770, %v1882
    %v1884 = vpop.f32.mrb[0].mxu0
    %v1885 = vadd.f32 %v1772, %v1884
    %1886 = vmatprep.mubr.bf16.mxu0 %v684
    %1887 = vmatmul.mubr.bf16.gmra.mrb[0].mxu0 %v683
    %v1888 = vpop.f32.mrb[0].mxu0
    %v1889 = vadd.f32 %v1776, %v1888
    %v1890 = vpop.f32.mrb[0].mxu0
    %v1891 = vadd.f32 %v1778, %v1890
    %v1892 = vpop.f32.mrb[0].mxu0
    %v1893 = vadd.f32 %v1780, %v1892
    %v1894 = vpop.f32.mrb[0].mxu0
    %v1895 = vadd.f32 %v1782, %v1894
    %1896 = vmatprep.mubr.bf16.mxu0 %v688
    %1897 = vmatmul.mubr.bf16.gmra.mrb[0].mxu0 %v687
    %v1898 = vpop.f32.mrb[0].mxu0
    %v1899 = vadd.f32 %v1786, %v1898
    %v1900 = vpop.f32.mrb[0].mxu0
    %v1901 = vadd.f32 %v1788, %v1900
    %v1902 = vpop.f32.mrb[0].mxu0
    %v1903 = vadd.f32 %v1790, %v1902
    %v1904 = vpop.f32.mrb[0].mxu0
    %v1905 = vadd.f32 %v1792, %v1904
    %1906 = vmatprep.mubr.bf16.mxu0 %v692
    %1907 = vmatmul.mubr.bf16.gmra.mrb[0].mxu0 %v691
    %v1908 = vpop.f32.mrb[0].mxu0
    %v1909 = vadd.f32 %v1796, %v1908
    %v1910 = vpop.f32.mrb[0].mxu0
    %v1911 = vadd.f32 %v1798, %v1910
    %v1912 = vpop.f32.mrb[0].mxu0
    %v1913 = vadd.f32 %v1800, %v1912
    %v1914 = vpop.f32.mrb[0].mxu0
    %v1915 = vadd.f32 %v1802, %v1914
    %1916 = vmatprep.mubr.bf16.mxu0 %v696
    %1917 = vmatmul.mubr.bf16.gmra.mrb[0].mxu0 %v695
    %v1918 = vpop.f32.mrb[0].mxu0
    %v1919 = vadd.f32 %v1806, %v1918
    %v1920 = vpop.f32.mrb[0].mxu0
    %v1921 = vadd.f32 %v1808, %v1920
    %v1922 = vpop.f32.mrb[0].mxu0
    %v1923 = vadd.f32 %v1810, %v1922
    %v1924 = vpop.f32.mrb[0].mxu0
    %v1925 = vadd.f32 %v1812, %v1924
    %1926 = vmatprep.mubr.bf16.mxu0 %v700
    %1927 = vmatmul.mubr.bf16.gmra.mrb[0].mxu0 %v699
    %v1928 = vpop.f32.mrb[0].mxu0
    %v1929 = vadd.f32 %v1816, %v1928
    %v1930 = vpop.f32.mrb[0].mxu0
    %v1931 = vadd.f32 %v1818, %v1930
    %v1932 = vpop.f32.mrb[0].mxu0
    %v1933 = vadd.f32 %v1820, %v1932
    %v1934 = vpop.f32.mrb[0].mxu0
    %v1935 = vadd.f32 %v1822, %v1934
    %1936 = vmatprep.mubr.bf16.mxu0 %v704
    %1937 = vmatmul.mubr.bf16.gmra.mrb[0].mxu0 %v703
    %v1938 = vpop.f32.mrb[0].mxu0
    %v1939 = vadd.f32 %v1826, %v1938
    %v1940 = vpop.f32.mrb[0].mxu0
    %v1941 = vadd.f32 %v1828, %v1940
    %v1942 = vpop.f32.mrb[0].mxu0
    %v1943 = vadd.f32 %v1830, %v1942
    %v1944 = vpop.f32.mrb[0].mxu0
    %v1945 = vadd.f32 %v1832, %v1944
    %1946 = vdwg.mxu0
    %v1947 = vmax.f32 %v1643, 0.0
    %v1948 = vmax.f32 %v1645, 0.0
    %v1949 = vmax.f32 %v1869, 0.0
    %v1950 = vmax.f32 %v1871, 0.0
    %v1951 = vmax.f32 %v1647, 0.0
    %v1952 = vmax.f32 %v1649, 0.0
    %v1953 = vmax.f32 %v1873, 0.0
    %v1954 = vmax.f32 %v1875, 0.0
    %v1955 = vmax.f32 %v1653, 0.0
    %v1956 = vmax.f32 %v1655, 0.0
    %v1957 = vmax.f32 %v1879, 0.0
    %v1958 = vmax.f32 %v1881, 0.0
    %v1959 = vmax.f32 %v1657, 0.0
    %v1960 = vmax.f32 %v1659, 0.0
    %v1961 = vmax.f32 %v1883, 0.0
    %v1962 = vmax.f32 %v1885, 0.0
    %v1963 = vmax.f32 %v1663, 0.0
    %v1964 = vmax.f32 %v1665, 0.0
    %v1965 = vmax.f32 %v1889, 0.0
    %v1966 = vmax.f32 %v1891, 0.0
    %v1967 = vmax.f32 %v1667, 0.0
    %v1968 = vmax.f32 %v1669, 0.0
    %v1969 = vmax.f32 %v1893, 0.0
    %v1970 = vmax.f32 %v1895, 0.0
    %v1971 = vmax.f32 %v1673, 0.0
    %v1972 = vmax.f32 %v1675, 0.0
    %v1973 = vmax.f32 %v1899, 0.0
    %v1974 = vmax.f32 %v1901, 0.0
    %v1975 = vmax.f32 %v1677, 0.0
    %v1976 = vmax.f32 %v1679, 0.0
    %v1977 = vmax.f32 %v1903, 0.0
    %v1978 = vmax.f32 %v1905, 0.0
    %v1979 = vmax.f32 %v1683, 0.0
    %v1980 = vmax.f32 %v1685, 0.0
    %v1981 = vmax.f32 %v1909, 0.0
    %v1982 = vmax.f32 %v1911, 0.0
    %v1983 = vmax.f32 %v1687, 0.0
    %v1984 = vmax.f32 %v1689, 0.0
    %v1985 = vmax.f32 %v1913, 0.0
    %v1986 = vmax.f32 %v1915, 0.0
    %v1987 = vmax.f32 %v1693, 0.0
    %v1988 = vmax.f32 %v1695, 0.0
    %v1989 = vmax.f32 %v1919, 0.0
    %v1990 = vmax.f32 %v1921, 0.0
    %v1991 = vmax.f32 %v1697, 0.0
    %v1992 = vmax.f32 %v1699, 0.0
    %v1993 = vmax.f32 %v1923, 0.0
    %v1994 = vmax.f32 %v1925, 0.0
    %v1995 = vmax.f32 %v1703, 0.0
    %v1996 = vmax.f32 %v1705, 0.0
    %v1997 = vmax.f32 %v1929, 0.0
    %v1998 = vmax.f32 %v1931, 0.0
    %v1999 = vmax.f32 %v1707, 0.0
    %v2000 = vmax.f32 %v1709, 0.0
    %v2001 = vmax.f32 %v1933, 0.0
    %v2002 = vmax.f32 %v1935, 0.0
    %v2003 = vmax.f32 %v1713, 0.0
    %v2004 = vmax.f32 %v1715, 0.0
    %v2005 = vmax.f32 %v1939, 0.0
    %v2006 = vmax.f32 %v1941, 0.0
    %v2007 = vmax.f32 %v1717, 0.0
    %v2008 = vmax.f32 %v1719, 0.0
    %v2009 = vmax.f32 %v1943, 0.0
    %v2010 = vmax.f32 %v1945, 0.0
    %v2011 = vadd.f32 %v609, %v1947
    %v2012 = vadd.f32 %v610, %v1948
    %v2013 = vadd.f32 %v611, %v1949
    %v2014 = vadd.f32 %v612, %v1950
    %v2015 = vadd.f32 %v613, %v1951
    %v2016 = vadd.f32 %v614, %v1952
    %v2017 = vadd.f32 %v615, %v1953
    %v2018 = vadd.f32 %v616, %v1954
    %v2019 = vadd.f32 %v617, %v1955
    %v2020 = vadd.f32 %v618, %v1956
    %v2021 = vadd.f32 %v619, %v1957
    %v2022 = vadd.f32 %v620, %v1958
    %v2023 = vadd.f32 %v621, %v1959
    %v2024 = vadd.f32 %v622, %v1960
    %v2025 = vadd.f32 %v623, %v1961
    %v2026 = vadd.f32 %v624, %v1962
    %v2027 = vadd.f32 %v625, %v1963
    %v2028 = vadd.f32 %v626, %v1964
    %v2029 = vadd.f32 %v627, %v1965
    %v2030 = vadd.f32 %v628, %v1966
    %v2031 = vadd.f32 %v629, %v1967
    %v2032 = vadd.f32 %v630, %v1968
    %v2033 = vadd.f32 %v631, %v1969
    %v2034 = vadd.f32 %v632, %v1970
    %v2035 = vadd.f32 %v633, %v1971
    %v2036 = vadd.f32 %v634, %v1972
    %v2037 = vadd.f32 %v635, %v1973
    %v2038 = vadd.f32 %v636, %v1974
    %v2039 = vadd.f32 %v637, %v1975
    %v2040 = vadd.f32 %v638, %v1976
    %v2041 = vadd.f32 %v639, %v1977
    %v2042 = vadd.f32 %v640, %v1978
    %v2043 = vadd.f32 %v641, %v1979
    %v2044 = vadd.f32 %v642, %v1980
    %v2045 = vadd.f32 %v643, %v1981
    %v2046 = vadd.f32 %v644, %v1982
    %v2047 = vadd.f32 %v645, %v1983
    %v2048 = vadd.f32 %v646, %v1984
    %v2049 = vadd.f32 %v647, %v1985
    %v2050 = vadd.f32 %v648, %v1986
    %v2051 = vadd.f32 %v649, %v1987
    %v2052 = vadd.f32 %v650, %v1988
    %v2053 = vadd.f32 %v651, %v1989
    %v2054 = vadd.f32 %v652, %v1990
    %v2055 = vadd.f32 %v653, %v1991
    %v2056 = vadd.f32 %v654, %v1992
    %v2057 = vadd.f32 %v655, %v1993
    %v2058 = vadd.f32 %v656, %v1994
    %v2059 = vadd.f32 %v657, %v1995
    %v2060 = vadd.f32 %v658, %v1996
    %v2061 = vadd.f32 %v659, %v1997
    %v2062 = vadd.f32 %v660, %v1998
    %v2063 = vadd.f32 %v661, %v1999
    %v2064 = vadd.f32 %v662, %v2000
    %v2065 = vadd.f32 %v663, %v2001
    %v2066 = vadd.f32 %v664, %v2002
    %v2067 = vadd.f32 %v665, %v2003
    %v2068 = vadd.f32 %v666, %v2004
    %v2069 = vadd.f32 %v667, %v2005
    %v2070 = vadd.f32 %v668, %v2006
    %v2071 = vadd.f32 %v669, %v2007
    %v2072 = vadd.f32 %v670, %v2008
    %v2073 = vadd.f32 %v671, %v2009
    %v2074 = vadd.f32 %v672, %v2010
    %v2075 = vpack.c.bf16 %v2015, %v2011
    %v2076 = vpack.c.bf16 %v2016, %v2012
    %v2077 = vpack.c.bf16 %v2017, %v2013
    %v2078 = vpack.c.bf16 %v2018, %v2014
    %v2079 = vpack.c.bf16 %v2023, %v2019
    %v2080 = vpack.c.bf16 %v2024, %v2020
    %v2081 = vpack.c.bf16 %v2025, %v2021
    %v2082 = vpack.c.bf16 %v2026, %v2022
    %v2083 = vpack.c.bf16 %v2031, %v2027
    %v2084 = vpack.c.bf16 %v2032, %v2028
    %v2085 = vpack.c.bf16 %v2033, %v2029
    %v2086 = vpack.c.bf16 %v2034, %v2030
    %v2087 = vpack.c.bf16 %v2039, %v2035
    %v2088 = vpack.c.bf16 %v2040, %v2036
    %v2089 = vpack.c.bf16 %v2041, %v2037
    %v2090 = vpack.c.bf16 %v2042, %v2038
    %v2091 = vpack.c.bf16 %v2047, %v2043
    %v2092 = vpack.c.bf16 %v2048, %v2044
    %v2093 = vpack.c.bf16 %v2049, %v2045
    %v2094 = vpack.c.bf16 %v2050, %v2046
    %v2095 = vpack.c.bf16 %v2055, %v2051
    %v2096 = vpack.c.bf16 %v2056, %v2052
    %v2097 = vpack.c.bf16 %v2057, %v2053
    %v2098 = vpack.c.bf16 %v2058, %v2054
    %v2099 = vpack.c.bf16 %v2063, %v2059
    %v2100 = vpack.c.bf16 %v2064, %v2060
    %v2101 = vpack.c.bf16 %v2065, %v2061
    %v2102 = vpack.c.bf16 %v2066, %v2062
    %v2103 = vpack.c.bf16 %v2071, %v2067
    %v2104 = vpack.c.bf16 %v2072, %v2068
    %v2105 = vpack.c.bf16 %v2073, %v2069
    %v2106 = vpack.c.bf16 %v2074, %v2070
    %s2107 = scalar_lea.vmem [#allocation6], 1024
    %v2108 = vld [vmem:[%s2107] sm:$0xff]
    %v2109 = vld [vmem:[%s2107 + $0x8] sm:$0xff]
    %v2110 = vld [vmem:[%s2107 + $0x10] sm:$0xff]
    %v2111 = vld [vmem:[%s2107 + $0x18] sm:$0xff]
    %v2112 = vld [vmem:[%s2107 + $0x20] sm:$0xff]
    %v2113 = vld [vmem:[%s2107 + $0x28] sm:$0xff]
    %v2114 = vld [vmem:[%s2107 + $0x30] sm:$0xff]
    %v2115 = vld [vmem:[%s2107 + $0x38] sm:$0xff]
    %v2116 = vld [vmem:[%s2107 + $0x40] sm:$0xff]
    %v2117 = vld [vmem:[%s2107 + $0x48] sm:$0xff]
    %v2118 = vld [vmem:[%s2107 + $0x50] sm:$0xff]
    %v2119 = vld [vmem:[%s2107 + $0x58] sm:$0xff]
    %v2120 = vld [vmem:[%s2107 + $0x60] sm:$0xff]
    %v2121 = vld [vmem:[%s2107 + $0x68] sm:$0xff]
    %v2122 = vld [vmem:[%s2107 + $0x70] sm:$0xff]
    %v2123 = vld [vmem:[%s2107 + $0x78] sm:$0xff]
    %v2124 = vld [vmem:[%s2107 + $0x80] sm:$0xff]
    %v2125 = vld [vmem:[%s2107 + $0x88] sm:$0xff]
    %v2126 = vld [vmem:[%s2107 + $0x90] sm:$0xff]
    %v2127 = vld [vmem:[%s2107 + $0x98] sm:$0xff]
    %v2128 = vld [vmem:[%s2107 + $0xa0] sm:$0xff]
    %v2129 = vld [vmem:[%s2107 + $0xa8] sm:$0xff]
    %v2130 = vld [vmem:[%s2107 + $0xb0] sm:$0xff]
    %v2131 = vld [vmem:[%s2107 + $0xb8] sm:$0xff]
    %v2132 = vld [vmem:[%s2107 + $0xc0] sm:$0xff]
    %v2133 = vld [vmem:[%s2107 + $0xc8] sm:$0xff]
    %v2134 = vld [vmem:[%s2107 + $0xd0] sm:$0xff]
    %v2135 = vld [vmem:[%s2107 + $0xd8] sm:$0xff]
    %v2136 = vld [vmem:[%s2107 + $0xe0] sm:$0xff]
    %v2137 = vld [vmem:[%s2107 + $0xe8] sm:$0xff]
    %v2138 = vld [vmem:[%s2107 + $0xf0] sm:$0xff]
    %v2139 = vld [vmem:[%s2107 + $0xf8] sm:$0xff]
    %v2140 = vld [vmem:[%s2107 + $0x100] sm:$0xff]
    %v2141 = vld [vmem:[%s2107 + $0x108] sm:$0xff]
    %v2142 = vld [vmem:[%s2107 + $0x110] sm:$0xff]
    %v2143 = vld [vmem:[%s2107 + $0x118] sm:$0xff]
    %v2144 = vld [vmem:[%s2107 + $0x120] sm:$0xff]
    %v2145 = vld [vmem:[%s2107 + $0x128] sm:$0xff]
    %v2146 = vld [vmem:[%s2107 + $0x130] sm:$0xff]
    %v2147 = vld [vmem:[%s2107 + $0x138] sm:$0xff]
    %v2148 = vld [vmem:[%s2107 + $0x140] sm:$0xff]
    %v2149 = vld [vmem:[%s2107 + $0x148] sm:$0xff]
    %v2150 = vld [vmem:[%s2107 + $0x150] sm:$0xff]
    %v2151 = vld [vmem:[%s2107 + $0x158] sm:$0xff]
    %v2152 = vld [vmem:[%s2107 + $0x160] sm:$0xff]
    %v2153 = vld [vmem:[%s2107 + $0x168] sm:$0xff]
    %v2154 = vld [vmem:[%s2107 + $0x170] sm:$0xff]
    %v2155 = vld [vmem:[%s2107 + $0x178] sm:$0xff]
    %v2156 = vld [vmem:[%s2107 + $0x180] sm:$0xff]
    %v2157 = vld [vmem:[%s2107 + $0x188] sm:$0xff]
    %v2158 = vld [vmem:[%s2107 + $0x190] sm:$0xff]
    %v2159 = vld [vmem:[%s2107 + $0x198] sm:$0xff]
    %v2160 = vld [vmem:[%s2107 + $0x1a0] sm:$0xff]
    %v2161 = vld [vmem:[%s2107 + $0x1a8] sm:$0xff]
    %v2162 = vld [vmem:[%s2107 + $0x1b0] sm:$0xff]
    %v2163 = vld [vmem:[%s2107 + $0x1b8] sm:$0xff]
    %v2164 = vld [vmem:[%s2107 + $0x1c0] sm:$0xff]
    %v2165 = vld [vmem:[%s2107 + $0x1c8] sm:$0xff]
    %v2166 = vld [vmem:[%s2107 + $0x1d0] sm:$0xff]
    %v2167 = vld [vmem:[%s2107 + $0x1d8] sm:$0xff]
    %v2168 = vld [vmem:[%s2107 + $0x1e0] sm:$0xff]
    %v2169 = vld [vmem:[%s2107 + $0x1e8] sm:$0xff]
    %v2170 = vld [vmem:[%s2107 + $0x1f0] sm:$0xff]
    %v2171 = vld [vmem:[%s2107 + $0x1f8] sm:$0xff]
    %v2172 = vld [vmem:[%s2107 + $0x200] sm:$0xff]
    %v2173 = vld [vmem:[%s2107 + $0x208] sm:$0xff]
    %v2174 = vld [vmem:[%s2107 + $0x210] sm:$0xff]
    %v2175 = vld [vmem:[%s2107 + $0x218] sm:$0xff]
    %v2176 = vld [vmem:[%s2107 + $0x220] sm:$0xff]
    %v2177 = vld [vmem:[%s2107 + $0x228] sm:$0xff]
    %v2178 = vld [vmem:[%s2107 + $0x230] sm:$0xff]
    %v2179 = vld [vmem:[%s2107 + $0x238] sm:$0xff]
    %v2180 = vld [vmem:[%s2107 + $0x240] sm:$0xff]
    %v2181 = vld [vmem:[%s2107 + $0x248] sm:$0xff]
    %v2182 = vld [vmem:[%s2107 + $0x250] sm:$0xff]
    %v2183 = vld [vmem:[%s2107 + $0x258] sm:$0xff]
    %v2184 = vld [vmem:[%s2107 + $0x260] sm:$0xff]
    %v2185 = vld [vmem:[%s2107 + $0x268] sm:$0xff]
    %v2186 = vld [vmem:[%s2107 + $0x270] sm:$0xff]
    %v2187 = vld [vmem:[%s2107 + $0x278] sm:$0xff]
    %v2188 = vld [vmem:[%s2107 + $0x280] sm:$0xff]
    %v2189 = vld [vmem:[%s2107 + $0x288] sm:$0xff]
    %v2190 = vld [vmem:[%s2107 + $0x290] sm:$0xff]
    %v2191 = vld [vmem:[%s2107 + $0x298] sm:$0xff]
    %v2192 = vld [vmem:[%s2107 + $0x2a0] sm:$0xff]
    %v2193 = vld [vmem:[%s2107 + $0x2a8] sm:$0xff]
    %v2194 = vld [vmem:[%s2107 + $0x2b0] sm:$0xff]
    %v2195 = vld [vmem:[%s2107 + $0x2b8] sm:$0xff]
    %v2196 = vld [vmem:[%s2107 + $0x2c0] sm:$0xff]
    %v2197 = vld [vmem:[%s2107 + $0x2c8] sm:$0xff]
    %v2198 = vld [vmem:[%s2107 + $0x2d0] sm:$0xff]
    %v2199 = vld [vmem:[%s2107 + $0x2d8] sm:$0xff]
    %v2200 = vld [vmem:[%s2107 + $0x2e0] sm:$0xff]
    %v2201 = vld [vmem:[%s2107 + $0x2e8] sm:$0xff]
    %v2202 = vld [vmem:[%s2107 + $0x2f0] sm:$0xff]
    %v2203 = vld [vmem:[%s2107 + $0x2f8] sm:$0xff]
    %v2204 = vld [vmem:[%s2107 + $0x300] sm:$0xff]
    %v2205 = vld [vmem:[%s2107 + $0x308] sm:$0xff]
    %v2206 = vld [vmem:[%s2107 + $0x310] sm:$0xff]
    %v2207 = vld [vmem:[%s2107 + $0x318] sm:$0xff]
    %v2208 = vld [vmem:[%s2107 + $0x320] sm:$0xff]
    %v2209 = vld [vmem:[%s2107 + $0x328] sm:$0xff]
    %v2210 = vld [vmem:[%s2107 + $0x330] sm:$0xff]
    %v2211 = vld [vmem:[%s2107 + $0x338] sm:$0xff]
    %v2212 = vld [vmem:[%s2107 + $0x340] sm:$0xff]
    %v2213 = vld [vmem:[%s2107 + $0x348] sm:$0xff]
    %v2214 = vld [vmem:[%s2107 + $0x350] sm:$0xff]
    %v2215 = vld [vmem:[%s2107 + $0x358] sm:$0xff]
    %v2216 = vld [vmem:[%s2107 + $0x360] sm:$0xff]
    %v2217 = vld [vmem:[%s2107 + $0x368] sm:$0xff]
    %v2218 = vld [vmem:[%s2107 + $0x370] sm:$0xff]
    %v2219 = vld [vmem:[%s2107 + $0x378] sm:$0xff]
    %v2220 = vld [vmem:[%s2107 + $0x380] sm:$0xff]
    %v2221 = vld [vmem:[%s2107 + $0x388] sm:$0xff]
    %v2222 = vld [vmem:[%s2107 + $0x390] sm:$0xff]
    %v2223 = vld [vmem:[%s2107 + $0x398] sm:$0xff]
    %v2224 = vld [vmem:[%s2107 + $0x3a0] sm:$0xff]
    %v2225 = vld [vmem:[%s2107 + $0x3a8] sm:$0xff]
    %v2226 = vld [vmem:[%s2107 + $0x3b0] sm:$0xff]
    %v2227 = vld [vmem:[%s2107 + $0x3b8] sm:$0xff]
    %v2228 = vld [vmem:[%s2107 + $0x3c0] sm:$0xff]
    %v2229 = vld [vmem:[%s2107 + $0x3c8] sm:$0xff]
    %v2230 = vld [vmem:[%s2107 + $0x3d0] sm:$0xff]
    %v2231 = vld [vmem:[%s2107 + $0x3d8] sm:$0xff]
    %v2232 = vld [vmem:[%s2107 + $0x3e0] sm:$0xff]
    %v2233 = vld [vmem:[%s2107 + $0x3e8] sm:$0xff]
    %v2234 = vld [vmem:[%s2107 + $0x3f0] sm:$0xff]
    %v2235 = vld [vmem:[%s2107 + $0x3f8] sm:$0xff]
    %s2236 = scalar_lea.vmem [#allocation7], 4
    %v2237 = vld [vmem:[%s2236] sm:$0xf]
    %v2239 = vlaneseq
    %v2240 = vshrl.u32 %v2239, 7
    %v2241 = vsub.s32 0, %v2240
    %v2242 = vrot.slane %v2237, %v2241
    %v2243 = vlaneseq
    %v2244 = vshrl.u32 %v2243, 7
    %v2245 = vsub.s32 1, %v2244
    %v2246 = vrot.slane %v2237, %v2245
    %v2247 = vlaneseq
    %v2248 = vshrl.u32 %v2247, 7
    %v2249 = vsub.s32 2, %v2248
    %v2250 = vrot.slane %v2237, %v2249
    %v2251 = vlaneseq
    %v2252 = vshrl.u32 %v2251, 7
    %v2253 = vsub.s32 3, %v2252
    %v2254 = vrot.slane %v2237, %v2253
    %v2387 = vunpack.c.l.b16 %v2108
    %v2388 = vunpack.c.h.b16 %v2108
    %v2389 = vunpack.c.l.b16 %v2109
    %v2390 = vunpack.c.h.b16 %v2109
    %v2391 = vunpack.c.l.b16 %v2110
    %v2392 = vunpack.c.h.b16 %v2110
    %v2393 = vunpack.c.l.b16 %v2111
    %v2394 = vunpack.c.h.b16 %v2111
    %v2395 = vunpack.c.l.b16 %v2112
    %v2396 = vunpack.c.h.b16 %v2112
    %v2397 = vunpack.c.l.b16 %v2113
    %v2398 = vunpack.c.h.b16 %v2113
    %v2399 = vunpack.c.l.b16 %v2114
    %v2400 = vunpack.c.h.b16 %v2114
    %v2401 = vunpack.c.l.b16 %v2115
    %v2402 = vunpack.c.h.b16 %v2115
    %v2403 = vunpack.c.l.b16 %v2116
    %v2404 = vunpack.c.h.b16 %v2116
    %v2405 = vunpack.c.l.b16 %v2117
    %v2406 = vunpack.c.h.b16 %v2117
    %v2407 = vunpack.c.l.b16 %v2118
    %v2408 = vunpack.c.h.b16 %v2118
    %v2409 = vunpack.c.l.b16 %v2119
    %v2410 = vunpack.c.h.b16 %v2119
    %v2411 = vunpack.c.l.b16 %v2120
    %v2412 = vunpack.c.h.b16 %v2120
    %v2413 = vunpack.c.l.b16 %v2121
    %v2414 = vunpack.c.h.b16 %v2121
    %v2415 = vunpack.c.l.b16 %v2122
    %v2416 = vunpack.c.h.b16 %v2122
    %v2417 = vunpack.c.l.b16 %v2123
    %v2418 = vunpack.c.h.b16 %v2123
    %v2419 = vunpack.c.l.b16 %v2124
    %v2420 = vunpack.c.h.b16 %v2124
    %v2421 = vunpack.c.l.b16 %v2125
    %v2422 = vunpack.c.h.b16 %v2125
    %v2423 = vunpack.c.l.b16 %v2126
    %v2424 = vunpack.c.h.b16 %v2126
    %v2425 = vunpack.c.l.b16 %v2127
    %v2426 = vunpack.c.h.b16 %v2127
    %v2427 = vunpack.c.l.b16 %v2128
    %v2428 = vunpack.c.h.b16 %v2128
    %v2429 = vunpack.c.l.b16 %v2129
    %v2430 = vunpack.c.h.b16 %v2129
    %v2431 = vunpack.c.l.b16 %v2130
    %v2432 = vunpack.c.h.b16 %v2130
    %v2433 = vunpack.c.l.b16 %v2131
    %v2434 = vunpack.c.h.b16 %v2131
    %v2435 = vunpack.c.l.b16 %v2132
    %v2436 = vunpack.c.h.b16 %v2132
    %v2437 = vunpack.c.l.b16 %v2133
    %v2438 = vunpack.c.h.b16 %v2133
    %v2439 = vunpack.c.l.b16 %v2134
    %v2440 = vunpack.c.h.b16 %v2134
    %v2441 = vunpack.c.l.b16 %v2135
    %v2442 = vunpack.c.h.b16 %v2135
    %v2443 = vunpack.c.l.b16 %v2136
    %v2444 = vunpack.c.h.b16 %v2136
    %v2445 = vunpack.c.l.b16 %v2137
    %v2446 = vunpack.c.h.b16 %v2137
    %v2447 = vunpack.c.l.b16 %v2138
    %v2448 = vunpack.c.h.b16 %v2138
    %v2449 = vunpack.c.l.b16 %v2139
    %v2450 = vunpack.c.h.b16 %v2139
    %v2451 = vunpack.c.l.b16 %v2140
    %v2452 = vunpack.c.h.b16 %v2140
    %v2453 = vunpack.c.l.b16 %v2141
    %v2454 = vunpack.c.h.b16 %v2141
    %v2455 = vunpack.c.l.b16 %v2142
    %v2456 = vunpack.c.h.b16 %v2142
    %v2457 = vunpack.c.l.b16 %v2143
    %v2458 = vunpack.c.h.b16 %v2143
    %v2459 = vunpack.c.l.b16 %v2144
    %v2460 = vunpack.c.h.b16 %v2144
    %v2461 = vunpack.c.l.b16 %v2145
    %v2462 = vunpack.c.h.b16 %v2145
    %v2463 = vunpack.c.l.b16 %v2146
    %v2464 = vunpack.c.h.b16 %v2146
    %v2465 = vunpack.c.l.b16 %v2147
    %v2466 = vunpack.c.h.b16 %v2147
    %v2467 = vunpack.c.l.b16 %v2148
    %v2468 = vunpack.c.h.b16 %v2148
    %v2469 = vunpack.c.l.b16 %v2149
    %v2470 = vunpack.c.h.b16 %v2149
    %v2471 = vunpack.c.l.b16 %v2150
    %v2472 = vunpack.c.h.b16 %v2150
    %v2473 = vunpack.c.l.b16 %v2151
    %v2474 = vunpack.c.h.b16 %v2151
    %v2475 = vunpack.c.l.b16 %v2152
    %v2476 = vunpack.c.h.b16 %v2152
    %v2477 = vunpack.c.l.b16 %v2153
    %v2478 = vunpack.c.h.b16 %v2153
    %v2479 = vunpack.c.l.b16 %v2154
    %v2480 = vunpack.c.h.b16 %v2154
    %v2481 = vunpack.c.l.b16 %v2155
    %v2482 = vunpack.c.h.b16 %v2155
    %v2483 = vunpack.c.l.b16 %v2156
    %v2484 = vunpack.c.h.b16 %v2156
    %v2485 = vunpack.c.l.b16 %v2157
    %v2486 = vunpack.c.h.b16 %v2157
    %v2487 = vunpack.c.l.b16 %v2158
    %v2488 = vunpack.c.h.b16 %v2158
    %v2489 = vunpack.c.l.b16 %v2159
    %v2490 = vunpack.c.h.b16 %v2159
    %v2491 = vunpack.c.l.b16 %v2160
    %v2492 = vunpack.c.h.b16 %v2160
    %v2493 = vunpack.c.l.b16 %v2161
    %v2494 = vunpack.c.h.b16 %v2161
    %v2495 = vunpack.c.l.b16 %v2162
    %v2496 = vunpack.c.h.b16 %v2162
    %v2497 = vunpack.c.l.b16 %v2163
    %v2498 = vunpack.c.h.b16 %v2163
    %v2499 = vunpack.c.l.b16 %v2164
    %v2500 = vunpack.c.h.b16 %v2164
    %v2501 = vunpack.c.l.b16 %v2165
    %v2502 = vunpack.c.h.b16 %v2165
    %v2503 = vunpack.c.l.b16 %v2166
    %v2504 = vunpack.c.h.b16 %v2166
    %v2505 = vunpack.c.l.b16 %v2167
    %v2506 = vunpack.c.h.b16 %v2167
    %v2507 = vunpack.c.l.b16 %v2168
    %v2508 = vunpack.c.h.b16 %v2168
    %v2509 = vunpack.c.l.b16 %v2169
    %v2510 = vunpack.c.h.b16 %v2169
    %v2511 = vunpack.c.l.b16 %v2170
    %v2512 = vunpack.c.h.b16 %v2170
    %v2513 = vunpack.c.l.b16 %v2171
    %v2514 = vunpack.c.h.b16 %v2171
    %v2515 = vunpack.c.l.b16 %v2172
    %v2516 = vunpack.c.h.b16 %v2172
    %v2517 = vunpack.c.l.b16 %v2173
    %v2518 = vunpack.c.h.b16 %v2173
    %v2519 = vunpack.c.l.b16 %v2174
    %v2520 = vunpack.c.h.b16 %v2174
    %v2521 = vunpack.c.l.b16 %v2175
    %v2522 = vunpack.c.h.b16 %v2175
    %v2523 = vunpack.c.l.b16 %v2176
    %v2524 = vunpack.c.h.b16 %v2176
    %v2525 = vunpack.c.l.b16 %v2177
    %v2526 = vunpack.c.h.b16 %v2177
    %v2527 = vunpack.c.l.b16 %v2178
    %v2528 = vunpack.c.h.b16 %v2178
    %v2529 = vunpack.c.l.b16 %v2179
    %v2530 = vunpack.c.h.b16 %v2179
    %v2531 = vunpack.c.l.b16 %v2180
    %v2532 = vunpack.c.h.b16 %v2180
    %v2533 = vunpack.c.l.b16 %v2181
    %v2534 = vunpack.c.h.b16 %v2181
    %v2535 = vunpack.c.l.b16 %v2182
    %v2536 = vunpack.c.h.b16 %v2182
    %v2537 = vunpack.c.l.b16 %v2183
    %v2538 = vunpack.c.h.b16 %v2183
    %v2539 = vunpack.c.l.b16 %v2184
    %v2540 = vunpack.c.h.b16 %v2184
    %v2541 = vunpack.c.l.b16 %v2185
    %v2542 = vunpack.c.h.b16 %v2185
    %v2543 = vunpack.c.l.b16 %v2186
    %v2544 = vunpack.c.h.b16 %v2186
    %v2545 = vunpack.c.l.b16 %v2187
    %v2546 = vunpack.c.h.b16 %v2187
    %v2547 = vunpack.c.l.b16 %v2188
    %v2548 = vunpack.c.h.b16 %v2188
    %v2549 = vunpack.c.l.b16 %v2189
    %v2550 = vunpack.c.h.b16 %v2189
    %v2551 = vunpack.c.l.b16 %v2190
    %v2552 = vunpack.c.h.b16 %v2190
    %v2553 = vunpack.c.l.b16 %v2191
    %v2554 = vunpack.c.h.b16 %v2191
    %v2555 = vunpack.c.l.b16 %v2192
    %v2556 = vunpack.c.h.b16 %v2192
    %v2557 = vunpack.c.l.b16 %v2193
    %v2558 = vunpack.c.h.b16 %v2193
    %v2559 = vunpack.c.l.b16 %v2194
    %v2560 = vunpack.c.h.b16 %v2194
    %v2561 = vunpack.c.l.b16 %v2195
    %v2562 = vunpack.c.h.b16 %v2195
    %v2563 = vunpack.c.l.b16 %v2196
    %v2564 = vunpack.c.h.b16 %v2196
    %v2565 = vunpack.c.l.b16 %v2197
    %v2566 = vunpack.c.h.b16 %v2197
    %v2567 = vunpack.c.l.b16 %v2198
    %v2568 = vunpack.c.h.b16 %v2198
    %v2569 = vunpack.c.l.b16 %v2199
    %v2570 = vunpack.c.h.b16 %v2199
    %v2571 = vunpack.c.l.b16 %v2200
    %v2572 = vunpack.c.h.b16 %v2200
    %v2573 = vunpack.c.l.b16 %v2201
    %v2574 = vunpack.c.h.b16 %v2201
    %v2575 = vunpack.c.l.b16 %v2202
    %v2576 = vunpack.c.h.b16 %v2202
    %v2577 = vunpack.c.l.b16 %v2203
    %v2578 = vunpack.c.h.b16 %v2203
    %v2579 = vunpack.c.l.b16 %v2204
    %v2580 = vunpack.c.h.b16 %v2204
    %v2581 = vunpack.c.l.b16 %v2205
    %v2582 = vunpack.c.h.b16 %v2205
    %v2583 = vunpack.c.l.b16 %v2206
    %v2584 = vunpack.c.h.b16 %v2206
    %v2585 = vunpack.c.l.b16 %v2207
    %v2586 = vunpack.c.h.b16 %v2207
    %v2587 = vunpack.c.l.b16 %v2208
    %v2588 = vunpack.c.h.b16 %v2208
    %v2589 = vunpack.c.l.b16 %v2209
    %v2590 = vunpack.c.h.b16 %v2209
    %v2591 = vunpack.c.l.b16 %v2210
    %v2592 = vunpack.c.h.b16 %v2210
    %v2593 = vunpack.c.l.b16 %v2211
    %v2594 = vunpack.c.h.b16 %v2211
    %v2595 = vunpack.c.l.b16 %v2212
    %v2596 = vunpack.c.h.b16 %v2212
    %v2597 = vunpack.c.l.b16 %v2213
    %v2598 = vunpack.c.h.b16 %v2213
    %v2599 = vunpack.c.l.b16 %v2214
    %v2600 = vunpack.c.h.b16 %v2214
    %v2601 = vunpack.c.l.b16 %v2215
    %v2602 = vunpack.c.h.b16 %v2215
    %v2603 = vunpack.c.l.b16 %v2216
    %v2604 = vunpack.c.h.b16 %v2216
    %v2605 = vunpack.c.l.b16 %v2217
    %v2606 = vunpack.c.h.b16 %v2217
    %v2607 = vunpack.c.l.b16 %v2218
    %v2608 = vunpack.c.h.b16 %v2218
    %v2609 = vunpack.c.l.b16 %v2219
    %v2610 = vunpack.c.h.b16 %v2219
    %v2611 = vunpack.c.l.b16 %v2220
    %v2612 = vunpack.c.h.b16 %v2220
    %v2613 = vunpack.c.l.b16 %v2221
    %v2614 = vunpack.c.h.b16 %v2221
    %v2615 = vunpack.c.l.b16 %v2222
    %v2616 = vunpack.c.h.b16 %v2222
    %v2617 = vunpack.c.l.b16 %v2223
    %v2618 = vunpack.c.h.b16 %v2223
    %v2619 = vunpack.c.l.b16 %v2224
    %v2620 = vunpack.c.h.b16 %v2224
    %v2621 = vunpack.c.l.b16 %v2225
    %v2622 = vunpack.c.h.b16 %v2225
    %v2623 = vunpack.c.l.b16 %v2226
    %v2624 = vunpack.c.h.b16 %v2226
    %v2625 = vunpack.c.l.b16 %v2227
    %v2626 = vunpack.c.h.b16 %v2227
    %v2627 = vunpack.c.l.b16 %v2228
    %v2628 = vunpack.c.h.b16 %v2228
    %v2629 = vunpack.c.l.b16 %v2229
    %v2630 = vunpack.c.h.b16 %v2229
    %v2631 = vunpack.c.l.b16 %v2230
    %v2632 = vunpack.c.h.b16 %v2230
    %v2633 = vunpack.c.l.b16 %v2231
    %v2634 = vunpack.c.h.b16 %v2231
    %v2635 = vunpack.c.l.b16 %v2232
    %v2636 = vunpack.c.h.b16 %v2232
    %v2637 = vunpack.c.l.b16 %v2233
    %v2638 = vunpack.c.h.b16 %v2233
    %v2639 = vunpack.c.l.b16 %v2234
    %v2640 = vunpack.c.h.b16 %v2234
    %v2641 = vunpack.c.l.b16 %v2235
    %v2642 = vunpack.c.h.b16 %v2235
    %v2643 = vpack.c.b16 %v2391, %v2387
    %v2644 = vpack.c.b16 %v2392, %v2388
    %v2645 = vpack.c.b16 %v2393, %v2389
    %v2646 = vpack.c.b16 %v2394, %v2390
    %v2647 = vpack.c.b16 %v2399, %v2395
    %v2648 = vpack.c.b16 %v2400, %v2396
    %v2649 = vpack.c.b16 %v2401, %v2397
    %v2650 = vpack.c.b16 %v2402, %v2398
    %v2651 = vpack.c.b16 %v2407, %v2403
    %v2652 = vpack.c.b16 %v2408, %v2404
    %v2653 = vpack.c.b16 %v2409, %v2405
    %v2654 = vpack.c.b16 %v2410, %v2406
    %v2655 = vpack.c.b16 %v2415, %v2411
    %v2656 = vpack.c.b16 %v2416, %v2412
    %v2657 = vpack.c.b16 %v2417, %v2413
    %v2658 = vpack.c.b16 %v2418, %v2414
    %v2659 = vpack.c.b16 %v2423, %v2419
    %v2660 = vpack.c.b16 %v2424, %v2420
    %v2661 = vpack.c.b16 %v2425, %v2421
    %v2662 = vpack.c.b16 %v2426, %v2422
    %v2663 = vpack.c.b16 %v2431, %v2427
    %v2664 = vpack.c.b16 %v2432, %v2428
    %v2665 = vpack.c.b16 %v2433, %v2429
    %v2666 = vpack.c.b16 %v2434, %v2430
    %v2667 = vpack.c.b16 %v2439, %v2435
    %v2668 = vpack.c.b16 %v2440, %v2436
    %v2669 = vpack.c.b16 %v2441, %v2437
    %v2670 = vpack.c.b16 %v2442, %v2438
    %v2671 = vpack.c.b16 %v2447, %v2443
    %v2672 = vpack.c.b16 %v2448, %v2444
    %v2673 = vpack.c.b16 %v2449, %v2445
    %v2674 = vpack.c.b16 %v2450, %v2446
    %v2675 = vpack.c.b16 %v2455, %v2451
    %v2676 = vpack.c.b16 %v2456, %v2452
    %v2677 = vpack.c.b16 %v2457, %v2453
    %v2678 = vpack.c.b16 %v2458, %v2454
    %v2679 = vpack.c.b16 %v2463, %v2459
    %v2680 = vpack.c.b16 %v2464, %v2460
    %v2681 = vpack.c.b16 %v2465, %v2461
    %v2682 = vpack.c.b16 %v2466, %v2462
    %v2683 = vpack.c.b16 %v2471, %v2467
    %v2684 = vpack.c.b16 %v2472, %v2468
    %v2685 = vpack.c.b16 %v2473, %v2469
    %v2686 = vpack.c.b16 %v2474, %v2470
    %v2687 = vpack.c.b16 %v2479, %v2475
    %v2688 = vpack.c.b16 %v2480, %v2476
    %v2689 = vpack.c.b16 %v2481, %v2477
    %v2690 = vpack.c.b16 %v2482, %v2478
    %v2691 = vpack.c.b16 %v2487, %v2483
    %v2692 = vpack.c.b16 %v2488, %v2484
    %v2693 = vpack.c.b16 %v2489, %v2485
    %v2694 = vpack.c.b16 %v2490, %v2486
    %v2695 = vpack.c.b16 %v2495, %v2491
    %v2696 = vpack.c.b16 %v2496, %v2492
    %v2697 = vpack.c.b16 %v2497, %v2493
    %v2698 = vpack.c.b16 %v2498, %v2494
    %v2699 = vpack.c.b16 %v2503, %v2499
    %v2700 = vpack.c.b16 %v2504, %v2500
    %v2701 = vpack.c.b16 %v2505, %v2501
    %v2702 = vpack.c.b16 %v2506, %v2502
    %v2703 = vpack.c.b16 %v2511, %v2507
    %v2704 = vpack.c.b16 %v2512, %v2508
    %v2705 = vpack.c.b16 %v2513, %v2509
    %v2706 = vpack.c.b16 %v2514, %v2510
    %v2707 = vpack.c.b16 %v2519, %v2515
    %v2708 = vpack.c.b16 %v2520, %v2516
    %v2709 = vpack.c.b16 %v2521, %v2517
    %v2710 = vpack.c.b16 %v2522, %v2518
    %v2711 = vpack.c.b16 %v2527, %v2523
    %v2712 = vpack.c.b16 %v2528, %v2524
    %v2713 = vpack.c.b16 %v2529, %v2525
    %v2714 = vpack.c.b16 %v2530, %v2526
    %v2715 = vpack.c.b16 %v2535, %v2531
    %v2716 = vpack.c.b16 %v2536, %v2532
    %v2717 = vpack.c.b16 %v2537, %v2533
    %v2718 = vpack.c.b16 %v2538, %v2534
    %v2719 = vpack.c.b16 %v2543, %v2539
    %v2720 = vpack.c.b16 %v2544, %v2540
    %v2721 = vpack.c.b16 %v2545, %v2541
    %v2722 = vpack.c.b16 %v2546, %v2542
    %v2723 = vpack.c.b16 %v2551, %v2547
    %v2724 = vpack.c.b16 %v2552, %v2548
    %v2725 = vpack.c.b16 %v2553, %v2549
    %v2726 = vpack.c.b16 %v2554, %v2550
    %v2727 = vpack.c.b16 %v2559, %v2555
    %v2728 = vpack.c.b16 %v2560, %v2556
    %v2729 = vpack.c.b16 %v2561, %v2557
    %v2730 = vpack.c.b16 %v2562, %v2558
    %v2731 = vpack.c.b16 %v2567, %v2563
    %v2732 = vpack.c.b16 %v2568, %v2564
    %v2733 = vpack.c.b16 %v2569, %v2565
    %v2734 = vpack.c.b16 %v2570, %v2566
    %v2735 = vpack.c.b16 %v2575, %v2571
    %v2736 = vpack.c.b16 %v2576, %v2572
    %v2737 = vpack.c.b16 %v2577, %v2573
    %v2738 = vpack.c.b16 %v2578, %v2574
    %v2739 = vpack.c.b16 %v2583, %v2579
    %v2740 = vpack.c.b16 %v2584, %v2580
    %v2741 = vpack.c.b16 %v2585, %v2581
    %v2742 = vpack.c.b16 %v2586, %v2582
    %v2743 = vpack.c.b16 %v2591, %v2587
    %v2744 = vpack.c.b16 %v2592, %v2588
    %v2745 = vpack.c.b16 %v2593, %v2589
    %v2746 = vpack.c.b16 %v2594, %v2590
    %v2747 = vpack.c.b16 %v2599, %v2595
    %v2748 = vpack.c.b16 %v2600, %v2596
    %v2749 = vpack.c.b16 %v2601, %v2597
    %v2750 = vpack.c.b16 %v2602, %v2598
    %v2751 = vpack.c.b16 %v2607, %v2603
    %v2752 = vpack.c.b16 %v2608, %v2604
    %v2753 = vpack.c.b16 %v2609, %v2605
    %v2754 = vpack.c.b16 %v2610, %v2606
    %v2755 = vpack.c.b16 %v2615, %v2611
    %v2756 = vpack.c.b16 %v2616, %v2612
    %v2757 = vpack.c.b16 %v2617, %v2613
    %v2758 = vpack.c.b16 %v2618, %v2614
    %v2759 = vpack.c.b16 %v2623, %v2619
    %v2760 = vpack.c.b16 %v2624, %v2620
    %v2761 = vpack.c.b16 %v2625, %v2621
    %v2762 = vpack.c.b16 %v2626, %v2622
    %v2763 = vpack.c.b16 %v2631, %v2627
    %v2764 = vpack.c.b16 %v2632, %v2628
    %v2765 = vpack.c.b16 %v2633, %v2629
    %v2766 = vpack.c.b16 %v2634, %v2630
    %v2767 = vpack.c.b16 %v2639, %v2635
    %v2768 = vpack.c.b16 %v2640, %v2636
    %v2769 = vpack.c.b16 %v2641, %v2637
    %v2770 = vpack.c.b16 %v2642, %v2638
    %2899 = vmatprep.subr.bf16.mxu0 %v2644
    %2900 = vmatpush1.bf16.msra.mxu0 %v2643
    %2901 = vmatprep.subr.bf16.mxu0 %v2648
    %2902 = vmatpush1.bf16.msra.mxu0 %v2647
    %2903 = vmatprep.subr.bf16.mxu0 %v2652
    %2904 = vmatpush1.bf16.msra.mxu0 %v2651
    %2905 = vmatprep.subr.bf16.mxu0 %v2656
    %2906 = vmatpush1.bf16.msra.mxu0 %v2655
    %2907 = vmatprep.subr.bf16.mxu0 %v2660
    %2908 = vmatpush1.bf16.msra.mxu0 %v2659
    %2909 = vmatprep.subr.bf16.mxu0 %v2664
    %2910 = vmatpush1.bf16.msra.mxu0 %v2663
    %2911 = vmatprep.subr.bf16.mxu0 %v2668
    %2912 = vmatpush1.bf16.msra.mxu0 %v2667
    %2913 = vmatprep.subr.bf16.mxu0 %v2672
    %2914 = vmatpush1.bf16.msra.mxu0 %v2671
    %2915 = vmatprep.subr.bf16.mxu0 %v2676
    %2916 = vmatpush1.bf16.msra.mxu0 %v2675
    %2917 = vmatprep.subr.bf16.mxu0 %v2680
    %2918 = vmatpush1.bf16.msra.mxu0 %v2679
    %2919 = vmatprep.subr.bf16.mxu0 %v2684
    %2920 = vmatpush1.bf16.msra.mxu0 %v2683
    %2921 = vmatprep.subr.bf16.mxu0 %v2688
    %2922 = vmatpush1.bf16.msra.mxu0 %v2687
    %2923 = vmatprep.subr.bf16.mxu0 %v2692
    %2924 = vmatpush1.bf16.msra.mxu0 %v2691
    %2925 = vmatprep.subr.bf16.mxu0 %v2696
    %2926 = vmatpush1.bf16.msra.mxu0 %v2695
    %2927 = vmatprep.subr.bf16.mxu0 %v2700
    %2928 = vmatpush1.bf16.msra.mxu0 %v2699
    %2929 = vmatprep.subr.bf16.mxu0 %v2704
    %2930 = vmatpush1.bf16.msra.mxu0 %v2703
    %2931 = vmatprep.mubr.bf16.mxu0 %v2076
    %2932 = vmatmul.mubr.bf16.gmra.mrb[0].mxu0 %v2075
    %v2933 = vpop.f32.mrb[0].mxu0
    %v2934 = vadd.f32 %v2242, %v2933
    %v2935 = vpop.f32.mrb[0].mxu0
    %v2936 = vadd.f32 %v2246, %v2935
    %v2937 = vpop.f32.mrb[0].mxu0
    %v2938 = vadd.f32 %v2242, %v2937
    %v2939 = vpop.f32.mrb[0].mxu0
    %v2940 = vadd.f32 %v2246, %v2939
    %2941 = vmatprep.mubr.bf16.mxu0 %v2080
    %2942 = vmatmul.mubr.bf16.gmra.mrb[0].mxu0 %v2079
    %v2943 = vpop.f32.mrb[0].mxu0
    %v2944 = vadd.f32 %v2242, %v2943
    %v2945 = vpop.f32.mrb[0].mxu0
    %v2946 = vadd.f32 %v2246, %v2945
    %v2947 = vpop.f32.mrb[0].mxu0
    %v2948 = vadd.f32 %v2242, %v2947
    %v2949 = vpop.f32.mrb[0].mxu0
    %v2950 = vadd.f32 %v2246, %v2949
    %2951 = vmatprep.mubr.bf16.mxu0 %v2084
    %2952 = vmatmul.mubr.bf16.gmra.mrb[0].mxu0 %v2083
    %v2953 = vpop.f32.mrb[0].mxu0
    %v2954 = vadd.f32 %v2242, %v2953
    %v2955 = vpop.f32.mrb[0].mxu0
    %v2956 = vadd.f32 %v2246, %v2955
    %v2957 = vpop.f32.mrb[0].mxu0
    %v2958 = vadd.f32 %v2242, %v2957
    %v2959 = vpop.f32.mrb[0].mxu0
    %v2960 = vadd.f32 %v2246, %v2959
    %2961 = vmatprep.mubr.bf16.mxu0 %v2088
    %2962 = vmatmul.mubr.bf16.gmra.mrb[0].mxu0 %v2087
    %v2963 = vpop.f32.mrb[0].mxu0
    %v2964 = vadd.f32 %v2242, %v2963
    %v2965 = vpop.f32.mrb[0].mxu0
    %v2966 = vadd.f32 %v2246, %v2965
    %v2967 = vpop.f32.mrb[0].mxu0
    %v2968 = vadd.f32 %v2242, %v2967
    %v2969 = vpop.f32.mrb[0].mxu0
    %v2970 = vadd.f32 %v2246, %v2969
    %2971 = vmatprep.mubr.bf16.mxu0 %v2092
    %2972 = vmatmul.mubr.bf16.gmra.mrb[0].mxu0 %v2091
    %v2973 = vpop.f32.mrb[0].mxu0
    %v2974 = vadd.f32 %v2242, %v2973
    %v2975 = vpop.f32.mrb[0].mxu0
    %v2976 = vadd.f32 %v2246, %v2975
    %v2977 = vpop.f32.mrb[0].mxu0
    %v2978 = vadd.f32 %v2242, %v2977
    %v2979 = vpop.f32.mrb[0].mxu0
    %v2980 = vadd.f32 %v2246, %v2979
    %2981 = vmatprep.mubr.bf16.mxu0 %v2096
    %2982 = vmatmul.mubr.bf16.gmra.mrb[0].mxu0 %v2095
    %v2983 = vpop.f32.mrb[0].mxu0
    %v2984 = vadd.f32 %v2242, %v2983
    %v2985 = vpop.f32.mrb[0].mxu0
    %v2986 = vadd.f32 %v2246, %v2985
    %v2987 = vpop.f32.mrb[0].mxu0
    %v2988 = vadd.f32 %v2242, %v2987
    %v2989 = vpop.f32.mrb[0].mxu0
    %v2990 = vadd.f32 %v2246, %v2989
    %2991 = vmatprep.mubr.bf16.mxu0 %v2100
    %2992 = vmatmul.mubr.bf16.gmra.mrb[0].mxu0 %v2099
    %v2993 = vpop.f32.mrb[0].mxu0
    %v2994 = vadd.f32 %v2242, %v2993
    %v2995 = vpop.f32.mrb[0].mxu0
    %v2996 = vadd.f32 %v2246, %v2995
    %v2997 = vpop.f32.mrb[0].mxu0
    %v2998 = vadd.f32 %v2242, %v2997
    %v2999 = vpop.f32.mrb[0].mxu0
    %v3000 = vadd.f32 %v2246, %v2999
    %3001 = vmatprep.mubr.bf16.mxu0 %v2104
    %3002 = vmatmul.mubr.bf16.gmra.mrb[0].mxu0 %v2103
    %v3003 = vpop.f32.mrb[0].mxu0
    %v3004 = vadd.f32 %v2242, %v3003
    %v3005 = vpop.f32.mrb[0].mxu0
    %v3006 = vadd.f32 %v2246, %v3005
    %v3007 = vpop.f32.mrb[0].mxu0
    %v3008 = vadd.f32 %v2242, %v3007
    %v3009 = vpop.f32.mrb[0].mxu0
    %v3010 = vadd.f32 %v2246, %v3009
    %3011 = vdwg.mxu0
    %3012 = vmatprep.subr.bf16.mxu0 %v2708
    %3013 = vmatpush1.bf16.msra.mxu0 %v2707
    %3014 = vmatprep.subr.bf16.mxu0 %v2712
    %3015 = vmatpush1.bf16.msra.mxu0 %v2711
    %3016 = vmatprep.subr.bf16.mxu0 %v2716
    %3017 = vmatpush1.bf16.msra.mxu0 %v2715
    %3018 = vmatprep.subr.bf16.mxu0 %v2720
    %3019 = vmatpush1.bf16.msra.mxu0 %v2719
    %3020 = vmatprep.subr.bf16.mxu0 %v2724
    %3021 = vmatpush1.bf16.msra.mxu0 %v2723
    %3022 = vmatprep.subr.bf16.mxu0 %v2728
    %3023 = vmatpush1.bf16.msra.mxu0 %v2727
    %3024 = vmatprep.subr.bf16.mxu0 %v2732
    %3025 = vmatpush1.bf16.msra.mxu0 %v2731
    %3026 = vmatprep.subr.bf16.mxu0 %v2736
    %3027 = vmatpush1.bf16.msra.mxu0 %v2735
    %3028 = vmatprep.subr.bf16.mxu0 %v2740
    %3029 = vmatpush1.bf16.msra.mxu0 %v2739
    %3030 = vmatprep.subr.bf16.mxu0 %v2744
    %3031 = vmatpush1.bf16.msra.mxu0 %v2743
    %3032 = vmatprep.subr.bf16.mxu0 %v2748
    %3033 = vmatpush1.bf16.msra.mxu0 %v2747
    %3034 = vmatprep.subr.bf16.mxu0 %v2752
    %3035 = vmatpush1.bf16.msra.mxu0 %v2751
    %3036 = vmatprep.subr.bf16.mxu0 %v2756
    %3037 = vmatpush1.bf16.msra.mxu0 %v2755
    %3038 = vmatprep.subr.bf16.mxu0 %v2760
    %3039 = vmatpush1.bf16.msra.mxu0 %v2759
    %3040 = vmatprep.subr.bf16.mxu0 %v2764
    %3041 = vmatpush1.bf16.msra.mxu0 %v2763
    %3042 = vmatprep.subr.bf16.mxu0 %v2768
    %3043 = vmatpush1.bf16.msra.mxu0 %v2767
    %3044 = vmatprep.mubr.bf16.mxu0 %v2078
    %3045 = vmatmul.mubr.bf16.gmra.mrb[0].mxu0 %v2077
    %v3046 = vpop.f32.mrb[0].mxu0
    %v3047 = vadd.f32 %v2934, %v3046
    %v3048 = vpop.f32.mrb[0].mxu0
    %v3049 = vadd.f32 %v2936, %v3048
    %v3050 = vpop.f32.mrb[0].mxu0
    %v3051 = vadd.f32 %v2938, %v3050
    %v3052 = vpop.f32.mrb[0].mxu0
    %v3053 = vadd.f32 %v2940, %v3052
    %3054 = vmatprep.mubr.bf16.mxu0 %v2082
    %3055 = vmatmul.mubr.bf16.gmra.mrb[0].mxu0 %v2081
    %v3056 = vpop.f32.mrb[0].mxu0
    %v3057 = vadd.f32 %v2944, %v3056
    %v3058 = vpop.f32.mrb[0].mxu0
    %v3059 = vadd.f32 %v2946, %v3058
    %v3060 = vpop.f32.mrb[0].mxu0
    %v3061 = vadd.f32 %v2948, %v3060
    %v3062 = vpop.f32.mrb[0].mxu0
    %v3063 = vadd.f32 %v2950, %v3062
    %3064 = vmatprep.mubr.bf16.mxu0 %v2086
    %3065 = vmatmul.mubr.bf16.gmra.mrb[0].mxu0 %v2085
    %v3066 = vpop.f32.mrb[0].mxu0
    %v3067 = vadd.f32 %v2954, %v3066
    %v3068 = vpop.f32.mrb[0].mxu0
    %v3069 = vadd.f32 %v2956, %v3068
    %v3070 = vpop.f32.mrb[0].mxu0
    %v3071 = vadd.f32 %v2958, %v3070
    %v3072 = vpop.f32.mrb[0].mxu0
    %v3073 = vadd.f32 %v2960, %v3072
    %3074 = vmatprep.mubr.bf16.mxu0 %v2090
    %3075 = vmatmul.mubr.bf16.gmra.mrb[0].mxu0 %v2089
    %v3076 = vpop.f32.mrb[0].mxu0
    %v3077 = vadd.f32 %v2964, %v3076
    %v3078 = vpop.f32.mrb[0].mxu0
    %v3079 = vadd.f32 %v2966, %v3078
    %v3080 = vpop.f32.mrb[0].mxu0
    %v3081 = vadd.f32 %v2968, %v3080
    %v3082 = vpop.f32.mrb[0].mxu0
    %v3083 = vadd.f32 %v2970, %v3082
    %3084 = vmatprep.mubr.bf16.mxu0 %v2094
    %3085 = vmatmul.mubr.bf16.gmra.mrb[0].mxu0 %v2093
    %v3086 = vpop.f32.mrb[0].mxu0
    %v3087 = vadd.f32 %v2974, %v3086
    %v3088 = vpop.f32.mrb[0].mxu0
    %v3089 = vadd.f32 %v2976, %v3088
    %v3090 = vpop.f32.mrb[0].mxu0
    %v3091 = vadd.f32 %v2978, %v3090
    %v3092 = vpop.f32.mrb[0].mxu0
    %v3093 = vadd.f32 %v2980, %v3092
    %3094 = vmatprep.mubr.bf16.mxu0 %v2098
    %3095 = vmatmul.mubr.bf16.gmra.mrb[0].mxu0 %v2097
    %v3096 = vpop.f32.mrb[0].mxu0
    %v3097 = vadd.f32 %v2984, %v3096
    %v3098 = vpop.f32.mrb[0].mxu0
    %v3099 = vadd.f32 %v2986, %v3098
    %v3100 = vpop.f32.mrb[0].mxu0
    %v3101 = vadd.f32 %v2988, %v3100
    %v3102 = vpop.f32.mrb[0].mxu0
    %v3103 = vadd.f32 %v2990, %v3102
    %3104 = vmatprep.mubr.bf16.mxu0 %v2102
    %3105 = vmatmul.mubr.bf16.gmra.mrb[0].mxu0 %v2101
    %v3106 = vpop.f32.mrb[0].mxu0
    %v3107 = vadd.f32 %v2994, %v3106
    %v3108 = vpop.f32.mrb[0].mxu0
    %v3109 = vadd.f32 %v2996, %v3108
    %v3110 = vpop.f32.mrb[0].mxu0
    %v3111 = vadd.f32 %v2998, %v3110
    %v3112 = vpop.f32.mrb[0].mxu0
    %v3113 = vadd.f32 %v3000, %v3112
    %3114 = vmatprep.mubr.bf16.mxu0 %v2106
    %3115 = vmatmul.mubr.bf16.gmra.mrb[0].mxu0 %v2105
    %v3116 = vpop.f32.mrb[0].mxu0
    %v3117 = vadd.f32 %v3004, %v3116
    %v3118 = vpop.f32.mrb[0].mxu0
    %v3119 = vadd.f32 %v3006, %v3118
    %v3120 = vpop.f32.mrb[0].mxu0
    %v3121 = vadd.f32 %v3008, %v3120
    %v3122 = vpop.f32.mrb[0].mxu0
    %v3123 = vadd.f32 %v3010, %v3122
    %3124 = vdwg.mxu0
    %3125 = vmatprep.subr.bf16.mxu0 %v2646
    %3126 = vmatpush1.bf16.msra.mxu0 %v2645
    %3127 = vmatprep.subr.bf16.mxu0 %v2650
    %3128 = vmatpush1.bf16.msra.mxu0 %v2649
    %3129 = vmatprep.subr.bf16.mxu0 %v2654
    %3130 = vmatpush1.bf16.msra.mxu0 %v2653
    %3131 = vmatprep.subr.bf16.mxu0 %v2658
    %3132 = vmatpush1.bf16.msra.mxu0 %v2657
    %3133 = vmatprep.subr.bf16.mxu0 %v2662
    %3134 = vmatpush1.bf16.msra.mxu0 %v2661
    %3135 = vmatprep.subr.bf16.mxu0 %v2666
    %3136 = vmatpush1.bf16.msra.mxu0 %v2665
    %3137 = vmatprep.subr.bf16.mxu0 %v2670
    %3138 = vmatpush1.bf16.msra.mxu0 %v2669
    %3139 = vmatprep.subr.bf16.mxu0 %v2674
    %3140 = vmatpush1.bf16.msra.mxu0 %v2673
    %3141 = vmatprep.subr.bf16.mxu0 %v2678
    %3142 = vmatpush1.bf16.msra.mxu0 %v2677
    %3143 = vmatprep.subr.bf16.mxu0 %v2682
    %3144 = vmatpush1.bf16.msra.mxu0 %v2681
    %3145 = vmatprep.subr.bf16.mxu0 %v2686
    %3146 = vmatpush1.bf16.msra.mxu0 %v2685
    %3147 = vmatprep.subr.bf16.mxu0 %v2690
    %3148 = vmatpush1.bf16.msra.mxu0 %v2689
    %3149 = vmatprep.subr.bf16.mxu0 %v2694
    %3150 = vmatpush1.bf16.msra.mxu0 %v2693
    %3151 = vmatprep.subr.bf16.mxu0 %v2698
    %3152 = vmatpush1.bf16.msra.mxu0 %v2697
    %3153 = vmatprep.subr.bf16.mxu0 %v2702
    %3154 = vmatpush1.bf16.msra.mxu0 %v2701
    %3155 = vmatprep.subr.bf16.mxu0 %v2706
    %3156 = vmatpush1.bf16.msra.mxu0 %v2705
    %3157 = vmatprep.mubr.bf16.mxu0 %v2076
    %3158 = vmatmul.mubr.bf16.gmra.mrb[0].mxu0 %v2075
    %v3159 = vpop.f32.mrb[0].mxu0
    %v3160 = vadd.f32 %v2250, %v3159
    %v3161 = vpop.f32.mrb[0].mxu0
    %v3162 = vadd.f32 %v2254, %v3161
    %v3163 = vpop.f32.mrb[0].mxu0
    %v3164 = vadd.f32 %v2250, %v3163
    %v3165 = vpop.f32.mrb[0].mxu0
    %v3166 = vadd.f32 %v2254, %v3165
    %3167 = vmatprep.mubr.bf16.mxu0 %v2080
    %3168 = vmatmul.mubr.bf16.gmra.mrb[0].mxu0 %v2079
    %v3169 = vpop.f32.mrb[0].mxu0
    %v3170 = vadd.f32 %v2250, %v3169
    %v3171 = vpop.f32.mrb[0].mxu0
    %v3172 = vadd.f32 %v2254, %v3171
    %v3173 = vpop.f32.mrb[0].mxu0
    %v3174 = vadd.f32 %v2250, %v3173
    %v3175 = vpop.f32.mrb[0].mxu0
    %v3176 = vadd.f32 %v2254, %v3175
    %3177 = vmatprep.mubr.bf16.mxu0 %v2084
    %3178 = vmatmul.mubr.bf16.gmra.mrb[0].mxu0 %v2083
    %v3179 = vpop.f32.mrb[0].mxu0
    %v3180 = vadd.f32 %v2250, %v3179
    %v3181 = vpop.f32.mrb[0].mxu0
    %v3182 = vadd.f32 %v2254, %v3181
    %v3183 = vpop.f32.mrb[0].mxu0
    %v3184 = vadd.f32 %v2250, %v3183
    %v3185 = vpop.f32.mrb[0].mxu0
    %v3186 = vadd.f32 %v2254, %v3185
    %3187 = vmatprep.mubr.bf16.mxu0 %v2088
    %3188 = vmatmul.mubr.bf16.gmra.mrb[0].mxu0 %v2087
    %v3189 = vpop.f32.mrb[0].mxu0
    %v3190 = vadd.f32 %v2250, %v3189
    %v3191 = vpop.f32.mrb[0].mxu0
    %v3192 = vadd.f32 %v2254, %v3191
    %v3193 = vpop.f32.mrb[0].mxu0
    %v3194 = vadd.f32 %v2250, %v3193
    %v3195 = vpop.f32.mrb[0].mxu0
    %v3196 = vadd.f32 %v2254, %v3195
    %3197 = vmatprep.mubr.bf16.mxu0 %v2092
    %3198 = vmatmul.mubr.bf16.gmra.mrb[0].mxu0 %v2091
    %v3199 = vpop.f32.mrb[0].mxu0
    %v3200 = vadd.f32 %v2250, %v3199
    %v3201 = vpop.f32.mrb[0].mxu0
    %v3202 = vadd.f32 %v2254, %v3201
    %v3203 = vpop.f32.mrb[0].mxu0
    %v3204 = vadd.f32 %v2250, %v3203
    %v3205 = vpop.f32.mrb[0].mxu0
    %v3206 = vadd.f32 %v2254, %v3205
    %3207 = vmatprep.mubr.bf16.mxu0 %v2096
    %3208 = vmatmul.mubr.bf16.gmra.mrb[0].mxu0 %v2095
    %v3209 = vpop.f32.mrb[0].mxu0
    %v3210 = vadd.f32 %v2250, %v3209
    %v3211 = vpop.f32.mrb[0].mxu0
    %v3212 = vadd.f32 %v2254, %v3211
    %v3213 = vpop.f32.mrb[0].mxu0
    %v3214 = vadd.f32 %v2250, %v3213
    %v3215 = vpop.f32.mrb[0].mxu0
    %v3216 = vadd.f32 %v2254, %v3215
    %3217 = vmatprep.mubr.bf16.mxu0 %v2100
    %3218 = vmatmul.mubr.bf16.gmra.mrb[0].mxu0 %v2099
    %v3219 = vpop.f32.mrb[0].mxu0
    %v3220 = vadd.f32 %v2250, %v3219
    %v3221 = vpop.f32.mrb[0].mxu0
    %v3222 = vadd.f32 %v2254, %v3221
    %v3223 = vpop.f32.mrb[0].mxu0
    %v3224 = vadd.f32 %v2250, %v3223
    %v3225 = vpop.f32.mrb[0].mxu0
    %v3226 = vadd.f32 %v2254, %v3225
    %3227 = vmatprep.mubr.bf16.mxu0 %v2104
    %3228 = vmatmul.mubr.bf16.gmra.mrb[0].mxu0 %v2103
    %v3229 = vpop.f32.mrb[0].mxu0
    %v3230 = vadd.f32 %v2250, %v3229
    %v3231 = vpop.f32.mrb[0].mxu0
    %v3232 = vadd.f32 %v2254, %v3231
    %v3233 = vpop.f32.mrb[0].mxu0
    %v3234 = vadd.f32 %v2250, %v3233
    %v3235 = vpop.f32.mrb[0].mxu0
    %v3236 = vadd.f32 %v2254, %v3235
    %3237 = vdwg.mxu0
    %3238 = vmatprep.subr.bf16.mxu0 %v2710
    %3239 = vmatpush1.bf16.msra.mxu0 %v2709
    %3240 = vmatprep.subr.bf16.mxu0 %v2714
    %3241 = vmatpush1.bf16.msra.mxu0 %v2713
    %3242 = vmatprep.subr.bf16.mxu0 %v2718
    %3243 = vmatpush1.bf16.msra.mxu0 %v2717
    %3244 = vmatprep.subr.bf16.mxu0 %v2722
    %3245 = vmatpush1.bf16.msra.mxu0 %v2721
    %3246 = vmatprep.subr.bf16.mxu0 %v2726
    %3247 = vmatpush1.bf16.msra.mxu0 %v2725
    %3248 = vmatprep.subr.bf16.mxu0 %v2730
    %3249 = vmatpush1.bf16.msra.mxu0 %v2729
    %3250 = vmatprep.subr.bf16.mxu0 %v2734
    %3251 = vmatpush1.bf16.msra.mxu0 %v2733
    %3252 = vmatprep.subr.bf16.mxu0 %v2738
    %3253 = vmatpush1.bf16.msra.mxu0 %v2737
    %3254 = vmatprep.subr.bf16.mxu0 %v2742
    %3255 = vmatpush1.bf16.msra.mxu0 %v2741
    %3256 = vmatprep.subr.bf16.mxu0 %v2746
    %3257 = vmatpush1.bf16.msra.mxu0 %v2745
    %3258 = vmatprep.subr.bf16.mxu0 %v2750
    %3259 = vmatpush1.bf16.msra.mxu0 %v2749
    %3260 = vmatprep.subr.bf16.mxu0 %v2754
    %3261 = vmatpush1.bf16.msra.mxu0 %v2753
    %3262 = vmatprep.subr.bf16.mxu0 %v2758
    %3263 = vmatpush1.bf16.msra.mxu0 %v2757
    %3264 = vmatprep.subr.bf16.mxu0 %v2762
    %3265 = vmatpush1.bf16.msra.mxu0 %v2761
    %3266 = vmatprep.subr.bf16.mxu0 %v2766
    %3267 = vmatpush1.bf16.msra.mxu0 %v2765
    %3268 = vmatprep.subr.bf16.mxu0 %v2770
    %3269 = vmatpush1.bf16.msra.mxu0 %v2769
    %3270 = vmatprep.mubr.bf16.mxu0 %v2078
    %3271 = vmatmul.mubr.bf16.gmra.mrb[0].mxu0 %v2077
    %v3272 = vpop.f32.mrb[0].mxu0
    %v3273 = vadd.f32 %v3160, %v3272
    %v3274 = vpop.f32.mrb[0].mxu0
    %v3275 = vadd.f32 %v3162, %v3274
    %v3276 = vpop.f32.mrb[0].mxu0
    %v3277 = vadd.f32 %v3164, %v3276
    %v3278 = vpop.f32.mrb[0].mxu0
    %v3279 = vadd.f32 %v3166, %v3278
    %3280 = vmatprep.mubr.bf16.mxu0 %v2082
    %3281 = vmatmul.mubr.bf16.gmra.mrb[0].mxu0 %v2081
    %v3282 = vpop.f32.mrb[0].mxu0
    %v3283 = vadd.f32 %v3170, %v3282
    %v3284 = vpop.f32.mrb[0].mxu0
    %v3285 = vadd.f32 %v3172, %v3284
    %v3286 = vpop.f32.mrb[0].mxu0
    %v3287 = vadd.f32 %v3174, %v3286
    %v3288 = vpop.f32.mrb[0].mxu0
    %v3289 = vadd.f32 %v3176, %v3288
    %3290 = vmatprep.mubr.bf16.mxu0 %v2086
    %3291 = vmatmul.mubr.bf16.gmra.mrb[0].mxu0 %v2085
    %v3292 = vpop.f32.mrb[0].mxu0
    %v3293 = vadd.f32 %v3180, %v3292
    %v3294 = vpop.f32.mrb[0].mxu0
    %v3295 = vadd.f32 %v3182, %v3294
    %v3296 = vpop.f32.mrb[0].mxu0
    %v3297 = vadd.f32 %v3184, %v3296
    %v3298 = vpop.f32.mrb[0].mxu0
    %v3299 = vadd.f32 %v3186, %v3298
    %3300 = vmatprep.mubr.bf16.mxu0 %v2090
    %3301 = vmatmul.mubr.bf16.gmra.mrb[0].mxu0 %v2089
    %v3302 = vpop.f32.mrb[0].mxu0
    %v3303 = vadd.f32 %v3190, %v3302
    %v3304 = vpop.f32.mrb[0].mxu0
    %v3305 = vadd.f32 %v3192, %v3304
    %v3306 = vpop.f32.mrb[0].mxu0
    %v3307 = vadd.f32 %v3194, %v3306
    %v3308 = vpop.f32.mrb[0].mxu0
    %v3309 = vadd.f32 %v3196, %v3308
    %3310 = vmatprep.mubr.bf16.mxu0 %v2094
    %3311 = vmatmul.mubr.bf16.gmra.mrb[0].mxu0 %v2093
    %v3312 = vpop.f32.mrb[0].mxu0
    %v3313 = vadd.f32 %v3200, %v3312
    %v3314 = vpop.f32.mrb[0].mxu0
    %v3315 = vadd.f32 %v3202, %v3314
    %v3316 = vpop.f32.mrb[0].mxu0
    %v3317 = vadd.f32 %v3204, %v3316
    %v3318 = vpop.f32.mrb[0].mxu0
    %v3319 = vadd.f32 %v3206, %v3318
    %3320 = vmatprep.mubr.bf16.mxu0 %v2098
    %3321 = vmatmul.mubr.bf16.gmra.mrb[0].mxu0 %v2097
    %v3322 = vpop.f32.mrb[0].mxu0
    %v3323 = vadd.f32 %v3210, %v3322
    %v3324 = vpop.f32.mrb[0].mxu0
    %v3325 = vadd.f32 %v3212, %v3324
    %v3326 = vpop.f32.mrb[0].mxu0
    %v3327 = vadd.f32 %v3214, %v3326
    %v3328 = vpop.f32.mrb[0].mxu0
    %v3329 = vadd.f32 %v3216, %v3328
    %3330 = vmatprep.mubr.bf16.mxu0 %v2102
    %3331 = vmatmul.mubr.bf16.gmra.mrb[0].mxu0 %v2101
    %v3332 = vpop.f32.mrb[0].mxu0
    %v3333 = vadd.f32 %v3220, %v3332
    %v3334 = vpop.f32.mrb[0].mxu0
    %v3335 = vadd.f32 %v3222, %v3334
    %v3336 = vpop.f32.mrb[0].mxu0
    %v3337 = vadd.f32 %v3224, %v3336
    %v3338 = vpop.f32.mrb[0].mxu0
    %v3339 = vadd.f32 %v3226, %v3338
    %3340 = vmatprep.mubr.bf16.mxu0 %v2106
    %3341 = vmatmul.mubr.bf16.gmra.mrb[0].mxu0 %v2105
    %v3342 = vpop.f32.mrb[0].mxu0
    %v3343 = vadd.f32 %v3230, %v3342
    %v3344 = vpop.f32.mrb[0].mxu0
    %v3345 = vadd.f32 %v3232, %v3344
    %v3346 = vpop.f32.mrb[0].mxu0
    %v3347 = vadd.f32 %v3234, %v3346
    %v3348 = vpop.f32.mrb[0].mxu0
    %v3349 = vadd.f32 %v3236, %v3348
    %3350 = vdwg.mxu0
    %v3351 = vmax.f32 %v3047, 0.0
    %v3352 = vmax.f32 %v3049, 0.0
    %v3353 = vmax.f32 %v3273, 0.0
    %v3354 = vmax.f32 %v3275, 0.0
    %v3355 = vmax.f32 %v3051, 0.0
    %v3356 = vmax.f32 %v3053, 0.0
    %v3357 = vmax.f32 %v3277, 0.0
    %v3358 = vmax.f32 %v3279, 0.0
    %v3359 = vmax.f32 %v3057, 0.0
    %v3360 = vmax.f32 %v3059, 0.0
    %v3361 = vmax.f32 %v3283, 0.0
    %v3362 = vmax.f32 %v3285, 0.0
    %v3363 = vmax.f32 %v3061, 0.0
    %v3364 = vmax.f32 %v3063, 0.0
    %v3365 = vmax.f32 %v3287, 0.0
    %v3366 = vmax.f32 %v3289, 0.0
    %v3367 = vmax.f32 %v3067, 0.0
    %v3368 = vmax.f32 %v3069, 0.0
    %v3369 = vmax.f32 %v3293, 0.0
    %v3370 = vmax.f32 %v3295, 0.0
    %v3371 = vmax.f32 %v3071, 0.0
    %v3372 = vmax.f32 %v3073, 0.0
    %v3373 = vmax.f32 %v3297, 0.0
    %v3374 = vmax.f32 %v3299, 0.0
    %v3375 = vmax.f32 %v3077, 0.0
    %v3376 = vmax.f32 %v3079, 0.0
    %v3377 = vmax.f32 %v3303, 0.0
    %v3378 = vmax.f32 %v3305, 0.0
    %v3379 = vmax.f32 %v3081, 0.0
    %v3380 = vmax.f32 %v3083, 0.0
    %v3381 = vmax.f32 %v3307, 0.0
    %v3382 = vmax.f32 %v3309, 0.0
    %v3383 = vmax.f32 %v3087, 0.0
    %v3384 = vmax.f32 %v3089, 0.0
    %v3385 = vmax.f32 %v3313, 0.0
    %v3386 = vmax.f32 %v3315, 0.0
    %v3387 = vmax.f32 %v3091, 0.0
    %v3388 = vmax.f32 %v3093, 0.0
    %v3389 = vmax.f32 %v3317, 0.0
    %v3390 = vmax.f32 %v3319, 0.0
    %v3391 = vmax.f32 %v3097, 0.0
    %v3392 = vmax.f32 %v3099, 0.0
    %v3393 = vmax.f32 %v3323, 0.0
    %v3394 = vmax.f32 %v3325, 0.0
    %v3395 = vmax.f32 %v3101, 0.0
    %v3396 = vmax.f32 %v3103, 0.0
    %v3397 = vmax.f32 %v3327, 0.0
    %v3398 = vmax.f32 %v3329, 0.0
    %v3399 = vmax.f32 %v3107, 0.0
    %v3400 = vmax.f32 %v3109, 0.0
    %v3401 = vmax.f32 %v3333, 0.0
    %v3402 = vmax.f32 %v3335, 0.0
    %v3403 = vmax.f32 %v3111, 0.0
    %v3404 = vmax.f32 %v3113, 0.0
    %v3405 = vmax.f32 %v3337, 0.0
    %v3406 = vmax.f32 %v3339, 0.0
    %v3407 = vmax.f32 %v3117, 0.0
    %v3408 = vmax.f32 %v3119, 0.0
    %v3409 = vmax.f32 %v3343, 0.0
    %v3410 = vmax.f32 %v3345, 0.0
    %v3411 = vmax.f32 %v3121, 0.0
    %v3412 = vmax.f32 %v3123, 0.0
    %v3413 = vmax.f32 %v3347, 0.0
    %v3414 = vmax.f32 %v3349, 0.0
    %v3415 = vadd.f32 %v2011, %v3351
    %v3416 = vadd.f32 %v2012, %v3352
    %v3417 = vadd.f32 %v2013, %v3353
    %v3418 = vadd.f32 %v2014, %v3354
    %v3419 = vadd.f32 %v2015, %v3355
    %v3420 = vadd.f32 %v2016, %v3356
    %v3421 = vadd.f32 %v2017, %v3357
    %v3422 = vadd.f32 %v2018, %v3358
    %v3423 = vadd.f32 %v2019, %v3359
    %v3424 = vadd.f32 %v2020, %v3360
    %v3425 = vadd.f32 %v2021, %v3361
    %v3426 = vadd.f32 %v2022, %v3362
    %v3427 = vadd.f32 %v2023, %v3363
    %v3428 = vadd.f32 %v2024, %v3364
    %v3429 = vadd.f32 %v2025, %v3365
    %v3430 = vadd.f32 %v2026, %v3366
    %v3431 = vadd.f32 %v2027, %v3367
    %v3432 = vadd.f32 %v2028, %v3368
    %v3433 = vadd.f32 %v2029, %v3369
    %v3434 = vadd.f32 %v2030, %v3370
    %v3435 = vadd.f32 %v2031, %v3371
    %v3436 = vadd.f32 %v2032, %v3372
    %v3437 = vadd.f32 %v2033, %v3373
    %v3438 = vadd.f32 %v2034, %v3374
    %v3439 = vadd.f32 %v2035, %v3375
    %v3440 = vadd.f32 %v2036, %v3376
    %v3441 = vadd.f32 %v2037, %v3377
    %v3442 = vadd.f32 %v2038, %v3378
    %v3443 = vadd.f32 %v2039, %v3379
    %v3444 = vadd.f32 %v2040, %v3380
    %v3445 = vadd.f32 %v2041, %v3381
    %v3446 = vadd.f32 %v2042, %v3382
    %v3447 = vadd.f32 %v2043, %v3383
    %v3448 = vadd.f32 %v2044, %v3384
    %v3449 = vadd.f32 %v2045, %v3385
    %v3450 = vadd.f32 %v2046, %v3386
    %v3451 = vadd.f32 %v2047, %v3387
    %v3452 = vadd.f32 %v2048, %v3388
    %v3453 = vadd.f32 %v2049, %v3389
    %v3454 = vadd.f32 %v2050, %v3390
    %v3455 = vadd.f32 %v2051, %v3391
    %v3456 = vadd.f32 %v2052, %v3392
    %v3457 = vadd.f32 %v2053, %v3393
    %v3458 = vadd.f32 %v2054, %v3394
    %v3459 = vadd.f32 %v2055, %v3395
    %v3460 = vadd.f32 %v2056, %v3396
    %v3461 = vadd.f32 %v2057, %v3397
    %v3462 = vadd.f32 %v2058, %v3398
    %v3463 = vadd.f32 %v2059, %v3399
    %v3464 = vadd.f32 %v2060, %v3400
    %v3465 = vadd.f32 %v2061, %v3401
    %v3466 = vadd.f32 %v2062, %v3402
    %v3467 = vadd.f32 %v2063, %v3403
    %v3468 = vadd.f32 %v2064, %v3404
    %v3469 = vadd.f32 %v2065, %v3405
    %v3470 = vadd.f32 %v2066, %v3406
    %v3471 = vadd.f32 %v2067, %v3407
    %v3472 = vadd.f32 %v2068, %v3408
    %v3473 = vadd.f32 %v2069, %v3409
    %v3474 = vadd.f32 %v2070, %v3410
    %v3475 = vadd.f32 %v2071, %v3411
    %v3476 = vadd.f32 %v2072, %v3412
    %v3477 = vadd.f32 %v2073, %v3413
    %v3478 = vadd.f32 %v2074, %v3414
    %v3479 = vpack.c.bf16 %v3419, %v3415
    %v3480 = vpack.c.bf16 %v3420, %v3416
    %v3481 = vpack.c.bf16 %v3421, %v3417
    %v3482 = vpack.c.bf16 %v3422, %v3418
    %v3483 = vpack.c.bf16 %v3427, %v3423
    %v3484 = vpack.c.bf16 %v3428, %v3424
    %v3485 = vpack.c.bf16 %v3429, %v3425
    %v3486 = vpack.c.bf16 %v3430, %v3426
    %v3487 = vpack.c.bf16 %v3435, %v3431
    %v3488 = vpack.c.bf16 %v3436, %v3432
    %v3489 = vpack.c.bf16 %v3437, %v3433
    %v3490 = vpack.c.bf16 %v3438, %v3434
    %v3491 = vpack.c.bf16 %v3443, %v3439
    %v3492 = vpack.c.bf16 %v3444, %v3440
    %v3493 = vpack.c.bf16 %v3445, %v3441
    %v3494 = vpack.c.bf16 %v3446, %v3442
    %v3495 = vpack.c.bf16 %v3451, %v3447
    %v3496 = vpack.c.bf16 %v3452, %v3448
    %v3497 = vpack.c.bf16 %v3453, %v3449
    %v3498 = vpack.c.bf16 %v3454, %v3450
    %v3499 = vpack.c.bf16 %v3459, %v3455
    %v3500 = vpack.c.bf16 %v3460, %v3456
    %v3501 = vpack.c.bf16 %v3461, %v3457
    %v3502 = vpack.c.bf16 %v3462, %v3458
    %v3503 = vpack.c.bf16 %v3467, %v3463
    %v3504 = vpack.c.bf16 %v3468, %v3464
    %v3505 = vpack.c.bf16 %v3469, %v3465
    %v3506 = vpack.c.bf16 %v3470, %v3466
    %v3507 = vpack.c.bf16 %v3475, %v3471
    %v3508 = vpack.c.bf16 %v3476, %v3472
    %v3509 = vpack.c.bf16 %v3477, %v3473
    %v3510 = vpack.c.bf16 %v3478, %v3474
    %s3511 = scalar_lea.vmem [#allocation6], 2048
    %v3512 = vld [vmem:[%s3511] sm:$0xff]
    %v3513 = vld [vmem:[%s3511 + $0x8] sm:$0xff]
    %v3514 = vld [vmem:[%s3511 + $0x10] sm:$0xff]
    %v3515 = vld [vmem:[%s3511 + $0x18] sm:$0xff]
    %v3516 = vld [vmem:[%s3511 + $0x20] sm:$0xff]
    %v3517 = vld [vmem:[%s3511 + $0x28] sm:$0xff]
    %v3518 = vld [vmem:[%s3511 + $0x30] sm:$0xff]
    %v3519 = vld [vmem:[%s3511 + $0x38] sm:$0xff]
    %v3520 = vld [vmem:[%s3511 + $0x40] sm:$0xff]
    %v3521 = vld [vmem:[%s3511 + $0x48] sm:$0xff]
    %v3522 = vld [vmem:[%s3511 + $0x50] sm:$0xff]
    %v3523 = vld [vmem:[%s3511 + $0x58] sm:$0xff]
    %v3524 = vld [vmem:[%s3511 + $0x60] sm:$0xff]
    %v3525 = vld [vmem:[%s3511 + $0x68] sm:$0xff]
    %v3526 = vld [vmem:[%s3511 + $0x70] sm:$0xff]
    %v3527 = vld [vmem:[%s3511 + $0x78] sm:$0xff]
    %v3528 = vld [vmem:[%s3511 + $0x80] sm:$0xff]
    %v3529 = vld [vmem:[%s3511 + $0x88] sm:$0xff]
    %v3530 = vld [vmem:[%s3511 + $0x90] sm:$0xff]
    %v3531 = vld [vmem:[%s3511 + $0x98] sm:$0xff]
    %v3532 = vld [vmem:[%s3511 + $0xa0] sm:$0xff]
    %v3533 = vld [vmem:[%s3511 + $0xa8] sm:$0xff]
    %v3534 = vld [vmem:[%s3511 + $0xb0] sm:$0xff]
    %v3535 = vld [vmem:[%s3511 + $0xb8] sm:$0xff]
    %v3536 = vld [vmem:[%s3511 + $0xc0] sm:$0xff]
    %v3537 = vld [vmem:[%s3511 + $0xc8] sm:$0xff]
    %v3538 = vld [vmem:[%s3511 + $0xd0] sm:$0xff]
    %v3539 = vld [vmem:[%s3511 + $0xd8] sm:$0xff]
    %v3540 = vld [vmem:[%s3511 + $0xe0] sm:$0xff]
    %v3541 = vld [vmem:[%s3511 + $0xe8] sm:$0xff]
    %v3542 = vld [vmem:[%s3511 + $0xf0] sm:$0xff]
    %v3543 = vld [vmem:[%s3511 + $0xf8] sm:$0xff]
    %v3544 = vld [vmem:[%s3511 + $0x100] sm:$0xff]
    %v3545 = vld [vmem:[%s3511 + $0x108] sm:$0xff]
    %v3546 = vld [vmem:[%s3511 + $0x110] sm:$0xff]
    %v3547 = vld [vmem:[%s3511 + $0x118] sm:$0xff]
    %v3548 = vld [vmem:[%s3511 + $0x120] sm:$0xff]
    %v3549 = vld [vmem:[%s3511 + $0x128] sm:$0xff]
    %v3550 = vld [vmem:[%s3511 + $0x130] sm:$0xff]
    %v3551 = vld [vmem:[%s3511 + $0x138] sm:$0xff]
    %v3552 = vld [vmem:[%s3511 + $0x140] sm:$0xff]
    %v3553 = vld [vmem:[%s3511 + $0x148] sm:$0xff]
    %v3554 = vld [vmem:[%s3511 + $0x150] sm:$0xff]
    %v3555 = vld [vmem:[%s3511 + $0x158] sm:$0xff]
    %v3556 = vld [vmem:[%s3511 + $0x160] sm:$0xff]
    %v3557 = vld [vmem:[%s3511 + $0x168] sm:$0xff]
    %v3558 = vld [vmem:[%s3511 + $0x170] sm:$0xff]
    %v3559 = vld [vmem:[%s3511 + $0x178] sm:$0xff]
    %v3560 = vld [vmem:[%s3511 + $0x180] sm:$0xff]
    %v3561 = vld [vmem:[%s3511 + $0x188] sm:$0xff]
    %v3562 = vld [vmem:[%s3511 + $0x190] sm:$0xff]
    %v3563 = vld [vmem:[%s3511 + $0x198] sm:$0xff]
    %v3564 = vld [vmem:[%s3511 + $0x1a0] sm:$0xff]
    %v3565 = vld [vmem:[%s3511 + $0x1a8] sm:$0xff]
    %v3566 = vld [vmem:[%s3511 + $0x1b0] sm:$0xff]
    %v3567 = vld [vmem:[%s3511 + $0x1b8] sm:$0xff]
    %v3568 = vld [vmem:[%s3511 + $0x1c0] sm:$0xff]
    %v3569 = vld [vmem:[%s3511 + $0x1c8] sm:$0xff]
    %v3570 = vld [vmem:[%s3511 + $0x1d0] sm:$0xff]
    %v3571 = vld [vmem:[%s3511 + $0x1d8] sm:$0xff]
    %v3572 = vld [vmem:[%s3511 + $0x1e0] sm:$0xff]
    %v3573 = vld [vmem:[%s3511 + $0x1e8] sm:$0xff]
    %v3574 = vld [vmem:[%s3511 + $0x1f0] sm:$0xff]
    %v3575 = vld [vmem:[%s3511 + $0x1f8] sm:$0xff]
    %v3576 = vld [vmem:[%s3511 + $0x200] sm:$0xff]
    %v3577 = vld [vmem:[%s3511 + $0x208] sm:$0xff]
    %v3578 = vld [vmem:[%s3511 + $0x210] sm:$0xff]
    %v3579 = vld [vmem:[%s3511 + $0x218] sm:$0xff]
    %v3580 = vld [vmem:[%s3511 + $0x220] sm:$0xff]
    %v3581 = vld [vmem:[%s3511 + $0x228] sm:$0xff]
    %v3582 = vld [vmem:[%s3511 + $0x230] sm:$0xff]
    %v3583 = vld [vmem:[%s3511 + $0x238] sm:$0xff]
    %v3584 = vld [vmem:[%s3511 + $0x240] sm:$0xff]
    %v3585 = vld [vmem:[%s3511 + $0x248] sm:$0xff]
    %v3586 = vld [vmem:[%s3511 + $0x250] sm:$0xff]
    %v3587 = vld [vmem:[%s3511 + $0x258] sm:$0xff]
    %v3588 = vld [vmem:[%s3511 + $0x260] sm:$0xff]
    %v3589 = vld [vmem:[%s3511 + $0x268] sm:$0xff]
    %v3590 = vld [vmem:[%s3511 + $0x270] sm:$0xff]
    %v3591 = vld [vmem:[%s3511 + $0x278] sm:$0xff]
    %v3592 = vld [vmem:[%s3511 + $0x280] sm:$0xff]
    %v3593 = vld [vmem:[%s3511 + $0x288] sm:$0xff]
    %v3594 = vld [vmem:[%s3511 + $0x290] sm:$0xff]
    %v3595 = vld [vmem:[%s3511 + $0x298] sm:$0xff]
    %v3596 = vld [vmem:[%s3511 + $0x2a0] sm:$0xff]
    %v3597 = vld [vmem:[%s3511 + $0x2a8] sm:$0xff]
    %v3598 = vld [vmem:[%s3511 + $0x2b0] sm:$0xff]
    %v3599 = vld [vmem:[%s3511 + $0x2b8] sm:$0xff]
    %v3600 = vld [vmem:[%s3511 + $0x2c0] sm:$0xff]
    %v3601 = vld [vmem:[%s3511 + $0x2c8] sm:$0xff]
    %v3602 = vld [vmem:[%s3511 + $0x2d0] sm:$0xff]
    %v3603 = vld [vmem:[%s3511 + $0x2d8] sm:$0xff]
    %v3604 = vld [vmem:[%s3511 + $0x2e0] sm:$0xff]
    %v3605 = vld [vmem:[%s3511 + $0x2e8] sm:$0xff]
    %v3606 = vld [vmem:[%s3511 + $0x2f0] sm:$0xff]
    %v3607 = vld [vmem:[%s3511 + $0x2f8] sm:$0xff]
    %v3608 = vld [vmem:[%s3511 + $0x300] sm:$0xff]
    %v3609 = vld [vmem:[%s3511 + $0x308] sm:$0xff]
    %v3610 = vld [vmem:[%s3511 + $0x310] sm:$0xff]
    %v3611 = vld [vmem:[%s3511 + $0x318] sm:$0xff]
    %v3612 = vld [vmem:[%s3511 + $0x320] sm:$0xff]
    %v3613 = vld [vmem:[%s3511 + $0x328] sm:$0xff]
    %v3614 = vld [vmem:[%s3511 + $0x330] sm:$0xff]
    %v3615 = vld [vmem:[%s3511 + $0x338] sm:$0xff]
    %v3616 = vld [vmem:[%s3511 + $0x340] sm:$0xff]
    %v3617 = vld [vmem:[%s3511 + $0x348] sm:$0xff]
    %v3618 = vld [vmem:[%s3511 + $0x350] sm:$0xff]
    %v3619 = vld [vmem:[%s3511 + $0x358] sm:$0xff]
    %v3620 = vld [vmem:[%s3511 + $0x360] sm:$0xff]
    %v3621 = vld [vmem:[%s3511 + $0x368] sm:$0xff]
    %v3622 = vld [vmem:[%s3511 + $0x370] sm:$0xff]
    %v3623 = vld [vmem:[%s3511 + $0x378] sm:$0xff]
    %v3624 = vld [vmem:[%s3511 + $0x380] sm:$0xff]
    %v3625 = vld [vmem:[%s3511 + $0x388] sm:$0xff]
    %v3626 = vld [vmem:[%s3511 + $0x390] sm:$0xff]
    %v3627 = vld [vmem:[%s3511 + $0x398] sm:$0xff]
    %v3628 = vld [vmem:[%s3511 + $0x3a0] sm:$0xff]
    %v3629 = vld [vmem:[%s3511 + $0x3a8] sm:$0xff]
    %v3630 = vld [vmem:[%s3511 + $0x3b0] sm:$0xff]
    %v3631 = vld [vmem:[%s3511 + $0x3b8] sm:$0xff]
    %v3632 = vld [vmem:[%s3511 + $0x3c0] sm:$0xff]
    %v3633 = vld [vmem:[%s3511 + $0x3c8] sm:$0xff]
    %v3634 = vld [vmem:[%s3511 + $0x3d0] sm:$0xff]
    %v3635 = vld [vmem:[%s3511 + $0x3d8] sm:$0xff]
    %v3636 = vld [vmem:[%s3511 + $0x3e0] sm:$0xff]
    %v3637 = vld [vmem:[%s3511 + $0x3e8] sm:$0xff]
    %v3638 = vld [vmem:[%s3511 + $0x3f0] sm:$0xff]
    %v3639 = vld [vmem:[%s3511 + $0x3f8] sm:$0xff]
    %s3640 = scalar_lea.vmem [#allocation7], 8
    %v3641 = vld [vmem:[%s3640] sm:$0xf]
    %v3643 = vlaneseq
    %v3644 = vshrl.u32 %v3643, 7
    %v3645 = vsub.s32 0, %v3644
    %v3646 = vrot.slane %v3641, %v3645
    %v3647 = vlaneseq
    %v3648 = vshrl.u32 %v3647, 7
    %v3649 = vsub.s32 1, %v3648
    %v3650 = vrot.slane %v3641, %v3649
    %v3651 = vlaneseq
    %v3652 = vshrl.u32 %v3651, 7
    %v3653 = vsub.s32 2, %v3652
    %v3654 = vrot.slane %v3641, %v3653
    %v3655 = vlaneseq
    %v3656 = vshrl.u32 %v3655, 7
    %v3657 = vsub.s32 3, %v3656
    %v3658 = vrot.slane %v3641, %v3657
    %v3791 = vunpack.c.l.b16 %v3512
    %v3792 = vunpack.c.h.b16 %v3512
    %v3793 = vunpack.c.l.b16 %v3513
    %v3794 = vunpack.c.h.b16 %v3513
    %v3795 = vunpack.c.l.b16 %v3514
    %v3796 = vunpack.c.h.b16 %v3514
    %v3797 = vunpack.c.l.b16 %v3515
    %v3798 = vunpack.c.h.b16 %v3515
    %v3799 = vunpack.c.l.b16 %v3516
    %v3800 = vunpack.c.h.b16 %v3516
    %v3801 = vunpack.c.l.b16 %v3517
    %v3802 = vunpack.c.h.b16 %v3517
    %v3803 = vunpack.c.l.b16 %v3518
    %v3804 = vunpack.c.h.b16 %v3518
    %v3805 = vunpack.c.l.b16 %v3519
    %v3806 = vunpack.c.h.b16 %v3519
    %v3807 = vunpack.c.l.b16 %v3520
    %v3808 = vunpack.c.h.b16 %v3520
    %v3809 = vunpack.c.l.b16 %v3521
    %v3810 = vunpack.c.h.b16 %v3521
    %v3811 = vunpack.c.l.b16 %v3522
    %v3812 = vunpack.c.h.b16 %v3522
    %v3813 = vunpack.c.l.b16 %v3523
    %v3814 = vunpack.c.h.b16 %v3523
    %v3815 = vunpack.c.l.b16 %v3524
    %v3816 = vunpack.c.h.b16 %v3524
    %v3817 = vunpack.c.l.b16 %v3525
    %v3818 = vunpack.c.h.b16 %v3525
    %v3819 = vunpack.c.l.b16 %v3526
    %v3820 = vunpack.c.h.b16 %v3526
    %v3821 = vunpack.c.l.b16 %v3527
    %v3822 = vunpack.c.h.b16 %v3527
    %v3823 = vunpack.c.l.b16 %v3528
    %v3824 = vunpack.c.h.b16 %v3528
    %v3825 = vunpack.c.l.b16 %v3529
    %v3826 = vunpack.c.h.b16 %v3529
    %v3827 = vunpack.c.l.b16 %v3530
    %v3828 = vunpack.c.h.b16 %v3530
    %v3829 = vunpack.c.l.b16 %v3531
    %v3830 = vunpack.c.h.b16 %v3531
    %v3831 = vunpack.c.l.b16 %v3532
    %v3832 = vunpack.c.h.b16 %v3532
    %v3833 = vunpack.c.l.b16 %v3533
    %v3834 = vunpack.c.h.b16 %v3533
    %v3835 = vunpack.c.l.b16 %v3534
    %v3836 = vunpack.c.h.b16 %v3534
    %v3837 = vunpack.c.l.b16 %v3535
    %v3838 = vunpack.c.h.b16 %v3535
    %v3839 = vunpack.c.l.b16 %v3536
    %v3840 = vunpack.c.h.b16 %v3536
    %v3841 = vunpack.c.l.b16 %v3537
    %v3842 = vunpack.c.h.b16 %v3537
    %v3843 = vunpack.c.l.b16 %v3538
    %v3844 = vunpack.c.h.b16 %v3538
    %v3845 = vunpack.c.l.b16 %v3539
    %v3846 = vunpack.c.h.b16 %v3539
    %v3847 = vunpack.c.l.b16 %v3540
    %v3848 = vunpack.c.h.b16 %v3540
    %v3849 = vunpack.c.l.b16 %v3541
    %v3850 = vunpack.c.h.b16 %v3541
    %v3851 = vunpack.c.l.b16 %v3542
    %v3852 = vunpack.c.h.b16 %v3542
    %v3853 = vunpack.c.l.b16 %v3543
    %v3854 = vunpack.c.h.b16 %v3543
    %v3855 = vunpack.c.l.b16 %v3544
    %v3856 = vunpack.c.h.b16 %v3544
    %v3857 = vunpack.c.l.b16 %v3545
    %v3858 = vunpack.c.h.b16 %v3545
    %v3859 = vunpack.c.l.b16 %v3546
    %v3860 = vunpack.c.h.b16 %v3546
    %v3861 = vunpack.c.l.b16 %v3547
    %v3862 = vunpack.c.h.b16 %v3547
    %v3863 = vunpack.c.l.b16 %v3548
    %v3864 = vunpack.c.h.b16 %v3548
    %v3865 = vunpack.c.l.b16 %v3549
    %v3866 = vunpack.c.h.b16 %v3549
    %v3867 = vunpack.c.l.b16 %v3550
    %v3868 = vunpack.c.h.b16 %v3550
    %v3869 = vunpack.c.l.b16 %v3551
    %v3870 = vunpack.c.h.b16 %v3551
    %v3871 = vunpack.c.l.b16 %v3552
    %v3872 = vunpack.c.h.b16 %v3552
    %v3873 = vunpack.c.l.b16 %v3553
    %v3874 = vunpack.c.h.b16 %v3553
    %v3875 = vunpack.c.l.b16 %v3554
    %v3876 = vunpack.c.h.b16 %v3554
    %v3877 = vunpack.c.l.b16 %v3555
    %v3878 = vunpack.c.h.b16 %v3555
    %v3879 = vunpack.c.l.b16 %v3556
    %v3880 = vunpack.c.h.b16 %v3556
    %v3881 = vunpack.c.l.b16 %v3557
    %v3882 = vunpack.c.h.b16 %v3557
    %v3883 = vunpack.c.l.b16 %v3558
    %v3884 = vunpack.c.h.b16 %v3558
    %v3885 = vunpack.c.l.b16 %v3559
    %v3886 = vunpack.c.h.b16 %v3559
    %v3887 = vunpack.c.l.b16 %v3560
    %v3888 = vunpack.c.h.b16 %v3560
    %v3889 = vunpack.c.l.b16 %v3561
    %v3890 = vunpack.c.h.b16 %v3561
    %v3891 = vunpack.c.l.b16 %v3562
    %v3892 = vunpack.c.h.b16 %v3562
    %v3893 = vunpack.c.l.b16 %v3563
    %v3894 = vunpack.c.h.b16 %v3563
    %v3895 = vunpack.c.l.b16 %v3564
    %v3896 = vunpack.c.h.b16 %v3564
    %v3897 = vunpack.c.l.b16 %v3565
    %v3898 = vunpack.c.h.b16 %v3565
    %v3899 = vunpack.c.l.b16 %v3566
    %v3900 = vunpack.c.h.b16 %v3566
    %v3901 = vunpack.c.l.b16 %v3567
    %v3902 = vunpack.c.h.b16 %v3567
    %v3903 = vunpack.c.l.b16 %v3568
    %v3904 = vunpack.c.h.b16 %v3568
    %v3905 = vunpack.c.l.b16 %v3569
    %v3906 = vunpack.c.h.b16 %v3569
    %v3907 = vunpack.c.l.b16 %v3570
    %v3908 = vunpack.c.h.b16 %v3570
    %v3909 = vunpack.c.l.b16 %v3571
    %v3910 = vunpack.c.h.b16 %v3571
    %v3911 = vunpack.c.l.b16 %v3572
    %v3912 = vunpack.c.h.b16 %v3572
    %v3913 = vunpack.c.l.b16 %v3573
    %v3914 = vunpack.c.h.b16 %v3573
    %v3915 = vunpack.c.l.b16 %v3574
    %v3916 = vunpack.c.h.b16 %v3574
    %v3917 = vunpack.c.l.b16 %v3575
    %v3918 = vunpack.c.h.b16 %v3575
    %v3919 = vunpack.c.l.b16 %v3576
    %v3920 = vunpack.c.h.b16 %v3576
    %v3921 = vunpack.c.l.b16 %v3577
    %v3922 = vunpack.c.h.b16 %v3577
    %v3923 = vunpack.c.l.b16 %v3578
    %v3924 = vunpack.c.h.b16 %v3578
    %v3925 = vunpack.c.l.b16 %v3579
    %v3926 = vunpack.c.h.b16 %v3579
    %v3927 = vunpack.c.l.b16 %v3580
    %v3928 = vunpack.c.h.b16 %v3580
    %v3929 = vunpack.c.l.b16 %v3581
    %v3930 = vunpack.c.h.b16 %v3581
    %v3931 = vunpack.c.l.b16 %v3582
    %v3932 = vunpack.c.h.b16 %v3582
    %v3933 = vunpack.c.l.b16 %v3583
    %v3934 = vunpack.c.h.b16 %v3583
    %v3935 = vunpack.c.l.b16 %v3584
    %v3936 = vunpack.c.h.b16 %v3584
    %v3937 = vunpack.c.l.b16 %v3585
    %v3938 = vunpack.c.h.b16 %v3585
    %v3939 = vunpack.c.l.b16 %v3586
    %v3940 = vunpack.c.h.b16 %v3586
    %v3941 = vunpack.c.l.b16 %v3587
    %v3942 = vunpack.c.h.b16 %v3587
    %v3943 = vunpack.c.l.b16 %v3588
    %v3944 = vunpack.c.h.b16 %v3588
    %v3945 = vunpack.c.l.b16 %v3589
    %v3946 = vunpack.c.h.b16 %v3589
    %v3947 = vunpack.c.l.b16 %v3590
    %v3948 = vunpack.c.h.b16 %v3590
    %v3949 = vunpack.c.l.b16 %v3591
    %v3950 = vunpack.c.h.b16 %v3591
    %v3951 = vunpack.c.l.b16 %v3592
    %v3952 = vunpack.c.h.b16 %v3592
    %v3953 = vunpack.c.l.b16 %v3593
    %v3954 = vunpack.c.h.b16 %v3593
    %v3955 = vunpack.c.l.b16 %v3594
    %v3956 = vunpack.c.h.b16 %v3594
    %v3957 = vunpack.c.l.b16 %v3595
    %v3958 = vunpack.c.h.b16 %v3595
    %v3959 = vunpack.c.l.b16 %v3596
    %v3960 = vunpack.c.h.b16 %v3596
    %v3961 = vunpack.c.l.b16 %v3597
    %v3962 = vunpack.c.h.b16 %v3597
    %v3963 = vunpack.c.l.b16 %v3598
    %v3964 = vunpack.c.h.b16 %v3598
    %v3965 = vunpack.c.l.b16 %v3599
    %v3966 = vunpack.c.h.b16 %v3599
    %v3967 = vunpack.c.l.b16 %v3600
    %v3968 = vunpack.c.h.b16 %v3600
    %v3969 = vunpack.c.l.b16 %v3601
    %v3970 = vunpack.c.h.b16 %v3601
    %v3971 = vunpack.c.l.b16 %v3602
    %v3972 = vunpack.c.h.b16 %v3602
    %v3973 = vunpack.c.l.b16 %v3603
    %v3974 = vunpack.c.h.b16 %v3603
    %v3975 = vunpack.c.l.b16 %v3604
    %v3976 = vunpack.c.h.b16 %v3604
    %v3977 = vunpack.c.l.b16 %v3605
    %v3978 = vunpack.c.h.b16 %v3605
    %v3979 = vunpack.c.l.b16 %v3606
    %v3980 = vunpack.c.h.b16 %v3606
    %v3981 = vunpack.c.l.b16 %v3607
    %v3982 = vunpack.c.h.b16 %v3607
    %v3983 = vunpack.c.l.b16 %v3608
    %v3984 = vunpack.c.h.b16 %v3608
    %v3985 = vunpack.c.l.b16 %v3609
    %v3986 = vunpack.c.h.b16 %v3609
    %v3987 = vunpack.c.l.b16 %v3610
    %v3988 = vunpack.c.h.b16 %v3610
    %v3989 = vunpack.c.l.b16 %v3611
    %v3990 = vunpack.c.h.b16 %v3611
    %v3991 = vunpack.c.l.b16 %v3612
    %v3992 = vunpack.c.h.b16 %v3612
    %v3993 = vunpack.c.l.b16 %v3613
    %v3994 = vunpack.c.h.b16 %v3613
    %v3995 = vunpack.c.l.b16 %v3614
    %v3996 = vunpack.c.h.b16 %v3614
    %v3997 = vunpack.c.l.b16 %v3615
    %v3998 = vunpack.c.h.b16 %v3615
    %v3999 = vunpack.c.l.b16 %v3616
    %v4000 = vunpack.c.h.b16 %v3616
    %v4001 = vunpack.c.l.b16 %v3617
    %v4002 = vunpack.c.h.b16 %v3617
    %v4003 = vunpack.c.l.b16 %v3618
    %v4004 = vunpack.c.h.b16 %v3618
    %v4005 = vunpack.c.l.b16 %v3619
    %v4006 = vunpack.c.h.b16 %v3619
    %v4007 = vunpack.c.l.b16 %v3620
    %v4008 = vunpack.c.h.b16 %v3620
    %v4009 = vunpack.c.l.b16 %v3621
    %v4010 = vunpack.c.h.b16 %v3621
    %v4011 = vunpack.c.l.b16 %v3622
    %v4012 = vunpack.c.h.b16 %v3622
    %v4013 = vunpack.c.l.b16 %v3623
    %v4014 = vunpack.c.h.b16 %v3623
    %v4015 = vunpack.c.l.b16 %v3624
    %v4016 = vunpack.c.h.b16 %v3624
    %v4017 = vunpack.c.l.b16 %v3625
    %v4018 = vunpack.c.h.b16 %v3625
    %v4019 = vunpack.c.l.b16 %v3626
    %v4020 = vunpack.c.h.b16 %v3626
    %v4021 = vunpack.c.l.b16 %v3627
    %v4022 = vunpack.c.h.b16 %v3627
    %v4023 = vunpack.c.l.b16 %v3628
    %v4024 = vunpack.c.h.b16 %v3628
    %v4025 = vunpack.c.l.b16 %v3629
    %v4026 = vunpack.c.h.b16 %v3629
    %v4027 = vunpack.c.l.b16 %v3630
    %v4028 = vunpack.c.h.b16 %v3630
    %v4029 = vunpack.c.l.b16 %v3631
    %v4030 = vunpack.c.h.b16 %v3631
    %v4031 = vunpack.c.l.b16 %v3632
    %v4032 = vunpack.c.h.b16 %v3632
    %v4033 = vunpack.c.l.b16 %v3633
    %v4034 = vunpack.c.h.b16 %v3633
    %v4035 = vunpack.c.l.b16 %v3634
    %v4036 = vunpack.c.h.b16 %v3634
    %v4037 = vunpack.c.l.b16 %v3635
    %v4038 = vunpack.c.h.b16 %v3635
    %v4039 = vunpack.c.l.b16 %v3636
    %v4040 = vunpack.c.h.b16 %v3636
    %v4041 = vunpack.c.l.b16 %v3637
    %v4042 = vunpack.c.h.b16 %v3637
    %v4043 = vunpack.c.l.b16 %v3638
    %v4044 = vunpack.c.h.b16 %v3638
    %v4045 = vunpack.c.l.b16 %v3639
    %v4046 = vunpack.c.h.b16 %v3639
    %v4047 = vpack.c.b16 %v3795, %v3791
    %v4048 = vpack.c.b16 %v3796, %v3792
    %v4049 = vpack.c.b16 %v3797, %v3793
    %v4050 = vpack.c.b16 %v3798, %v3794
    %v4051 = vpack.c.b16 %v3803, %v3799
    %v4052 = vpack.c.b16 %v3804, %v3800
    %v4053 = vpack.c.b16 %v3805, %v3801
    %v4054 = vpack.c.b16 %v3806, %v3802
    %v4055 = vpack.c.b16 %v3811, %v3807
    %v4056 = vpack.c.b16 %v3812, %v3808
    %v4057 = vpack.c.b16 %v3813, %v3809
    %v4058 = vpack.c.b16 %v3814, %v3810
    %v4059 = vpack.c.b16 %v3819, %v3815
    %v4060 = vpack.c.b16 %v3820, %v3816
    %v4061 = vpack.c.b16 %v3821, %v3817
    %v4062 = vpack.c.b16 %v3822, %v3818
    %v4063 = vpack.c.b16 %v3827, %v3823
    %v4064 = vpack.c.b16 %v3828, %v3824
    %v4065 = vpack.c.b16 %v3829, %v3825
    %v4066 = vpack.c.b16 %v3830, %v3826
    %v4067 = vpack.c.b16 %v3835, %v3831
    %v4068 = vpack.c.b16 %v3836, %v3832
    %v4069 = vpack.c.b16 %v3837, %v3833
    %v4070 = vpack.c.b16 %v3838, %v3834
    %v4071 = vpack.c.b16 %v3843, %v3839
    %v4072 = vpack.c.b16 %v3844, %v3840
    %v4073 = vpack.c.b16 %v3845, %v3841
    %v4074 = vpack.c.b16 %v3846, %v3842
    %v4075 = vpack.c.b16 %v3851, %v3847
    %v4076 = vpack.c.b16 %v3852, %v3848
    %v4077 = vpack.c.b16 %v3853, %v3849
    %v4078 = vpack.c.b16 %v3854, %v3850
    %v4079 = vpack.c.b16 %v3859, %v3855
    %v4080 = vpack.c.b16 %v3860, %v3856
    %v4081 = vpack.c.b16 %v3861, %v3857
    %v4082 = vpack.c.b16 %v3862, %v3858
    %v4083 = vpack.c.b16 %v3867, %v3863
    %v4084 = vpack.c.b16 %v3868, %v3864
    %v4085 = vpack.c.b16 %v3869, %v3865
    %v4086 = vpack.c.b16 %v3870, %v3866
    %v4087 = vpack.c.b16 %v3875, %v3871
    %v4088 = vpack.c.b16 %v3876, %v3872
    %v4089 = vpack.c.b16 %v3877, %v3873
    %v4090 = vpack.c.b16 %v3878, %v3874
    %v4091 = vpack.c.b16 %v3883, %v3879
    %v4092 = vpack.c.b16 %v3884, %v3880
    %v4093 = vpack.c.b16 %v3885, %v3881
    %v4094 = vpack.c.b16 %v3886, %v3882
    %v4095 = vpack.c.b16 %v3891, %v3887
    %v4096 = vpack.c.b16 %v3892, %v3888
    %v4097 = vpack.c.b16 %v3893, %v3889
    %v4098 = vpack.c.b16 %v3894, %v3890
    %v4099 = vpack.c.b16 %v3899, %v3895
    %v4100 = vpack.c.b16 %v3900, %v3896
    %v4101 = vpack.c.b16 %v3901, %v3897
    %v4102 = vpack.c.b16 %v3902, %v3898
    %v4103 = vpack.c.b16 %v3907, %v3903
    %v4104 = vpack.c.b16 %v3908, %v3904
    %v4105 = vpack.c.b16 %v3909, %v3905
    %v4106 = vpack.c.b16 %v3910, %v3906
    %v4107 = vpack.c.b16 %v3915, %v3911
    %v4108 = vpack.c.b16 %v3916, %v3912
    %v4109 = vpack.c.b16 %v3917, %v3913
    %v4110 = vpack.c.b16 %v3918, %v3914
    %v4111 = vpack.c.b16 %v3923, %v3919
    %v4112 = vpack.c.b16 %v3924, %v3920
    %v4113 = vpack.c.b16 %v3925, %v3921
    %v4114 = vpack.c.b16 %v3926, %v3922
    %v4115 = vpack.c.b16 %v3931, %v3927
    %v4116 = vpack.c.b16 %v3932, %v3928
    %v4117 = vpack.c.b16 %v3933, %v3929
    %v4118 = vpack.c.b16 %v3934, %v3930
    %v4119 = vpack.c.b16 %v3939, %v3935
    %v4120 = vpack.c.b16 %v3940, %v3936
    %v4121 = vpack.c.b16 %v3941, %v3937
    %v4122 = vpack.c.b16 %v3942, %v3938
    %v4123 = vpack.c.b16 %v3947, %v3943
    %v4124 = vpack.c.b16 %v3948, %v3944
    %v4125 = vpack.c.b16 %v3949, %v3945
    %v4126 = vpack.c.b16 %v3950, %v3946
    %v4127 = vpack.c.b16 %v3955, %v3951
    %v4128 = vpack.c.b16 %v3956, %v3952
    %v4129 = vpack.c.b16 %v3957, %v3953
    %v4130 = vpack.c.b16 %v3958, %v3954
    %v4131 = vpack.c.b16 %v3963, %v3959
    %v4132 = vpack.c.b16 %v3964, %v3960
    %v4133 = vpack.c.b16 %v3965, %v3961
    %v4134 = vpack.c.b16 %v3966, %v3962
    %v4135 = vpack.c.b16 %v3971, %v3967
    %v4136 = vpack.c.b16 %v3972, %v3968
    %v4137 = vpack.c.b16 %v3973, %v3969
    %v4138 = vpack.c.b16 %v3974, %v3970
    %v4139 = vpack.c.b16 %v3979, %v3975
    %v4140 = vpack.c.b16 %v3980, %v3976
    %v4141 = vpack.c.b16 %v3981, %v3977
    %v4142 = vpack.c.b16 %v3982, %v3978
    %v4143 = vpack.c.b16 %v3987, %v3983
    %v4144 = vpack.c.b16 %v3988, %v3984
    %v4145 = vpack.c.b16 %v3989, %v3985
    %v4146 = vpack.c.b16 %v3990, %v3986
    %v4147 = vpack.c.b16 %v3995, %v3991
    %v4148 = vpack.c.b16 %v3996, %v3992
    %v4149 = vpack.c.b16 %v3997, %v3993
    %v4150 = vpack.c.b16 %v3998, %v3994
    %v4151 = vpack.c.b16 %v4003, %v3999
    %v4152 = vpack.c.b16 %v4004, %v4000
    %v4153 = vpack.c.b16 %v4005, %v4001
    %v4154 = vpack.c.b16 %v4006, %v4002
    %v4155 = vpack.c.b16 %v4011, %v4007
    %v4156 = vpack.c.b16 %v4012, %v4008
    %v4157 = vpack.c.b16 %v4013, %v4009
    %v4158 = vpack.c.b16 %v4014, %v4010
    %v4159 = vpack.c.b16 %v4019, %v4015
    %v4160 = vpack.c.b16 %v4020, %v4016
    %v4161 = vpack.c.b16 %v4021, %v4017
    %v4162 = vpack.c.b16 %v4022, %v4018
    %v4163 = vpack.c.b16 %v4027, %v4023
    %v4164 = vpack.c.b16 %v4028, %v4024
    %v4165 = vpack.c.b16 %v4029, %v4025
    %v4166 = vpack.c.b16 %v4030, %v4026
    %v4167 = vpack.c.b16 %v4035, %v4031
    %v4168 = vpack.c.b16 %v4036, %v4032
    %v4169 = vpack.c.b16 %v4037, %v4033
    %v4170 = vpack.c.b16 %v4038, %v4034
    %v4171 = vpack.c.b16 %v4043, %v4039
    %v4172 = vpack.c.b16 %v4044, %v4040
    %v4173 = vpack.c.b16 %v4045, %v4041
    %v4174 = vpack.c.b16 %v4046, %v4042
    %4303 = vmatprep.subr.bf16.mxu0 %v4048
    %4304 = vmatpush1.bf16.msra.mxu0 %v4047
    %4305 = vmatprep.subr.bf16.mxu0 %v4052
    %4306 = vmatpush1.bf16.msra.mxu0 %v4051
    %4307 = vmatprep.subr.bf16.mxu0 %v4056
    %4308 = vmatpush1.bf16.msra.mxu0 %v4055
    %4309 = vmatprep.subr.bf16.mxu0 %v4060
    %4310 = vmatpush1.bf16.msra.mxu0 %v4059
    %4311 = vmatprep.subr.bf16.mxu0 %v4064
    %4312 = vmatpush1.bf16.msra.mxu0 %v4063
    %4313 = vmatprep.subr.bf16.mxu0 %v4068
    %4314 = vmatpush1.bf16.msra.mxu0 %v4067
    %4315 = vmatprep.subr.bf16.mxu0 %v4072
    %4316 = vmatpush1.bf16.msra.mxu0 %v4071
    %4317 = vmatprep.subr.bf16.mxu0 %v4076
    %4318 = vmatpush1.bf16.msra.mxu0 %v4075
    %4319 = vmatprep.subr.bf16.mxu0 %v4080
    %4320 = vmatpush1.bf16.msra.mxu0 %v4079
    %4321 = vmatprep.subr.bf16.mxu0 %v4084
    %4322 = vmatpush1.bf16.msra.mxu0 %v4083
    %4323 = vmatprep.subr.bf16.mxu0 %v4088
    %4324 = vmatpush1.bf16.msra.mxu0 %v4087
    %4325 = vmatprep.subr.bf16.mxu0 %v4092
    %4326 = vmatpush1.bf16.msra.mxu0 %v4091
    %4327 = vmatprep.subr.bf16.mxu0 %v4096
    %4328 = vmatpush1.bf16.msra.mxu0 %v4095
    %4329 = vmatprep.subr.bf16.mxu0 %v4100
    %4330 = vmatpush1.bf16.msra.mxu0 %v4099
    %4331 = vmatprep.subr.bf16.mxu0 %v4104
    %4332 = vmatpush1.bf16.msra.mxu0 %v4103
    %4333 = vmatprep.subr.bf16.mxu0 %v4108
    %4334 = vmatpush1.bf16.msra.mxu0 %v4107
    %4335 = vmatprep.mubr.bf16.mxu0 %v3480
    %4336 = vmatmul.mubr.bf16.gmra.mrb[0].mxu0 %v3479
    %v4337 = vpop.f32.mrb[0].mxu0
    %v4338 = vadd.f32 %v3646, %v4337
    %v4339 = vpop.f32.mrb[0].mxu0
    %v4340 = vadd.f32 %v3650, %v4339
    %v4341 = vpop.f32.mrb[0].mxu0
    %v4342 = vadd.f32 %v3646, %v4341
    %v4343 = vpop.f32.mrb[0].mxu0
    %v4344 = vadd.f32 %v3650, %v4343
    %4345 = vmatprep.mubr.bf16.mxu0 %v3484
    %4346 = vmatmul.mubr.bf16.gmra.mrb[0].mxu0 %v3483
    %v4347 = vpop.f32.mrb[0].mxu0
    %v4348 = vadd.f32 %v3646, %v4347
    %v4349 = vpop.f32.mrb[0].mxu0
    %v4350 = vadd.f32 %v3650, %v4349
    %v4351 = vpop.f32.mrb[0].mxu0
    %v4352 = vadd.f32 %v3646, %v4351
    %v4353 = vpop.f32.mrb[0].mxu0
    %v4354 = vadd.f32 %v3650, %v4353
    %4355 = vmatprep.mubr.bf16.mxu0 %v3488
    %4356 = vmatmul.mubr.bf16.gmra.mrb[0].mxu0 %v3487
    %v4357 = vpop.f32.mrb[0].mxu0
    %v4358 = vadd.f32 %v3646, %v4357
    %v4359 = vpop.f32.mrb[0].mxu0
    %v4360 = vadd.f32 %v3650, %v4359
    %v4361 = vpop.f32.mrb[0].mxu0
    %v4362 = vadd.f32 %v3646, %v4361
    %v4363 = vpop.f32.mrb[0].mxu0
    %v4364 = vadd.f32 %v3650, %v4363
    %4365 = vmatprep.mubr.bf16.mxu0 %v3492
    %4366 = vmatmul.mubr.bf16.gmra.mrb[0].mxu0 %v3491
    %v4367 = vpop.f32.mrb[0].mxu0
    %v4368 = vadd.f32 %v3646, %v4367
    %v4369 = vpop.f32.mrb[0].mxu0
    %v4370 = vadd.f32 %v3650, %v4369
    %v4371 = vpop.f32.mrb[0].mxu0
    %v4372 = vadd.f32 %v3646, %v4371
    %v4373 = vpop.f32.mrb[0].mxu0
    %v4374 = vadd.f32 %v3650, %v4373
    %4375 = vmatprep.mubr.bf16.mxu0 %v3496
    %4376 = vmatmul.mubr.bf16.gmra.mrb[0].mxu0 %v3495
    %v4377 = vpop.f32.mrb[0].mxu0
    %v4378 = vadd.f32 %v3646, %v4377
    %v4379 = vpop.f32.mrb[0].mxu0
    %v4380 = vadd.f32 %v3650, %v4379
    %v4381 = vpop.f32.mrb[0].mxu0
    %v4382 = vadd.f32 %v3646, %v4381
    %v4383 = vpop.f32.mrb[0].mxu0
    %v4384 = vadd.f32 %v3650, %v4383
    %4385 = vmatprep.mubr.bf16.mxu0 %v3500
    %4386 = vmatmul.mubr.bf16.gmra.mrb[0].mxu0 %v3499
    %v4387 = vpop.f32.mrb[0].mxu0
    %v4388 = vadd.f32 %v3646, %v4387
    %v4389 = vpop.f32.mrb[0].mxu0
    %v4390 = vadd.f32 %v3650, %v4389
    %v4391 = vpop.f32.mrb[0].mxu0
    %v4392 = vadd.f32 %v3646, %v4391
    %v4393 = vpop.f32.mrb[0].mxu0
    %v4394 = vadd.f32 %v3650, %v4393
    %4395 = vmatprep.mubr.bf16.mxu0 %v3504
    %4396 = vmatmul.mubr.bf16.gmra.mrb[0].mxu0 %v3503
    %v4397 = vpop.f32.mrb[0].mxu0
    %v4398 = vadd.f32 %v3646, %v4397
    %v4399 = vpop.f32.mrb[0].mxu0
    %v4400 = vadd.f32 %v3650, %v4399
    %v4401 = vpop.f32.mrb[0].mxu0
    %v4402 = vadd.f32 %v3646, %v4401
    %v4403 = vpop.f32.mrb[0].mxu0
    %v4404 = vadd.f32 %v3650, %v4403
    %4405 = vmatprep.mubr.bf16.mxu0 %v3508
    %4406 = vmatmul.mubr.bf16.gmra.mrb[0].mxu0 %v3507
    %v4407 = vpop.f32.mrb[0].mxu0
    %v4408 = vadd.f32 %v3646, %v4407
    %v4409 = vpop.f32.mrb[0].mxu0
    %v4410 = vadd.f32 %v3650, %v4409
    %v4411 = vpop.f32.mrb[0].mxu0
    %v4412 = vadd.f32 %v3646, %v4411
    %v4413 = vpop.f32.mrb[0].mxu0
    %v4414 = vadd.f32 %v3650, %v4413
    %4415 = vdwg.mxu0
    %4416 = vmatprep.subr.bf16.mxu0 %v4112
    %4417 = vmatpush1.bf16.msra.mxu0 %v4111
    %4418 = vmatprep.subr.bf16.mxu0 %v4116
    %4419 = vmatpush1.bf16.msra.mxu0 %v4115
    %4420 = vmatprep.subr.bf16.mxu0 %v4120
    %4421 = vmatpush1.bf16.msra.mxu0 %v4119
    %4422 = vmatprep.subr.bf16.mxu0 %v4124
    %4423 = vmatpush1.bf16.msra.mxu0 %v4123
    %4424 = vmatprep.subr.bf16.mxu0 %v4128
    %4425 = vmatpush1.bf16.msra.mxu0 %v4127
    %4426 = vmatprep.subr.bf16.mxu0 %v4132
    %4427 = vmatpush1.bf16.msra.mxu0 %v4131
    %4428 = vmatprep.subr.bf16.mxu0 %v4136
    %4429 = vmatpush1.bf16.msra.mxu0 %v4135
    %4430 = vmatprep.subr.bf16.mxu0 %v4140
    %4431 = vmatpush1.bf16.msra.mxu0 %v4139
    %4432 = vmatprep.subr.bf16.mxu0 %v4144
    %4433 = vmatpush1.bf16.msra.mxu0 %v4143
    %4434 = vmatprep.subr.bf16.mxu0 %v4148
    %4435 = vmatpush1.bf16.msra.mxu0 %v4147
    %4436 = vmatprep.subr.bf16.mxu0 %v4152
    %4437 = vmatpush1.bf16.msra.mxu0 %v4151
    %4438 = vmatprep.subr.bf16.mxu0 %v4156
    %4439 = vmatpush1.bf16.msra.mxu0 %v4155
    %4440 = vmatprep.subr.bf16.mxu0 %v4160
    %4441 = vmatpush1.bf16.msra.mxu0 %v4159
    %4442 = vmatprep.subr.bf16.mxu0 %v4164
    %4443 = vmatpush1.bf16.msra.mxu0 %v4163
    %4444 = vmatprep.subr.bf16.mxu0 %v4168
    %4445 = vmatpush1.bf16.msra.mxu0 %v4167
    %4446 = vmatprep.subr.bf16.mxu0 %v4172
    %4447 = vmatpush1.bf16.msra.mxu0 %v4171
    %4448 = vmatprep.mubr.bf16.mxu0 %v3482
    %4449 = vmatmul.mubr.bf16.gmra.mrb[0].mxu0 %v3481
    %v4450 = vpop.f32.mrb[0].mxu0
    %v4451 = vadd.f32 %v4338, %v4450
    %v4452 = vpop.f32.mrb[0].mxu0
    %v4453 = vadd.f32 %v4340, %v4452
    %v4454 = vpop.f32.mrb[0].mxu0
    %v4455 = vadd.f32 %v4342, %v4454
    %v4456 = vpop.f32.mrb[0].mxu0
    %v4457 = vadd.f32 %v4344, %v4456
    %4458 = vmatprep.mubr.bf16.mxu0 %v3486
    %4459 = vmatmul.mubr.bf16.gmra.mrb[0].mxu0 %v3485
    %v4460 = vpop.f32.mrb[0].mxu0
    %v4461 = vadd.f32 %v4348, %v4460
    %v4462 = vpop.f32.mrb[0].mxu0
    %v4463 = vadd.f32 %v4350, %v4462
    %v4464 = vpop.f32.mrb[0].mxu0
    %v4465 = vadd.f32 %v4352, %v4464
    %v4466 = vpop.f32.mrb[0].mxu0
    %v4467 = vadd.f32 %v4354, %v4466
    %4468 = vmatprep.mubr.bf16.mxu0 %v3490
    %4469 = vmatmul.mubr.bf16.gmra.mrb[0].mxu0 %v3489
    %v4470 = vpop.f32.mrb[0].mxu0
    %v4471 = vadd.f32 %v4358, %v4470
    %v4472 = vpop.f32.mrb[0].mxu0
    %v4473 = vadd.f32 %v4360, %v4472
    %v4474 = vpop.f32.mrb[0].mxu0
    %v4475 = vadd.f32 %v4362, %v4474
    %v4476 = vpop.f32.mrb[0].mxu0
    %v4477 = vadd.f32 %v4364, %v4476
    %4478 = vmatprep.mubr.bf16.mxu0 %v3494
    %4479 = vmatmul.mubr.bf16.gmra.mrb[0].mxu0 %v3493
    %v4480 = vpop.f32.mrb[0].mxu0
    %v4481 = vadd.f32 %v4368, %v4480
    %v4482 = vpop.f32.mrb[0].mxu0
    %v4483 = vadd.f32 %v4370, %v4482
    %v4484 = vpop.f32.mrb[0].mxu0
    %v4485 = vadd.f32 %v4372, %v4484
    %v4486 = vpop.f32.mrb[0].mxu0
    %v4487 = vadd.f32 %v4374, %v4486
    %4488 = vmatprep.mubr.bf16.mxu0 %v3498
    %4489 = vmatmul.mubr.bf16.gmra.mrb[0].mxu0 %v3497
    %v4490 = vpop.f32.mrb[0].mxu0
    %v4491 = vadd.f32 %v4378, %v4490
    %v4492 = vpop.f32.mrb[0].mxu0
    %v4493 = vadd.f32 %v4380, %v4492
    %v4494 = vpop.f32.mrb[0].mxu0
    %v4495 = vadd.f32 %v4382, %v4494
    %v4496 = vpop.f32.mrb[0].mxu0
    %v4497 = vadd.f32 %v4384, %v4496
    %4498 = vmatprep.mubr.bf16.mxu0 %v3502
    %4499 = vmatmul.mubr.bf16.gmra.mrb[0].mxu0 %v3501
    %v4500 = vpop.f32.mrb[0].mxu0
    %v4501 = vadd.f32 %v4388, %v4500
    %v4502 = vpop.f32.mrb[0].mxu0
    %v4503 = vadd.f32 %v4390, %v4502
    %v4504 = vpop.f32.mrb[0].mxu0
    %v4505 = vadd.f32 %v4392, %v4504
    %v4506 = vpop.f32.mrb[0].mxu0
    %v4507 = vadd.f32 %v4394, %v4506
    %4508 = vmatprep.mubr.bf16.mxu0 %v3506
    %4509 = vmatmul.mubr.bf16.gmra.mrb[0].mxu0 %v3505
    %v4510 = vpop.f32.mrb[0].mxu0
    %v4511 = vadd.f32 %v4398, %v4510
    %v4512 = vpop.f32.mrb[0].mxu0
    %v4513 = vadd.f32 %v4400, %v4512
    %v4514 = vpop.f32.mrb[0].mxu0
    %v4515 = vadd.f32 %v4402, %v4514
    %v4516 = vpop.f32.mrb[0].mxu0
    %v4517 = vadd.f32 %v4404, %v4516
    %4518 = vmatprep.mubr.bf16.mxu0 %v3510
    %4519 = vmatmul.mubr.bf16.gmra.mrb[0].mxu0 %v3509
    %v4520 = vpop.f32.mrb[0].mxu0
    %v4521 = vadd.f32 %v4408, %v4520
    %v4522 = vpop.f32.mrb[0].mxu0
    %v4523 = vadd.f32 %v4410, %v4522
    %v4524 = vpop.f32.mrb[0].mxu0
    %v4525 = vadd.f32 %v4412, %v4524
    %v4526 = vpop.f32.mrb[0].mxu0
    %v4527 = vadd.f32 %v4414, %v4526
    %4528 = vdwg.mxu0
    %4529 = vmatprep.subr.bf16.mxu0 %v4050
    %4530 = vmatpush1.bf16.msra.mxu0 %v4049
    %4531 = vmatprep.subr.bf16.mxu0 %v4054
    %4532 = vmatpush1.bf16.msra.mxu0 %v4053
    %4533 = vmatprep.subr.bf16.mxu0 %v4058
    %4534 = vmatpush1.bf16.msra.mxu0 %v4057
    %4535 = vmatprep.subr.bf16.mxu0 %v4062
    %4536 = vmatpush1.bf16.msra.mxu0 %v4061
    %4537 = vmatprep.subr.bf16.mxu0 %v4066
    %4538 = vmatpush1.bf16.msra.mxu0 %v4065
    %4539 = vmatprep.subr.bf16.mxu0 %v4070
    %4540 = vmatpush1.bf16.msra.mxu0 %v4069
    %4541 = vmatprep.subr.bf16.mxu0 %v4074
    %4542 = vmatpush1.bf16.msra.mxu0 %v4073
    %4543 = vmatprep.subr.bf16.mxu0 %v4078
    %4544 = vmatpush1.bf16.msra.mxu0 %v4077
    %4545 = vmatprep.subr.bf16.mxu0 %v4082
    %4546 = vmatpush1.bf16.msra.mxu0 %v4081
    %4547 = vmatprep.subr.bf16.mxu0 %v4086
    %4548 = vmatpush1.bf16.msra.mxu0 %v4085
    %4549 = vmatprep.subr.bf16.mxu0 %v4090
    %4550 = vmatpush1.bf16.msra.mxu0 %v4089
    %4551 = vmatprep.subr.bf16.mxu0 %v4094
    %4552 = vmatpush1.bf16.msra.mxu0 %v4093
    %4553 = vmatprep.subr.bf16.mxu0 %v4098
    %4554 = vmatpush1.bf16.msra.mxu0 %v4097
    %4555 = vmatprep.subr.bf16.mxu0 %v4102
    %4556 = vmatpush1.bf16.msra.mxu0 %v4101
    %4557 = vmatprep.subr.bf16.mxu0 %v4106
    %4558 = vmatpush1.bf16.msra.mxu0 %v4105
    %4559 = vmatprep.subr.bf16.mxu0 %v4110
    %4560 = vmatpush1.bf16.msra.mxu0 %v4109
    %4561 = vmatprep.mubr.bf16.mxu0 %v3480
    %4562 = vmatmul.mubr.bf16.gmra.mrb[0].mxu0 %v3479
    %v4563 = vpop.f32.mrb[0].mxu0
    %v4564 = vadd.f32 %v3654, %v4563
    %v4565 = vpop.f32.mrb[0].mxu0
    %v4566 = vadd.f32 %v3658, %v4565
    %v4567 = vpop.f32.mrb[0].mxu0
    %v4568 = vadd.f32 %v3654, %v4567
    %v4569 = vpop.f32.mrb[0].mxu0
    %v4570 = vadd.f32 %v3658, %v4569
    %4571 = vmatprep.mubr.bf16.mxu0 %v3484
    %4572 = vmatmul.mubr.bf16.gmra.mrb[0].mxu0 %v3483
    %v4573 = vpop.f32.mrb[0].mxu0
    %v4574 = vadd.f32 %v3654, %v4573
    %v4575 = vpop.f32.mrb[0].mxu0
    %v4576 = vadd.f32 %v3658, %v4575
    %v4577 = vpop.f32.mrb[0].mxu0
    %v4578 = vadd.f32 %v3654, %v4577
    %v4579 = vpop.f32.mrb[0].mxu0
    %v4580 = vadd.f32 %v3658, %v4579
    %4581 = vmatprep.mubr.bf16.mxu0 %v3488
    %4582 = vmatmul.mubr.bf16.gmra.mrb[0].mxu0 %v3487
    %v4583 = vpop.f32.mrb[0].mxu0
    %v4584 = vadd.f32 %v3654, %v4583
    %v4585 = vpop.f32.mrb[0].mxu0
    %v4586 = vadd.f32 %v3658, %v4585
    %v4587 = vpop.f32.mrb[0].mxu0
    %v4588 = vadd.f32 %v3654, %v4587
    %v4589 = vpop.f32.mrb[0].mxu0
    %v4590 = vadd.f32 %v3658, %v4589
    %4591 = vmatprep.mubr.bf16.mxu0 %v3492
    %4592 = vmatmul.mubr.bf16.gmra.mrb[0].mxu0 %v3491
    %v4593 = vpop.f32.mrb[0].mxu0
    %v4594 = vadd.f32 %v3654, %v4593
    %v4595 = vpop.f32.mrb[0].mxu0
    %v4596 = vadd.f32 %v3658, %v4595
    %v4597 = vpop.f32.mrb[0].mxu0
    %v4598 = vadd.f32 %v3654, %v4597
    %v4599 = vpop.f32.mrb[0].mxu0
    %v4600 = vadd.f32 %v3658, %v4599
    %4601 = vmatprep.mubr.bf16.mxu0 %v3496
    %4602 = vmatmul.mubr.bf16.gmra.mrb[0].mxu0 %v3495
    %v4603 = vpop.f32.mrb[0].mxu0
    %v4604 = vadd.f32 %v3654, %v4603
    %v4605 = vpop.f32.mrb[0].mxu0
    %v4606 = vadd.f32 %v3658, %v4605
    %v4607 = vpop.f32.mrb[0].mxu0
    %v4608 = vadd.f32 %v3654, %v4607
    %v4609 = vpop.f32.mrb[0].mxu0
    %v4610 = vadd.f32 %v3658, %v4609
    %4611 = vmatprep.mubr.bf16.mxu0 %v3500
    %4612 = vmatmul.mubr.bf16.gmra.mrb[0].mxu0 %v3499
    %v4613 = vpop.f32.mrb[0].mxu0
    %v4614 = vadd.f32 %v3654, %v4613
    %v4615 = vpop.f32.mrb[0].mxu0
    %v4616 = vadd.f32 %v3658, %v4615
    %v4617 = vpop.f32.mrb[0].mxu0
    %v4618 = vadd.f32 %v3654, %v4617
    %v4619 = vpop.f32.mrb[0].mxu0
    %v4620 = vadd.f32 %v3658, %v4619
    %4621 = vmatprep.mubr.bf16.mxu0 %v3504
    %4622 = vmatmul.mubr.bf16.gmra.mrb[0].mxu0 %v3503
    %v4623 = vpop.f32.mrb[0].mxu0
    %v4624 = vadd.f32 %v3654, %v4623
    %v4625 = vpop.f32.mrb[0].mxu0
    %v4626 = vadd.f32 %v3658, %v4625
    %v4627 = vpop.f32.mrb[0].mxu0
    %v4628 = vadd.f32 %v3654, %v4627
    %v4629 = vpop.f32.mrb[0].mxu0
    %v4630 = vadd.f32 %v3658, %v4629
    %4631 = vmatprep.mubr.bf16.mxu0 %v3508
    %4632 = vmatmul.mubr.bf16.gmra.mrb[0].mxu0 %v3507
    %v4633 = vpop.f32.mrb[0].mxu0
    %v4634 = vadd.f32 %v3654, %v4633
    %v4635 = vpop.f32.mrb[0].mxu0
    %v4636 = vadd.f32 %v3658, %v4635
    %v4637 = vpop.f32.mrb[0].mxu0
    %v4638 = vadd.f32 %v3654, %v4637
    %v4639 = vpop.f32.mrb[0].mxu0
    %v4640 = vadd.f32 %v3658, %v4639
    %4641 = vdwg.mxu0
    %4642 = vmatprep.subr.bf16.mxu0 %v4114
    %4643 = vmatpush1.bf16.msra.mxu0 %v4113
    %4644 = vmatprep.subr.bf16.mxu0 %v4118
    %4645 = vmatpush1.bf16.msra.mxu0 %v4117
    %4646 = vmatprep.subr.bf16.mxu0 %v4122
    %4647 = vmatpush1.bf16.msra.mxu0 %v4121
    %4648 = vmatprep.subr.bf16.mxu0 %v4126
    %4649 = vmatpush1.bf16.msra.mxu0 %v4125
    %4650 = vmatprep.subr.bf16.mxu0 %v4130
    %4651 = vmatpush1.bf16.msra.mxu0 %v4129
    %4652 = vmatprep.subr.bf16.mxu0 %v4134
    %4653 = vmatpush1.bf16.msra.mxu0 %v4133
    %4654 = vmatprep.subr.bf16.mxu0 %v4138
    %4655 = vmatpush1.bf16.msra.mxu0 %v4137
    %4656 = vmatprep.subr.bf16.mxu0 %v4142
    %4657 = vmatpush1.bf16.msra.mxu0 %v4141
    %4658 = vmatprep.subr.bf16.mxu0 %v4146
    %4659 = vmatpush1.bf16.msra.mxu0 %v4145
    %4660 = vmatprep.subr.bf16.mxu0 %v4150
    %4661 = vmatpush1.bf16.msra.mxu0 %v4149
    %4662 = vmatprep.subr.bf16.mxu0 %v4154
    %4663 = vmatpush1.bf16.msra.mxu0 %v4153
    %4664 = vmatprep.subr.bf16.mxu0 %v4158
    %4665 = vmatpush1.bf16.msra.mxu0 %v4157
    %4666 = vmatprep.subr.bf16.mxu0 %v4162
    %4667 = vmatpush1.bf16.msra.mxu0 %v4161
    %4668 = vmatprep.subr.bf16.mxu0 %v4166
    %4669 = vmatpush1.bf16.msra.mxu0 %v4165
    %4670 = vmatprep.subr.bf16.mxu0 %v4170
    %4671 = vmatpush1.bf16.msra.mxu0 %v4169
    %4672 = vmatprep.subr.bf16.mxu0 %v4174
    %4673 = vmatpush1.bf16.msra.mxu0 %v4173
    %4674 = vmatprep.mubr.bf16.mxu0 %v3482
    %4675 = vmatmul.mubr.bf16.gmra.mrb[0].mxu0 %v3481
    %v4676 = vpop.f32.mrb[0].mxu0
    %v4677 = vadd.f32 %v4564, %v4676
    %v4678 = vpop.f32.mrb[0].mxu0
    %v4679 = vadd.f32 %v4566, %v4678
    %v4680 = vpop.f32.mrb[0].mxu0
    %v4681 = vadd.f32 %v4568, %v4680
    %v4682 = vpop.f32.mrb[0].mxu0
    %v4683 = vadd.f32 %v4570, %v4682
    %4684 = vmatprep.mubr.bf16.mxu0 %v3486
    %4685 = vmatmul.mubr.bf16.gmra.mrb[0].mxu0 %v3485
    %v4686 = vpop.f32.mrb[0].mxu0
    %v4687 = vadd.f32 %v4574, %v4686
    %v4688 = vpop.f32.mrb[0].mxu0
    %v4689 = vadd.f32 %v4576, %v4688
    %v4690 = vpop.f32.mrb[0].mxu0
    %v4691 = vadd.f32 %v4578, %v4690
    %v4692 = vpop.f32.mrb[0].mxu0
    %v4693 = vadd.f32 %v4580, %v4692
    %4694 = vmatprep.mubr.bf16.mxu0 %v3490
    %4695 = vmatmul.mubr.bf16.gmra.mrb[0].mxu0 %v3489
    %v4696 = vpop.f32.mrb[0].mxu0
    %v4697 = vadd.f32 %v4584, %v4696
    %v4698 = vpop.f32.mrb[0].mxu0
    %v4699 = vadd.f32 %v4586, %v4698
    %v4700 = vpop.f32.mrb[0].mxu0
    %v4701 = vadd.f32 %v4588, %v4700
    %v4702 = vpop.f32.mrb[0].mxu0
    %v4703 = vadd.f32 %v4590, %v4702
    %4704 = vmatprep.mubr.bf16.mxu0 %v3494
    %4705 = vmatmul.mubr.bf16.gmra.mrb[0].mxu0 %v3493
    %v4706 = vpop.f32.mrb[0].mxu0
    %v4707 = vadd.f32 %v4594, %v4706
    %v4708 = vpop.f32.mrb[0].mxu0
    %v4709 = vadd.f32 %v4596, %v4708
    %v4710 = vpop.f32.mrb[0].mxu0
    %v4711 = vadd.f32 %v4598, %v4710
    %v4712 = vpop.f32.mrb[0].mxu0
    %v4713 = vadd.f32 %v4600, %v4712
    %4714 = vmatprep.mubr.bf16.mxu0 %v3498
    %4715 = vmatmul.mubr.bf16.gmra.mrb[0].mxu0 %v3497
    %v4716 = vpop.f32.mrb[0].mxu0
    %v4717 = vadd.f32 %v4604, %v4716
    %v4718 = vpop.f32.mrb[0].mxu0
    %v4719 = vadd.f32 %v4606, %v4718
    %v4720 = vpop.f32.mrb[0].mxu0
    %v4721 = vadd.f32 %v4608, %v4720
    %v4722 = vpop.f32.mrb[0].mxu0
    %v4723 = vadd.f32 %v4610, %v4722
    %4724 = vmatprep.mubr.bf16.mxu0 %v3502
    %4725 = vmatmul.mubr.bf16.gmra.mrb[0].mxu0 %v3501
    %v4726 = vpop.f32.mrb[0].mxu0
    %v4727 = vadd.f32 %v4614, %v4726
    %v4728 = vpop.f32.mrb[0].mxu0
    %v4729 = vadd.f32 %v4616, %v4728
    %v4730 = vpop.f32.mrb[0].mxu0
    %v4731 = vadd.f32 %v4618, %v4730
    %v4732 = vpop.f32.mrb[0].mxu0
    %v4733 = vadd.f32 %v4620, %v4732
    %4734 = vmatprep.mubr.bf16.mxu0 %v3506
    %4735 = vmatmul.mubr.bf16.gmra.mrb[0].mxu0 %v3505
    %v4736 = vpop.f32.mrb[0].mxu0
    %v4737 = vadd.f32 %v4624, %v4736
    %v4738 = vpop.f32.mrb[0].mxu0
    %v4739 = vadd.f32 %v4626, %v4738
    %v4740 = vpop.f32.mrb[0].mxu0
    %v4741 = vadd.f32 %v4628, %v4740
    %v4742 = vpop.f32.mrb[0].mxu0
    %v4743 = vadd.f32 %v4630, %v4742
    %4744 = vmatprep.mubr.bf16.mxu0 %v3510
    %4745 = vmatmul.mubr.bf16.gmra.mrb[0].mxu0 %v3509
    %v4746 = vpop.f32.mrb[0].mxu0
    %v4747 = vadd.f32 %v4634, %v4746
    %v4748 = vpop.f32.mrb[0].mxu0
    %v4749 = vadd.f32 %v4636, %v4748
    %v4750 = vpop.f32.mrb[0].mxu0
    %v4751 = vadd.f32 %v4638, %v4750
    %v4752 = vpop.f32.mrb[0].mxu0
    %v4753 = vadd.f32 %v4640, %v4752
    %4754 = vdwg.mxu0
    %v4755 = vmax.f32 %v4451, 0.0
    %v4756 = vmax.f32 %v4453, 0.0
    %v4757 = vmax.f32 %v4677, 0.0
    %v4758 = vmax.f32 %v4679, 0.0
    %v4759 = vmax.f32 %v4455, 0.0
    %v4760 = vmax.f32 %v4457, 0.0
    %v4761 = vmax.f32 %v4681, 0.0
    %v4762 = vmax.f32 %v4683, 0.0
    %v4763 = vmax.f32 %v4461, 0.0
    %v4764 = vmax.f32 %v4463, 0.0
    %v4765 = vmax.f32 %v4687, 0.0
    %v4766 = vmax.f32 %v4689, 0.0
    %v4767 = vmax.f32 %v4465, 0.0
    %v4768 = vmax.f32 %v4467, 0.0
    %v4769 = vmax.f32 %v4691, 0.0
    %v4770 = vmax.f32 %v4693, 0.0
    %v4771 = vmax.f32 %v4471, 0.0
    %v4772 = vmax.f32 %v4473, 0.0
    %v4773 = vmax.f32 %v4697, 0.0
    %v4774 = vmax.f32 %v4699, 0.0
    %v4775 = vmax.f32 %v4475, 0.0
    %v4776 = vmax.f32 %v4477, 0.0
    %v4777 = vmax.f32 %v4701, 0.0
    %v4778 = vmax.f32 %v4703, 0.0
    %v4779 = vmax.f32 %v4481, 0.0
    %v4780 = vmax.f32 %v4483, 0.0
    %v4781 = vmax.f32 %v4707, 0.0
    %v4782 = vmax.f32 %v4709, 0.0
    %v4783 = vmax.f32 %v4485, 0.0
    %v4784 = vmax.f32 %v4487, 0.0
    %v4785 = vmax.f32 %v4711, 0.0
    %v4786 = vmax.f32 %v4713, 0.0
    %v4787 = vmax.f32 %v4491, 0.0
    %v4788 = vmax.f32 %v4493, 0.0
    %v4789 = vmax.f32 %v4717, 0.0
    %v4790 = vmax.f32 %v4719, 0.0
    %v4791 = vmax.f32 %v4495, 0.0
    %v4792 = vmax.f32 %v4497, 0.0
    %v4793 = vmax.f32 %v4721, 0.0
    %v4794 = vmax.f32 %v4723, 0.0
    %v4795 = vmax.f32 %v4501, 0.0
    %v4796 = vmax.f32 %v4503, 0.0
    %v4797 = vmax.f32 %v4727, 0.0
    %v4798 = vmax.f32 %v4729, 0.0
    %v4799 = vmax.f32 %v4505, 0.0
    %v4800 = vmax.f32 %v4507, 0.0
    %v4801 = vmax.f32 %v4731, 0.0
    %v4802 = vmax.f32 %v4733, 0.0
    %v4803 = vmax.f32 %v4511, 0.0
    %v4804 = vmax.f32 %v4513, 0.0
    %v4805 = vmax.f32 %v4737, 0.0
    %v4806 = vmax.f32 %v4739, 0.0
    %v4807 = vmax.f32 %v4515, 0.0
    %v4808 = vmax.f32 %v4517, 0.0
    %v4809 = vmax.f32 %v4741, 0.0
    %v4810 = vmax.f32 %v4743, 0.0
    %v4811 = vmax.f32 %v4521, 0.0
    %v4812 = vmax.f32 %v4523, 0.0
    %v4813 = vmax.f32 %v4747, 0.0
    %v4814 = vmax.f32 %v4749, 0.0
    %v4815 = vmax.f32 %v4525, 0.0
    %v4816 = vmax.f32 %v4527, 0.0
    %v4817 = vmax.f32 %v4751, 0.0
    %v4818 = vmax.f32 %v4753, 0.0
    %v4819 = vadd.f32 %v3415, %v4755
    %v4820 = vadd.f32 %v3416, %v4756
    %v4821 = vadd.f32 %v3417, %v4757
    %v4822 = vadd.f32 %v3418, %v4758
    %v4823 = vadd.f32 %v3419, %v4759
    %v4824 = vadd.f32 %v3420, %v4760
    %v4825 = vadd.f32 %v3421, %v4761
    %v4826 = vadd.f32 %v3422, %v4762
    %v4827 = vadd.f32 %v3423, %v4763
    %v4828 = vadd.f32 %v3424, %v4764
    %v4829 = vadd.f32 %v3425, %v4765
    %v4830 = vadd.f32 %v3426, %v4766
    %v4831 = vadd.f32 %v3427, %v4767
    %v4832 = vadd.f32 %v3428, %v4768
    %v4833 = vadd.f32 %v3429, %v4769
    %v4834 = vadd.f32 %v3430, %v4770
    %v4835 = vadd.f32 %v3431, %v4771
    %v4836 = vadd.f32 %v3432, %v4772
    %v4837 = vadd.f32 %v3433, %v4773
    %v4838 = vadd.f32 %v3434, %v4774
    %v4839 = vadd.f32 %v3435, %v4775
    %v4840 = vadd.f32 %v3436, %v4776
    %v4841 = vadd.f32 %v3437, %v4777
    %v4842 = vadd.f32 %v3438, %v4778
    %v4843 = vadd.f32 %v3439, %v4779
    %v4844 = vadd.f32 %v3440, %v4780
    %v4845 = vadd.f32 %v3441, %v4781
    %v4846 = vadd.f32 %v3442, %v4782
    %v4847 = vadd.f32 %v3443, %v4783
    %v4848 = vadd.f32 %v3444, %v4784
    %v4849 = vadd.f32 %v3445, %v4785
    %v4850 = vadd.f32 %v3446, %v4786
    %v4851 = vadd.f32 %v3447, %v4787
    %v4852 = vadd.f32 %v3448, %v4788
    %v4853 = vadd.f32 %v3449, %v4789
    %v4854 = vadd.f32 %v3450, %v4790
    %v4855 = vadd.f32 %v3451, %v4791
    %v4856 = vadd.f32 %v3452, %v4792
    %v4857 = vadd.f32 %v3453, %v4793
    %v4858 = vadd.f32 %v3454, %v4794
    %v4859 = vadd.f32 %v3455, %v4795
    %v4860 = vadd.f32 %v3456, %v4796
    %v4861 = vadd.f32 %v3457, %v4797
    %v4862 = vadd.f32 %v3458, %v4798
    %v4863 = vadd.f32 %v3459, %v4799
    %v4864 = vadd.f32 %v3460, %v4800
    %v4865 = vadd.f32 %v3461, %v4801
    %v4866 = vadd.f32 %v3462, %v4802
    %v4867 = vadd.f32 %v3463, %v4803
    %v4868 = vadd.f32 %v3464, %v4804
    %v4869 = vadd.f32 %v3465, %v4805
    %v4870 = vadd.f32 %v3466, %v4806
    %v4871 = vadd.f32 %v3467, %v4807
    %v4872 = vadd.f32 %v3468, %v4808
    %v4873 = vadd.f32 %v3469, %v4809
    %v4874 = vadd.f32 %v3470, %v4810
    %v4875 = vadd.f32 %v3471, %v4811
    %v4876 = vadd.f32 %v3472, %v4812
    %v4877 = vadd.f32 %v3473, %v4813
    %v4878 = vadd.f32 %v3474, %v4814
    %v4879 = vadd.f32 %v3475, %v4815
    %v4880 = vadd.f32 %v3476, %v4816
    %v4881 = vadd.f32 %v3477, %v4817
    %v4882 = vadd.f32 %v3478, %v4818
    %v4883 = vpack.c.bf16 %v4823, %v4819
    %v4884 = vpack.c.bf16 %v4824, %v4820
    %v4885 = vpack.c.bf16 %v4825, %v4821
    %v4886 = vpack.c.bf16 %v4826, %v4822
    %v4887 = vpack.c.bf16 %v4831, %v4827
    %v4888 = vpack.c.bf16 %v4832, %v4828
    %v4889 = vpack.c.bf16 %v4833, %v4829
    %v4890 = vpack.c.bf16 %v4834, %v4830
    %v4891 = vpack.c.bf16 %v4839, %v4835
    %v4892 = vpack.c.bf16 %v4840, %v4836
    %v4893 = vpack.c.bf16 %v4841, %v4837
    %v4894 = vpack.c.bf16 %v4842, %v4838
    %v4895 = vpack.c.bf16 %v4847, %v4843
    %v4896 = vpack.c.bf16 %v4848, %v4844
    %v4897 = vpack.c.bf16 %v4849, %v4845
    %v4898 = vpack.c.bf16 %v4850, %v4846
    %v4899 = vpack.c.bf16 %v4855, %v4851
    %v4900 = vpack.c.bf16 %v4856, %v4852
    %v4901 = vpack.c.bf16 %v4857, %v4853
    %v4902 = vpack.c.bf16 %v4858, %v4854
    %v4903 = vpack.c.bf16 %v4863, %v4859
    %v4904 = vpack.c.bf16 %v4864, %v4860
    %v4905 = vpack.c.bf16 %v4865, %v4861
    %v4906 = vpack.c.bf16 %v4866, %v4862
    %v4907 = vpack.c.bf16 %v4871, %v4867
    %v4908 = vpack.c.bf16 %v4872, %v4868
    %v4909 = vpack.c.bf16 %v4873, %v4869
    %v4910 = vpack.c.bf16 %v4874, %v4870
    %v4911 = vpack.c.bf16 %v4879, %v4875
    %v4912 = vpack.c.bf16 %v4880, %v4876
    %v4913 = vpack.c.bf16 %v4881, %v4877
    %v4914 = vpack.c.bf16 %v4882, %v4878
    %s4915 = scalar_lea.vmem [#allocation6], 3072
    %v4916 = vld [vmem:[%s4915] sm:$0xff]
    %v4917 = vld [vmem:[%s4915 + $0x8] sm:$0xff]
    %v4918 = vld [vmem:[%s4915 + $0x10] sm:$0xff]
    %v4919 = vld [vmem:[%s4915 + $0x18] sm:$0xff]
    %v4920 = vld [vmem:[%s4915 + $0x20] sm:$0xff]
    %v4921 = vld [vmem:[%s4915 + $0x28] sm:$0xff]
    %v4922 = vld [vmem:[%s4915 + $0x30] sm:$0xff]
    %v4923 = vld [vmem:[%s4915 + $0x38] sm:$0xff]
    %v4924 = vld [vmem:[%s4915 + $0x40] sm:$0xff]
    %v4925 = vld [vmem:[%s4915 + $0x48] sm:$0xff]
    %v4926 = vld [vmem:[%s4915 + $0x50] sm:$0xff]
    %v4927 = vld [vmem:[%s4915 + $0x58] sm:$0xff]
    %v4928 = vld [vmem:[%s4915 + $0x60] sm:$0xff]
    %v4929 = vld [vmem:[%s4915 + $0x68] sm:$0xff]
    %v4930 = vld [vmem:[%s4915 + $0x70] sm:$0xff]
    %v4931 = vld [vmem:[%s4915 + $0x78] sm:$0xff]
    %v4932 = vld [vmem:[%s4915 + $0x80] sm:$0xff]
    %v4933 = vld [vmem:[%s4915 + $0x88] sm:$0xff]
    %v4934 = vld [vmem:[%s4915 + $0x90] sm:$0xff]
    %v4935 = vld [vmem:[%s4915 + $0x98] sm:$0xff]
    %v4936 = vld [vmem:[%s4915 + $0xa0] sm:$0xff]
    %v4937 = vld [vmem:[%s4915 + $0xa8] sm:$0xff]
    %v4938 = vld [vmem:[%s4915 + $0xb0] sm:$0xff]
    %v4939 = vld [vmem:[%s4915 + $0xb8] sm:$0xff]
    %v4940 = vld [vmem:[%s4915 + $0xc0] sm:$0xff]
    %v4941 = vld [vmem:[%s4915 + $0xc8] sm:$0xff]
    %v4942 = vld [vmem:[%s4915 + $0xd0] sm:$0xff]
    %v4943 = vld [vmem:[%s4915 + $0xd8] sm:$0xff]
    %v4944 = vld [vmem:[%s4915 + $0xe0] sm:$0xff]
    %v4945 = vld [vmem:[%s4915 + $0xe8] sm:$0xff]
    %v4946 = vld [vmem:[%s4915 + $0xf0] sm:$0xff]
    %v4947 = vld [vmem:[%s4915 + $0xf8] sm:$0xff]
    %v4948 = vld [vmem:[%s4915 + $0x100] sm:$0xff]
    %v4949 = vld [vmem:[%s4915 + $0x108] sm:$0xff]
    %v4950 = vld [vmem:[%s4915 + $0x110] sm:$0xff]
    %v4951 = vld [vmem:[%s4915 + $0x118] sm:$0xff]
    %v4952 = vld [vmem:[%s4915 + $0x120] sm:$0xff]
    %v4953 = vld [vmem:[%s4915 + $0x128] sm:$0xff]
    %v4954 = vld [vmem:[%s4915 + $0x130] sm:$0xff]
    %v4955 = vld [vmem:[%s4915 + $0x138] sm:$0xff]
    %v4956 = vld [vmem:[%s4915 + $0x140] sm:$0xff]
    %v4957 = vld [vmem:[%s4915 + $0x148] sm:$0xff]
    %v4958 = vld [vmem:[%s4915 + $0x150] sm:$0xff]
    %v4959 = vld [vmem:[%s4915 + $0x158] sm:$0xff]
    %v4960 = vld [vmem:[%s4915 + $0x160] sm:$0xff]
    %v4961 = vld [vmem:[%s4915 + $0x168] sm:$0xff]
    %v4962 = vld [vmem:[%s4915 + $0x170] sm:$0xff]
    %v4963 = vld [vmem:[%s4915 + $0x178] sm:$0xff]
    %v4964 = vld [vmem:[%s4915 + $0x180] sm:$0xff]
    %v4965 = vld [vmem:[%s4915 + $0x188] sm:$0xff]
    %v4966 = vld [vmem:[%s4915 + $0x190] sm:$0xff]
    %v4967 = vld [vmem:[%s4915 + $0x198] sm:$0xff]
    %v4968 = vld [vmem:[%s4915 + $0x1a0] sm:$0xff]
    %v4969 = vld [vmem:[%s4915 + $0x1a8] sm:$0xff]
    %v4970 = vld [vmem:[%s4915 + $0x1b0] sm:$0xff]
    %v4971 = vld [vmem:[%s4915 + $0x1b8] sm:$0xff]
    %v4972 = vld [vmem:[%s4915 + $0x1c0] sm:$0xff]
    %v4973 = vld [vmem:[%s4915 + $0x1c8] sm:$0xff]
    %v4974 = vld [vmem:[%s4915 + $0x1d0] sm:$0xff]
    %v4975 = vld [vmem:[%s4915 + $0x1d8] sm:$0xff]
    %v4976 = vld [vmem:[%s4915 + $0x1e0] sm:$0xff]
    %v4977 = vld [vmem:[%s4915 + $0x1e8] sm:$0xff]
    %v4978 = vld [vmem:[%s4915 + $0x1f0] sm:$0xff]
    %v4979 = vld [vmem:[%s4915 + $0x1f8] sm:$0xff]
    %v4980 = vld [vmem:[%s4915 + $0x200] sm:$0xff]
    %v4981 = vld [vmem:[%s4915 + $0x208] sm:$0xff]
    %v4982 = vld [vmem:[%s4915 + $0x210] sm:$0xff]
    %v4983 = vld [vmem:[%s4915 + $0x218] sm:$0xff]
    %v4984 = vld [vmem:[%s4915 + $0x220] sm:$0xff]
    %v4985 = vld [vmem:[%s4915 + $0x228] sm:$0xff]
    %v4986 = vld [vmem:[%s4915 + $0x230] sm:$0xff]
    %v4987 = vld [vmem:[%s4915 + $0x238] sm:$0xff]
    %v4988 = vld [vmem:[%s4915 + $0x240] sm:$0xff]
    %v4989 = vld [vmem:[%s4915 + $0x248] sm:$0xff]
    %v4990 = vld [vmem:[%s4915 + $0x250] sm:$0xff]
    %v4991 = vld [vmem:[%s4915 + $0x258] sm:$0xff]
    %v4992 = vld [vmem:[%s4915 + $0x260] sm:$0xff]
    %v4993 = vld [vmem:[%s4915 + $0x268] sm:$0xff]
    %v4994 = vld [vmem:[%s4915 + $0x270] sm:$0xff]
    %v4995 = vld [vmem:[%s4915 + $0x278] sm:$0xff]
    %v4996 = vld [vmem:[%s4915 + $0x280] sm:$0xff]
    %v4997 = vld [vmem:[%s4915 + $0x288] sm:$0xff]
    %v4998 = vld [vmem:[%s4915 + $0x290] sm:$0xff]
    %v4999 = vld [vmem:[%s4915 + $0x298] sm:$0xff]
    %v5000 = vld [vmem:[%s4915 + $0x2a0] sm:$0xff]
    %v5001 = vld [vmem:[%s4915 + $0x2a8] sm:$0xff]
    %v5002 = vld [vmem:[%s4915 + $0x2b0] sm:$0xff]
    %v5003 = vld [vmem:[%s4915 + $0x2b8] sm:$0xff]
    %v5004 = vld [vmem:[%s4915 + $0x2c0] sm:$0xff]
    %v5005 = vld [vmem:[%s4915 + $0x2c8] sm:$0xff]
    %v5006 = vld [vmem:[%s4915 + $0x2d0] sm:$0xff]
    %v5007 = vld [vmem:[%s4915 + $0x2d8] sm:$0xff]
    %v5008 = vld [vmem:[%s4915 + $0x2e0] sm:$0xff]
    %v5009 = vld [vmem:[%s4915 + $0x2e8] sm:$0xff]
    %v5010 = vld [vmem:[%s4915 + $0x2f0] sm:$0xff]
    %v5011 = vld [vmem:[%s4915 + $0x2f8] sm:$0xff]
    %v5012 = vld [vmem:[%s4915 + $0x300] sm:$0xff]
    %v5013 = vld [vmem:[%s4915 + $0x308] sm:$0xff]
    %v5014 = vld [vmem:[%s4915 + $0x310] sm:$0xff]
    %v5015 = vld [vmem:[%s4915 + $0x318] sm:$0xff]
    %v5016 = vld [vmem:[%s4915 + $0x320] sm:$0xff]
    %v5017 = vld [vmem:[%s4915 + $0x328] sm:$0xff]
    %v5018 = vld [vmem:[%s4915 + $0x330] sm:$0xff]
    %v5019 = vld [vmem:[%s4915 + $0x338] sm:$0xff]
    %v5020 = vld [vmem:[%s4915 + $0x340] sm:$0xff]
    %v5021 = vld [vmem:[%s4915 + $0x348] sm:$0xff]
    %v5022 = vld [vmem:[%s4915 + $0x350] sm:$0xff]
    %v5023 = vld [vmem:[%s4915 + $0x358] sm:$0xff]
    %v5024 = vld [vmem:[%s4915 + $0x360] sm:$0xff]
    %v5025 = vld [vmem:[%s4915 + $0x368] sm:$0xff]
    %v5026 = vld [vmem:[%s4915 + $0x370] sm:$0xff]
    %v5027 = vld [vmem:[%s4915 + $0x378] sm:$0xff]
    %v5028 = vld [vmem:[%s4915 + $0x380] sm:$0xff]
    %v5029 = vld [vmem:[%s4915 + $0x388] sm:$0xff]
    %v5030 = vld [vmem:[%s4915 + $0x390] sm:$0xff]
    %v5031 = vld [vmem:[%s4915 + $0x398] sm:$0xff]
    %v5032 = vld [vmem:[%s4915 + $0x3a0] sm:$0xff]
    %v5033 = vld [vmem:[%s4915 + $0x3a8] sm:$0xff]
    %v5034 = vld [vmem:[%s4915 + $0x3b0] sm:$0xff]
    %v5035 = vld [vmem:[%s4915 + $0x3b8] sm:$0xff]
    %v5036 = vld [vmem:[%s4915 + $0x3c0] sm:$0xff]
    %v5037 = vld [vmem:[%s4915 + $0x3c8] sm:$0xff]
    %v5038 = vld [vmem:[%s4915 + $0x3d0] sm:$0xff]
    %v5039 = vld [vmem:[%s4915 + $0x3d8] sm:$0xff]
    %v5040 = vld [vmem:[%s4915 + $0x3e0] sm:$0xff]
    %v5041 = vld [vmem:[%s4915 + $0x3e8] sm:$0xff]
    %v5042 = vld [vmem:[%s4915 + $0x3f0] sm:$0xff]
    %v5043 = vld [vmem:[%s4915 + $0x3f8] sm:$0xff]
    %s5044 = scalar_lea.vmem [#allocation7], 12
    %v5045 = vld [vmem:[%s5044] sm:$0xf]
    %v5047 = vlaneseq
    %v5048 = vshrl.u32 %v5047, 7
    %v5049 = vsub.s32 0, %v5048
    %v5050 = vrot.slane %v5045, %v5049
    %v5051 = vlaneseq
    %v5052 = vshrl.u32 %v5051, 7
    %v5053 = vsub.s32 1, %v5052
    %v5054 = vrot.slane %v5045, %v5053
    %v5055 = vlaneseq
    %v5056 = vshrl.u32 %v5055, 7
    %v5057 = vsub.s32 2, %v5056
    %v5058 = vrot.slane %v5045, %v5057
    %v5059 = vlaneseq
    %v5060 = vshrl.u32 %v5059, 7
    %v5061 = vsub.s32 3, %v5060
    %v5062 = vrot.slane %v5045, %v5061
    %v5195 = vunpack.c.l.b16 %v4916
    %v5196 = vunpack.c.h.b16 %v4916
    %v5197 = vunpack.c.l.b16 %v4917
    %v5198 = vunpack.c.h.b16 %v4917
    %v5199 = vunpack.c.l.b16 %v4918
    %v5200 = vunpack.c.h.b16 %v4918
    %v5201 = vunpack.c.l.b16 %v4919
    %v5202 = vunpack.c.h.b16 %v4919
    %v5203 = vunpack.c.l.b16 %v4920
    %v5204 = vunpack.c.h.b16 %v4920
    %v5205 = vunpack.c.l.b16 %v4921
    %v5206 = vunpack.c.h.b16 %v4921
    %v5207 = vunpack.c.l.b16 %v4922
    %v5208 = vunpack.c.h.b16 %v4922
    %v5209 = vunpack.c.l.b16 %v4923
    %v5210 = vunpack.c.h.b16 %v4923
    %v5211 = vunpack.c.l.b16 %v4924
    %v5212 = vunpack.c.h.b16 %v4924
    %v5213 = vunpack.c.l.b16 %v4925
    %v5214 = vunpack.c.h.b16 %v4925
    %v5215 = vunpack.c.l.b16 %v4926
    %v5216 = vunpack.c.h.b16 %v4926
    %v5217 = vunpack.c.l.b16 %v4927
    %v5218 = vunpack.c.h.b16 %v4927
    %v5219 = vunpack.c.l.b16 %v4928
    %v5220 = vunpack.c.h.b16 %v4928
    %v5221 = vunpack.c.l.b16 %v4929
    %v5222 = vunpack.c.h.b16 %v4929
    %v5223 = vunpack.c.l.b16 %v4930
    %v5224 = vunpack.c.h.b16 %v4930
    %v5225 = vunpack.c.l.b16 %v4931
    %v5226 = vunpack.c.h.b16 %v4931
    %v5227 = vunpack.c.l.b16 %v4932
    %v5228 = vunpack.c.h.b16 %v4932
    %v5229 = vunpack.c.l.b16 %v4933
    %v5230 = vunpack.c.h.b16 %v4933
    %v5231 = vunpack.c.l.b16 %v4934
    %v5232 = vunpack.c.h.b16 %v4934
    %v5233 = vunpack.c.l.b16 %v4935
    %v5234 = vunpack.c.h.b16 %v4935
    %v5235 = vunpack.c.l.b16 %v4936
    %v5236 = vunpack.c.h.b16 %v4936
    %v5237 = vunpack.c.l.b16 %v4937
    %v5238 = vunpack.c.h.b16 %v4937
    %v5239 = vunpack.c.l.b16 %v4938
    %v5240 = vunpack.c.h.b16 %v4938
    %v5241 = vunpack.c.l.b16 %v4939
    %v5242 = vunpack.c.h.b16 %v4939
    %v5243 = vunpack.c.l.b16 %v4940
    %v5244 = vunpack.c.h.b16 %v4940
    %v5245 = vunpack.c.l.b16 %v4941
    %v5246 = vunpack.c.h.b16 %v4941
    %v5247 = vunpack.c.l.b16 %v4942
    %v5248 = vunpack.c.h.b16 %v4942
    %v5249 = vunpack.c.l.b16 %v4943
    %v5250 = vunpack.c.h.b16 %v4943
    %v5251 = vunpack.c.l.b16 %v4944
    %v5252 = vunpack.c.h.b16 %v4944
    %v5253 = vunpack.c.l.b16 %v4945
    %v5254 = vunpack.c.h.b16 %v4945
    %v5255 = vunpack.c.l.b16 %v4946
    %v5256 = vunpack.c.h.b16 %v4946
    %v5257 = vunpack.c.l.b16 %v4947
    %v5258 = vunpack.c.h.b16 %v4947
    %v5259 = vunpack.c.l.b16 %v4948
    %v5260 = vunpack.c.h.b16 %v4948
    %v5261 = vunpack.c.l.b16 %v4949
    %v5262 = vunpack.c.h.b16 %v4949
    %v5263 = vunpack.c.l.b16 %v4950
    %v5264 = vunpack.c.h.b16 %v4950
    %v5265 = vunpack.c.l.b16 %v4951
    %v5266 = vunpack.c.h.b16 %v4951
    %v5267 = vunpack.c.l.b16 %v4952
    %v5268 = vunpack.c.h.b16 %v4952
    %v5269 = vunpack.c.l.b16 %v4953
    %v5270 = vunpack.c.h.b16 %v4953
    %v5271 = vunpack.c.l.b16 %v4954
    %v5272 = vunpack.c.h.b16 %v4954
    %v5273 = vunpack.c.l.b16 %v4955
    %v5274 = vunpack.c.h.b16 %v4955
    %v5275 = vunpack.c.l.b16 %v4956
    %v5276 = vunpack.c.h.b16 %v4956
    %v5277 = vunpack.c.l.b16 %v4957
    %v5278 = vunpack.c.h.b16 %v4957
    %v5279 = vunpack.c.l.b16 %v4958
    %v5280 = vunpack.c.h.b16 %v4958
    %v5281 = vunpack.c.l.b16 %v4959
    %v5282 = vunpack.c.h.b16 %v4959
    %v5283 = vunpack.c.l.b16 %v4960
    %v5284 = vunpack.c.h.b16 %v4960
    %v5285 = vunpack.c.l.b16 %v4961
    %v5286 = vunpack.c.h.b16 %v4961
    %v5287 = vunpack.c.l.b16 %v4962
    %v5288 = vunpack.c.h.b16 %v4962
    %v5289 = vunpack.c.l.b16 %v4963
    %v5290 = vunpack.c.h.b16 %v4963
    %v5291 = vunpack.c.l.b16 %v4964
    %v5292 = vunpack.c.h.b16 %v4964
    %v5293 = vunpack.c.l.b16 %v4965
    %v5294 = vunpack.c.h.b16 %v4965
    %v5295 = vunpack.c.l.b16 %v4966
    %v5296 = vunpack.c.h.b16 %v4966
    %v5297 = vunpack.c.l.b16 %v4967
    %v5298 = vunpack.c.h.b16 %v4967
    %v5299 = vunpack.c.l.b16 %v4968
    %v5300 = vunpack.c.h.b16 %v4968
    %v5301 = vunpack.c.l.b16 %v4969
    %v5302 = vunpack.c.h.b16 %v4969
    %v5303 = vunpack.c.l.b16 %v4970
    %v5304 = vunpack.c.h.b16 %v4970
    %v5305 = vunpack.c.l.b16 %v4971
    %v5306 = vunpack.c.h.b16 %v4971
    %v5307 = vunpack.c.l.b16 %v4972
    %v5308 = vunpack.c.h.b16 %v4972
    %v5309 = vunpack.c.l.b16 %v4973
    %v5310 = vunpack.c.h.b16 %v4973
    %v5311 = vunpack.c.l.b16 %v4974
    %v5312 = vunpack.c.h.b16 %v4974
    %v5313 = vunpack.c.l.b16 %v4975
    %v5314 = vunpack.c.h.b16 %v4975
    %v5315 = vunpack.c.l.b16 %v4976
    %v5316 = vunpack.c.h.b16 %v4976
    %v5317 = vunpack.c.l.b16 %v4977
    %v5318 = vunpack.c.h.b16 %v4977
    %v5319 = vunpack.c.l.b16 %v4978
    %v5320 = vunpack.c.h.b16 %v4978
    %v5321 = vunpack.c.l.b16 %v4979
    %v5322 = vunpack.c.h.b16 %v4979
    %v5323 = vunpack.c.l.b16 %v4980
    %v5324 = vunpack.c.h.b16 %v4980
    %v5325 = vunpack.c.l.b16 %v4981
    %v5326 = vunpack.c.h.b16 %v4981
    %v5327 = vunpack.c.l.b16 %v4982
    %v5328 = vunpack.c.h.b16 %v4982
    %v5329 = vunpack.c.l.b16 %v4983
    %v5330 = vunpack.c.h.b16 %v4983
    %v5331 = vunpack.c.l.b16 %v4984
    %v5332 = vunpack.c.h.b16 %v4984
    %v5333 = vunpack.c.l.b16 %v4985
    %v5334 = vunpack.c.h.b16 %v4985
    %v5335 = vunpack.c.l.b16 %v4986
    %v5336 = vunpack.c.h.b16 %v4986
    %v5337 = vunpack.c.l.b16 %v4987
    %v5338 = vunpack.c.h.b16 %v4987
    %v5339 = vunpack.c.l.b16 %v4988
    %v5340 = vunpack.c.h.b16 %v4988
    %v5341 = vunpack.c.l.b16 %v4989
    %v5342 = vunpack.c.h.b16 %v4989
    %v5343 = vunpack.c.l.b16 %v4990
    %v5344 = vunpack.c.h.b16 %v4990
    %v5345 = vunpack.c.l.b16 %v4991
    %v5346 = vunpack.c.h.b16 %v4991
    %v5347 = vunpack.c.l.b16 %v4992
    %v5348 = vunpack.c.h.b16 %v4992
    %v5349 = vunpack.c.l.b16 %v4993
    %v5350 = vunpack.c.h.b16 %v4993
    %v5351 = vunpack.c.l.b16 %v4994
    %v5352 = vunpack.c.h.b16 %v4994
    %v5353 = vunpack.c.l.b16 %v4995
    %v5354 = vunpack.c.h.b16 %v4995
    %v5355 = vunpack.c.l.b16 %v4996
    %v5356 = vunpack.c.h.b16 %v4996
    %v5357 = vunpack.c.l.b16 %v4997
    %v5358 = vunpack.c.h.b16 %v4997
    %v5359 = vunpack.c.l.b16 %v4998
    %v5360 = vunpack.c.h.b16 %v4998
    %v5361 = vunpack.c.l.b16 %v4999
    %v5362 = vunpack.c.h.b16 %v4999
    %v5363 = vunpack.c.l.b16 %v5000
    %v5364 = vunpack.c.h.b16 %v5000
    %v5365 = vunpack.c.l.b16 %v5001
    %v5366 = vunpack.c.h.b16 %v5001
    %v5367 = vunpack.c.l.b16 %v5002
    %v5368 = vunpack.c.h.b16 %v5002
    %v5369 = vunpack.c.l.b16 %v5003
    %v5370 = vunpack.c.h.b16 %v5003
    %v5371 = vunpack.c.l.b16 %v5004
    %v5372 = vunpack.c.h.b16 %v5004
    %v5373 = vunpack.c.l.b16 %v5005
    %v5374 = vunpack.c.h.b16 %v5005
    %v5375 = vunpack.c.l.b16 %v5006
    %v5376 = vunpack.c.h.b16 %v5006
    %v5377 = vunpack.c.l.b16 %v5007
    %v5378 = vunpack.c.h.b16 %v5007
    %v5379 = vunpack.c.l.b16 %v5008
    %v5380 = vunpack.c.h.b16 %v5008
    %v5381 = vunpack.c.l.b16 %v5009
    %v5382 = vunpack.c.h.b16 %v5009
    %v5383 = vunpack.c.l.b16 %v5010
    %v5384 = vunpack.c.h.b16 %v5010
    %v5385 = vunpack.c.l.b16 %v5011
    %v5386 = vunpack.c.h.b16 %v5011
    %v5387 = vunpack.c.l.b16 %v5012
    %v5388 = vunpack.c.h.b16 %v5012
    %v5389 = vunpack.c.l.b16 %v5013
    %v5390 = vunpack.c.h.b16 %v5013
    %v5391 = vunpack.c.l.b16 %v5014
    %v5392 = vunpack.c.h.b16 %v5014
    %v5393 = vunpack.c.l.b16 %v5015
    %v5394 = vunpack.c.h.b16 %v5015
    %v5395 = vunpack.c.l.b16 %v5016
    %v5396 = vunpack.c.h.b16 %v5016
    %v5397 = vunpack.c.l.b16 %v5017
    %v5398 = vunpack.c.h.b16 %v5017
    %v5399 = vunpack.c.l.b16 %v5018
    %v5400 = vunpack.c.h.b16 %v5018
    %v5401 = vunpack.c.l.b16 %v5019
    %v5402 = vunpack.c.h.b16 %v5019
    %v5403 = vunpack.c.l.b16 %v5020
    %v5404 = vunpack.c.h.b16 %v5020
    %v5405 = vunpack.c.l.b16 %v5021
    %v5406 = vunpack.c.h.b16 %v5021
    %v5407 = vunpack.c.l.b16 %v5022
    %v5408 = vunpack.c.h.b16 %v5022
    %v5409 = vunpack.c.l.b16 %v5023
    %v5410 = vunpack.c.h.b16 %v5023
    %v5411 = vunpack.c.l.b16 %v5024
    %v5412 = vunpack.c.h.b16 %v5024
    %v5413 = vunpack.c.l.b16 %v5025
    %v5414 = vunpack.c.h.b16 %v5025
    %v5415 = vunpack.c.l.b16 %v5026
    %v5416 = vunpack.c.h.b16 %v5026
    %v5417 = vunpack.c.l.b16 %v5027
    %v5418 = vunpack.c.h.b16 %v5027
    %v5419 = vunpack.c.l.b16 %v5028
    %v5420 = vunpack.c.h.b16 %v5028
    %v5421 = vunpack.c.l.b16 %v5029
    %v5422 = vunpack.c.h.b16 %v5029
    %v5423 = vunpack.c.l.b16 %v5030
    %v5424 = vunpack.c.h.b16 %v5030
    %v5425 = vunpack.c.l.b16 %v5031
    %v5426 = vunpack.c.h.b16 %v5031
    %v5427 = vunpack.c.l.b16 %v5032
    %v5428 = vunpack.c.h.b16 %v5032
    %v5429 = vunpack.c.l.b16 %v5033
    %v5430 = vunpack.c.h.b16 %v5033
    %v5431 = vunpack.c.l.b16 %v5034
    %v5432 = vunpack.c.h.b16 %v5034
    %v5433 = vunpack.c.l.b16 %v5035
    %v5434 = vunpack.c.h.b16 %v5035
    %v5435 = vunpack.c.l.b16 %v5036
    %v5436 = vunpack.c.h.b16 %v5036
    %v5437 = vunpack.c.l.b16 %v5037
    %v5438 = vunpack.c.h.b16 %v5037
    %v5439 = vunpack.c.l.b16 %v5038
    %v5440 = vunpack.c.h.b16 %v5038
    %v5441 = vunpack.c.l.b16 %v5039
    %v5442 = vunpack.c.h.b16 %v5039
    %v5443 = vunpack.c.l.b16 %v5040
    %v5444 = vunpack.c.h.b16 %v5040
    %v5445 = vunpack.c.l.b16 %v5041
    %v5446 = vunpack.c.h.b16 %v5041
    %v5447 = vunpack.c.l.b16 %v5042
    %v5448 = vunpack.c.h.b16 %v5042
    %v5449 = vunpack.c.l.b16 %v5043
    %v5450 = vunpack.c.h.b16 %v5043
    %v5451 = vpack.c.b16 %v5199, %v5195
    %v5452 = vpack.c.b16 %v5200, %v5196
    %v5453 = vpack.c.b16 %v5201, %v5197
    %v5454 = vpack.c.b16 %v5202, %v5198
    %v5455 = vpack.c.b16 %v5207, %v5203
    %v5456 = vpack.c.b16 %v5208, %v5204
    %v5457 = vpack.c.b16 %v5209, %v5205
    %v5458 = vpack.c.b16 %v5210, %v5206
    %v5459 = vpack.c.b16 %v5215, %v5211
    %v5460 = vpack.c.b16 %v5216, %v5212
    %v5461 = vpack.c.b16 %v5217, %v5213
    %v5462 = vpack.c.b16 %v5218, %v5214
    %v5463 = vpack.c.b16 %v5223, %v5219
    %v5464 = vpack.c.b16 %v5224, %v5220
    %v5465 = vpack.c.b16 %v5225, %v5221
    %v5466 = vpack.c.b16 %v5226, %v5222
    %v5467 = vpack.c.b16 %v5231, %v5227
    %v5468 = vpack.c.b16 %v5232, %v5228
    %v5469 = vpack.c.b16 %v5233, %v5229
    %v5470 = vpack.c.b16 %v5234, %v5230
    %v5471 = vpack.c.b16 %v5239, %v5235
    %v5472 = vpack.c.b16 %v5240, %v5236
    %v5473 = vpack.c.b16 %v5241, %v5237
    %v5474 = vpack.c.b16 %v5242, %v5238
    %v5475 = vpack.c.b16 %v5247, %v5243
    %v5476 = vpack.c.b16 %v5248, %v5244
    %v5477 = vpack.c.b16 %v5249, %v5245
    %v5478 = vpack.c.b16 %v5250, %v5246
    %v5479 = vpack.c.b16 %v5255, %v5251
    %v5480 = vpack.c.b16 %v5256, %v5252
    %v5481 = vpack.c.b16 %v5257, %v5253
    %v5482 = vpack.c.b16 %v5258, %v5254
    %v5483 = vpack.c.b16 %v5263, %v5259
    %v5484 = vpack.c.b16 %v5264, %v5260
    %v5485 = vpack.c.b16 %v5265, %v5261
    %v5486 = vpack.c.b16 %v5266, %v5262
    %v5487 = vpack.c.b16 %v5271, %v5267
    %v5488 = vpack.c.b16 %v5272, %v5268
    %v5489 = vpack.c.b16 %v5273, %v5269
    %v5490 = vpack.c.b16 %v5274, %v5270
    %v5491 = vpack.c.b16 %v5279, %v5275
    %v5492 = vpack.c.b16 %v5280, %v5276
    %v5493 = vpack.c.b16 %v5281, %v5277
    %v5494 = vpack.c.b16 %v5282, %v5278
    %v5495 = vpack.c.b16 %v5287, %v5283
    %v5496 = vpack.c.b16 %v5288, %v5284
    %v5497 = vpack.c.b16 %v5289, %v5285
    %v5498 = vpack.c.b16 %v5290, %v5286
    %v5499 = vpack.c.b16 %v5295, %v5291
    %v5500 = vpack.c.b16 %v5296, %v5292
    %v5501 = vpack.c.b16 %v5297, %v5293
    %v5502 = vpack.c.b16 %v5298, %v5294
    %v5503 = vpack.c.b16 %v5303, %v5299
    %v5504 = vpack.c.b16 %v5304, %v5300
    %v5505 = vpack.c.b16 %v5305, %v5301
    %v5506 = vpack.c.b16 %v5306, %v5302
    %v5507 = vpack.c.b16 %v5311, %v5307
    %v5508 = vpack.c.b16 %v5312, %v5308
    %v5509 = vpack.c.b16 %v5313, %v5309
    %v5510 = vpack.c.b16 %v5314, %v5310
    %v5511 = vpack.c.b16 %v5319, %v5315
    %v5512 = vpack.c.b16 %v5320, %v5316
    %v5513 = vpack.c.b16 %v5321, %v5317
    %v5514 = vpack.c.b16 %v5322, %v5318
    %v5515 = vpack.c.b16 %v5327, %v5323
    %v5516 = vpack.c.b16 %v5328, %v5324
    %v5517 = vpack.c.b16 %v5329, %v5325
    %v5518 = vpack.c.b16 %v5330, %v5326
    %v5519 = vpack.c.b16 %v5335, %v5331
    %v5520 = vpack.c.b16 %v5336, %v5332
    %v5521 = vpack.c.b16 %v5337, %v5333
    %v5522 = vpack.c.b16 %v5338, %v5334
    %v5523 = vpack.c.b16 %v5343, %v5339
    %v5524 = vpack.c.b16 %v5344, %v5340
    %v5525 = vpack.c.b16 %v5345, %v5341
    %v5526 = vpack.c.b16 %v5346, %v5342
    %v5527 = vpack.c.b16 %v5351, %v5347
    %v5528 = vpack.c.b16 %v5352, %v5348
    %v5529 = vpack.c.b16 %v5353, %v5349
    %v5530 = vpack.c.b16 %v5354, %v5350
    %v5531 = vpack.c.b16 %v5359, %v5355
    %v5532 = vpack.c.b16 %v5360, %v5356
    %v5533 = vpack.c.b16 %v5361, %v5357
    %v5534 = vpack.c.b16 %v5362, %v5358
    %v5535 = vpack.c.b16 %v5367, %v5363
    %v5536 = vpack.c.b16 %v5368, %v5364
    %v5537 = vpack.c.b16 %v5369, %v5365
    %v5538 = vpack.c.b16 %v5370, %v5366
    %v5539 = vpack.c.b16 %v5375, %v5371
    %v5540 = vpack.c.b16 %v5376, %v5372
    %v5541 = vpack.c.b16 %v5377, %v5373
    %v5542 = vpack.c.b16 %v5378, %v5374
    %v5543 = vpack.c.b16 %v5383, %v5379
    %v5544 = vpack.c.b16 %v5384, %v5380
    %v5545 = vpack.c.b16 %v5385, %v5381
    %v5546 = vpack.c.b16 %v5386, %v5382
    %v5547 = vpack.c.b16 %v5391, %v5387
    %v5548 = vpack.c.b16 %v5392, %v5388
    %v5549 = vpack.c.b16 %v5393, %v5389
    %v5550 = vpack.c.b16 %v5394, %v5390
    %v5551 = vpack.c.b16 %v5399, %v5395
    %v5552 = vpack.c.b16 %v5400, %v5396
    %v5553 = vpack.c.b16 %v5401, %v5397
    %v5554 = vpack.c.b16 %v5402, %v5398
    %v5555 = vpack.c.b16 %v5407, %v5403
    %v5556 = vpack.c.b16 %v5408, %v5404
    %v5557 = vpack.c.b16 %v5409, %v5405
    %v5558 = vpack.c.b16 %v5410, %v5406
    %v5559 = vpack.c.b16 %v5415, %v5411
    %v5560 = vpack.c.b16 %v5416, %v5412
    %v5561 = vpack.c.b16 %v5417, %v5413
    %v5562 = vpack.c.b16 %v5418, %v5414
    %v5563 = vpack.c.b16 %v5423, %v5419
    %v5564 = vpack.c.b16 %v5424, %v5420
    %v5565 = vpack.c.b16 %v5425, %v5421
    %v5566 = vpack.c.b16 %v5426, %v5422
    %v5567 = vpack.c.b16 %v5431, %v5427
    %v5568 = vpack.c.b16 %v5432, %v5428
    %v5569 = vpack.c.b16 %v5433, %v5429
    %v5570 = vpack.c.b16 %v5434, %v5430
    %v5571 = vpack.c.b16 %v5439, %v5435
    %v5572 = vpack.c.b16 %v5440, %v5436
    %v5573 = vpack.c.b16 %v5441, %v5437
    %v5574 = vpack.c.b16 %v5442, %v5438
    %v5575 = vpack.c.b16 %v5447, %v5443
    %v5576 = vpack.c.b16 %v5448, %v5444
    %v5577 = vpack.c.b16 %v5449, %v5445
    %v5578 = vpack.c.b16 %v5450, %v5446
    %5707 = vmatprep.subr.bf16.mxu0 %v5452
    %5708 = vmatpush1.bf16.msra.mxu0 %v5451
    %5709 = vmatprep.subr.bf16.mxu0 %v5456
    %5710 = vmatpush1.bf16.msra.mxu0 %v5455
    %5711 = vmatprep.subr.bf16.mxu0 %v5460
    %5712 = vmatpush1.bf16.msra.mxu0 %v5459
    %5713 = vmatprep.subr.bf16.mxu0 %v5464
    %5714 = vmatpush1.bf16.msra.mxu0 %v5463
    %5715 = vmatprep.subr.bf16.mxu0 %v5468
    %5716 = vmatpush1.bf16.msra.mxu0 %v5467
    %5717 = vmatprep.subr.bf16.mxu0 %v5472
    %5718 = vmatpush1.bf16.msra.mxu0 %v5471
    %5719 = vmatprep.subr.bf16.mxu0 %v5476
    %5720 = vmatpush1.bf16.msra.mxu0 %v5475
    %5721 = vmatprep.subr.bf16.mxu0 %v5480
    %5722 = vmatpush1.bf16.msra.mxu0 %v5479
    %5723 = vmatprep.subr.bf16.mxu0 %v5484
    %5724 = vmatpush1.bf16.msra.mxu0 %v5483
    %5725 = vmatprep.subr.bf16.mxu0 %v5488
    %5726 = vmatpush1.bf16.msra.mxu0 %v5487
    %5727 = vmatprep.subr.bf16.mxu0 %v5492
    %5728 = vmatpush1.bf16.msra.mxu0 %v5491
    %5729 = vmatprep.subr.bf16.mxu0 %v5496
    %5730 = vmatpush1.bf16.msra.mxu0 %v5495
    %5731 = vmatprep.subr.bf16.mxu0 %v5500
    %5732 = vmatpush1.bf16.msra.mxu0 %v5499
    %5733 = vmatprep.subr.bf16.mxu0 %v5504
    %5734 = vmatpush1.bf16.msra.mxu0 %v5503
    %5735 = vmatprep.subr.bf16.mxu0 %v5508
    %5736 = vmatpush1.bf16.msra.mxu0 %v5507
    %5737 = vmatprep.subr.bf16.mxu0 %v5512
    %5738 = vmatpush1.bf16.msra.mxu0 %v5511
    %5739 = vmatprep.mubr.bf16.mxu0 %v4884
    %5740 = vmatmul.mubr.bf16.gmra.mrb[0].mxu0 %v4883
    %v5741 = vpop.f32.mrb[0].mxu0
    %v5742 = vadd.f32 %v5050, %v5741
    %v5743 = vpop.f32.mrb[0].mxu0
    %v5744 = vadd.f32 %v5054, %v5743
    %v5745 = vpop.f32.mrb[0].mxu0
    %v5746 = vadd.f32 %v5050, %v5745
    %v5747 = vpop.f32.mrb[0].mxu0
    %v5748 = vadd.f32 %v5054, %v5747
    %5749 = vmatprep.mubr.bf16.mxu0 %v4888
    %5750 = vmatmul.mubr.bf16.gmra.mrb[0].mxu0 %v4887
    %v5751 = vpop.f32.mrb[0].mxu0
    %v5752 = vadd.f32 %v5050, %v5751
    %v5753 = vpop.f32.mrb[0].mxu0
    %v5754 = vadd.f32 %v5054, %v5753
    %v5755 = vpop.f32.mrb[0].mxu0
    %v5756 = vadd.f32 %v5050, %v5755
    %v5757 = vpop.f32.mrb[0].mxu0
    %v5758 = vadd.f32 %v5054, %v5757
    %5759 = vmatprep.mubr.bf16.mxu0 %v4892
    %5760 = vmatmul.mubr.bf16.gmra.mrb[0].mxu0 %v4891
    %v5761 = vpop.f32.mrb[0].mxu0
    %v5762 = vadd.f32 %v5050, %v5761
    %v5763 = vpop.f32.mrb[0].mxu0
    %v5764 = vadd.f32 %v5054, %v5763
    %v5765 = vpop.f32.mrb[0].mxu0
    %v5766 = vadd.f32 %v5050, %v5765
    %v5767 = vpop.f32.mrb[0].mxu0
    %v5768 = vadd.f32 %v5054, %v5767
    %5769 = vmatprep.mubr.bf16.mxu0 %v4896
    %5770 = vmatmul.mubr.bf16.gmra.mrb[0].mxu0 %v4895
    %v5771 = vpop.f32.mrb[0].mxu0
    %v5772 = vadd.f32 %v5050, %v5771
    %v5773 = vpop.f32.mrb[0].mxu0
    %v5774 = vadd.f32 %v5054, %v5773
    %v5775 = vpop.f32.mrb[0].mxu0
    %v5776 = vadd.f32 %v5050, %v5775
    %v5777 = vpop.f32.mrb[0].mxu0
    %v5778 = vadd.f32 %v5054, %v5777
    %5779 = vmatprep.mubr.bf16.mxu0 %v4900
    %5780 = vmatmul.mubr.bf16.gmra.mrb[0].mxu0 %v4899
    %v5781 = vpop.f32.mrb[0].mxu0
    %v5782 = vadd.f32 %v5050, %v5781
    %v5783 = vpop.f32.mrb[0].mxu0
    %v5784 = vadd.f32 %v5054, %v5783
    %v5785 = vpop.f32.mrb[0].mxu0
    %v5786 = vadd.f32 %v5050, %v5785
    %v5787 = vpop.f32.mrb[0].mxu0
    %v5788 = vadd.f32 %v5054, %v5787
    %5789 = vmatprep.mubr.bf16.mxu0 %v4904
    %5790 = vmatmul.mubr.bf16.gmra.mrb[0].mxu0 %v4903
    %v5791 = vpop.f32.mrb[0].mxu0
    %v5792 = vadd.f32 %v5050, %v5791
    %v5793 = vpop.f32.mrb[0].mxu0
    %v5794 = vadd.f32 %v5054, %v5793
    %v5795 = vpop.f32.mrb[0].mxu0
    %v5796 = vadd.f32 %v5050, %v5795
    %v5797 = vpop.f32.mrb[0].mxu0
    %v5798 = vadd.f32 %v5054, %v5797
    %5799 = vmatprep.mubr.bf16.mxu0 %v4908
    %5800 = vmatmul.mubr.bf16.gmra.mrb[0].mxu0 %v4907
    %v5801 = vpop.f32.mrb[0].mxu0
    %v5802 = vadd.f32 %v5050, %v5801
    %v5803 = vpop.f32.mrb[0].mxu0
    %v5804 = vadd.f32 %v5054, %v5803
    %v5805 = vpop.f32.mrb[0].mxu0
    %v5806 = vadd.f32 %v5050, %v5805
    %v5807 = vpop.f32.mrb[0].mxu0
    %v5808 = vadd.f32 %v5054, %v5807
    %5809 = vmatprep.mubr.bf16.mxu0 %v4912
    %5810 = vmatmul.mubr.bf16.gmra.mrb[0].mxu0 %v4911
    %v5811 = vpop.f32.mrb[0].mxu0
    %v5812 = vadd.f32 %v5050, %v5811
    %v5813 = vpop.f32.mrb[0].mxu0
    %v5814 = vadd.f32 %v5054, %v5813
    %v5815 = vpop.f32.mrb[0].mxu0
    %v5816 = vadd.f32 %v5050, %v5815
    %v5817 = vpop.f32.mrb[0].mxu0
    %v5818 = vadd.f32 %v5054, %v5817
    %5819 = vdwg.mxu0
    %5820 = vmatprep.subr.bf16.mxu0 %v5516
    %5821 = vmatpush1.bf16.msra.mxu0 %v5515
    %5822 = vmatprep.subr.bf16.mxu0 %v5520
    %5823 = vmatpush1.bf16.msra.mxu0 %v5519
    %5824 = vmatprep.subr.bf16.mxu0 %v5524
    %5825 = vmatpush1.bf16.msra.mxu0 %v5523
    %5826 = vmatprep.subr.bf16.mxu0 %v5528
    %5827 = vmatpush1.bf16.msra.mxu0 %v5527
    %5828 = vmatprep.subr.bf16.mxu0 %v5532
    %5829 = vmatpush1.bf16.msra.mxu0 %v5531
    %5830 = vmatprep.subr.bf16.mxu0 %v5536
    %5831 = vmatpush1.bf16.msra.mxu0 %v5535
    %5832 = vmatprep.subr.bf16.mxu0 %v5540
    %5833 = vmatpush1.bf16.msra.mxu0 %v5539
    %5834 = vmatprep.subr.bf16.mxu0 %v5544
    %5835 = vmatpush1.bf16.msra.mxu0 %v5543
    %5836 = vmatprep.subr.bf16.mxu0 %v5548
    %5837 = vmatpush1.bf16.msra.mxu0 %v5547
    %5838 = vmatprep.subr.bf16.mxu0 %v5552
    %5839 = vmatpush1.bf16.msra.mxu0 %v5551
    %5840 = vmatprep.subr.bf16.mxu0 %v5556
    %5841 = vmatpush1.bf16.msra.mxu0 %v5555
    %5842 = vmatprep.subr.bf16.mxu0 %v5560
    %5843 = vmatpush1.bf16.msra.mxu0 %v5559
    %5844 = vmatprep.subr.bf16.mxu0 %v5564
    %5845 = vmatpush1.bf16.msra.mxu0 %v5563
    %5846 = vmatprep.subr.bf16.mxu0 %v5568
    %5847 = vmatpush1.bf16.msra.mxu0 %v5567
    %5848 = vmatprep.subr.bf16.mxu0 %v5572
    %5849 = vmatpush1.bf16.msra.mxu0 %v5571
    %5850 = vmatprep.subr.bf16.mxu0 %v5576
    %5851 = vmatpush1.bf16.msra.mxu0 %v5575
    %5852 = vmatprep.mubr.bf16.mxu0 %v4886
    %5853 = vmatmul.mubr.bf16.gmra.mrb[0].mxu0 %v4885
    %v5854 = vpop.f32.mrb[0].mxu0
    %v5855 = vadd.f32 %v5742, %v5854
    %v5856 = vpop.f32.mrb[0].mxu0
    %v5857 = vadd.f32 %v5744, %v5856
    %v5858 = vpop.f32.mrb[0].mxu0
    %v5859 = vadd.f32 %v5746, %v5858
    %v5860 = vpop.f32.mrb[0].mxu0
    %v5861 = vadd.f32 %v5748, %v5860
    %5862 = vmatprep.mubr.bf16.mxu0 %v4890
    %5863 = vmatmul.mubr.bf16.gmra.mrb[0].mxu0 %v4889
    %v5864 = vpop.f32.mrb[0].mxu0
    %v5865 = vadd.f32 %v5752, %v5864
    %v5866 = vpop.f32.mrb[0].mxu0
    %v5867 = vadd.f32 %v5754, %v5866
    %v5868 = vpop.f32.mrb[0].mxu0
    %v5869 = vadd.f32 %v5756, %v5868
    %v5870 = vpop.f32.mrb[0].mxu0
    %v5871 = vadd.f32 %v5758, %v5870
    %5872 = vmatprep.mubr.bf16.mxu0 %v4894
    %5873 = vmatmul.mubr.bf16.gmra.mrb[0].mxu0 %v4893
    %v5874 = vpop.f32.mrb[0].mxu0
    %v5875 = vadd.f32 %v5762, %v5874
    %v5876 = vpop.f32.mrb[0].mxu0
    %v5877 = vadd.f32 %v5764, %v5876
    %v5878 = vpop.f32.mrb[0].mxu0
    %v5879 = vadd.f32 %v5766, %v5878
    %v5880 = vpop.f32.mrb[0].mxu0
    %v5881 = vadd.f32 %v5768, %v5880
    %5882 = vmatprep.mubr.bf16.mxu0 %v4898
    %5883 = vmatmul.mubr.bf16.gmra.mrb[0].mxu0 %v4897
    %v5884 = vpop.f32.mrb[0].mxu0
    %v5885 = vadd.f32 %v5772, %v5884
    %v5886 = vpop.f32.mrb[0].mxu0
    %v5887 = vadd.f32 %v5774, %v5886
    %v5888 = vpop.f32.mrb[0].mxu0
    %v5889 = vadd.f32 %v5776, %v5888
    %v5890 = vpop.f32.mrb[0].mxu0
    %v5891 = vadd.f32 %v5778, %v5890
    %5892 = vmatprep.mubr.bf16.mxu0 %v4902
    %5893 = vmatmul.mubr.bf16.gmra.mrb[0].mxu0 %v4901
    %v5894 = vpop.f32.mrb[0].mxu0
    %v5895 = vadd.f32 %v5782, %v5894
    %v5896 = vpop.f32.mrb[0].mxu0
    %v5897 = vadd.f32 %v5784, %v5896
    %v5898 = vpop.f32.mrb[0].mxu0
    %v5899 = vadd.f32 %v5786, %v5898
    %v5900 = vpop.f32.mrb[0].mxu0
    %v5901 = vadd.f32 %v5788, %v5900
    %5902 = vmatprep.mubr.bf16.mxu0 %v4906
    %5903 = vmatmul.mubr.bf16.gmra.mrb[0].mxu0 %v4905
    %v5904 = vpop.f32.mrb[0].mxu0
    %v5905 = vadd.f32 %v5792, %v5904
    %v5906 = vpop.f32.mrb[0].mxu0
    %v5907 = vadd.f32 %v5794, %v5906
    %v5908 = vpop.f32.mrb[0].mxu0
    %v5909 = vadd.f32 %v5796, %v5908
    %v5910 = vpop.f32.mrb[0].mxu0
    %v5911 = vadd.f32 %v5798, %v5910
    %5912 = vmatprep.mubr.bf16.mxu0 %v4910
    %5913 = vmatmul.mubr.bf16.gmra.mrb[0].mxu0 %v4909
    %v5914 = vpop.f32.mrb[0].mxu0
    %v5915 = vadd.f32 %v5802, %v5914
    %v5916 = vpop.f32.mrb[0].mxu0
    %v5917 = vadd.f32 %v5804, %v5916
    %v5918 = vpop.f32.mrb[0].mxu0
    %v5919 = vadd.f32 %v5806, %v5918
    %v5920 = vpop.f32.mrb[0].mxu0
    %v5921 = vadd.f32 %v5808, %v5920
    %5922 = vmatprep.mubr.bf16.mxu0 %v4914
    %5923 = vmatmul.mubr.bf16.gmra.mrb[0].mxu0 %v4913
    %v5924 = vpop.f32.mrb[0].mxu0
    %v5925 = vadd.f32 %v5812, %v5924
    %v5926 = vpop.f32.mrb[0].mxu0
    %v5927 = vadd.f32 %v5814, %v5926
    %v5928 = vpop.f32.mrb[0].mxu0
    %v5929 = vadd.f32 %v5816, %v5928
    %v5930 = vpop.f32.mrb[0].mxu0
    %v5931 = vadd.f32 %v5818, %v5930
    %5932 = vdwg.mxu0
    %5933 = vmatprep.subr.bf16.mxu0 %v5454
    %5934 = vmatpush1.bf16.msra.mxu0 %v5453
    %5935 = vmatprep.subr.bf16.mxu0 %v5458
    %5936 = vmatpush1.bf16.msra.mxu0 %v5457
    %5937 = vmatprep.subr.bf16.mxu0 %v5462
    %5938 = vmatpush1.bf16.msra.mxu0 %v5461
    %5939 = vmatprep.subr.bf16.mxu0 %v5466
    %5940 = vmatpush1.bf16.msra.mxu0 %v5465
    %5941 = vmatprep.subr.bf16.mxu0 %v5470
    %5942 = vmatpush1.bf16.msra.mxu0 %v5469
    %5943 = vmatprep.subr.bf16.mxu0 %v5474
    %5944 = vmatpush1.bf16.msra.mxu0 %v5473
    %5945 = vmatprep.subr.bf16.mxu0 %v5478
    %5946 = vmatpush1.bf16.msra.mxu0 %v5477
    %5947 = vmatprep.subr.bf16.mxu0 %v5482
    %5948 = vmatpush1.bf16.msra.mxu0 %v5481
    %5949 = vmatprep.subr.bf16.mxu0 %v5486
    %5950 = vmatpush1.bf16.msra.mxu0 %v5485
    %5951 = vmatprep.subr.bf16.mxu0 %v5490
    %5952 = vmatpush1.bf16.msra.mxu0 %v5489
    %5953 = vmatprep.subr.bf16.mxu0 %v5494
    %5954 = vmatpush1.bf16.msra.mxu0 %v5493
    %5955 = vmatprep.subr.bf16.mxu0 %v5498
    %5956 = vmatpush1.bf16.msra.mxu0 %v5497
    %5957 = vmatprep.subr.bf16.mxu0 %v5502
    %5958 = vmatpush1.bf16.msra.mxu0 %v5501
    %5959 = vmatprep.subr.bf16.mxu0 %v5506
    %5960 = vmatpush1.bf16.msra.mxu0 %v5505
    %5961 = vmatprep.subr.bf16.mxu0 %v5510
    %5962 = vmatpush1.bf16.msra.mxu0 %v5509
    %5963 = vmatprep.subr.bf16.mxu0 %v5514
    %5964 = vmatpush1.bf16.msra.mxu0 %v5513
    %5965 = vmatprep.mubr.bf16.mxu0 %v4884
    %5966 = vmatmul.mubr.bf16.gmra.mrb[0].mxu0 %v4883
    %v5967 = vpop.f32.mrb[0].mxu0
    %v5968 = vadd.f32 %v5058, %v5967
    %v5969 = vpop.f32.mrb[0].mxu0
    %v5970 = vadd.f32 %v5062, %v5969
    %v5971 = vpop.f32.mrb[0].mxu0
    %v5972 = vadd.f32 %v5058, %v5971
    %v5973 = vpop.f32.mrb[0].mxu0
    %v5974 = vadd.f32 %v5062, %v5973
    %5975 = vmatprep.mubr.bf16.mxu0 %v4888
    %5976 = vmatmul.mubr.bf16.gmra.mrb[0].mxu0 %v4887
    %v5977 = vpop.f32.mrb[0].mxu0
    %v5978 = vadd.f32 %v5058, %v5977
    %v5979 = vpop.f32.mrb[0].mxu0
    %v5980 = vadd.f32 %v5062, %v5979
    %v5981 = vpop.f32.mrb[0].mxu0
    %v5982 = vadd.f32 %v5058, %v5981
    %v5983 = vpop.f32.mrb[0].mxu0
    %v5984 = vadd.f32 %v5062, %v5983
    %5985 = vmatprep.mubr.bf16.mxu0 %v4892
    %5986 = vmatmul.mubr.bf16.gmra.mrb[0].mxu0 %v4891
    %v5987 = vpop.f32.mrb[0].mxu0
    %v5988 = vadd.f32 %v5058, %v5987
    %v5989 = vpop.f32.mrb[0].mxu0
    %v5990 = vadd.f32 %v5062, %v5989
    %v5991 = vpop.f32.mrb[0].mxu0
    %v5992 = vadd.f32 %v5058, %v5991
    %v5993 = vpop.f32.mrb[0].mxu0
    %v5994 = vadd.f32 %v5062, %v5993
    %5995 = vmatprep.mubr.bf16.mxu0 %v4896
    %5996 = vmatmul.mubr.bf16.gmra.mrb[0].mxu0 %v4895
    %v5997 = vpop.f32.mrb[0].mxu0
    %v5998 = vadd.f32 %v5058, %v5997
    %v5999 = vpop.f32.mrb[0].mxu0
    %v6000 = vadd.f32 %v5062, %v5999
    %v6001 = vpop.f32.mrb[0].mxu0
    %v6002 = vadd.f32 %v5058, %v6001
    %v6003 = vpop.f32.mrb[0].mxu0
    %v6004 = vadd.f32 %v5062, %v6003
    %6005 = vmatprep.mubr.bf16.mxu0 %v4900
    %6006 = vmatmul.mubr.bf16.gmra.mrb[0].mxu0 %v4899
    %v6007 = vpop.f32.mrb[0].mxu0
    %v6008 = vadd.f32 %v5058, %v6007
    %v6009 = vpop.f32.mrb[0].mxu0
    %v6010 = vadd.f32 %v5062, %v6009
    %v6011 = vpop.f32.mrb[0].mxu0
    %v6012 = vadd.f32 %v5058, %v6011
    %v6013 = vpop.f32.mrb[0].mxu0
    %v6014 = vadd.f32 %v5062, %v6013
    %6015 = vmatprep.mubr.bf16.mxu0 %v4904
    %6016 = vmatmul.mubr.bf16.gmra.mrb[0].mxu0 %v4903
    %v6017 = vpop.f32.mrb[0].mxu0
    %v6018 = vadd.f32 %v5058, %v6017
    %v6019 = vpop.f32.mrb[0].mxu0
    %v6020 = vadd.f32 %v5062, %v6019
    %v6021 = vpop.f32.mrb[0].mxu0
    %v6022 = vadd.f32 %v5058, %v6021
    %v6023 = vpop.f32.mrb[0].mxu0
    %v6024 = vadd.f32 %v5062, %v6023
    %6025 = vmatprep.mubr.bf16.mxu0 %v4908
    %6026 = vmatmul.mubr.bf16.gmra.mrb[0].mxu0 %v4907
    %v6027 = vpop.f32.mrb[0].mxu0
    %v6028 = vadd.f32 %v5058, %v6027
    %v6029 = vpop.f32.mrb[0].mxu0
    %v6030 = vadd.f32 %v5062, %v6029
    %v6031 = vpop.f32.mrb[0].mxu0
    %v6032 = vadd.f32 %v5058, %v6031
    %v6033 = vpop.f32.mrb[0].mxu0
    %v6034 = vadd.f32 %v5062, %v6033
    %6035 = vmatprep.mubr.bf16.mxu0 %v4912
    %6036 = vmatmul.mubr.bf16.gmra.mrb[0].mxu0 %v4911
    %v6037 = vpop.f32.mrb[0].mxu0
    %v6038 = vadd.f32 %v5058, %v6037
    %v6039 = vpop.f32.mrb[0].mxu0
    %v6040 = vadd.f32 %v5062, %v6039
    %v6041 = vpop.f32.mrb[0].mxu0
    %v6042 = vadd.f32 %v5058, %v6041
    %v6043 = vpop.f32.mrb[0].mxu0
    %v6044 = vadd.f32 %v5062, %v6043
    %6045 = vdwg.mxu0
    %6046 = vmatprep.subr.bf16.mxu0 %v5518
    %6047 = vmatpush1.bf16.msra.mxu0 %v5517
    %6048 = vmatprep.subr.bf16.mxu0 %v5522
    %6049 = vmatpush1.bf16.msra.mxu0 %v5521
    %6050 = vmatprep.subr.bf16.mxu0 %v5526
    %6051 = vmatpush1.bf16.msra.mxu0 %v5525
    %6052 = vmatprep.subr.bf16.mxu0 %v5530
    %6053 = vmatpush1.bf16.msra.mxu0 %v5529
    %6054 = vmatprep.subr.bf16.mxu0 %v5534
    %6055 = vmatpush1.bf16.msra.mxu0 %v5533
    %6056 = vmatprep.subr.bf16.mxu0 %v5538
    %6057 = vmatpush1.bf16.msra.mxu0 %v5537
    %6058 = vmatprep.subr.bf16.mxu0 %v5542
    %6059 = vmatpush1.bf16.msra.mxu0 %v5541
    %6060 = vmatprep.subr.bf16.mxu0 %v5546
    %6061 = vmatpush1.bf16.msra.mxu0 %v5545
    %6062 = vmatprep.subr.bf16.mxu0 %v5550
    %6063 = vmatpush1.bf16.msra.mxu0 %v5549
    %6064 = vmatprep.subr.bf16.mxu0 %v5554
    %6065 = vmatpush1.bf16.msra.mxu0 %v5553
    %6066 = vmatprep.subr.bf16.mxu0 %v5558
    %6067 = vmatpush1.bf16.msra.mxu0 %v5557
    %6068 = vmatprep.subr.bf16.mxu0 %v5562
    %6069 = vmatpush1.bf16.msra.mxu0 %v5561
    %6070 = vmatprep.subr.bf16.mxu0 %v5566
    %6071 = vmatpush1.bf16.msra.mxu0 %v5565
    %6072 = vmatprep.subr.bf16.mxu0 %v5570
    %6073 = vmatpush1.bf16.msra.mxu0 %v5569
    %6074 = vmatprep.subr.bf16.mxu0 %v5574
    %6075 = vmatpush1.bf16.msra.mxu0 %v5573
    %6076 = vmatprep.subr.bf16.mxu0 %v5578
    %6077 = vmatpush1.bf16.msra.mxu0 %v5577
    %6078 = vmatprep.mubr.bf16.mxu0 %v4886
    %6079 = vmatmul.mubr.bf16.gmra.mrb[0].mxu0 %v4885
    %v6080 = vpop.f32.mrb[0].mxu0
    %v6081 = vadd.f32 %v5968, %v6080
    %v6082 = vpop.f32.mrb[0].mxu0
    %v6083 = vadd.f32 %v5970, %v6082
    %v6084 = vpop.f32.mrb[0].mxu0
    %v6085 = vadd.f32 %v5972, %v6084
    %v6086 = vpop.f32.mrb[0].mxu0
    %v6087 = vadd.f32 %v5974, %v6086
    %6088 = vmatprep.mubr.bf16.mxu0 %v4890
    %6089 = vmatmul.mubr.bf16.gmra.mrb[0].mxu0 %v4889
    %v6090 = vpop.f32.mrb[0].mxu0
    %v6091 = vadd.f32 %v5978, %v6090
    %v6092 = vpop.f32.mrb[0].mxu0
    %v6093 = vadd.f32 %v5980, %v6092
    %v6094 = vpop.f32.mrb[0].mxu0
    %v6095 = vadd.f32 %v5982, %v6094
    %v6096 = vpop.f32.mrb[0].mxu0
    %v6097 = vadd.f32 %v5984, %v6096
    %6098 = vmatprep.mubr.bf16.mxu0 %v4894
    %6099 = vmatmul.mubr.bf16.gmra.mrb[0].mxu0 %v4893
    %v6100 = vpop.f32.mrb[0].mxu0
    %v6101 = vadd.f32 %v5988, %v6100
    %v6102 = vpop.f32.mrb[0].mxu0
    %v6103 = vadd.f32 %v5990, %v6102
    %v6104 = vpop.f32.mrb[0].mxu0
    %v6105 = vadd.f32 %v5992, %v6104
    %v6106 = vpop.f32.mrb[0].mxu0
    %v6107 = vadd.f32 %v5994, %v6106
    %6108 = vmatprep.mubr.bf16.mxu0 %v4898
    %6109 = vmatmul.mubr.bf16.gmra.mrb[0].mxu0 %v4897
    %v6110 = vpop.f32.mrb[0].mxu0
    %v6111 = vadd.f32 %v5998, %v6110
    %v6112 = vpop.f32.mrb[0].mxu0
    %v6113 = vadd.f32 %v6000, %v6112
    %v6114 = vpop.f32.mrb[0].mxu0
    %v6115 = vadd.f32 %v6002, %v6114
    %v6116 = vpop.f32.mrb[0].mxu0
    %v6117 = vadd.f32 %v6004, %v6116
    %6118 = vmatprep.mubr.bf16.mxu0 %v4902
    %6119 = vmatmul.mubr.bf16.gmra.mrb[0].mxu0 %v4901
    %v6120 = vpop.f32.mrb[0].mxu0
    %v6121 = vadd.f32 %v6008, %v6120
    %v6122 = vpop.f32.mrb[0].mxu0
    %v6123 = vadd.f32 %v6010, %v6122
    %v6124 = vpop.f32.mrb[0].mxu0
    %v6125 = vadd.f32 %v6012, %v6124
    %v6126 = vpop.f32.mrb[0].mxu0
    %v6127 = vadd.f32 %v6014, %v6126
    %6128 = vmatprep.mubr.bf16.mxu0 %v4906
    %6129 = vmatmul.mubr.bf16.gmra.mrb[0].mxu0 %v4905
    %v6130 = vpop.f32.mrb[0].mxu0
    %v6131 = vadd.f32 %v6018, %v6130
    %v6132 = vpop.f32.mrb[0].mxu0
    %v6133 = vadd.f32 %v6020, %v6132
    %v6134 = vpop.f32.mrb[0].mxu0
    %v6135 = vadd.f32 %v6022, %v6134
    %v6136 = vpop.f32.mrb[0].mxu0
    %v6137 = vadd.f32 %v6024, %v6136
    %6138 = vmatprep.mubr.bf16.mxu0 %v4910
    %6139 = vmatmul.mubr.bf16.gmra.mrb[0].mxu0 %v4909
    %v6140 = vpop.f32.mrb[0].mxu0
    %v6141 = vadd.f32 %v6028, %v6140
    %v6142 = vpop.f32.mrb[0].mxu0
    %v6143 = vadd.f32 %v6030, %v6142
    %v6144 = vpop.f32.mrb[0].mxu0
    %v6145 = vadd.f32 %v6032, %v6144
    %v6146 = vpop.f32.mrb[0].mxu0
    %v6147 = vadd.f32 %v6034, %v6146
    %6148 = vmatprep.mubr.bf16.mxu0 %v4914
    %6149 = vmatmul.mubr.bf16.gmra.mrb[0].mxu0 %v4913
    %v6150 = vpop.f32.mrb[0].mxu0
    %v6151 = vadd.f32 %v6038, %v6150
    %v6152 = vpop.f32.mrb[0].mxu0
    %v6153 = vadd.f32 %v6040, %v6152
    %v6154 = vpop.f32.mrb[0].mxu0
    %v6155 = vadd.f32 %v6042, %v6154
    %v6156 = vpop.f32.mrb[0].mxu0
    %v6157 = vadd.f32 %v6044, %v6156
    %6158 = vdwg.mxu0
    %v6159 = vmax.f32 %v5855, 0.0
    %v6160 = vmax.f32 %v5857, 0.0
    %v6161 = vmax.f32 %v6081, 0.0
    %v6162 = vmax.f32 %v6083, 0.0
    %v6163 = vmax.f32 %v5859, 0.0
    %v6164 = vmax.f32 %v5861, 0.0
    %v6165 = vmax.f32 %v6085, 0.0
    %v6166 = vmax.f32 %v6087, 0.0
    %v6167 = vmax.f32 %v5865, 0.0
    %v6168 = vmax.f32 %v5867, 0.0
    %v6169 = vmax.f32 %v6091, 0.0
    %v6170 = vmax.f32 %v6093, 0.0
    %v6171 = vmax.f32 %v5869, 0.0
    %v6172 = vmax.f32 %v5871, 0.0
    %v6173 = vmax.f32 %v6095, 0.0
    %v6174 = vmax.f32 %v6097, 0.0
    %v6175 = vmax.f32 %v5875, 0.0
    %v6176 = vmax.f32 %v5877, 0.0
    %v6177 = vmax.f32 %v6101, 0.0
    %v6178 = vmax.f32 %v6103, 0.0
    %v6179 = vmax.f32 %v5879, 0.0
    %v6180 = vmax.f32 %v5881, 0.0
    %v6181 = vmax.f32 %v6105, 0.0
    %v6182 = vmax.f32 %v6107, 0.0
    %v6183 = vmax.f32 %v5885, 0.0
    %v6184 = vmax.f32 %v5887, 0.0
    %v6185 = vmax.f32 %v6111, 0.0
    %v6186 = vmax.f32 %v6113, 0.0
    %v6187 = vmax.f32 %v5889, 0.0
    %v6188 = vmax.f32 %v5891, 0.0
    %v6189 = vmax.f32 %v6115, 0.0
    %v6190 = vmax.f32 %v6117, 0.0
    %v6191 = vmax.f32 %v5895, 0.0
    %v6192 = vmax.f32 %v5897, 0.0
    %v6193 = vmax.f32 %v6121, 0.0
    %v6194 = vmax.f32 %v6123, 0.0
    %v6195 = vmax.f32 %v5899, 0.0
    %v6196 = vmax.f32 %v5901, 0.0
    %v6197 = vmax.f32 %v6125, 0.0
    %v6198 = vmax.f32 %v6127, 0.0
    %v6199 = vmax.f32 %v5905, 0.0
    %v6200 = vmax.f32 %v5907, 0.0
    %v6201 = vmax.f32 %v6131, 0.0
    %v6202 = vmax.f32 %v6133, 0.0
    %v6203 = vmax.f32 %v5909, 0.0
    %v6204 = vmax.f32 %v5911, 0.0
    %v6205 = vmax.f32 %v6135, 0.0
    %v6206 = vmax.f32 %v6137, 0.0
    %v6207 = vmax.f32 %v5915, 0.0
    %v6208 = vmax.f32 %v5917, 0.0
    %v6209 = vmax.f32 %v6141, 0.0
    %v6210 = vmax.f32 %v6143, 0.0
    %v6211 = vmax.f32 %v5919, 0.0
    %v6212 = vmax.f32 %v5921, 0.0
    %v6213 = vmax.f32 %v6145, 0.0
    %v6214 = vmax.f32 %v6147, 0.0
    %v6215 = vmax.f32 %v5925, 0.0
    %v6216 = vmax.f32 %v5927, 0.0
    %v6217 = vmax.f32 %v6151, 0.0
    %v6218 = vmax.f32 %v6153, 0.0
    %v6219 = vmax.f32 %v5929, 0.0
    %v6220 = vmax.f32 %v5931, 0.0
    %v6221 = vmax.f32 %v6155, 0.0
    %v6222 = vmax.f32 %v6157, 0.0
    %v6223 = vadd.f32 %v4819, %v6159
    %v6224 = vadd.f32 %v4820, %v6160
    %v6225 = vadd.f32 %v4821, %v6161
    %v6226 = vadd.f32 %v4822, %v6162
    %v6227 = vadd.f32 %v4823, %v6163
    %v6228 = vadd.f32 %v4824, %v6164
    %v6229 = vadd.f32 %v4825, %v6165
    %v6230 = vadd.f32 %v4826, %v6166
    %v6231 = vadd.f32 %v4827, %v6167
    %v6232 = vadd.f32 %v4828, %v6168
    %v6233 = vadd.f32 %v4829, %v6169
    %v6234 = vadd.f32 %v4830, %v6170
    %v6235 = vadd.f32 %v4831, %v6171
    %v6236 = vadd.f32 %v4832, %v6172
    %v6237 = vadd.f32 %v4833, %v6173
    %v6238 = vadd.f32 %v4834, %v6174
    %v6239 = vadd.f32 %v4835, %v6175
    %v6240 = vadd.f32 %v4836, %v6176
    %v6241 = vadd.f32 %v4837, %v6177
    %v6242 = vadd.f32 %v4838, %v6178
    %v6243 = vadd.f32 %v4839, %v6179
    %v6244 = vadd.f32 %v4840, %v6180
    %v6245 = vadd.f32 %v4841, %v6181
    %v6246 = vadd.f32 %v4842, %v6182
    %v6247 = vadd.f32 %v4843, %v6183
    %v6248 = vadd.f32 %v4844, %v6184
    %v6249 = vadd.f32 %v4845, %v6185
    %v6250 = vadd.f32 %v4846, %v6186
    %v6251 = vadd.f32 %v4847, %v6187
    %v6252 = vadd.f32 %v4848, %v6188
    %v6253 = vadd.f32 %v4849, %v6189
    %v6254 = vadd.f32 %v4850, %v6190
    %v6255 = vadd.f32 %v4851, %v6191
    %v6256 = vadd.f32 %v4852, %v6192
    %v6257 = vadd.f32 %v4853, %v6193
    %v6258 = vadd.f32 %v4854, %v6194
    %v6259 = vadd.f32 %v4855, %v6195
    %v6260 = vadd.f32 %v4856, %v6196
    %v6261 = vadd.f32 %v4857, %v6197
    %v6262 = vadd.f32 %v4858, %v6198
    %v6263 = vadd.f32 %v4859, %v6199
    %v6264 = vadd.f32 %v4860, %v6200
    %v6265 = vadd.f32 %v4861, %v6201
    %v6266 = vadd.f32 %v4862, %v6202
    %v6267 = vadd.f32 %v4863, %v6203
    %v6268 = vadd.f32 %v4864, %v6204
    %v6269 = vadd.f32 %v4865, %v6205
    %v6270 = vadd.f32 %v4866, %v6206
    %v6271 = vadd.f32 %v4867, %v6207
    %v6272 = vadd.f32 %v4868, %v6208
    %v6273 = vadd.f32 %v4869, %v6209
    %v6274 = vadd.f32 %v4870, %v6210
    %v6275 = vadd.f32 %v4871, %v6211
    %v6276 = vadd.f32 %v4872, %v6212
    %v6277 = vadd.f32 %v4873, %v6213
    %v6278 = vadd.f32 %v4874, %v6214
    %v6279 = vadd.f32 %v4875, %v6215
    %v6280 = vadd.f32 %v4876, %v6216
    %v6281 = vadd.f32 %v4877, %v6217
    %v6282 = vadd.f32 %v4878, %v6218
    %v6283 = vadd.f32 %v4879, %v6219
    %v6284 = vadd.f32 %v4880, %v6220
    %v6285 = vadd.f32 %v4881, %v6221
    %v6286 = vadd.f32 %v4882, %v6222
    %v6287 = vpack.c.bf16 %v6227, %v6223
    %v6288 = vpack.c.bf16 %v6228, %v6224
    %v6289 = vpack.c.bf16 %v6229, %v6225
    %v6290 = vpack.c.bf16 %v6230, %v6226
    %v6291 = vpack.c.bf16 %v6235, %v6231
    %v6292 = vpack.c.bf16 %v6236, %v6232
    %v6293 = vpack.c.bf16 %v6237, %v6233
    %v6294 = vpack.c.bf16 %v6238, %v6234
    %v6295 = vpack.c.bf16 %v6243, %v6239
    %v6296 = vpack.c.bf16 %v6244, %v6240
    %v6297 = vpack.c.bf16 %v6245, %v6241
    %v6298 = vpack.c.bf16 %v6246, %v6242
    %v6299 = vpack.c.bf16 %v6251, %v6247
    %v6300 = vpack.c.bf16 %v6252, %v6248
    %v6301 = vpack.c.bf16 %v6253, %v6249
    %v6302 = vpack.c.bf16 %v6254, %v6250
    %v6303 = vpack.c.bf16 %v6259, %v6255
    %v6304 = vpack.c.bf16 %v6260, %v6256
    %v6305 = vpack.c.bf16 %v6261, %v6257
    %v6306 = vpack.c.bf16 %v6262, %v6258
    %v6307 = vpack.c.bf16 %v6267, %v6263
    %v6308 = vpack.c.bf16 %v6268, %v6264
    %v6309 = vpack.c.bf16 %v6269, %v6265
    %v6310 = vpack.c.bf16 %v6270, %v6266
    %v6311 = vpack.c.bf16 %v6275, %v6271
    %v6312 = vpack.c.bf16 %v6276, %v6272
    %v6313 = vpack.c.bf16 %v6277, %v6273
    %v6314 = vpack.c.bf16 %v6278, %v6274
    %v6315 = vpack.c.bf16 %v6283, %v6279
    %v6316 = vpack.c.bf16 %v6284, %v6280
    %v6317 = vpack.c.bf16 %v6285, %v6281
    %v6318 = vpack.c.bf16 %v6286, %v6282
    %s6319 = scalar_lea.vmem [#allocation6], 4096
    %v6320 = vld [vmem:[%s6319] sm:$0xff]
    %v6321 = vld [vmem:[%s6319 + $0x8] sm:$0xff]
    %v6322 = vld [vmem:[%s6319 + $0x10] sm:$0xff]
    %v6323 = vld [vmem:[%s6319 + $0x18] sm:$0xff]
    %v6324 = vld [vmem:[%s6319 + $0x20] sm:$0xff]
    %v6325 = vld [vmem:[%s6319 + $0x28] sm:$0xff]
    %v6326 = vld [vmem:[%s6319 + $0x30] sm:$0xff]
    %v6327 = vld [vmem:[%s6319 + $0x38] sm:$0xff]
    %v6328 = vld [vmem:[%s6319 + $0x40] sm:$0xff]
    %v6329 = vld [vmem:[%s6319 + $0x48] sm:$0xff]
    %v6330 = vld [vmem:[%s6319 + $0x50] sm:$0xff]
    %v6331 = vld [vmem:[%s6319 + $0x58] sm:$0xff]
    %v6332 = vld [vmem:[%s6319 + $0x60] sm:$0xff]
    %v6333 = vld [vmem:[%s6319 + $0x68] sm:$0xff]
    %v6334 = vld [vmem:[%s6319 + $0x70] sm:$0xff]
    %v6335 = vld [vmem:[%s6319 + $0x78] sm:$0xff]
    %v6336 = vld [vmem:[%s6319 + $0x80] sm:$0xff]
    %v6337 = vld [vmem:[%s6319 + $0x88] sm:$0xff]
    %v6338 = vld [vmem:[%s6319 + $0x90] sm:$0xff]
    %v6339 = vld [vmem:[%s6319 + $0x98] sm:$0xff]
    %v6340 = vld [vmem:[%s6319 + $0xa0] sm:$0xff]
    %v6341 = vld [vmem:[%s6319 + $0xa8] sm:$0xff]
    %v6342 = vld [vmem:[%s6319 + $0xb0] sm:$0xff]
    %v6343 = vld [vmem:[%s6319 + $0xb8] sm:$0xff]
    %v6344 = vld [vmem:[%s6319 + $0xc0] sm:$0xff]
    %v6345 = vld [vmem:[%s6319 + $0xc8] sm:$0xff]
    %v6346 = vld [vmem:[%s6319 + $0xd0] sm:$0xff]
    %v6347 = vld [vmem:[%s6319 + $0xd8] sm:$0xff]
    %v6348 = vld [vmem:[%s6319 + $0xe0] sm:$0xff]
    %v6349 = vld [vmem:[%s6319 + $0xe8] sm:$0xff]
    %v6350 = vld [vmem:[%s6319 + $0xf0] sm:$0xff]
    %v6351 = vld [vmem:[%s6319 + $0xf8] sm:$0xff]
    %v6352 = vld [vmem:[%s6319 + $0x100] sm:$0xff]
    %v6353 = vld [vmem:[%s6319 + $0x108] sm:$0xff]
    %v6354 = vld [vmem:[%s6319 + $0x110] sm:$0xff]
    %v6355 = vld [vmem:[%s6319 + $0x118] sm:$0xff]
    %v6356 = vld [vmem:[%s6319 + $0x120] sm:$0xff]
    %v6357 = vld [vmem:[%s6319 + $0x128] sm:$0xff]
    %v6358 = vld [vmem:[%s6319 + $0x130] sm:$0xff]
    %v6359 = vld [vmem:[%s6319 + $0x138] sm:$0xff]
    %v6360 = vld [vmem:[%s6319 + $0x140] sm:$0xff]
    %v6361 = vld [vmem:[%s6319 + $0x148] sm:$0xff]
    %v6362 = vld [vmem:[%s6319 + $0x150] sm:$0xff]
    %v6363 = vld [vmem:[%s6319 + $0x158] sm:$0xff]
    %v6364 = vld [vmem:[%s6319 + $0x160] sm:$0xff]
    %v6365 = vld [vmem:[%s6319 + $0x168] sm:$0xff]
    %v6366 = vld [vmem:[%s6319 + $0x170] sm:$0xff]
    %v6367 = vld [vmem:[%s6319 + $0x178] sm:$0xff]
    %v6368 = vld [vmem:[%s6319 + $0x180] sm:$0xff]
    %v6369 = vld [vmem:[%s6319 + $0x188] sm:$0xff]
    %v6370 = vld [vmem:[%s6319 + $0x190] sm:$0xff]
    %v6371 = vld [vmem:[%s6319 + $0x198] sm:$0xff]
    %v6372 = vld [vmem:[%s6319 + $0x1a0] sm:$0xff]
    %v6373 = vld [vmem:[%s6319 + $0x1a8] sm:$0xff]
    %v6374 = vld [vmem:[%s6319 + $0x1b0] sm:$0xff]
    %v6375 = vld [vmem:[%s6319 + $0x1b8] sm:$0xff]
    %v6376 = vld [vmem:[%s6319 + $0x1c0] sm:$0xff]
    %v6377 = vld [vmem:[%s6319 + $0x1c8] sm:$0xff]
    %v6378 = vld [vmem:[%s6319 + $0x1d0] sm:$0xff]
    %v6379 = vld [vmem:[%s6319 + $0x1d8] sm:$0xff]
    %v6380 = vld [vmem:[%s6319 + $0x1e0] sm:$0xff]
    %v6381 = vld [vmem:[%s6319 + $0x1e8] sm:$0xff]
    %v6382 = vld [vmem:[%s6319 + $0x1f0] sm:$0xff]
    %v6383 = vld [vmem:[%s6319 + $0x1f8] sm:$0xff]
    %v6384 = vld [vmem:[%s6319 + $0x200] sm:$0xff]
    %v6385 = vld [vmem:[%s6319 + $0x208] sm:$0xff]
    %v6386 = vld [vmem:[%s6319 + $0x210] sm:$0xff]
    %v6387 = vld [vmem:[%s6319 + $0x218] sm:$0xff]
    %v6388 = vld [vmem:[%s6319 + $0x220] sm:$0xff]
    %v6389 = vld [vmem:[%s6319 + $0x228] sm:$0xff]
    %v6390 = vld [vmem:[%s6319 + $0x230] sm:$0xff]
    %v6391 = vld [vmem:[%s6319 + $0x238] sm:$0xff]
    %v6392 = vld [vmem:[%s6319 + $0x240] sm:$0xff]
    %v6393 = vld [vmem:[%s6319 + $0x248] sm:$0xff]
    %v6394 = vld [vmem:[%s6319 + $0x250] sm:$0xff]
    %v6395 = vld [vmem:[%s6319 + $0x258] sm:$0xff]
    %v6396 = vld [vmem:[%s6319 + $0x260] sm:$0xff]
    %v6397 = vld [vmem:[%s6319 + $0x268] sm:$0xff]
    %v6398 = vld [vmem:[%s6319 + $0x270] sm:$0xff]
    %v6399 = vld [vmem:[%s6319 + $0x278] sm:$0xff]
    %v6400 = vld [vmem:[%s6319 + $0x280] sm:$0xff]
    %v6401 = vld [vmem:[%s6319 + $0x288] sm:$0xff]
    %v6402 = vld [vmem:[%s6319 + $0x290] sm:$0xff]
    %v6403 = vld [vmem:[%s6319 + $0x298] sm:$0xff]
    %v6404 = vld [vmem:[%s6319 + $0x2a0] sm:$0xff]
    %v6405 = vld [vmem:[%s6319 + $0x2a8] sm:$0xff]
    %v6406 = vld [vmem:[%s6319 + $0x2b0] sm:$0xff]
    %v6407 = vld [vmem:[%s6319 + $0x2b8] sm:$0xff]
    %v6408 = vld [vmem:[%s6319 + $0x2c0] sm:$0xff]
    %v6409 = vld [vmem:[%s6319 + $0x2c8] sm:$0xff]
    %v6410 = vld [vmem:[%s6319 + $0x2d0] sm:$0xff]
    %v6411 = vld [vmem:[%s6319 + $0x2d8] sm:$0xff]
    %v6412 = vld [vmem:[%s6319 + $0x2e0] sm:$0xff]
    %v6413 = vld [vmem:[%s6319 + $0x2e8] sm:$0xff]
    %v6414 = vld [vmem:[%s6319 + $0x2f0] sm:$0xff]
    %v6415 = vld [vmem:[%s6319 + $0x2f8] sm:$0xff]
    %v6416 = vld [vmem:[%s6319 + $0x300] sm:$0xff]
    %v6417 = vld [vmem:[%s6319 + $0x308] sm:$0xff]
    %v6418 = vld [vmem:[%s6319 + $0x310] sm:$0xff]
    %v6419 = vld [vmem:[%s6319 + $0x318] sm:$0xff]
    %v6420 = vld [vmem:[%s6319 + $0x320] sm:$0xff]
    %v6421 = vld [vmem:[%s6319 + $0x328] sm:$0xff]
    %v6422 = vld [vmem:[%s6319 + $0x330] sm:$0xff]
    %v6423 = vld [vmem:[%s6319 + $0x338] sm:$0xff]
    %v6424 = vld [vmem:[%s6319 + $0x340] sm:$0xff]
    %v6425 = vld [vmem:[%s6319 + $0x348] sm:$0xff]
    %v6426 = vld [vmem:[%s6319 + $0x350] sm:$0xff]
    %v6427 = vld [vmem:[%s6319 + $0x358] sm:$0xff]
    %v6428 = vld [vmem:[%s6319 + $0x360] sm:$0xff]
    %v6429 = vld [vmem:[%s6319 + $0x368] sm:$0xff]
    %v6430 = vld [vmem:[%s6319 + $0x370] sm:$0xff]
    %v6431 = vld [vmem:[%s6319 + $0x378] sm:$0xff]
    %v6432 = vld [vmem:[%s6319 + $0x380] sm:$0xff]
    %v6433 = vld [vmem:[%s6319 + $0x388] sm:$0xff]
    %v6434 = vld [vmem:[%s6319 + $0x390] sm:$0xff]
    %v6435 = vld [vmem:[%s6319 + $0x398] sm:$0xff]
    %v6436 = vld [vmem:[%s6319 + $0x3a0] sm:$0xff]
    %v6437 = vld [vmem:[%s6319 + $0x3a8] sm:$0xff]
    %v6438 = vld [vmem:[%s6319 + $0x3b0] sm:$0xff]
    %v6439 = vld [vmem:[%s6319 + $0x3b8] sm:$0xff]
    %v6440 = vld [vmem:[%s6319 + $0x3c0] sm:$0xff]
    %v6441 = vld [vmem:[%s6319 + $0x3c8] sm:$0xff]
    %v6442 = vld [vmem:[%s6319 + $0x3d0] sm:$0xff]
    %v6443 = vld [vmem:[%s6319 + $0x3d8] sm:$0xff]
    %v6444 = vld [vmem:[%s6319 + $0x3e0] sm:$0xff]
    %v6445 = vld [vmem:[%s6319 + $0x3e8] sm:$0xff]
    %v6446 = vld [vmem:[%s6319 + $0x3f0] sm:$0xff]
    %v6447 = vld [vmem:[%s6319 + $0x3f8] sm:$0xff]
    %s6448 = scalar_lea.vmem [#allocation7], 16
    %v6449 = vld [vmem:[%s6448] sm:$0xf]
    %v6451 = vlaneseq
    %v6452 = vshrl.u32 %v6451, 7
    %v6453 = vsub.s32 0, %v6452
    %v6454 = vrot.slane %v6449, %v6453
    %v6455 = vlaneseq
    %v6456 = vshrl.u32 %v6455, 7
    %v6457 = vsub.s32 1, %v6456
    %v6458 = vrot.slane %v6449, %v6457
    %v6459 = vlaneseq
    %v6460 = vshrl.u32 %v6459, 7
    %v6461 = vsub.s32 2, %v6460
    %v6462 = vrot.slane %v6449, %v6461
    %v6463 = vlaneseq
    %v6464 = vshrl.u32 %v6463, 7
    %v6465 = vsub.s32 3, %v6464
    %v6466 = vrot.slane %v6449, %v6465
    %v6599 = vunpack.c.l.b16 %v6320
    %v6600 = vunpack.c.h.b16 %v6320
    %v6601 = vunpack.c.l.b16 %v6321
    %v6602 = vunpack.c.h.b16 %v6321
    %v6603 = vunpack.c.l.b16 %v6322
    %v6604 = vunpack.c.h.b16 %v6322
    %v6605 = vunpack.c.l.b16 %v6323
    %v6606 = vunpack.c.h.b16 %v6323
    %v6607 = vunpack.c.l.b16 %v6324
    %v6608 = vunpack.c.h.b16 %v6324
    %v6609 = vunpack.c.l.b16 %v6325
    %v6610 = vunpack.c.h.b16 %v6325
    %v6611 = vunpack.c.l.b16 %v6326
    %v6612 = vunpack.c.h.b16 %v6326
    %v6613 = vunpack.c.l.b16 %v6327
    %v6614 = vunpack.c.h.b16 %v6327
    %v6615 = vunpack.c.l.b16 %v6328
    %v6616 = vunpack.c.h.b16 %v6328
    %v6617 = vunpack.c.l.b16 %v6329
    %v6618 = vunpack.c.h.b16 %v6329
    %v6619 = vunpack.c.l.b16 %v6330
    %v6620 = vunpack.c.h.b16 %v6330
    %v6621 = vunpack.c.l.b16 %v6331
    %v6622 = vunpack.c.h.b16 %v6331
    %v6623 = vunpack.c.l.b16 %v6332
    %v6624 = vunpack.c.h.b16 %v6332
    %v6625 = vunpack.c.l.b16 %v6333
    %v6626 = vunpack.c.h.b16 %v6333
    %v6627 = vunpack.c.l.b16 %v6334
    %v6628 = vunpack.c.h.b16 %v6334
    %v6629 = vunpack.c.l.b16 %v6335
    %v6630 = vunpack.c.h.b16 %v6335
    %v6631 = vunpack.c.l.b16 %v6336
    %v6632 = vunpack.c.h.b16 %v6336
    %v6633 = vunpack.c.l.b16 %v6337
    %v6634 = vunpack.c.h.b16 %v6337
    %v6635 = vunpack.c.l.b16 %v6338
    %v6636 = vunpack.c.h.b16 %v6338
    %v6637 = vunpack.c.l.b16 %v6339
    %v6638 = vunpack.c.h.b16 %v6339
    %v6639 = vunpack.c.l.b16 %v6340
    %v6640 = vunpack.c.h.b16 %v6340
    %v6641 = vunpack.c.l.b16 %v6341
    %v6642 = vunpack.c.h.b16 %v6341
    %v6643 = vunpack.c.l.b16 %v6342
    %v6644 = vunpack.c.h.b16 %v6342
    %v6645 = vunpack.c.l.b16 %v6343
    %v6646 = vunpack.c.h.b16 %v6343
    %v6647 = vunpack.c.l.b16 %v6344
    %v6648 = vunpack.c.h.b16 %v6344
    %v6649 = vunpack.c.l.b16 %v6345
    %v6650 = vunpack.c.h.b16 %v6345
    %v6651 = vunpack.c.l.b16 %v6346
    %v6652 = vunpack.c.h.b16 %v6346
    %v6653 = vunpack.c.l.b16 %v6347
    %v6654 = vunpack.c.h.b16 %v6347
    %v6655 = vunpack.c.l.b16 %v6348
    %v6656 = vunpack.c.h.b16 %v6348
    %v6657 = vunpack.c.l.b16 %v6349
    %v6658 = vunpack.c.h.b16 %v6349
    %v6659 = vunpack.c.l.b16 %v6350
    %v6660 = vunpack.c.h.b16 %v6350
    %v6661 = vunpack.c.l.b16 %v6351
    %v6662 = vunpack.c.h.b16 %v6351
    %v6663 = vunpack.c.l.b16 %v6352
    %v6664 = vunpack.c.h.b16 %v6352
    %v6665 = vunpack.c.l.b16 %v6353
    %v6666 = vunpack.c.h.b16 %v6353
    %v6667 = vunpack.c.l.b16 %v6354
    %v6668 = vunpack.c.h.b16 %v6354
    %v6669 = vunpack.c.l.b16 %v6355
    %v6670 = vunpack.c.h.b16 %v6355
    %v6671 = vunpack.c.l.b16 %v6356
    %v6672 = vunpack.c.h.b16 %v6356
    %v6673 = vunpack.c.l.b16 %v6357
    %v6674 = vunpack.c.h.b16 %v6357
    %v6675 = vunpack.c.l.b16 %v6358
    %v6676 = vunpack.c.h.b16 %v6358
    %v6677 = vunpack.c.l.b16 %v6359
    %v6678 = vunpack.c.h.b16 %v6359
    %v6679 = vunpack.c.l.b16 %v6360
    %v6680 = vunpack.c.h.b16 %v6360
    %v6681 = vunpack.c.l.b16 %v6361
    %v6682 = vunpack.c.h.b16 %v6361
    %v6683 = vunpack.c.l.b16 %v6362
    %v6684 = vunpack.c.h.b16 %v6362
    %v6685 = vunpack.c.l.b16 %v6363
    %v6686 = vunpack.c.h.b16 %v6363
    %v6687 = vunpack.c.l.b16 %v6364
    %v6688 = vunpack.c.h.b16 %v6364
    %v6689 = vunpack.c.l.b16 %v6365
    %v6690 = vunpack.c.h.b16 %v6365
    %v6691 = vunpack.c.l.b16 %v6366
    %v6692 = vunpack.c.h.b16 %v6366
    %v6693 = vunpack.c.l.b16 %v6367
    %v6694 = vunpack.c.h.b16 %v6367
    %v6695 = vunpack.c.l.b16 %v6368
    %v6696 = vunpack.c.h.b16 %v6368
    %v6697 = vunpack.c.l.b16 %v6369
    %v6698 = vunpack.c.h.b16 %v6369
    %v6699 = vunpack.c.l.b16 %v6370
    %v6700 = vunpack.c.h.b16 %v6370
    %v6701 = vunpack.c.l.b16 %v6371
    %v6702 = vunpack.c.h.b16 %v6371
    %v6703 = vunpack.c.l.b16 %v6372
    %v6704 = vunpack.c.h.b16 %v6372
    %v6705 = vunpack.c.l.b16 %v6373
    %v6706 = vunpack.c.h.b16 %v6373
    %v6707 = vunpack.c.l.b16 %v6374
    %v6708 = vunpack.c.h.b16 %v6374
    %v6709 = vunpack.c.l.b16 %v6375
    %v6710 = vunpack.c.h.b16 %v6375
    %v6711 = vunpack.c.l.b16 %v6376
    %v6712 = vunpack.c.h.b16 %v6376
    %v6713 = vunpack.c.l.b16 %v6377
    %v6714 = vunpack.c.h.b16 %v6377
    %v6715 = vunpack.c.l.b16 %v6378
    %v6716 = vunpack.c.h.b16 %v6378
    %v6717 = vunpack.c.l.b16 %v6379
    %v6718 = vunpack.c.h.b16 %v6379
    %v6719 = vunpack.c.l.b16 %v6380
    %v6720 = vunpack.c.h.b16 %v6380
    %v6721 = vunpack.c.l.b16 %v6381
    %v6722 = vunpack.c.h.b16 %v6381
    %v6723 = vunpack.c.l.b16 %v6382
    %v6724 = vunpack.c.h.b16 %v6382
    %v6725 = vunpack.c.l.b16 %v6383
    %v6726 = vunpack.c.h.b16 %v6383
    %v6727 = vunpack.c.l.b16 %v6384
    %v6728 = vunpack.c.h.b16 %v6384
    %v6729 = vunpack.c.l.b16 %v6385
    %v6730 = vunpack.c.h.b16 %v6385
    %v6731 = vunpack.c.l.b16 %v6386
    %v6732 = vunpack.c.h.b16 %v6386
    %v6733 = vunpack.c.l.b16 %v6387
    %v6734 = vunpack.c.h.b16 %v6387
    %v6735 = vunpack.c.l.b16 %v6388
    %v6736 = vunpack.c.h.b16 %v6388
    %v6737 = vunpack.c.l.b16 %v6389
    %v6738 = vunpack.c.h.b16 %v6389
    %v6739 = vunpack.c.l.b16 %v6390
    %v6740 = vunpack.c.h.b16 %v6390
    %v6741 = vunpack.c.l.b16 %v6391
    %v6742 = vunpack.c.h.b16 %v6391
    %v6743 = vunpack.c.l.b16 %v6392
    %v6744 = vunpack.c.h.b16 %v6392
    %v6745 = vunpack.c.l.b16 %v6393
    %v6746 = vunpack.c.h.b16 %v6393
    %v6747 = vunpack.c.l.b16 %v6394
    %v6748 = vunpack.c.h.b16 %v6394
    %v6749 = vunpack.c.l.b16 %v6395
    %v6750 = vunpack.c.h.b16 %v6395
    %v6751 = vunpack.c.l.b16 %v6396
    %v6752 = vunpack.c.h.b16 %v6396
    %v6753 = vunpack.c.l.b16 %v6397
    %v6754 = vunpack.c.h.b16 %v6397
    %v6755 = vunpack.c.l.b16 %v6398
    %v6756 = vunpack.c.h.b16 %v6398
    %v6757 = vunpack.c.l.b16 %v6399
    %v6758 = vunpack.c.h.b16 %v6399
    %v6759 = vunpack.c.l.b16 %v6400
    %v6760 = vunpack.c.h.b16 %v6400
    %v6761 = vunpack.c.l.b16 %v6401
    %v6762 = vunpack.c.h.b16 %v6401
    %v6763 = vunpack.c.l.b16 %v6402
    %v6764 = vunpack.c.h.b16 %v6402
    %v6765 = vunpack.c.l.b16 %v6403
    %v6766 = vunpack.c.h.b16 %v6403
    %v6767 = vunpack.c.l.b16 %v6404
    %v6768 = vunpack.c.h.b16 %v6404
    %v6769 = vunpack.c.l.b16 %v6405
    %v6770 = vunpack.c.h.b16 %v6405
    %v6771 = vunpack.c.l.b16 %v6406
    %v6772 = vunpack.c.h.b16 %v6406
    %v6773 = vunpack.c.l.b16 %v6407
    %v6774 = vunpack.c.h.b16 %v6407
    %v6775 = vunpack.c.l.b16 %v6408
    %v6776 = vunpack.c.h.b16 %v6408
    %v6777 = vunpack.c.l.b16 %v6409
    %v6778 = vunpack.c.h.b16 %v6409
    %v6779 = vunpack.c.l.b16 %v6410
    %v6780 = vunpack.c.h.b16 %v6410
    %v6781 = vunpack.c.l.b16 %v6411
    %v6782 = vunpack.c.h.b16 %v6411
    %v6783 = vunpack.c.l.b16 %v6412
    %v6784 = vunpack.c.h.b16 %v6412
    %v6785 = vunpack.c.l.b16 %v6413
    %v6786 = vunpack.c.h.b16 %v6413
    %v6787 = vunpack.c.l.b16 %v6414
    %v6788 = vunpack.c.h.b16 %v6414
    %v6789 = vunpack.c.l.b16 %v6415
    %v6790 = vunpack.c.h.b16 %v6415
    %v6791 = vunpack.c.l.b16 %v6416
    %v6792 = vunpack.c.h.b16 %v6416
    %v6793 = vunpack.c.l.b16 %v6417
    %v6794 = vunpack.c.h.b16 %v6417
    %v6795 = vunpack.c.l.b16 %v6418
    %v6796 = vunpack.c.h.b16 %v6418
    %v6797 = vunpack.c.l.b16 %v6419
    %v6798 = vunpack.c.h.b16 %v6419
    %v6799 = vunpack.c.l.b16 %v6420
    %v6800 = vunpack.c.h.b16 %v6420
    %v6801 = vunpack.c.l.b16 %v6421
    %v6802 = vunpack.c.h.b16 %v6421
    %v6803 = vunpack.c.l.b16 %v6422
    %v6804 = vunpack.c.h.b16 %v6422
    %v6805 = vunpack.c.l.b16 %v6423
    %v6806 = vunpack.c.h.b16 %v6423
    %v6807 = vunpack.c.l.b16 %v6424
    %v6808 = vunpack.c.h.b16 %v6424
    %v6809 = vunpack.c.l.b16 %v6425
    %v6810 = vunpack.c.h.b16 %v6425
    %v6811 = vunpack.c.l.b16 %v6426
    %v6812 = vunpack.c.h.b16 %v6426
    %v6813 = vunpack.c.l.b16 %v6427
    %v6814 = vunpack.c.h.b16 %v6427
    %v6815 = vunpack.c.l.b16 %v6428
    %v6816 = vunpack.c.h.b16 %v6428
    %v6817 = vunpack.c.l.b16 %v6429
    %v6818 = vunpack.c.h.b16 %v6429
    %v6819 = vunpack.c.l.b16 %v6430
    %v6820 = vunpack.c.h.b16 %v6430
    %v6821 = vunpack.c.l.b16 %v6431
    %v6822 = vunpack.c.h.b16 %v6431
    %v6823 = vunpack.c.l.b16 %v6432
    %v6824 = vunpack.c.h.b16 %v6432
    %v6825 = vunpack.c.l.b16 %v6433
    %v6826 = vunpack.c.h.b16 %v6433
    %v6827 = vunpack.c.l.b16 %v6434
    %v6828 = vunpack.c.h.b16 %v6434
    %v6829 = vunpack.c.l.b16 %v6435
    %v6830 = vunpack.c.h.b16 %v6435
    %v6831 = vunpack.c.l.b16 %v6436
    %v6832 = vunpack.c.h.b16 %v6436
    %v6833 = vunpack.c.l.b16 %v6437
    %v6834 = vunpack.c.h.b16 %v6437
    %v6835 = vunpack.c.l.b16 %v6438
    %v6836 = vunpack.c.h.b16 %v6438
    %v6837 = vunpack.c.l.b16 %v6439
    %v6838 = vunpack.c.h.b16 %v6439
    %v6839 = vunpack.c.l.b16 %v6440
    %v6840 = vunpack.c.h.b16 %v6440
    %v6841 = vunpack.c.l.b16 %v6441
    %v6842 = vunpack.c.h.b16 %v6441
    %v6843 = vunpack.c.l.b16 %v6442
    %v6844 = vunpack.c.h.b16 %v6442
    %v6845 = vunpack.c.l.b16 %v6443
    %v6846 = vunpack.c.h.b16 %v6443
    %v6847 = vunpack.c.l.b16 %v6444
    %v6848 = vunpack.c.h.b16 %v6444
    %v6849 = vunpack.c.l.b16 %v6445
    %v6850 = vunpack.c.h.b16 %v6445
    %v6851 = vunpack.c.l.b16 %v6446
    %v6852 = vunpack.c.h.b16 %v6446
    %v6853 = vunpack.c.l.b16 %v6447
    %v6854 = vunpack.c.h.b16 %v6447
    %v6855 = vpack.c.b16 %v6603, %v6599
    %v6856 = vpack.c.b16 %v6604, %v6600
    %v6857 = vpack.c.b16 %v6605, %v6601
    %v6858 = vpack.c.b16 %v6606, %v6602
    %v6859 = vpack.c.b16 %v6611, %v6607
    %v6860 = vpack.c.b16 %v6612, %v6608
    %v6861 = vpack.c.b16 %v6613, %v6609
    %v6862 = vpack.c.b16 %v6614, %v6610
    %v6863 = vpack.c.b16 %v6619, %v6615
    %v6864 = vpack.c.b16 %v6620, %v6616
    %v6865 = vpack.c.b16 %v6621, %v6617
    %v6866 = vpack.c.b16 %v6622, %v6618
    %v6867 = vpack.c.b16 %v6627, %v6623
    %v6868 = vpack.c.b16 %v6628, %v6624
    %v6869 = vpack.c.b16 %v6629, %v6625
    %v6870 = vpack.c.b16 %v6630, %v6626
    %v6871 = vpack.c.b16 %v6635, %v6631
    %v6872 = vpack.c.b16 %v6636, %v6632
    %v6873 = vpack.c.b16 %v6637, %v6633
    %v6874 = vpack.c.b16 %v6638, %v6634
    %v6875 = vpack.c.b16 %v6643, %v6639
    %v6876 = vpack.c.b16 %v6644, %v6640
    %v6877 = vpack.c.b16 %v6645, %v6641
    %v6878 = vpack.c.b16 %v6646, %v6642
    %v6879 = vpack.c.b16 %v6651, %v6647
    %v6880 = vpack.c.b16 %v6652, %v6648
    %v6881 = vpack.c.b16 %v6653, %v6649
    %v6882 = vpack.c.b16 %v6654, %v6650
    %v6883 = vpack.c.b16 %v6659, %v6655
    %v6884 = vpack.c.b16 %v6660, %v6656
    %v6885 = vpack.c.b16 %v6661, %v6657
    %v6886 = vpack.c.b16 %v6662, %v6658
    %v6887 = vpack.c.b16 %v6667, %v6663
    %v6888 = vpack.c.b16 %v6668, %v6664
    %v6889 = vpack.c.b16 %v6669, %v6665
    %v6890 = vpack.c.b16 %v6670, %v6666
    %v6891 = vpack.c.b16 %v6675, %v6671
    %v6892 = vpack.c.b16 %v6676, %v6672
    %v6893 = vpack.c.b16 %v6677, %v6673
    %v6894 = vpack.c.b16 %v6678, %v6674
    %v6895 = vpack.c.b16 %v6683, %v6679
    %v6896 = vpack.c.b16 %v6684, %v6680
    %v6897 = vpack.c.b16 %v6685, %v6681
    %v6898 = vpack.c.b16 %v6686, %v6682
    %v6899 = vpack.c.b16 %v6691, %v6687
    %v6900 = vpack.c.b16 %v6692, %v6688
    %v6901 = vpack.c.b16 %v6693, %v6689
    %v6902 = vpack.c.b16 %v6694, %v6690
    %v6903 = vpack.c.b16 %v6699, %v6695
    %v6904 = vpack.c.b16 %v6700, %v6696
    %v6905 = vpack.c.b16 %v6701, %v6697
    %v6906 = vpack.c.b16 %v6702, %v6698
    %v6907 = vpack.c.b16 %v6707, %v6703
    %v6908 = vpack.c.b16 %v6708, %v6704
    %v6909 = vpack.c.b16 %v6709, %v6705
    %v6910 = vpack.c.b16 %v6710, %v6706
    %v6911 = vpack.c.b16 %v6715, %v6711
    %v6912 = vpack.c.b16 %v6716, %v6712
    %v6913 = vpack.c.b16 %v6717, %v6713
    %v6914 = vpack.c.b16 %v6718, %v6714
    %v6915 = vpack.c.b16 %v6723, %v6719
    %v6916 = vpack.c.b16 %v6724, %v6720
    %v6917 = vpack.c.b16 %v6725, %v6721
    %v6918 = vpack.c.b16 %v6726, %v6722
    %v6919 = vpack.c.b16 %v6731, %v6727
    %v6920 = vpack.c.b16 %v6732, %v6728
    %v6921 = vpack.c.b16 %v6733, %v6729
    %v6922 = vpack.c.b16 %v6734, %v6730
    %v6923 = vpack.c.b16 %v6739, %v6735
    %v6924 = vpack.c.b16 %v6740, %v6736
    %v6925 = vpack.c.b16 %v6741, %v6737
    %v6926 = vpack.c.b16 %v6742, %v6738
    %v6927 = vpack.c.b16 %v6747, %v6743
    %v6928 = vpack.c.b16 %v6748, %v6744
    %v6929 = vpack.c.b16 %v6749, %v6745
    %v6930 = vpack.c.b16 %v6750, %v6746
    %v6931 = vpack.c.b16 %v6755, %v6751
    %v6932 = vpack.c.b16 %v6756, %v6752
    %v6933 = vpack.c.b16 %v6757, %v6753
    %v6934 = vpack.c.b16 %v6758, %v6754
    %v6935 = vpack.c.b16 %v6763, %v6759
    %v6936 = vpack.c.b16 %v6764, %v6760
    %v6937 = vpack.c.b16 %v6765, %v6761
    %v6938 = vpack.c.b16 %v6766, %v6762
    %v6939 = vpack.c.b16 %v6771, %v6767
    %v6940 = vpack.c.b16 %v6772, %v6768
    %v6941 = vpack.c.b16 %v6773, %v6769
    %v6942 = vpack.c.b16 %v6774, %v6770
    %v6943 = vpack.c.b16 %v6779, %v6775
    %v6944 = vpack.c.b16 %v6780, %v6776
    %v6945 = vpack.c.b16 %v6781, %v6777
    %v6946 = vpack.c.b16 %v6782, %v6778
    %v6947 = vpack.c.b16 %v6787, %v6783
    %v6948 = vpack.c.b16 %v6788, %v6784
    %v6949 = vpack.c.b16 %v6789, %v6785
    %v6950 = vpack.c.b16 %v6790, %v6786
    %v6951 = vpack.c.b16 %v6795, %v6791
    %v6952 = vpack.c.b16 %v6796, %v6792
    %v6953 = vpack.c.b16 %v6797, %v6793
    %v6954 = vpack.c.b16 %v6798, %v6794
    %v6955 = vpack.c.b16 %v6803, %v6799
    %v6956 = vpack.c.b16 %v6804, %v6800
    %v6957 = vpack.c.b16 %v6805, %v6801
    %v6958 = vpack.c.b16 %v6806, %v6802
    %v6959 = vpack.c.b16 %v6811, %v6807
    %v6960 = vpack.c.b16 %v6812, %v6808
    %v6961 = vpack.c.b16 %v6813, %v6809
    %v6962 = vpack.c.b16 %v6814, %v6810
    %v6963 = vpack.c.b16 %v6819, %v6815
    %v6964 = vpack.c.b16 %v6820, %v6816
    %v6965 = vpack.c.b16 %v6821, %v6817
    %v6966 = vpack.c.b16 %v6822, %v6818
    %v6967 = vpack.c.b16 %v6827, %v6823
    %v6968 = vpack.c.b16 %v6828, %v6824
    %v6969 = vpack.c.b16 %v6829, %v6825
    %v6970 = vpack.c.b16 %v6830, %v6826
    %v6971 = vpack.c.b16 %v6835, %v6831
    %v6972 = vpack.c.b16 %v6836, %v6832
    %v6973 = vpack.c.b16 %v6837, %v6833
    %v6974 = vpack.c.b16 %v6838, %v6834
    %v6975 = vpack.c.b16 %v6843, %v6839
    %v6976 = vpack.c.b16 %v6844, %v6840
    %v6977 = vpack.c.b16 %v6845, %v6841
    %v6978 = vpack.c.b16 %v6846, %v6842
    %v6979 = vpack.c.b16 %v6851, %v6847
    %v6980 = vpack.c.b16 %v6852, %v6848
    %v6981 = vpack.c.b16 %v6853, %v6849
    %v6982 = vpack.c.b16 %v6854, %v6850
    %7111 = vmatprep.subr.bf16.mxu0 %v6856
    %7112 = vmatpush1.bf16.msra.mxu0 %v6855
    %7113 = vmatprep.subr.bf16.mxu0 %v6860
    %7114 = vmatpush1.bf16.msra.mxu0 %v6859
    %7115 = vmatprep.subr.bf16.mxu0 %v6864
    %7116 = vmatpush1.bf16.msra.mxu0 %v6863
    %7117 = vmatprep.subr.bf16.mxu0 %v6868
    %7118 = vmatpush1.bf16.msra.mxu0 %v6867
    %7119 = vmatprep.subr.bf16.mxu0 %v6872
    %7120 = vmatpush1.bf16.msra.mxu0 %v6871
    %7121 = vmatprep.subr.bf16.mxu0 %v6876
    %7122 = vmatpush1.bf16.msra.mxu0 %v6875
    %7123 = vmatprep.subr.bf16.mxu0 %v6880
    %7124 = vmatpush1.bf16.msra.mxu0 %v6879
    %7125 = vmatprep.subr.bf16.mxu0 %v6884
    %7126 = vmatpush1.bf16.msra.mxu0 %v6883
    %7127 = vmatprep.subr.bf16.mxu0 %v6888
    %7128 = vmatpush1.bf16.msra.mxu0 %v6887
    %7129 = vmatprep.subr.bf16.mxu0 %v6892
    %7130 = vmatpush1.bf16.msra.mxu0 %v6891
    %7131 = vmatprep.subr.bf16.mxu0 %v6896
    %7132 = vmatpush1.bf16.msra.mxu0 %v6895
    %7133 = vmatprep.subr.bf16.mxu0 %v6900
    %7134 = vmatpush1.bf16.msra.mxu0 %v6899
    %7135 = vmatprep.subr.bf16.mxu0 %v6904
    %7136 = vmatpush1.bf16.msra.mxu0 %v6903
    %7137 = vmatprep.subr.bf16.mxu0 %v6908
    %7138 = vmatpush1.bf16.msra.mxu0 %v6907
    %7139 = vmatprep.subr.bf16.mxu0 %v6912
    %7140 = vmatpush1.bf16.msra.mxu0 %v6911
    %7141 = vmatprep.subr.bf16.mxu0 %v6916
    %7142 = vmatpush1.bf16.msra.mxu0 %v6915
    %7143 = vmatprep.mubr.bf16.mxu0 %v6288
    %7144 = vmatmul.mubr.bf16.gmra.mrb[0].mxu0 %v6287
    %v7145 = vpop.f32.mrb[0].mxu0
    %v7146 = vadd.f32 %v6454, %v7145
    %v7147 = vpop.f32.mrb[0].mxu0
    %v7148 = vadd.f32 %v6458, %v7147
    %v7149 = vpop.f32.mrb[0].mxu0
    %v7150 = vadd.f32 %v6454, %v7149
    %v7151 = vpop.f32.mrb[0].mxu0
    %v7152 = vadd.f32 %v6458, %v7151
    %7153 = vmatprep.mubr.bf16.mxu0 %v6292
    %7154 = vmatmul.mubr.bf16.gmra.mrb[0].mxu0 %v6291
    %v7155 = vpop.f32.mrb[0].mxu0
    %v7156 = vadd.f32 %v6454, %v7155
    %v7157 = vpop.f32.mrb[0].mxu0
    %v7158 = vadd.f32 %v6458, %v7157
    %v7159 = vpop.f32.mrb[0].mxu0
    %v7160 = vadd.f32 %v6454, %v7159
    %v7161 = vpop.f32.mrb[0].mxu0
    %v7162 = vadd.f32 %v6458, %v7161
    %7163 = vmatprep.mubr.bf16.mxu0 %v6296
    %7164 = vmatmul.mubr.bf16.gmra.mrb[0].mxu0 %v6295
    %v7165 = vpop.f32.mrb[0].mxu0
    %v7166 = vadd.f32 %v6454, %v7165
    %v7167 = vpop.f32.mrb[0].mxu0
    %v7168 = vadd.f32 %v6458, %v7167
    %v7169 = vpop.f32.mrb[0].mxu0
    %v7170 = vadd.f32 %v6454, %v7169
    %v7171 = vpop.f32.mrb[0].mxu0
    %v7172 = vadd.f32 %v6458, %v7171
    %7173 = vmatprep.mubr.bf16.mxu0 %v6300
    %7174 = vmatmul.mubr.bf16.gmra.mrb[0].mxu0 %v6299
    %v7175 = vpop.f32.mrb[0].mxu0
    %v7176 = vadd.f32 %v6454, %v7175
    %v7177 = vpop.f32.mrb[0].mxu0
    %v7178 = vadd.f32 %v6458, %v7177
    %v7179 = vpop.f32.mrb[0].mxu0
    %v7180 = vadd.f32 %v6454, %v7179
    %v7181 = vpop.f32.mrb[0].mxu0
    %v7182 = vadd.f32 %v6458, %v7181
    %7183 = vmatprep.mubr.bf16.mxu0 %v6304
    %7184 = vmatmul.mubr.bf16.gmra.mrb[0].mxu0 %v6303
    %v7185 = vpop.f32.mrb[0].mxu0
    %v7186 = vadd.f32 %v6454, %v7185
    %v7187 = vpop.f32.mrb[0].mxu0
    %v7188 = vadd.f32 %v6458, %v7187
    %v7189 = vpop.f32.mrb[0].mxu0
    %v7190 = vadd.f32 %v6454, %v7189
    %v7191 = vpop.f32.mrb[0].mxu0
    %v7192 = vadd.f32 %v6458, %v7191
    %7193 = vmatprep.mubr.bf16.mxu0 %v6308
    %7194 = vmatmul.mubr.bf16.gmra.mrb[0].mxu0 %v6307
    %v7195 = vpop.f32.mrb[0].mxu0
    %v7196 = vadd.f32 %v6454, %v7195
    %v7197 = vpop.f32.mrb[0].mxu0
    %v7198 = vadd.f32 %v6458, %v7197
    %v7199 = vpop.f32.mrb[0].mxu0
    %v7200 = vadd.f32 %v6454, %v7199
    %v7201 = vpop.f32.mrb[0].mxu0
    %v7202 = vadd.f32 %v6458, %v7201
    %7203 = vmatprep.mubr.bf16.mxu0 %v6312
    %7204 = vmatmul.mubr.bf16.gmra.mrb[0].mxu0 %v6311
    %v7205 = vpop.f32.mrb[0].mxu0
    %v7206 = vadd.f32 %v6454, %v7205
    %v7207 = vpop.f32.mrb[0].mxu0
    %v7208 = vadd.f32 %v6458, %v7207
    %v7209 = vpop.f32.mrb[0].mxu0
    %v7210 = vadd.f32 %v6454, %v7209
    %v7211 = vpop.f32.mrb[0].mxu0
    %v7212 = vadd.f32 %v6458, %v7211
    %7213 = vmatprep.mubr.bf16.mxu0 %v6316
    %7214 = vmatmul.mubr.bf16.gmra.mrb[0].mxu0 %v6315
    %v7215 = vpop.f32.mrb[0].mxu0
    %v7216 = vadd.f32 %v6454, %v7215
    %v7217 = vpop.f32.mrb[0].mxu0
    %v7218 = vadd.f32 %v6458, %v7217
    %v7219 = vpop.f32.mrb[0].mxu0
    %v7220 = vadd.f32 %v6454, %v7219
    %v7221 = vpop.f32.mrb[0].mxu0
    %v7222 = vadd.f32 %v6458, %v7221
    %7223 = vdwg.mxu0
    %7224 = vmatprep.subr.bf16.mxu0 %v6920
    %7225 = vmatpush1.bf16.msra.mxu0 %v6919
    %7226 = vmatprep.subr.bf16.mxu0 %v6924
    %7227 = vmatpush1.bf16.msra.mxu0 %v6923
    %7228 = vmatprep.subr.bf16.mxu0 %v6928
    %7229 = vmatpush1.bf16.msra.mxu0 %v6927
    %7230 = vmatprep.subr.bf16.mxu0 %v6932
    %7231 = vmatpush1.bf16.msra.mxu0 %v6931
    %7232 = vmatprep.subr.bf16.mxu0 %v6936
    %7233 = vmatpush1.bf16.msra.mxu0 %v6935
    %7234 = vmatprep.subr.bf16.mxu0 %v6940
    %7235 = vmatpush1.bf16.msra.mxu0 %v6939
    %7236 = vmatprep.subr.bf16.mxu0 %v6944
    %7237 = vmatpush1.bf16.msra.mxu0 %v6943
    %7238 = vmatprep.subr.bf16.mxu0 %v6948
    %7239 = vmatpush1.bf16.msra.mxu0 %v6947
    %7240 = vmatprep.subr.bf16.mxu0 %v6952
    %7241 = vmatpush1.bf16.msra.mxu0 %v6951
    %7242 = vmatprep.subr.bf16.mxu0 %v6956
    %7243 = vmatpush1.bf16.msra.mxu0 %v6955
    %7244 = vmatprep.subr.bf16.mxu0 %v6960
    %7245 = vmatpush1.bf16.msra.mxu0 %v6959
    %7246 = vmatprep.subr.bf16.mxu0 %v6964
    %7247 = vmatpush1.bf16.msra.mxu0 %v6963
    %7248 = vmatprep.subr.bf16.mxu0 %v6968
    %7249 = vmatpush1.bf16.msra.mxu0 %v6967
    %7250 = vmatprep.subr.bf16.mxu0 %v6972
    %7251 = vmatpush1.bf16.msra.mxu0 %v6971
    %7252 = vmatprep.subr.bf16.mxu0 %v6976
    %7253 = vmatpush1.bf16.msra.mxu0 %v6975
    %7254 = vmatprep.subr.bf16.mxu0 %v6980
    %7255 = vmatpush1.bf16.msra.mxu0 %v6979
    %7256 = vmatprep.mubr.bf16.mxu0 %v6290
    %7257 = vmatmul.mubr.bf16.gmra.mrb[0].mxu0 %v6289
    %v7258 = vpop.f32.mrb[0].mxu0
    %v7259 = vadd.f32 %v7146, %v7258
    %v7260 = vpop.f32.mrb[0].mxu0
    %v7261 = vadd.f32 %v7148, %v7260
    %v7262 = vpop.f32.mrb[0].mxu0
    %v7263 = vadd.f32 %v7150, %v7262
    %v7264 = vpop.f32.mrb[0].mxu0
    %v7265 = vadd.f32 %v7152, %v7264
    %7266 = vmatprep.mubr.bf16.mxu0 %v6294
    %7267 = vmatmul.mubr.bf16.gmra.mrb[0].mxu0 %v6293
    %v7268 = vpop.f32.mrb[0].mxu0
    %v7269 = vadd.f32 %v7156, %v7268
    %v7270 = vpop.f32.mrb[0].mxu0
    %v7271 = vadd.f32 %v7158, %v7270
    %v7272 = vpop.f32.mrb[0].mxu0
    %v7273 = vadd.f32 %v7160, %v7272
    %v7274 = vpop.f32.mrb[0].mxu0
    %v7275 = vadd.f32 %v7162, %v7274
    %7276 = vmatprep.mubr.bf16.mxu0 %v6298
    %7277 = vmatmul.mubr.bf16.gmra.mrb[0].mxu0 %v6297
    %v7278 = vpop.f32.mrb[0].mxu0
    %v7279 = vadd.f32 %v7166, %v7278
    %v7280 = vpop.f32.mrb[0].mxu0
    %v7281 = vadd.f32 %v7168, %v7280
    %v7282 = vpop.f32.mrb[0].mxu0
    %v7283 = vadd.f32 %v7170, %v7282
    %v7284 = vpop.f32.mrb[0].mxu0
    %v7285 = vadd.f32 %v7172, %v7284
    %7286 = vmatprep.mubr.bf16.mxu0 %v6302
    %7287 = vmatmul.mubr.bf16.gmra.mrb[0].mxu0 %v6301
    %v7288 = vpop.f32.mrb[0].mxu0
    %v7289 = vadd.f32 %v7176, %v7288
    %v7290 = vpop.f32.mrb[0].mxu0
    %v7291 = vadd.f32 %v7178, %v7290
    %v7292 = vpop.f32.mrb[0].mxu0
    %v7293 = vadd.f32 %v7180, %v7292
    %v7294 = vpop.f32.mrb[0].mxu0
    %v7295 = vadd.f32 %v7182, %v7294
    %7296 = vmatprep.mubr.bf16.mxu0 %v6306
    %7297 = vmatmul.mubr.bf16.gmra.mrb[0].mxu0 %v6305
    %v7298 = vpop.f32.mrb[0].mxu0
    %v7299 = vadd.f32 %v7186, %v7298
    %v7300 = vpop.f32.mrb[0].mxu0
    %v7301 = vadd.f32 %v7188, %v7300
    %v7302 = vpop.f32.mrb[0].mxu0
    %v7303 = vadd.f32 %v7190, %v7302
    %v7304 = vpop.f32.mrb[0].mxu0
    %v7305 = vadd.f32 %v7192, %v7304
    %7306 = vmatprep.mubr.bf16.mxu0 %v6310
    %7307 = vmatmul.mubr.bf16.gmra.mrb[0].mxu0 %v6309
    %v7308 = vpop.f32.mrb[0].mxu0
    %v7309 = vadd.f32 %v7196, %v7308
    %v7310 = vpop.f32.mrb[0].mxu0
    %v7311 = vadd.f32 %v7198, %v7310
    %v7312 = vpop.f32.mrb[0].mxu0
    %v7313 = vadd.f32 %v7200, %v7312
    %v7314 = vpop.f32.mrb[0].mxu0
    %v7315 = vadd.f32 %v7202, %v7314
    %7316 = vmatprep.mubr.bf16.mxu0 %v6314
    %7317 = vmatmul.mubr.bf16.gmra.mrb[0].mxu0 %v6313
    %v7318 = vpop.f32.mrb[0].mxu0
    %v7319 = vadd.f32 %v7206, %v7318
    %v7320 = vpop.f32.mrb[0].mxu0
    %v7321 = vadd.f32 %v7208, %v7320
    %v7322 = vpop.f32.mrb[0].mxu0
    %v7323 = vadd.f32 %v7210, %v7322
    %v7324 = vpop.f32.mrb[0].mxu0
    %v7325 = vadd.f32 %v7212, %v7324
    %7326 = vmatprep.mubr.bf16.mxu0 %v6318
    %7327 = vmatmul.mubr.bf16.gmra.mrb[0].mxu0 %v6317
    %v7328 = vpop.f32.mrb[0].mxu0
    %v7329 = vadd.f32 %v7216, %v7328
    %v7330 = vpop.f32.mrb[0].mxu0
    %v7331 = vadd.f32 %v7218, %v7330
    %v7332 = vpop.f32.mrb[0].mxu0
    %v7333 = vadd.f32 %v7220, %v7332
    %v7334 = vpop.f32.mrb[0].mxu0
    %v7335 = vadd.f32 %v7222, %v7334
    %7336 = vdwg.mxu0
    %7337 = vmatprep.subr.bf16.mxu0 %v6858
    %7338 = vmatpush1.bf16.msra.mxu0 %v6857
    %7339 = vmatprep.subr.bf16.mxu0 %v6862
    %7340 = vmatpush1.bf16.msra.mxu0 %v6861
    %7341 = vmatprep.subr.bf16.mxu0 %v6866
    %7342 = vmatpush1.bf16.msra.mxu0 %v6865
    %7343 = vmatprep.subr.bf16.mxu0 %v6870
    %7344 = vmatpush1.bf16.msra.mxu0 %v6869
    %7345 = vmatprep.subr.bf16.mxu0 %v6874
    %7346 = vmatpush1.bf16.msra.mxu0 %v6873
    %7347 = vmatprep.subr.bf16.mxu0 %v6878
    %7348 = vmatpush1.bf16.msra.mxu0 %v6877
    %7349 = vmatprep.subr.bf16.mxu0 %v6882
    %7350 = vmatpush1.bf16.msra.mxu0 %v6881
    %7351 = vmatprep.subr.bf16.mxu0 %v6886
    %7352 = vmatpush1.bf16.msra.mxu0 %v6885
    %7353 = vmatprep.subr.bf16.mxu0 %v6890
    %7354 = vmatpush1.bf16.msra.mxu0 %v6889
    %7355 = vmatprep.subr.bf16.mxu0 %v6894
    %7356 = vmatpush1.bf16.msra.mxu0 %v6893
    %7357 = vmatprep.subr.bf16.mxu0 %v6898
    %7358 = vmatpush1.bf16.msra.mxu0 %v6897
    %7359 = vmatprep.subr.bf16.mxu0 %v6902
    %7360 = vmatpush1.bf16.msra.mxu0 %v6901
    %7361 = vmatprep.subr.bf16.mxu0 %v6906
    %7362 = vmatpush1.bf16.msra.mxu0 %v6905
    %7363 = vmatprep.subr.bf16.mxu0 %v6910
    %7364 = vmatpush1.bf16.msra.mxu0 %v6909
    %7365 = vmatprep.subr.bf16.mxu0 %v6914
    %7366 = vmatpush1.bf16.msra.mxu0 %v6913
    %7367 = vmatprep.subr.bf16.mxu0 %v6918
    %7368 = vmatpush1.bf16.msra.mxu0 %v6917
    %7369 = vmatprep.mubr.bf16.mxu0 %v6288
    %7370 = vmatmul.mubr.bf16.gmra.mrb[0].mxu0 %v6287
    %v7371 = vpop.f32.mrb[0].mxu0
    %v7372 = vadd.f32 %v6462, %v7371
    %v7373 = vpop.f32.mrb[0].mxu0
    %v7374 = vadd.f32 %v6466, %v7373
    %v7375 = vpop.f32.mrb[0].mxu0
    %v7376 = vadd.f32 %v6462, %v7375
    %v7377 = vpop.f32.mrb[0].mxu0
    %v7378 = vadd.f32 %v6466, %v7377
    %7379 = vmatprep.mubr.bf16.mxu0 %v6292
    %7380 = vmatmul.mubr.bf16.gmra.mrb[0].mxu0 %v6291
    %v7381 = vpop.f32.mrb[0].mxu0
    %v7382 = vadd.f32 %v6462, %v7381
    %v7383 = vpop.f32.mrb[0].mxu0
    %v7384 = vadd.f32 %v6466, %v7383
    %v7385 = vpop.f32.mrb[0].mxu0
    %v7386 = vadd.f32 %v6462, %v7385
    %v7387 = vpop.f32.mrb[0].mxu0
    %v7388 = vadd.f32 %v6466, %v7387
    %7389 = vmatprep.mubr.bf16.mxu0 %v6296
    %7390 = vmatmul.mubr.bf16.gmra.mrb[0].mxu0 %v6295
    %v7391 = vpop.f32.mrb[0].mxu0
    %v7392 = vadd.f32 %v6462, %v7391
    %v7393 = vpop.f32.mrb[0].mxu0
    %v7394 = vadd.f32 %v6466, %v7393
    %v7395 = vpop.f32.mrb[0].mxu0
    %v7396 = vadd.f32 %v6462, %v7395
    %v7397 = vpop.f32.mrb[0].mxu0
    %v7398 = vadd.f32 %v6466, %v7397
    %7399 = vmatprep.mubr.bf16.mxu0 %v6300
    %7400 = vmatmul.mubr.bf16.gmra.mrb[0].mxu0 %v6299
    %v7401 = vpop.f32.mrb[0].mxu0
    %v7402 = vadd.f32 %v6462, %v7401
    %v7403 = vpop.f32.mrb[0].mxu0
    %v7404 = vadd.f32 %v6466, %v7403
    %v7405 = vpop.f32.mrb[0].mxu0
    %v7406 = vadd.f32 %v6462, %v7405
    %v7407 = vpop.f32.mrb[0].mxu0
    %v7408 = vadd.f32 %v6466, %v7407
    %7409 = vmatprep.mubr.bf16.mxu0 %v6304
    %7410 = vmatmul.mubr.bf16.gmra.mrb[0].mxu0 %v6303
    %v7411 = vpop.f32.mrb[0].mxu0
    %v7412 = vadd.f32 %v6462, %v7411
    %v7413 = vpop.f32.mrb[0].mxu0
    %v7414 = vadd.f32 %v6466, %v7413
    %v7415 = vpop.f32.mrb[0].mxu0
    %v7416 = vadd.f32 %v6462, %v7415
    %v7417 = vpop.f32.mrb[0].mxu0
    %v7418 = vadd.f32 %v6466, %v7417
    %7419 = vmatprep.mubr.bf16.mxu0 %v6308
    %7420 = vmatmul.mubr.bf16.gmra.mrb[0].mxu0 %v6307
    %v7421 = vpop.f32.mrb[0].mxu0
    %v7422 = vadd.f32 %v6462, %v7421
    %v7423 = vpop.f32.mrb[0].mxu0
    %v7424 = vadd.f32 %v6466, %v7423
    %v7425 = vpop.f32.mrb[0].mxu0
    %v7426 = vadd.f32 %v6462, %v7425
    %v7427 = vpop.f32.mrb[0].mxu0
    %v7428 = vadd.f32 %v6466, %v7427
    %7429 = vmatprep.mubr.bf16.mxu0 %v6312
    %7430 = vmatmul.mubr.bf16.gmra.mrb[0].mxu0 %v6311
    %v7431 = vpop.f32.mrb[0].mxu0
    %v7432 = vadd.f32 %v6462, %v7431
    %v7433 = vpop.f32.mrb[0].mxu0
    %v7434 = vadd.f32 %v6466, %v7433
    %v7435 = vpop.f32.mrb[0].mxu0
    %v7436 = vadd.f32 %v6462, %v7435
    %v7437 = vpop.f32.mrb[0].mxu0
    %v7438 = vadd.f32 %v6466, %v7437
    %7439 = vmatprep.mubr.bf16.mxu0 %v6316
    %7440 = vmatmul.mubr.bf16.gmra.mrb[0].mxu0 %v6315
    %v7441 = vpop.f32.mrb[0].mxu0
    %v7442 = vadd.f32 %v6462, %v7441
    %v7443 = vpop.f32.mrb[0].mxu0
    %v7444 = vadd.f32 %v6466, %v7443
    %v7445 = vpop.f32.mrb[0].mxu0
    %v7446 = vadd.f32 %v6462, %v7445
    %v7447 = vpop.f32.mrb[0].mxu0
    %v7448 = vadd.f32 %v6466, %v7447
    %7449 = vdwg.mxu0
    %7450 = vmatprep.subr.bf16.mxu0 %v6922
    %7451 = vmatpush1.bf16.msra.mxu0 %v6921
    %7452 = vmatprep.subr.bf16.mxu0 %v6926
    %7453 = vmatpush1.bf16.msra.mxu0 %v6925
    %7454 = vmatprep.subr.bf16.mxu0 %v6930
    %7455 = vmatpush1.bf16.msra.mxu0 %v6929
    %7456 = vmatprep.subr.bf16.mxu0 %v6934
    %7457 = vmatpush1.bf16.msra.mxu0 %v6933
    %7458 = vmatprep.subr.bf16.mxu0 %v6938
    %7459 = vmatpush1.bf16.msra.mxu0 %v6937
    %7460 = vmatprep.subr.bf16.mxu0 %v6942
    %7461 = vmatpush1.bf16.msra.mxu0 %v6941
    %7462 = vmatprep.subr.bf16.mxu0 %v6946
    %7463 = vmatpush1.bf16.msra.mxu0 %v6945
    %7464 = vmatprep.subr.bf16.mxu0 %v6950
    %7465 = vmatpush1.bf16.msra.mxu0 %v6949
    %7466 = vmatprep.subr.bf16.mxu0 %v6954
    %7467 = vmatpush1.bf16.msra.mxu0 %v6953
    %7468 = vmatprep.subr.bf16.mxu0 %v6958
    %7469 = vmatpush1.bf16.msra.mxu0 %v6957
    %7470 = vmatprep.subr.bf16.mxu0 %v6962
    %7471 = vmatpush1.bf16.msra.mxu0 %v6961
    %7472 = vmatprep.subr.bf16.mxu0 %v6966
    %7473 = vmatpush1.bf16.msra.mxu0 %v6965
    %7474 = vmatprep.subr.bf16.mxu0 %v6970
    %7475 = vmatpush1.bf16.msra.mxu0 %v6969
    %7476 = vmatprep.subr.bf16.mxu0 %v6974
    %7477 = vmatpush1.bf16.msra.mxu0 %v6973
    %7478 = vmatprep.subr.bf16.mxu0 %v6978
    %7479 = vmatpush1.bf16.msra.mxu0 %v6977
    %7480 = vmatprep.subr.bf16.mxu0 %v6982
    %7481 = vmatpush1.bf16.msra.mxu0 %v6981
    %7482 = vmatprep.mubr.bf16.mxu0 %v6290
    %7483 = vmatmul.mubr.bf16.gmra.mrb[0].mxu0 %v6289
    %v7484 = vpop.f32.mrb[0].mxu0
    %v7485 = vadd.f32 %v7372, %v7484
    %v7486 = vpop.f32.mrb[0].mxu0
    %v7487 = vadd.f32 %v7374, %v7486
    %v7488 = vpop.f32.mrb[0].mxu0
    %v7489 = vadd.f32 %v7376, %v7488
    %v7490 = vpop.f32.mrb[0].mxu0
    %v7491 = vadd.f32 %v7378, %v7490
    %7492 = vmatprep.mubr.bf16.mxu0 %v6294
    %7493 = vmatmul.mubr.bf16.gmra.mrb[0].mxu0 %v6293
    %v7494 = vpop.f32.mrb[0].mxu0
    %v7495 = vadd.f32 %v7382, %v7494
    %v7496 = vpop.f32.mrb[0].mxu0
    %v7497 = vadd.f32 %v7384, %v7496
    %v7498 = vpop.f32.mrb[0].mxu0
    %v7499 = vadd.f32 %v7386, %v7498
    %v7500 = vpop.f32.mrb[0].mxu0
    %v7501 = vadd.f32 %v7388, %v7500
    %7502 = vmatprep.mubr.bf16.mxu0 %v6298
    %7503 = vmatmul.mubr.bf16.gmra.mrb[0].mxu0 %v6297
    %v7504 = vpop.f32.mrb[0].mxu0
    %v7505 = vadd.f32 %v7392, %v7504
    %v7506 = vpop.f32.mrb[0].mxu0
    %v7507 = vadd.f32 %v7394, %v7506
    %v7508 = vpop.f32.mrb[0].mxu0
    %v7509 = vadd.f32 %v7396, %v7508
    %v7510 = vpop.f32.mrb[0].mxu0
    %v7511 = vadd.f32 %v7398, %v7510
    %7512 = vmatprep.mubr.bf16.mxu0 %v6302
    %7513 = vmatmul.mubr.bf16.gmra.mrb[0].mxu0 %v6301
    %v7514 = vpop.f32.mrb[0].mxu0
    %v7515 = vadd.f32 %v7402, %v7514
    %v7516 = vpop.f32.mrb[0].mxu0
    %v7517 = vadd.f32 %v7404, %v7516
    %v7518 = vpop.f32.mrb[0].mxu0
    %v7519 = vadd.f32 %v7406, %v7518
    %v7520 = vpop.f32.mrb[0].mxu0
    %v7521 = vadd.f32 %v7408, %v7520
    %7522 = vmatprep.mubr.bf16.mxu0 %v6306
    %7523 = vmatmul.mubr.bf16.gmra.mrb[0].mxu0 %v6305
    %v7524 = vpop.f32.mrb[0].mxu0
    %v7525 = vadd.f32 %v7412, %v7524
    %v7526 = vpop.f32.mrb[0].mxu0
    %v7527 = vadd.f32 %v7414, %v7526
    %v7528 = vpop.f32.mrb[0].mxu0
    %v7529 = vadd.f32 %v7416, %v7528
    %v7530 = vpop.f32.mrb[0].mxu0
    %v7531 = vadd.f32 %v7418, %v7530
    %7532 = vmatprep.mubr.bf16.mxu0 %v6310
    %7533 = vmatmul.mubr.bf16.gmra.mrb[0].mxu0 %v6309
    %v7534 = vpop.f32.mrb[0].mxu0
    %v7535 = vadd.f32 %v7422, %v7534
    %v7536 = vpop.f32.mrb[0].mxu0
    %v7537 = vadd.f32 %v7424, %v7536
    %v7538 = vpop.f32.mrb[0].mxu0
    %v7539 = vadd.f32 %v7426, %v7538
    %v7540 = vpop.f32.mrb[0].mxu0
    %v7541 = vadd.f32 %v7428, %v7540
    %7542 = vmatprep.mubr.bf16.mxu0 %v6314
    %7543 = vmatmul.mubr.bf16.gmra.mrb[0].mxu0 %v6313
    %v7544 = vpop.f32.mrb[0].mxu0
    %v7545 = vadd.f32 %v7432, %v7544
    %v7546 = vpop.f32.mrb[0].mxu0
    %v7547 = vadd.f32 %v7434, %v7546
    %v7548 = vpop.f32.mrb[0].mxu0
    %v7549 = vadd.f32 %v7436, %v7548
    %v7550 = vpop.f32.mrb[0].mxu0
    %v7551 = vadd.f32 %v7438, %v7550
    %7552 = vmatprep.mubr.bf16.mxu0 %v6318
    %7553 = vmatmul.mubr.bf16.gmra.mrb[0].mxu0 %v6317
    %v7554 = vpop.f32.mrb[0].mxu0
    %v7555 = vadd.f32 %v7442, %v7554
    %v7556 = vpop.f32.mrb[0].mxu0
    %v7557 = vadd.f32 %v7444, %v7556
    %v7558 = vpop.f32.mrb[0].mxu0
    %v7559 = vadd.f32 %v7446, %v7558
    %v7560 = vpop.f32.mrb[0].mxu0
    %v7561 = vadd.f32 %v7448, %v7560
    %7562 = vdwg.mxu0
    %v7563 = vmax.f32 %v7259, 0.0
    %v7564 = vmax.f32 %v7261, 0.0
    %v7565 = vmax.f32 %v7485, 0.0
    %v7566 = vmax.f32 %v7487, 0.0
    %v7567 = vmax.f32 %v7263, 0.0
    %v7568 = vmax.f32 %v7265, 0.0
    %v7569 = vmax.f32 %v7489, 0.0
    %v7570 = vmax.f32 %v7491, 0.0
    %v7571 = vmax.f32 %v7269, 0.0
    %v7572 = vmax.f32 %v7271, 0.0
    %v7573 = vmax.f32 %v7495, 0.0
    %v7574 = vmax.f32 %v7497, 0.0
    %v7575 = vmax.f32 %v7273, 0.0
    %v7576 = vmax.f32 %v7275, 0.0
    %v7577 = vmax.f32 %v7499, 0.0
    %v7578 = vmax.f32 %v7501, 0.0
    %v7579 = vmax.f32 %v7279, 0.0
    %v7580 = vmax.f32 %v7281, 0.0
    %v7581 = vmax.f32 %v7505, 0.0
    %v7582 = vmax.f32 %v7507, 0.0
    %v7583 = vmax.f32 %v7283, 0.0
    %v7584 = vmax.f32 %v7285, 0.0
    %v7585 = vmax.f32 %v7509, 0.0
    %v7586 = vmax.f32 %v7511, 0.0
    %v7587 = vmax.f32 %v7289, 0.0
    %v7588 = vmax.f32 %v7291, 0.0
    %v7589 = vmax.f32 %v7515, 0.0
    %v7590 = vmax.f32 %v7517, 0.0
    %v7591 = vmax.f32 %v7293, 0.0
    %v7592 = vmax.f32 %v7295, 0.0
    %v7593 = vmax.f32 %v7519, 0.0
    %v7594 = vmax.f32 %v7521, 0.0
    %v7595 = vmax.f32 %v7299, 0.0
    %v7596 = vmax.f32 %v7301, 0.0
    %v7597 = vmax.f32 %v7525, 0.0
    %v7598 = vmax.f32 %v7527, 0.0
    %v7599 = vmax.f32 %v7303, 0.0
    %v7600 = vmax.f32 %v7305, 0.0
    %v7601 = vmax.f32 %v7529, 0.0
    %v7602 = vmax.f32 %v7531, 0.0
    %v7603 = vmax.f32 %v7309, 0.0
    %v7604 = vmax.f32 %v7311, 0.0
    %v7605 = vmax.f32 %v7535, 0.0
    %v7606 = vmax.f32 %v7537, 0.0
    %v7607 = vmax.f32 %v7313, 0.0
    %v7608 = vmax.f32 %v7315, 0.0
    %v7609 = vmax.f32 %v7539, 0.0
    %v7610 = vmax.f32 %v7541, 0.0
    %v7611 = vmax.f32 %v7319, 0.0
    %v7612 = vmax.f32 %v7321, 0.0
    %v7613 = vmax.f32 %v7545, 0.0
    %v7614 = vmax.f32 %v7547, 0.0
    %v7615 = vmax.f32 %v7323, 0.0
    %v7616 = vmax.f32 %v7325, 0.0
    %v7617 = vmax.f32 %v7549, 0.0
    %v7618 = vmax.f32 %v7551, 0.0
    %v7619 = vmax.f32 %v7329, 0.0
    %v7620 = vmax.f32 %v7331, 0.0
    %v7621 = vmax.f32 %v7555, 0.0
    %v7622 = vmax.f32 %v7557, 0.0
    %v7623 = vmax.f32 %v7333, 0.0
    %v7624 = vmax.f32 %v7335, 0.0
    %v7625 = vmax.f32 %v7559, 0.0
    %v7626 = vmax.f32 %v7561, 0.0
    %v7627 = vadd.f32 %v6223, %v7563
    %v7628 = vadd.f32 %v6224, %v7564
    %v7629 = vadd.f32 %v6225, %v7565
    %v7630 = vadd.f32 %v6226, %v7566
    %v7631 = vadd.f32 %v6227, %v7567
    %v7632 = vadd.f32 %v6228, %v7568
    %v7633 = vadd.f32 %v6229, %v7569
    %v7634 = vadd.f32 %v6230, %v7570
    %v7635 = vadd.f32 %v6231, %v7571
    %v7636 = vadd.f32 %v6232, %v7572
    %v7637 = vadd.f32 %v6233, %v7573
    %v7638 = vadd.f32 %v6234, %v7574
    %v7639 = vadd.f32 %v6235, %v7575
    %v7640 = vadd.f32 %v6236, %v7576
    %v7641 = vadd.f32 %v6237, %v7577
    %v7642 = vadd.f32 %v6238, %v7578
    %v7643 = vadd.f32 %v6239, %v7579
    %v7644 = vadd.f32 %v6240, %v7580
    %v7645 = vadd.f32 %v6241, %v7581
    %v7646 = vadd.f32 %v6242, %v7582
    %v7647 = vadd.f32 %v6243, %v7583
    %v7648 = vadd.f32 %v6244, %v7584
    %v7649 = vadd.f32 %v6245, %v7585
    %v7650 = vadd.f32 %v6246, %v7586
    %v7651 = vadd.f32 %v6247, %v7587
    %v7652 = vadd.f32 %v6248, %v7588
    %v7653 = vadd.f32 %v6249, %v7589
    %v7654 = vadd.f32 %v6250, %v7590
    %v7655 = vadd.f32 %v6251, %v7591
    %v7656 = vadd.f32 %v6252, %v7592
    %v7657 = vadd.f32 %v6253, %v7593
    %v7658 = vadd.f32 %v6254, %v7594
    %v7659 = vadd.f32 %v6255, %v7595
    %v7660 = vadd.f32 %v6256, %v7596
    %v7661 = vadd.f32 %v6257, %v7597
    %v7662 = vadd.f32 %v6258, %v7598
    %v7663 = vadd.f32 %v6259, %v7599
    %v7664 = vadd.f32 %v6260, %v7600
    %v7665 = vadd.f32 %v6261, %v7601
    %v7666 = vadd.f32 %v6262, %v7602
    %v7667 = vadd.f32 %v6263, %v7603
    %v7668 = vadd.f32 %v6264, %v7604
    %v7669 = vadd.f32 %v6265, %v7605
    %v7670 = vadd.f32 %v6266, %v7606
    %v7671 = vadd.f32 %v6267, %v7607
    %v7672 = vadd.f32 %v6268, %v7608
    %v7673 = vadd.f32 %v6269, %v7609
    %v7674 = vadd.f32 %v6270, %v7610
    %v7675 = vadd.f32 %v6271, %v7611
    %v7676 = vadd.f32 %v6272, %v7612
    %v7677 = vadd.f32 %v6273, %v7613
    %v7678 = vadd.f32 %v6274, %v7614
    %v7679 = vadd.f32 %v6275, %v7615
    %v7680 = vadd.f32 %v6276, %v7616
    %v7681 = vadd.f32 %v6277, %v7617
    %v7682 = vadd.f32 %v6278, %v7618
    %v7683 = vadd.f32 %v6279, %v7619
    %v7684 = vadd.f32 %v6280, %v7620
    %v7685 = vadd.f32 %v6281, %v7621
    %v7686 = vadd.f32 %v6282, %v7622
    %v7687 = vadd.f32 %v6283, %v7623
    %v7688 = vadd.f32 %v6284, %v7624
    %v7689 = vadd.f32 %v6285, %v7625
    %v7690 = vadd.f32 %v6286, %v7626
    %v7691 = vpack.c.bf16 %v7631, %v7627
    %v7692 = vpack.c.bf16 %v7632, %v7628
    %v7693 = vpack.c.bf16 %v7633, %v7629
    %v7694 = vpack.c.bf16 %v7634, %v7630
    %v7695 = vpack.c.bf16 %v7639, %v7635
    %v7696 = vpack.c.bf16 %v7640, %v7636
    %v7697 = vpack.c.bf16 %v7641, %v7637
    %v7698 = vpack.c.bf16 %v7642, %v7638
    %v7699 = vpack.c.bf16 %v7647, %v7643
    %v7700 = vpack.c.bf16 %v7648, %v7644
    %v7701 = vpack.c.bf16 %v7649, %v7645
    %v7702 = vpack.c.bf16 %v7650, %v7646
    %v7703 = vpack.c.bf16 %v7655, %v7651
    %v7704 = vpack.c.bf16 %v7656, %v7652
    %v7705 = vpack.c.bf16 %v7657, %v7653
    %v7706 = vpack.c.bf16 %v7658, %v7654
    %v7707 = vpack.c.bf16 %v7663, %v7659
    %v7708 = vpack.c.bf16 %v7664, %v7660
    %v7709 = vpack.c.bf16 %v7665, %v7661
    %v7710 = vpack.c.bf16 %v7666, %v7662
    %v7711 = vpack.c.bf16 %v7671, %v7667
    %v7712 = vpack.c.bf16 %v7672, %v7668
    %v7713 = vpack.c.bf16 %v7673, %v7669
    %v7714 = vpack.c.bf16 %v7674, %v7670
    %v7715 = vpack.c.bf16 %v7679, %v7675
    %v7716 = vpack.c.bf16 %v7680, %v7676
    %v7717 = vpack.c.bf16 %v7681, %v7677
    %v7718 = vpack.c.bf16 %v7682, %v7678
    %v7719 = vpack.c.bf16 %v7687, %v7683
    %v7720 = vpack.c.bf16 %v7688, %v7684
    %v7721 = vpack.c.bf16 %v7689, %v7685
    %v7722 = vpack.c.bf16 %v7690, %v7686
    %s7723 = scalar_lea.vmem [#allocation6], 5120
    %v7724 = vld [vmem:[%s7723] sm:$0xff]
    %v7725 = vld [vmem:[%s7723 + $0x8] sm:$0xff]
    %v7726 = vld [vmem:[%s7723 + $0x10] sm:$0xff]
    %v7727 = vld [vmem:[%s7723 + $0x18] sm:$0xff]
    %v7728 = vld [vmem:[%s7723 + $0x20] sm:$0xff]
    %v7729 = vld [vmem:[%s7723 + $0x28] sm:$0xff]
    %v7730 = vld [vmem:[%s7723 + $0x30] sm:$0xff]
    %v7731 = vld [vmem:[%s7723 + $0x38] sm:$0xff]
    %v7732 = vld [vmem:[%s7723 + $0x40] sm:$0xff]
    %v7733 = vld [vmem:[%s7723 + $0x48] sm:$0xff]
    %v7734 = vld [vmem:[%s7723 + $0x50] sm:$0xff]
    %v7735 = vld [vmem:[%s7723 + $0x58] sm:$0xff]
    %v7736 = vld [vmem:[%s7723 + $0x60] sm:$0xff]
    %v7737 = vld [vmem:[%s7723 + $0x68] sm:$0xff]
    %v7738 = vld [vmem:[%s7723 + $0x70] sm:$0xff]
    %v7739 = vld [vmem:[%s7723 + $0x78] sm:$0xff]
    %v7740 = vld [vmem:[%s7723 + $0x80] sm:$0xff]
    %v7741 = vld [vmem:[%s7723 + $0x88] sm:$0xff]
    %v7742 = vld [vmem:[%s7723 + $0x90] sm:$0xff]
    %v7743 = vld [vmem:[%s7723 + $0x98] sm:$0xff]
    %v7744 = vld [vmem:[%s7723 + $0xa0] sm:$0xff]
    %v7745 = vld [vmem:[%s7723 + $0xa8] sm:$0xff]
    %v7746 = vld [vmem:[%s7723 + $0xb0] sm:$0xff]
    %v7747 = vld [vmem:[%s7723 + $0xb8] sm:$0xff]
    %v7748 = vld [vmem:[%s7723 + $0xc0] sm:$0xff]
    %v7749 = vld [vmem:[%s7723 + $0xc8] sm:$0xff]
    %v7750 = vld [vmem:[%s7723 + $0xd0] sm:$0xff]
    %v7751 = vld [vmem:[%s7723 + $0xd8] sm:$0xff]
    %v7752 = vld [vmem:[%s7723 + $0xe0] sm:$0xff]
    %v7753 = vld [vmem:[%s7723 + $0xe8] sm:$0xff]
    %v7754 = vld [vmem:[%s7723 + $0xf0] sm:$0xff]
    %v7755 = vld [vmem:[%s7723 + $0xf8] sm:$0xff]
    %v7756 = vld [vmem:[%s7723 + $0x100] sm:$0xff]
    %v7757 = vld [vmem:[%s7723 + $0x108] sm:$0xff]
    %v7758 = vld [vmem:[%s7723 + $0x110] sm:$0xff]
    %v7759 = vld [vmem:[%s7723 + $0x118] sm:$0xff]
    %v7760 = vld [vmem:[%s7723 + $0x120] sm:$0xff]
    %v7761 = vld [vmem:[%s7723 + $0x128] sm:$0xff]
    %v7762 = vld [vmem:[%s7723 + $0x130] sm:$0xff]
    %v7763 = vld [vmem:[%s7723 + $0x138] sm:$0xff]
    %v7764 = vld [vmem:[%s7723 + $0x140] sm:$0xff]
    %v7765 = vld [vmem:[%s7723 + $0x148] sm:$0xff]
    %v7766 = vld [vmem:[%s7723 + $0x150] sm:$0xff]
    %v7767 = vld [vmem:[%s7723 + $0x158] sm:$0xff]
    %v7768 = vld [vmem:[%s7723 + $0x160] sm:$0xff]
    %v7769 = vld [vmem:[%s7723 + $0x168] sm:$0xff]
    %v7770 = vld [vmem:[%s7723 + $0x170] sm:$0xff]
    %v7771 = vld [vmem:[%s7723 + $0x178] sm:$0xff]
    %v7772 = vld [vmem:[%s7723 + $0x180] sm:$0xff]
    %v7773 = vld [vmem:[%s7723 + $0x188] sm:$0xff]
    %v7774 = vld [vmem:[%s7723 + $0x190] sm:$0xff]
    %v7775 = vld [vmem:[%s7723 + $0x198] sm:$0xff]
    %v7776 = vld [vmem:[%s7723 + $0x1a0] sm:$0xff]
    %v7777 = vld [vmem:[%s7723 + $0x1a8] sm:$0xff]
    %v7778 = vld [vmem:[%s7723 + $0x1b0] sm:$0xff]
    %v7779 = vld [vmem:[%s7723 + $0x1b8] sm:$0xff]
    %v7780 = vld [vmem:[%s7723 + $0x1c0] sm:$0xff]
    %v7781 = vld [vmem:[%s7723 + $0x1c8] sm:$0xff]
    %v7782 = vld [vmem:[%s7723 + $0x1d0] sm:$0xff]
    %v7783 = vld [vmem:[%s7723 + $0x1d8] sm:$0xff]
    %v7784 = vld [vmem:[%s7723 + $0x1e0] sm:$0xff]
    %v7785 = vld [vmem:[%s7723 + $0x1e8] sm:$0xff]
    %v7786 = vld [vmem:[%s7723 + $0x1f0] sm:$0xff]
    %v7787 = vld [vmem:[%s7723 + $0x1f8] sm:$0xff]
    %v7788 = vld [vmem:[%s7723 + $0x200] sm:$0xff]
    %v7789 = vld [vmem:[%s7723 + $0x208] sm:$0xff]
    %v7790 = vld [vmem:[%s7723 + $0x210] sm:$0xff]
    %v7791 = vld [vmem:[%s7723 + $0x218] sm:$0xff]
    %v7792 = vld [vmem:[%s7723 + $0x220] sm:$0xff]
    %v7793 = vld [vmem:[%s7723 + $0x228] sm:$0xff]
    %v7794 = vld [vmem:[%s7723 + $0x230] sm:$0xff]
    %v7795 = vld [vmem:[%s7723 + $0x238] sm:$0xff]
    %v7796 = vld [vmem:[%s7723 + $0x240] sm:$0xff]
    %v7797 = vld [vmem:[%s7723 + $0x248] sm:$0xff]
    %v7798 = vld [vmem:[%s7723 + $0x250] sm:$0xff]
    %v7799 = vld [vmem:[%s7723 + $0x258] sm:$0xff]
    %v7800 = vld [vmem:[%s7723 + $0x260] sm:$0xff]
    %v7801 = vld [vmem:[%s7723 + $0x268] sm:$0xff]
    %v7802 = vld [vmem:[%s7723 + $0x270] sm:$0xff]
    %v7803 = vld [vmem:[%s7723 + $0x278] sm:$0xff]
    %v7804 = vld [vmem:[%s7723 + $0x280] sm:$0xff]
    %v7805 = vld [vmem:[%s7723 + $0x288] sm:$0xff]
    %v7806 = vld [vmem:[%s7723 + $0x290] sm:$0xff]
    %v7807 = vld [vmem:[%s7723 + $0x298] sm:$0xff]
    %v7808 = vld [vmem:[%s7723 + $0x2a0] sm:$0xff]
    %v7809 = vld [vmem:[%s7723 + $0x2a8] sm:$0xff]
    %v7810 = vld [vmem:[%s7723 + $0x2b0] sm:$0xff]
    %v7811 = vld [vmem:[%s7723 + $0x2b8] sm:$0xff]
    %v7812 = vld [vmem:[%s7723 + $0x2c0] sm:$0xff]
    %v7813 = vld [vmem:[%s7723 + $0x2c8] sm:$0xff]
    %v7814 = vld [vmem:[%s7723 + $0x2d0] sm:$0xff]
    %v7815 = vld [vmem:[%s7723 + $0x2d8] sm:$0xff]
    %v7816 = vld [vmem:[%s7723 + $0x2e0] sm:$0xff]
    %v7817 = vld [vmem:[%s7723 + $0x2e8] sm:$0xff]
    %v7818 = vld [vmem:[%s7723 + $0x2f0] sm:$0xff]
    %v7819 = vld [vmem:[%s7723 + $0x2f8] sm:$0xff]
    %v7820 = vld [vmem:[%s7723 + $0x300] sm:$0xff]
    %v7821 = vld [vmem:[%s7723 + $0x308] sm:$0xff]
    %v7822 = vld [vmem:[%s7723 + $0x310] sm:$0xff]
    %v7823 = vld [vmem:[%s7723 + $0x318] sm:$0xff]
    %v7824 = vld [vmem:[%s7723 + $0x320] sm:$0xff]
    %v7825 = vld [vmem:[%s7723 + $0x328] sm:$0xff]
    %v7826 = vld [vmem:[%s7723 + $0x330] sm:$0xff]
    %v7827 = vld [vmem:[%s7723 + $0x338] sm:$0xff]
    %v7828 = vld [vmem:[%s7723 + $0x340] sm:$0xff]
    %v7829 = vld [vmem:[%s7723 + $0x348] sm:$0xff]
    %v7830 = vld [vmem:[%s7723 + $0x350] sm:$0xff]
    %v7831 = vld [vmem:[%s7723 + $0x358] sm:$0xff]
    %v7832 = vld [vmem:[%s7723 + $0x360] sm:$0xff]
    %v7833 = vld [vmem:[%s7723 + $0x368] sm:$0xff]
    %v7834 = vld [vmem:[%s7723 + $0x370] sm:$0xff]
    %v7835 = vld [vmem:[%s7723 + $0x378] sm:$0xff]
    %v7836 = vld [vmem:[%s7723 + $0x380] sm:$0xff]
    %v7837 = vld [vmem:[%s7723 + $0x388] sm:$0xff]
    %v7838 = vld [vmem:[%s7723 + $0x390] sm:$0xff]
    %v7839 = vld [vmem:[%s7723 + $0x398] sm:$0xff]
    %v7840 = vld [vmem:[%s7723 + $0x3a0] sm:$0xff]
    %v7841 = vld [vmem:[%s7723 + $0x3a8] sm:$0xff]
    %v7842 = vld [vmem:[%s7723 + $0x3b0] sm:$0xff]
    %v7843 = vld [vmem:[%s7723 + $0x3b8] sm:$0xff]
    %v7844 = vld [vmem:[%s7723 + $0x3c0] sm:$0xff]
    %v7845 = vld [vmem:[%s7723 + $0x3c8] sm:$0xff]
    %v7846 = vld [vmem:[%s7723 + $0x3d0] sm:$0xff]
    %v7847 = vld [vmem:[%s7723 + $0x3d8] sm:$0xff]
    %v7848 = vld [vmem:[%s7723 + $0x3e0] sm:$0xff]
    %v7849 = vld [vmem:[%s7723 + $0x3e8] sm:$0xff]
    %v7850 = vld [vmem:[%s7723 + $0x3f0] sm:$0xff]
    %v7851 = vld [vmem:[%s7723 + $0x3f8] sm:$0xff]
    %s7852 = scalar_lea.vmem [#allocation7], 20
    %v7853 = vld [vmem:[%s7852] sm:$0xf]
    %v7855 = vlaneseq
    %v7856 = vshrl.u32 %v7855, 7
    %v7857 = vsub.s32 0, %v7856
    %v7858 = vrot.slane %v7853, %v7857
    %v7859 = vlaneseq
    %v7860 = vshrl.u32 %v7859, 7
    %v7861 = vsub.s32 1, %v7860
    %v7862 = vrot.slane %v7853, %v7861
    %v7863 = vlaneseq
    %v7864 = vshrl.u32 %v7863, 7
    %v7865 = vsub.s32 2, %v7864
    %v7866 = vrot.slane %v7853, %v7865
    %v7867 = vlaneseq
    %v7868 = vshrl.u32 %v7867, 7
    %v7869 = vsub.s32 3, %v7868
    %v7870 = vrot.slane %v7853, %v7869
    %v8003 = vunpack.c.l.b16 %v7724
    %v8004 = vunpack.c.h.b16 %v7724
    %v8005 = vunpack.c.l.b16 %v7725
    %v8006 = vunpack.c.h.b16 %v7725
    %v8007 = vunpack.c.l.b16 %v7726
    %v8008 = vunpack.c.h.b16 %v7726
    %v8009 = vunpack.c.l.b16 %v7727
    %v8010 = vunpack.c.h.b16 %v7727
    %v8011 = vunpack.c.l.b16 %v7728
    %v8012 = vunpack.c.h.b16 %v7728
    %v8013 = vunpack.c.l.b16 %v7729
    %v8014 = vunpack.c.h.b16 %v7729
    %v8015 = vunpack.c.l.b16 %v7730
    %v8016 = vunpack.c.h.b16 %v7730
    %v8017 = vunpack.c.l.b16 %v7731
    %v8018 = vunpack.c.h.b16 %v7731
    %v8019 = vunpack.c.l.b16 %v7732
    %v8020 = vunpack.c.h.b16 %v7732
    %v8021 = vunpack.c.l.b16 %v7733
    %v8022 = vunpack.c.h.b16 %v7733
    %v8023 = vunpack.c.l.b16 %v7734
    %v8024 = vunpack.c.h.b16 %v7734
    %v8025 = vunpack.c.l.b16 %v7735
    %v8026 = vunpack.c.h.b16 %v7735
    %v8027 = vunpack.c.l.b16 %v7736
    %v8028 = vunpack.c.h.b16 %v7736
    %v8029 = vunpack.c.l.b16 %v7737
    %v8030 = vunpack.c.h.b16 %v7737
    %v8031 = vunpack.c.l.b16 %v7738
    %v8032 = vunpack.c.h.b16 %v7738
    %v8033 = vunpack.c.l.b16 %v7739
    %v8034 = vunpack.c.h.b16 %v7739
    %v8035 = vunpack.c.l.b16 %v7740
    %v8036 = vunpack.c.h.b16 %v7740
    %v8037 = vunpack.c.l.b16 %v7741
    %v8038 = vunpack.c.h.b16 %v7741
    %v8039 = vunpack.c.l.b16 %v7742
    %v8040 = vunpack.c.h.b16 %v7742
    %v8041 = vunpack.c.l.b16 %v7743
    %v8042 = vunpack.c.h.b16 %v7743
    %v8043 = vunpack.c.l.b16 %v7744
    %v8044 = vunpack.c.h.b16 %v7744
    %v8045 = vunpack.c.l.b16 %v7745
    %v8046 = vunpack.c.h.b16 %v7745
    %v8047 = vunpack.c.l.b16 %v7746
    %v8048 = vunpack.c.h.b16 %v7746
    %v8049 = vunpack.c.l.b16 %v7747
    %v8050 = vunpack.c.h.b16 %v7747
    %v8051 = vunpack.c.l.b16 %v7748
    %v8052 = vunpack.c.h.b16 %v7748
    %v8053 = vunpack.c.l.b16 %v7749
    %v8054 = vunpack.c.h.b16 %v7749
    %v8055 = vunpack.c.l.b16 %v7750
    %v8056 = vunpack.c.h.b16 %v7750
    %v8057 = vunpack.c.l.b16 %v7751
    %v8058 = vunpack.c.h.b16 %v7751
    %v8059 = vunpack.c.l.b16 %v7752
    %v8060 = vunpack.c.h.b16 %v7752
    %v8061 = vunpack.c.l.b16 %v7753
    %v8062 = vunpack.c.h.b16 %v7753
    %v8063 = vunpack.c.l.b16 %v7754
    %v8064 = vunpack.c.h.b16 %v7754
    %v8065 = vunpack.c.l.b16 %v7755
    %v8066 = vunpack.c.h.b16 %v7755
    %v8067 = vunpack.c.l.b16 %v7756
    %v8068 = vunpack.c.h.b16 %v7756
    %v8069 = vunpack.c.l.b16 %v7757
    %v8070 = vunpack.c.h.b16 %v7757
    %v8071 = vunpack.c.l.b16 %v7758
    %v8072 = vunpack.c.h.b16 %v7758
    %v8073 = vunpack.c.l.b16 %v7759
    %v8074 = vunpack.c.h.b16 %v7759
    %v8075 = vunpack.c.l.b16 %v7760
    %v8076 = vunpack.c.h.b16 %v7760
    %v8077 = vunpack.c.l.b16 %v7761
    %v8078 = vunpack.c.h.b16 %v7761
    %v8079 = vunpack.c.l.b16 %v7762
    %v8080 = vunpack.c.h.b16 %v7762
    %v8081 = vunpack.c.l.b16 %v7763
    %v8082 = vunpack.c.h.b16 %v7763
    %v8083 = vunpack.c.l.b16 %v7764
    %v8084 = vunpack.c.h.b16 %v7764
    %v8085 = vunpack.c.l.b16 %v7765
    %v8086 = vunpack.c.h.b16 %v7765
    %v8087 = vunpack.c.l.b16 %v7766
    %v8088 = vunpack.c.h.b16 %v7766
    %v8089 = vunpack.c.l.b16 %v7767
    %v8090 = vunpack.c.h.b16 %v7767
    %v8091 = vunpack.c.l.b16 %v7768
    %v8092 = vunpack.c.h.b16 %v7768
    %v8093 = vunpack.c.l.b16 %v7769
    %v8094 = vunpack.c.h.b16 %v7769
    %v8095 = vunpack.c.l.b16 %v7770
    %v8096 = vunpack.c.h.b16 %v7770
    %v8097 = vunpack.c.l.b16 %v7771
    %v8098 = vunpack.c.h.b16 %v7771
    %v8099 = vunpack.c.l.b16 %v7772
    %v8100 = vunpack.c.h.b16 %v7772
    %v8101 = vunpack.c.l.b16 %v7773
    %v8102 = vunpack.c.h.b16 %v7773
    %v8103 = vunpack.c.l.b16 %v7774
    %v8104 = vunpack.c.h.b16 %v7774
    %v8105 = vunpack.c.l.b16 %v7775
    %v8106 = vunpack.c.h.b16 %v7775
    %v8107 = vunpack.c.l.b16 %v7776
    %v8108 = vunpack.c.h.b16 %v7776
    %v8109 = vunpack.c.l.b16 %v7777
    %v8110 = vunpack.c.h.b16 %v7777
    %v8111 = vunpack.c.l.b16 %v7778
    %v8112 = vunpack.c.h.b16 %v7778
    %v8113 = vunpack.c.l.b16 %v7779
    %v8114 = vunpack.c.h.b16 %v7779
    %v8115 = vunpack.c.l.b16 %v7780
    %v8116 = vunpack.c.h.b16 %v7780
    %v8117 = vunpack.c.l.b16 %v7781
    %v8118 = vunpack.c.h.b16 %v7781
    %v8119 = vunpack.c.l.b16 %v7782
    %v8120 = vunpack.c.h.b16 %v7782
    %v8121 = vunpack.c.l.b16 %v7783
    %v8122 = vunpack.c.h.b16 %v7783
    %v8123 = vunpack.c.l.b16 %v7784
    %v8124 = vunpack.c.h.b16 %v7784
    %v8125 = vunpack.c.l.b16 %v7785
    %v8126 = vunpack.c.h.b16 %v7785
    %v8127 = vunpack.c.l.b16 %v7786
    %v8128 = vunpack.c.h.b16 %v7786
    %v8129 = vunpack.c.l.b16 %v7787
    %v8130 = vunpack.c.h.b16 %v7787
    %v8131 = vunpack.c.l.b16 %v7788
    %v8132 = vunpack.c.h.b16 %v7788
    %v8133 = vunpack.c.l.b16 %v7789
    %v8134 = vunpack.c.h.b16 %v7789
    %v8135 = vunpack.c.l.b16 %v7790
    %v8136 = vunpack.c.h.b16 %v7790
    %v8137 = vunpack.c.l.b16 %v7791
    %v8138 = vunpack.c.h.b16 %v7791
    %v8139 = vunpack.c.l.b16 %v7792
    %v8140 = vunpack.c.h.b16 %v7792
    %v8141 = vunpack.c.l.b16 %v7793
    %v8142 = vunpack.c.h.b16 %v7793
    %v8143 = vunpack.c.l.b16 %v7794
    %v8144 = vunpack.c.h.b16 %v7794
    %v8145 = vunpack.c.l.b16 %v7795
    %v8146 = vunpack.c.h.b16 %v7795
    %v8147 = vunpack.c.l.b16 %v7796
    %v8148 = vunpack.c.h.b16 %v7796
    %v8149 = vunpack.c.l.b16 %v7797
    %v8150 = vunpack.c.h.b16 %v7797
    %v8151 = vunpack.c.l.b16 %v7798
    %v8152 = vunpack.c.h.b16 %v7798
    %v8153 = vunpack.c.l.b16 %v7799
    %v8154 = vunpack.c.h.b16 %v7799
    %v8155 = vunpack.c.l.b16 %v7800
    %v8156 = vunpack.c.h.b16 %v7800
    %v8157 = vunpack.c.l.b16 %v7801
    %v8158 = vunpack.c.h.b16 %v7801
    %v8159 = vunpack.c.l.b16 %v7802
    %v8160 = vunpack.c.h.b16 %v7802
    %v8161 = vunpack.c.l.b16 %v7803
    %v8162 = vunpack.c.h.b16 %v7803
    %v8163 = vunpack.c.l.b16 %v7804
    %v8164 = vunpack.c.h.b16 %v7804
    %v8165 = vunpack.c.l.b16 %v7805
    %v8166 = vunpack.c.h.b16 %v7805
    %v8167 = vunpack.c.l.b16 %v7806
    %v8168 = vunpack.c.h.b16 %v7806
    %v8169 = vunpack.c.l.b16 %v7807
    %v8170 = vunpack.c.h.b16 %v7807
    %v8171 = vunpack.c.l.b16 %v7808
    %v8172 = vunpack.c.h.b16 %v7808
    %v8173 = vunpack.c.l.b16 %v7809
    %v8174 = vunpack.c.h.b16 %v7809
    %v8175 = vunpack.c.l.b16 %v7810
    %v8176 = vunpack.c.h.b16 %v7810
    %v8177 = vunpack.c.l.b16 %v7811
    %v8178 = vunpack.c.h.b16 %v7811
    %v8179 = vunpack.c.l.b16 %v7812
    %v8180 = vunpack.c.h.b16 %v7812
    %v8181 = vunpack.c.l.b16 %v7813
    %v8182 = vunpack.c.h.b16 %v7813
    %v8183 = vunpack.c.l.b16 %v7814
    %v8184 = vunpack.c.h.b16 %v7814
    %v8185 = vunpack.c.l.b16 %v7815
    %v8186 = vunpack.c.h.b16 %v7815
    %v8187 = vunpack.c.l.b16 %v7816
    %v8188 = vunpack.c.h.b16 %v7816
    %v8189 = vunpack.c.l.b16 %v7817
    %v8190 = vunpack.c.h.b16 %v7817
    %v8191 = vunpack.c.l.b16 %v7818
    %v8192 = vunpack.c.h.b16 %v7818
    %v8193 = vunpack.c.l.b16 %v7819
    %v8194 = vunpack.c.h.b16 %v7819
    %v8195 = vunpack.c.l.b16 %v7820
    %v8196 = vunpack.c.h.b16 %v7820
    %v8197 = vunpack.c.l.b16 %v7821
    %v8198 = vunpack.c.h.b16 %v7821
    %v8199 = vunpack.c.l.b16 %v7822
    %v8200 = vunpack.c.h.b16 %v7822
    %v8201 = vunpack.c.l.b16 %v7823
    %v8202 = vunpack.c.h.b16 %v7823
    %v8203 = vunpack.c.l.b16 %v7824
    %v8204 = vunpack.c.h.b16 %v7824
    %v8205 = vunpack.c.l.b16 %v7825
    %v8206 = vunpack.c.h.b16 %v7825
    %v8207 = vunpack.c.l.b16 %v7826
    %v8208 = vunpack.c.h.b16 %v7826
    %v8209 = vunpack.c.l.b16 %v7827
    %v8210 = vunpack.c.h.b16 %v7827
    %v8211 = vunpack.c.l.b16 %v7828
    %v8212 = vunpack.c.h.b16 %v7828
    %v8213 = vunpack.c.l.b16 %v7829
    %v8214 = vunpack.c.h.b16 %v7829
    %v8215 = vunpack.c.l.b16 %v7830
    %v8216 = vunpack.c.h.b16 %v7830
    %v8217 = vunpack.c.l.b16 %v7831
    %v8218 = vunpack.c.h.b16 %v7831
    %v8219 = vunpack.c.l.b16 %v7832
    %v8220 = vunpack.c.h.b16 %v7832
    %v8221 = vunpack.c.l.b16 %v7833
    %v8222 = vunpack.c.h.b16 %v7833
    %v8223 = vunpack.c.l.b16 %v7834
    %v8224 = vunpack.c.h.b16 %v7834
    %v8225 = vunpack.c.l.b16 %v7835
    %v8226 = vunpack.c.h.b16 %v7835
    %v8227 = vunpack.c.l.b16 %v7836
    %v8228 = vunpack.c.h.b16 %v7836
    %v8229 = vunpack.c.l.b16 %v7837
    %v8230 = vunpack.c.h.b16 %v7837
    %v8231 = vunpack.c.l.b16 %v7838
    %v8232 = vunpack.c.h.b16 %v7838
    %v8233 = vunpack.c.l.b16 %v7839
    %v8234 = vunpack.c.h.b16 %v7839
    %v8235 = vunpack.c.l.b16 %v7840
    %v8236 = vunpack.c.h.b16 %v7840
    %v8237 = vunpack.c.l.b16 %v7841
    %v8238 = vunpack.c.h.b16 %v7841
    %v8239 = vunpack.c.l.b16 %v7842
    %v8240 = vunpack.c.h.b16 %v7842
    %v8241 = vunpack.c.l.b16 %v7843
    %v8242 = vunpack.c.h.b16 %v7843
    %v8243 = vunpack.c.l.b16 %v7844
    %v8244 = vunpack.c.h.b16 %v7844
    %v8245 = vunpack.c.l.b16 %v7845
    %v8246 = vunpack.c.h.b16 %v7845
    %v8247 = vunpack.c.l.b16 %v7846
    %v8248 = vunpack.c.h.b16 %v7846
    %v8249 = vunpack.c.l.b16 %v7847
    %v8250 = vunpack.c.h.b16 %v7847
    %v8251 = vunpack.c.l.b16 %v7848
    %v8252 = vunpack.c.h.b16 %v7848
    %v8253 = vunpack.c.l.b16 %v7849
    %v8254 = vunpack.c.h.b16 %v7849
    %v8255 = vunpack.c.l.b16 %v7850
    %v8256 = vunpack.c.h.b16 %v7850
    %v8257 = vunpack.c.l.b16 %v7851
    %v8258 = vunpack.c.h.b16 %v7851
    %v8259 = vpack.c.b16 %v8007, %v8003
    %v8260 = vpack.c.b16 %v8008, %v8004
    %v8261 = vpack.c.b16 %v8009, %v8005
    %v8262 = vpack.c.b16 %v8010, %v8006
    %v8263 = vpack.c.b16 %v8015, %v8011
    %v8264 = vpack.c.b16 %v8016, %v8012
    %v8265 = vpack.c.b16 %v8017, %v8013
    %v8266 = vpack.c.b16 %v8018, %v8014
    %v8267 = vpack.c.b16 %v8023, %v8019
    %v8268 = vpack.c.b16 %v8024, %v8020
    %v8269 = vpack.c.b16 %v8025, %v8021
    %v8270 = vpack.c.b16 %v8026, %v8022
    %v8271 = vpack.c.b16 %v8031, %v8027
    %v8272 = vpack.c.b16 %v8032, %v8028
    %v8273 = vpack.c.b16 %v8033, %v8029
    %v8274 = vpack.c.b16 %v8034, %v8030
    %v8275 = vpack.c.b16 %v8039, %v8035
    %v8276 = vpack.c.b16 %v8040, %v8036
    %v8277 = vpack.c.b16 %v8041, %v8037
    %v8278 = vpack.c.b16 %v8042, %v8038
    %v8279 = vpack.c.b16 %v8047, %v8043
    %v8280 = vpack.c.b16 %v8048, %v8044
    %v8281 = vpack.c.b16 %v8049, %v8045
    %v8282 = vpack.c.b16 %v8050, %v8046
    %v8283 = vpack.c.b16 %v8055, %v8051
    %v8284 = vpack.c.b16 %v8056, %v8052
    %v8285 = vpack.c.b16 %v8057, %v8053
    %v8286 = vpack.c.b16 %v8058, %v8054
    %v8287 = vpack.c.b16 %v8063, %v8059
    %v8288 = vpack.c.b16 %v8064, %v8060
    %v8289 = vpack.c.b16 %v8065, %v8061
    %v8290 = vpack.c.b16 %v8066, %v8062
    %v8291 = vpack.c.b16 %v8071, %v8067
    %v8292 = vpack.c.b16 %v8072, %v8068
    %v8293 = vpack.c.b16 %v8073, %v8069
    %v8294 = vpack.c.b16 %v8074, %v8070
    %v8295 = vpack.c.b16 %v8079, %v8075
    %v8296 = vpack.c.b16 %v8080, %v8076
    %v8297 = vpack.c.b16 %v8081, %v8077
    %v8298 = vpack.c.b16 %v8082, %v8078
    %v8299 = vpack.c.b16 %v8087, %v8083
    %v8300 = vpack.c.b16 %v8088, %v8084
    %v8301 = vpack.c.b16 %v8089, %v8085
    %v8302 = vpack.c.b16 %v8090, %v8086
    %v8303 = vpack.c.b16 %v8095, %v8091
    %v8304 = vpack.c.b16 %v8096, %v8092
    %v8305 = vpack.c.b16 %v8097, %v8093
    %v8306 = vpack.c.b16 %v8098, %v8094
    %v8307 = vpack.c.b16 %v8103, %v8099
    %v8308 = vpack.c.b16 %v8104, %v8100
    %v8309 = vpack.c.b16 %v8105, %v8101
    %v8310 = vpack.c.b16 %v8106, %v8102
    %v8311 = vpack.c.b16 %v8111, %v8107
    %v8312 = vpack.c.b16 %v8112, %v8108
    %v8313 = vpack.c.b16 %v8113, %v8109
    %v8314 = vpack.c.b16 %v8114, %v8110
    %v8315 = vpack.c.b16 %v8119, %v8115
    %v8316 = vpack.c.b16 %v8120, %v8116
    %v8317 = vpack.c.b16 %v8121, %v8117
    %v8318 = vpack.c.b16 %v8122, %v8118
    %v8319 = vpack.c.b16 %v8127, %v8123
    %v8320 = vpack.c.b16 %v8128, %v8124
    %v8321 = vpack.c.b16 %v8129, %v8125
    %v8322 = vpack.c.b16 %v8130, %v8126
    %v8323 = vpack.c.b16 %v8135, %v8131
    %v8324 = vpack.c.b16 %v8136, %v8132
    %v8325 = vpack.c.b16 %v8137, %v8133
    %v8326 = vpack.c.b16 %v8138, %v8134
    %v8327 = vpack.c.b16 %v8143, %v8139
    %v8328 = vpack.c.b16 %v8144, %v8140
    %v8329 = vpack.c.b16 %v8145, %v8141
    %v8330 = vpack.c.b16 %v8146, %v8142
    %v8331 = vpack.c.b16 %v8151, %v8147
    %v8332 = vpack.c.b16 %v8152, %v8148
    %v8333 = vpack.c.b16 %v8153, %v8149
    %v8334 = vpack.c.b16 %v8154, %v8150
    %v8335 = vpack.c.b16 %v8159, %v8155
    %v8336 = vpack.c.b16 %v8160, %v8156
    %v8337 = vpack.c.b16 %v8161, %v8157
    %v8338 = vpack.c.b16 %v8162, %v8158
    %v8339 = vpack.c.b16 %v8167, %v8163
    %v8340 = vpack.c.b16 %v8168, %v8164
    %v8341 = vpack.c.b16 %v8169, %v8165
    %v8342 = vpack.c.b16 %v8170, %v8166
    %v8343 = vpack.c.b16 %v8175, %v8171
    %v8344 = vpack.c.b16 %v8176, %v8172
    %v8345 = vpack.c.b16 %v8177, %v8173
    %v8346 = vpack.c.b16 %v8178, %v8174
    %v8347 = vpack.c.b16 %v8183, %v8179
    %v8348 = vpack.c.b16 %v8184, %v8180
    %v8349 = vpack.c.b16 %v8185, %v8181
    %v8350 = vpack.c.b16 %v8186, %v8182
    %v8351 = vpack.c.b16 %v8191, %v8187
    %v8352 = vpack.c.b16 %v8192, %v8188
    %v8353 = vpack.c.b16 %v8193, %v8189
    %v8354 = vpack.c.b16 %v8194, %v8190
    %v8355 = vpack.c.b16 %v8199, %v8195
    %v8356 = vpack.c.b16 %v8200, %v8196
    %v8357 = vpack.c.b16 %v8201, %v8197
    %v8358 = vpack.c.b16 %v8202, %v8198
    %v8359 = vpack.c.b16 %v8207, %v8203
    %v8360 = vpack.c.b16 %v8208, %v8204
    %v8361 = vpack.c.b16 %v8209, %v8205
    %v8362 = vpack.c.b16 %v8210, %v8206
    %v8363 = vpack.c.b16 %v8215, %v8211
    %v8364 = vpack.c.b16 %v8216, %v8212
    %v8365 = vpack.c.b16 %v8217, %v8213
    %v8366 = vpack.c.b16 %v8218, %v8214
    %v8367 = vpack.c.b16 %v8223, %v8219
    %v8368 = vpack.c.b16 %v8224, %v8220
    %v8369 = vpack.c.b16 %v8225, %v8221
    %v8370 = vpack.c.b16 %v8226, %v8222
    %v8371 = vpack.c.b16 %v8231, %v8227
    %v8372 = vpack.c.b16 %v8232, %v8228
    %v8373 = vpack.c.b16 %v8233, %v8229
    %v8374 = vpack.c.b16 %v8234, %v8230
    %v8375 = vpack.c.b16 %v8239, %v8235
    %v8376 = vpack.c.b16 %v8240, %v8236
    %v8377 = vpack.c.b16 %v8241, %v8237
    %v8378 = vpack.c.b16 %v8242, %v8238
    %v8379 = vpack.c.b16 %v8247, %v8243
    %v8380 = vpack.c.b16 %v8248, %v8244
    %v8381 = vpack.c.b16 %v8249, %v8245
    %v8382 = vpack.c.b16 %v8250, %v8246
    %v8383 = vpack.c.b16 %v8255, %v8251
    %v8384 = vpack.c.b16 %v8256, %v8252
    %v8385 = vpack.c.b16 %v8257, %v8253
    %v8386 = vpack.c.b16 %v8258, %v8254
    %8515 = vmatprep.subr.bf16.mxu0 %v8260
    %8516 = vmatpush1.bf16.msra.mxu0 %v8259
    %8517 = vmatprep.subr.bf16.mxu0 %v8264
    %8518 = vmatpush1.bf16.msra.mxu0 %v8263
    %8519 = vmatprep.subr.bf16.mxu0 %v8268
    %8520 = vmatpush1.bf16.msra.mxu0 %v8267
    %8521 = vmatprep.subr.bf16.mxu0 %v8272
    %8522 = vmatpush1.bf16.msra.mxu0 %v8271
    %8523 = vmatprep.subr.bf16.mxu0 %v8276
    %8524 = vmatpush1.bf16.msra.mxu0 %v8275
    %8525 = vmatprep.subr.bf16.mxu0 %v8280
    %8526 = vmatpush1.bf16.msra.mxu0 %v8279
    %8527 = vmatprep.subr.bf16.mxu0 %v8284
    %8528 = vmatpush1.bf16.msra.mxu0 %v8283
    %8529 = vmatprep.subr.bf16.mxu0 %v8288
    %8530 = vmatpush1.bf16.msra.mxu0 %v8287
    %8531 = vmatprep.subr.bf16.mxu0 %v8292
    %8532 = vmatpush1.bf16.msra.mxu0 %v8291
    %8533 = vmatprep.subr.bf16.mxu0 %v8296
    %8534 = vmatpush1.bf16.msra.mxu0 %v8295
    %8535 = vmatprep.subr.bf16.mxu0 %v8300
    %8536 = vmatpush1.bf16.msra.mxu0 %v8299
    %8537 = vmatprep.subr.bf16.mxu0 %v8304
    %8538 = vmatpush1.bf16.msra.mxu0 %v8303
    %8539 = vmatprep.subr.bf16.mxu0 %v8308
    %8540 = vmatpush1.bf16.msra.mxu0 %v8307
    %8541 = vmatprep.subr.bf16.mxu0 %v8312
    %8542 = vmatpush1.bf16.msra.mxu0 %v8311
    %8543 = vmatprep.subr.bf16.mxu0 %v8316
    %8544 = vmatpush1.bf16.msra.mxu0 %v8315
    %8545 = vmatprep.subr.bf16.mxu0 %v8320
    %8546 = vmatpush1.bf16.msra.mxu0 %v8319
    %8547 = vmatprep.mubr.bf16.mxu0 %v7692
    %8548 = vmatmul.mubr.bf16.gmra.mrb[0].mxu0 %v7691
    %v8549 = vpop.f32.mrb[0].mxu0
    %v8550 = vadd.f32 %v7858, %v8549
    %v8551 = vpop.f32.mrb[0].mxu0
    %v8552 = vadd.f32 %v7862, %v8551
    %v8553 = vpop.f32.mrb[0].mxu0
    %v8554 = vadd.f32 %v7858, %v8553
    %v8555 = vpop.f32.mrb[0].mxu0
    %v8556 = vadd.f32 %v7862, %v8555
    %8557 = vmatprep.mubr.bf16.mxu0 %v7696
    %8558 = vmatmul.mubr.bf16.gmra.mrb[0].mxu0 %v7695
    %v8559 = vpop.f32.mrb[0].mxu0
    %v8560 = vadd.f32 %v7858, %v8559
    %v8561 = vpop.f32.mrb[0].mxu0
    %v8562 = vadd.f32 %v7862, %v8561
    %v8563 = vpop.f32.mrb[0].mxu0
    %v8564 = vadd.f32 %v7858, %v8563
    %v8565 = vpop.f32.mrb[0].mxu0
    %v8566 = vadd.f32 %v7862, %v8565
    %8567 = vmatprep.mubr.bf16.mxu0 %v7700
    %8568 = vmatmul.mubr.bf16.gmra.mrb[0].mxu0 %v7699
    %v8569 = vpop.f32.mrb[0].mxu0
    %v8570 = vadd.f32 %v7858, %v8569
    %v8571 = vpop.f32.mrb[0].mxu0
    %v8572 = vadd.f32 %v7862, %v8571
    %v8573 = vpop.f32.mrb[0].mxu0
    %v8574 = vadd.f32 %v7858, %v8573
    %v8575 = vpop.f32.mrb[0].mxu0
    %v8576 = vadd.f32 %v7862, %v8575
    %8577 = vmatprep.mubr.bf16.mxu0 %v7704
    %8578 = vmatmul.mubr.bf16.gmra.mrb[0].mxu0 %v7703
    %v8579 = vpop.f32.mrb[0].mxu0
    %v8580 = vadd.f32 %v7858, %v8579
    %v8581 = vpop.f32.mrb[0].mxu0
    %v8582 = vadd.f32 %v7862, %v8581
    %v8583 = vpop.f32.mrb[0].mxu0
    %v8584 = vadd.f32 %v7858, %v8583
    %v8585 = vpop.f32.mrb[0].mxu0
    %v8586 = vadd.f32 %v7862, %v8585
    %8587 = vmatprep.mubr.bf16.mxu0 %v7708
    %8588 = vmatmul.mubr.bf16.gmra.mrb[0].mxu0 %v7707
    %v8589 = vpop.f32.mrb[0].mxu0
    %v8590 = vadd.f32 %v7858, %v8589
    %v8591 = vpop.f32.mrb[0].mxu0
    %v8592 = vadd.f32 %v7862, %v8591
    %v8593 = vpop.f32.mrb[0].mxu0
    %v8594 = vadd.f32 %v7858, %v8593
    %v8595 = vpop.f32.mrb[0].mxu0
    %v8596 = vadd.f32 %v7862, %v8595
    %8597 = vmatprep.mubr.bf16.mxu0 %v7712
    %8598 = vmatmul.mubr.bf16.gmra.mrb[0].mxu0 %v7711
    %v8599 = vpop.f32.mrb[0].mxu0
    %v8600 = vadd.f32 %v7858, %v8599
    %v8601 = vpop.f32.mrb[0].mxu0
    %v8602 = vadd.f32 %v7862, %v8601
    %v8603 = vpop.f32.mrb[0].mxu0
    %v8604 = vadd.f32 %v7858, %v8603
    %v8605 = vpop.f32.mrb[0].mxu0
    %v8606 = vadd.f32 %v7862, %v8605
    %8607 = vmatprep.mubr.bf16.mxu0 %v7716
    %8608 = vmatmul.mubr.bf16.gmra.mrb[0].mxu0 %v7715
    %v8609 = vpop.f32.mrb[0].mxu0
    %v8610 = vadd.f32 %v7858, %v8609
    %v8611 = vpop.f32.mrb[0].mxu0
    %v8612 = vadd.f32 %v7862, %v8611
    %v8613 = vpop.f32.mrb[0].mxu0
    %v8614 = vadd.f32 %v7858, %v8613
    %v8615 = vpop.f32.mrb[0].mxu0
    %v8616 = vadd.f32 %v7862, %v8615
    %8617 = vmatprep.mubr.bf16.mxu0 %v7720
    %8618 = vmatmul.mubr.bf16.gmra.mrb[0].mxu0 %v7719
    %v8619 = vpop.f32.mrb[0].mxu0
    %v8620 = vadd.f32 %v7858, %v8619
    %v8621 = vpop.f32.mrb[0].mxu0
    %v8622 = vadd.f32 %v7862, %v8621
    %v8623 = vpop.f32.mrb[0].mxu0
    %v8624 = vadd.f32 %v7858, %v8623
    %v8625 = vpop.f32.mrb[0].mxu0
    %v8626 = vadd.f32 %v7862, %v8625
    %8627 = vdwg.mxu0
    %8628 = vmatprep.subr.bf16.mxu0 %v8324
    %8629 = vmatpush1.bf16.msra.mxu0 %v8323
    %8630 = vmatprep.subr.bf16.mxu0 %v8328
    %8631 = vmatpush1.bf16.msra.mxu0 %v8327
    %8632 = vmatprep.subr.bf16.mxu0 %v8332
    %8633 = vmatpush1.bf16.msra.mxu0 %v8331
    %8634 = vmatprep.subr.bf16.mxu0 %v8336
    %8635 = vmatpush1.bf16.msra.mxu0 %v8335
    %8636 = vmatprep.subr.bf16.mxu0 %v8340
    %8637 = vmatpush1.bf16.msra.mxu0 %v8339
    %8638 = vmatprep.subr.bf16.mxu0 %v8344
    %8639 = vmatpush1.bf16.msra.mxu0 %v8343
    %8640 = vmatprep.subr.bf16.mxu0 %v8348
    %8641 = vmatpush1.bf16.msra.mxu0 %v8347
    %8642 = vmatprep.subr.bf16.mxu0 %v8352
    %8643 = vmatpush1.bf16.msra.mxu0 %v8351
    %8644 = vmatprep.subr.bf16.mxu0 %v8356
    %8645 = vmatpush1.bf16.msra.mxu0 %v8355
    %8646 = vmatprep.subr.bf16.mxu0 %v8360
    %8647 = vmatpush1.bf16.msra.mxu0 %v8359
    %8648 = vmatprep.subr.bf16.mxu0 %v8364
    %8649 = vmatpush1.bf16.msra.mxu0 %v8363
    %8650 = vmatprep.subr.bf16.mxu0 %v8368
    %8651 = vmatpush1.bf16.msra.mxu0 %v8367
    %8652 = vmatprep.subr.bf16.mxu0 %v8372
    %8653 = vmatpush1.bf16.msra.mxu0 %v8371
    %8654 = vmatprep.subr.bf16.mxu0 %v8376
    %8655 = vmatpush1.bf16.msra.mxu0 %v8375
    %8656 = vmatprep.subr.bf16.mxu0 %v8380
    %8657 = vmatpush1.bf16.msra.mxu0 %v8379
    %8658 = vmatprep.subr.bf16.mxu0 %v8384
    %8659 = vmatpush1.bf16.msra.mxu0 %v8383
    %8660 = vmatprep.mubr.bf16.mxu0 %v7694
    %8661 = vmatmul.mubr.bf16.gmra.mrb[0].mxu0 %v7693
    %v8662 = vpop.f32.mrb[0].mxu0
    %v8663 = vadd.f32 %v8550, %v8662
    %v8664 = vpop.f32.mrb[0].mxu0
    %v8665 = vadd.f32 %v8552, %v8664
    %v8666 = vpop.f32.mrb[0].mxu0
    %v8667 = vadd.f32 %v8554, %v8666
    %v8668 = vpop.f32.mrb[0].mxu0
    %v8669 = vadd.f32 %v8556, %v8668
    %8670 = vmatprep.mubr.bf16.mxu0 %v7698
    %8671 = vmatmul.mubr.bf16.gmra.mrb[0].mxu0 %v7697
    %v8672 = vpop.f32.mrb[0].mxu0
    %v8673 = vadd.f32 %v8560, %v8672
    %v8674 = vpop.f32.mrb[0].mxu0
    %v8675 = vadd.f32 %v8562, %v8674
    %v8676 = vpop.f32.mrb[0].mxu0
    %v8677 = vadd.f32 %v8564, %v8676
    %v8678 = vpop.f32.mrb[0].mxu0
    %v8679 = vadd.f32 %v8566, %v8678
    %8680 = vmatprep.mubr.bf16.mxu0 %v7702
    %8681 = vmatmul.mubr.bf16.gmra.mrb[0].mxu0 %v7701
    %v8682 = vpop.f32.mrb[0].mxu0
    %v8683 = vadd.f32 %v8570, %v8682
    %v8684 = vpop.f32.mrb[0].mxu0
    %v8685 = vadd.f32 %v8572, %v8684
    %v8686 = vpop.f32.mrb[0].mxu0
    %v8687 = vadd.f32 %v8574, %v8686
    %v8688 = vpop.f32.mrb[0].mxu0
    %v8689 = vadd.f32 %v8576, %v8688
    %8690 = vmatprep.mubr.bf16.mxu0 %v7706
    %8691 = vmatmul.mubr.bf16.gmra.mrb[0].mxu0 %v7705
    %v8692 = vpop.f32.mrb[0].mxu0
    %v8693 = vadd.f32 %v8580, %v8692
    %v8694 = vpop.f32.mrb[0].mxu0
    %v8695 = vadd.f32 %v8582, %v8694
    %v8696 = vpop.f32.mrb[0].mxu0
    %v8697 = vadd.f32 %v8584, %v8696
    %v8698 = vpop.f32.mrb[0].mxu0
    %v8699 = vadd.f32 %v8586, %v8698
    %8700 = vmatprep.mubr.bf16.mxu0 %v7710
    %8701 = vmatmul.mubr.bf16.gmra.mrb[0].mxu0 %v7709
    %v8702 = vpop.f32.mrb[0].mxu0
    %v8703 = vadd.f32 %v8590, %v8702
    %v8704 = vpop.f32.mrb[0].mxu0
    %v8705 = vadd.f32 %v8592, %v8704
    %v8706 = vpop.f32.mrb[0].mxu0
    %v8707 = vadd.f32 %v8594, %v8706
    %v8708 = vpop.f32.mrb[0].mxu0
    %v8709 = vadd.f32 %v8596, %v8708
    %8710 = vmatprep.mubr.bf16.mxu0 %v7714
    %8711 = vmatmul.mubr.bf16.gmra.mrb[0].mxu0 %v7713
    %v8712 = vpop.f32.mrb[0].mxu0
    %v8713 = vadd.f32 %v8600, %v8712
    %v8714 = vpop.f32.mrb[0].mxu0
    %v8715 = vadd.f32 %v8602, %v8714
    %v8716 = vpop.f32.mrb[0].mxu0
    %v8717 = vadd.f32 %v8604, %v8716
    %v8718 = vpop.f32.mrb[0].mxu0
    %v8719 = vadd.f32 %v8606, %v8718
    %8720 = vmatprep.mubr.bf16.mxu0 %v7718
    %8721 = vmatmul.mubr.bf16.gmra.mrb[0].mxu0 %v7717
    %v8722 = vpop.f32.mrb[0].mxu0
    %v8723 = vadd.f32 %v8610, %v8722
    %v8724 = vpop.f32.mrb[0].mxu0
    %v8725 = vadd.f32 %v8612, %v8724
    %v8726 = vpop.f32.mrb[0].mxu0
    %v8727 = vadd.f32 %v8614, %v8726
    %v8728 = vpop.f32.mrb[0].mxu0
    %v8729 = vadd.f32 %v8616, %v8728
    %8730 = vmatprep.mubr.bf16.mxu0 %v7722
    %8731 = vmatmul.mubr.bf16.gmra.mrb[0].mxu0 %v7721
    %v8732 = vpop.f32.mrb[0].mxu0
    %v8733 = vadd.f32 %v8620, %v8732
    %v8734 = vpop.f32.mrb[0].mxu0
    %v8735 = vadd.f32 %v8622, %v8734
    %v8736 = vpop.f32.mrb[0].mxu0
    %v8737 = vadd.f32 %v8624, %v8736
    %v8738 = vpop.f32.mrb[0].mxu0
    %v8739 = vadd.f32 %v8626, %v8738
    %8740 = vdwg.mxu0
    %8741 = vmatprep.subr.bf16.mxu0 %v8262
    %8742 = vmatpush1.bf16.msra.mxu0 %v8261
    %8743 = vmatprep.subr.bf16.mxu0 %v8266
    %8744 = vmatpush1.bf16.msra.mxu0 %v8265
    %8745 = vmatprep.subr.bf16.mxu0 %v8270
    %8746 = vmatpush1.bf16.msra.mxu0 %v8269
    %8747 = vmatprep.subr.bf16.mxu0 %v8274
    %8748 = vmatpush1.bf16.msra.mxu0 %v8273
    %8749 = vmatprep.subr.bf16.mxu0 %v8278
    %8750 = vmatpush1.bf16.msra.mxu0 %v8277
    %8751 = vmatprep.subr.bf16.mxu0 %v8282
    %8752 = vmatpush1.bf16.msra.mxu0 %v8281
    %8753 = vmatprep.subr.bf16.mxu0 %v8286
    %8754 = vmatpush1.bf16.msra.mxu0 %v8285
    %8755 = vmatprep.subr.bf16.mxu0 %v8290
    %8756 = vmatpush1.bf16.msra.mxu0 %v8289
    %8757 = vmatprep.subr.bf16.mxu0 %v8294
    %8758 = vmatpush1.bf16.msra.mxu0 %v8293
    %8759 = vmatprep.subr.bf16.mxu0 %v8298
    %8760 = vmatpush1.bf16.msra.mxu0 %v8297
    %8761 = vmatprep.subr.bf16.mxu0 %v8302
    %8762 = vmatpush1.bf16.msra.mxu0 %v8301
    %8763 = vmatprep.subr.bf16.mxu0 %v8306
    %8764 = vmatpush1.bf16.msra.mxu0 %v8305
    %8765 = vmatprep.subr.bf16.mxu0 %v8310
    %8766 = vmatpush1.bf16.msra.mxu0 %v8309
    %8767 = vmatprep.subr.bf16.mxu0 %v8314
    %8768 = vmatpush1.bf16.msra.mxu0 %v8313
    %8769 = vmatprep.subr.bf16.mxu0 %v8318
    %8770 = vmatpush1.bf16.msra.mxu0 %v8317
    %8771 = vmatprep.subr.bf16.mxu0 %v8322
    %8772 = vmatpush1.bf16.msra.mxu0 %v8321
    %8773 = vmatprep.mubr.bf16.mxu0 %v7692
    %8774 = vmatmul.mubr.bf16.gmra.mrb[0].mxu0 %v7691
    %v8775 = vpop.f32.mrb[0].mxu0
    %v8776 = vadd.f32 %v7866, %v8775
    %v8777 = vpop.f32.mrb[0].mxu0
    %v8778 = vadd.f32 %v7870, %v8777
    %v8779 = vpop.f32.mrb[0].mxu0
    %v8780 = vadd.f32 %v7866, %v8779
    %v8781 = vpop.f32.mrb[0].mxu0
    %v8782 = vadd.f32 %v7870, %v8781
    %8783 = vmatprep.mubr.bf16.mxu0 %v7696
    %8784 = vmatmul.mubr.bf16.gmra.mrb[0].mxu0 %v7695
    %v8785 = vpop.f32.mrb[0].mxu0
    %v8786 = vadd.f32 %v7866, %v8785
    %v8787 = vpop.f32.mrb[0].mxu0
    %v8788 = vadd.f32 %v7870, %v8787
    %v8789 = vpop.f32.mrb[0].mxu0
    %v8790 = vadd.f32 %v7866, %v8789
    %v8791 = vpop.f32.mrb[0].mxu0
    %v8792 = vadd.f32 %v7870, %v8791
    %8793 = vmatprep.mubr.bf16.mxu0 %v7700
    %8794 = vmatmul.mubr.bf16.gmra.mrb[0].mxu0 %v7699
    %v8795 = vpop.f32.mrb[0].mxu0
    %v8796 = vadd.f32 %v7866, %v8795
    %v8797 = vpop.f32.mrb[0].mxu0
    %v8798 = vadd.f32 %v7870, %v8797
    %v8799 = vpop.f32.mrb[0].mxu0
    %v8800 = vadd.f32 %v7866, %v8799
    %v8801 = vpop.f32.mrb[0].mxu0
    %v8802 = vadd.f32 %v7870, %v8801
    %8803 = vmatprep.mubr.bf16.mxu0 %v7704
    %8804 = vmatmul.mubr.bf16.gmra.mrb[0].mxu0 %v7703
    %v8805 = vpop.f32.mrb[0].mxu0
    %v8806 = vadd.f32 %v7866, %v8805
    %v8807 = vpop.f32.mrb[0].mxu0
    %v8808 = vadd.f32 %v7870, %v8807
    %v8809 = vpop.f32.mrb[0].mxu0
    %v8810 = vadd.f32 %v7866, %v8809
    %v8811 = vpop.f32.mrb[0].mxu0
    %v8812 = vadd.f32 %v7870, %v8811
    %8813 = vmatprep.mubr.bf16.mxu0 %v7708
    %8814 = vmatmul.mubr.bf16.gmra.mrb[0].mxu0 %v7707
    %v8815 = vpop.f32.mrb[0].mxu0
    %v8816 = vadd.f32 %v7866, %v8815
    %v8817 = vpop.f32.mrb[0].mxu0
    %v8818 = vadd.f32 %v7870, %v8817
    %v8819 = vpop.f32.mrb[0].mxu0
    %v8820 = vadd.f32 %v7866, %v8819
    %v8821 = vpop.f32.mrb[0].mxu0
    %v8822 = vadd.f32 %v7870, %v8821
    %8823 = vmatprep.mubr.bf16.mxu0 %v7712
    %8824 = vmatmul.mubr.bf16.gmra.mrb[0].mxu0 %v7711
    %v8825 = vpop.f32.mrb[0].mxu0
    %v8826 = vadd.f32 %v7866, %v8825
    %v8827 = vpop.f32.mrb[0].mxu0
    %v8828 = vadd.f32 %v7870, %v8827
    %v8829 = vpop.f32.mrb[0].mxu0
    %v8830 = vadd.f32 %v7866, %v8829
    %v8831 = vpop.f32.mrb[0].mxu0
    %v8832 = vadd.f32 %v7870, %v8831
    %8833 = vmatprep.mubr.bf16.mxu0 %v7716
    %8834 = vmatmul.mubr.bf16.gmra.mrb[0].mxu0 %v7715
    %v8835 = vpop.f32.mrb[0].mxu0
    %v8836 = vadd.f32 %v7866, %v8835
    %v8837 = vpop.f32.mrb[0].mxu0
    %v8838 = vadd.f32 %v7870, %v8837
    %v8839 = vpop.f32.mrb[0].mxu0
    %v8840 = vadd.f32 %v7866, %v8839
    %v8841 = vpop.f32.mrb[0].mxu0
    %v8842 = vadd.f32 %v7870, %v8841
    %8843 = vmatprep.mubr.bf16.mxu0 %v7720
    %8844 = vmatmul.mubr.bf16.gmra.mrb[0].mxu0 %v7719
    %v8845 = vpop.f32.mrb[0].mxu0
    %v8846 = vadd.f32 %v7866, %v8845
    %v8847 = vpop.f32.mrb[0].mxu0
    %v8848 = vadd.f32 %v7870, %v8847
    %v8849 = vpop.f32.mrb[0].mxu0
    %v8850 = vadd.f32 %v7866, %v8849
    %v8851 = vpop.f32.mrb[0].mxu0
    %v8852 = vadd.f32 %v7870, %v8851
    %8853 = vdwg.mxu0
    %8854 = vmatprep.subr.bf16.mxu0 %v8326
    %8855 = vmatpush1.bf16.msra.mxu0 %v8325
    %8856 = vmatprep.subr.bf16.mxu0 %v8330
    %8857 = vmatpush1.bf16.msra.mxu0 %v8329
    %8858 = vmatprep.subr.bf16.mxu0 %v8334
    %8859 = vmatpush1.bf16.msra.mxu0 %v8333
    %8860 = vmatprep.subr.bf16.mxu0 %v8338
    %8861 = vmatpush1.bf16.msra.mxu0 %v8337
    %8862 = vmatprep.subr.bf16.mxu0 %v8342
    %8863 = vmatpush1.bf16.msra.mxu0 %v8341
    %8864 = vmatprep.subr.bf16.mxu0 %v8346
    %8865 = vmatpush1.bf16.msra.mxu0 %v8345
    %8866 = vmatprep.subr.bf16.mxu0 %v8350
    %8867 = vmatpush1.bf16.msra.mxu0 %v8349
    %8868 = vmatprep.subr.bf16.mxu0 %v8354
    %8869 = vmatpush1.bf16.msra.mxu0 %v8353
    %8870 = vmatprep.subr.bf16.mxu0 %v8358
    %8871 = vmatpush1.bf16.msra.mxu0 %v8357
    %8872 = vmatprep.subr.bf16.mxu0 %v8362
    %8873 = vmatpush1.bf16.msra.mxu0 %v8361
    %8874 = vmatprep.subr.bf16.mxu0 %v8366
    %8875 = vmatpush1.bf16.msra.mxu0 %v8365
    %8876 = vmatprep.subr.bf16.mxu0 %v8370
    %8877 = vmatpush1.bf16.msra.mxu0 %v8369
    %8878 = vmatprep.subr.bf16.mxu0 %v8374
    %8879 = vmatpush1.bf16.msra.mxu0 %v8373
    %8880 = vmatprep.subr.bf16.mxu0 %v8378
    %8881 = vmatpush1.bf16.msra.mxu0 %v8377
    %8882 = vmatprep.subr.bf16.mxu0 %v8382
    %8883 = vmatpush1.bf16.msra.mxu0 %v8381
    %8884 = vmatprep.subr.bf16.mxu0 %v8386
    %8885 = vmatpush1.bf16.msra.mxu0 %v8385
    %8886 = vmatprep.mubr.bf16.mxu0 %v7694
    %8887 = vmatmul.mubr.bf16.gmra.mrb[0].mxu0 %v7693
    %v8888 = vpop.f32.mrb[0].mxu0
    %v8889 = vadd.f32 %v8776, %v8888
    %v8890 = vpop.f32.mrb[0].mxu0
    %v8891 = vadd.f32 %v8778, %v8890
    %v8892 = vpop.f32.mrb[0].mxu0
    %v8893 = vadd.f32 %v8780, %v8892
    %v8894 = vpop.f32.mrb[0].mxu0
    %v8895 = vadd.f32 %v8782, %v8894
    %8896 = vmatprep.mubr.bf16.mxu0 %v7698
    %8897 = vmatmul.mubr.bf16.gmra.mrb[0].mxu0 %v7697
    %v8898 = vpop.f32.mrb[0].mxu0
    %v8899 = vadd.f32 %v8786, %v8898
    %v8900 = vpop.f32.mrb[0].mxu0
    %v8901 = vadd.f32 %v8788, %v8900
    %v8902 = vpop.f32.mrb[0].mxu0
    %v8903 = vadd.f32 %v8790, %v8902
    %v8904 = vpop.f32.mrb[0].mxu0
    %v8905 = vadd.f32 %v8792, %v8904
    %8906 = vmatprep.mubr.bf16.mxu0 %v7702
    %8907 = vmatmul.mubr.bf16.gmra.mrb[0].mxu0 %v7701
    %v8908 = vpop.f32.mrb[0].mxu0
    %v8909 = vadd.f32 %v8796, %v8908
    %v8910 = vpop.f32.mrb[0].mxu0
    %v8911 = vadd.f32 %v8798, %v8910
    %v8912 = vpop.f32.mrb[0].mxu0
    %v8913 = vadd.f32 %v8800, %v8912
    %v8914 = vpop.f32.mrb[0].mxu0
    %v8915 = vadd.f32 %v8802, %v8914
    %8916 = vmatprep.mubr.bf16.mxu0 %v7706
    %8917 = vmatmul.mubr.bf16.gmra.mrb[0].mxu0 %v7705
    %v8918 = vpop.f32.mrb[0].mxu0
    %v8919 = vadd.f32 %v8806, %v8918
    %v8920 = vpop.f32.mrb[0].mxu0
    %v8921 = vadd.f32 %v8808, %v8920
    %v8922 = vpop.f32.mrb[0].mxu0
    %v8923 = vadd.f32 %v8810, %v8922
    %v8924 = vpop.f32.mrb[0].mxu0
    %v8925 = vadd.f32 %v8812, %v8924
    %8926 = vmatprep.mubr.bf16.mxu0 %v7710
    %8927 = vmatmul.mubr.bf16.gmra.mrb[0].mxu0 %v7709
    %v8928 = vpop.f32.mrb[0].mxu0
    %v8929 = vadd.f32 %v8816, %v8928
    %v8930 = vpop.f32.mrb[0].mxu0
    %v8931 = vadd.f32 %v8818, %v8930
    %v8932 = vpop.f32.mrb[0].mxu0
    %v8933 = vadd.f32 %v8820, %v8932
    %v8934 = vpop.f32.mrb[0].mxu0
    %v8935 = vadd.f32 %v8822, %v8934
    %8936 = vmatprep.mubr.bf16.mxu0 %v7714
    %8937 = vmatmul.mubr.bf16.gmra.mrb[0].mxu0 %v7713
    %v8938 = vpop.f32.mrb[0].mxu0
    %v8939 = vadd.f32 %v8826, %v8938
    %v8940 = vpop.f32.mrb[0].mxu0
    %v8941 = vadd.f32 %v8828, %v8940
    %v8942 = vpop.f32.mrb[0].mxu0
    %v8943 = vadd.f32 %v8830, %v8942
    %v8944 = vpop.f32.mrb[0].mxu0
    %v8945 = vadd.f32 %v8832, %v8944
    %8946 = vmatprep.mubr.bf16.mxu0 %v7718
    %8947 = vmatmul.mubr.bf16.gmra.mrb[0].mxu0 %v7717
    %v8948 = vpop.f32.mrb[0].mxu0
    %v8949 = vadd.f32 %v8836, %v8948
    %v8950 = vpop.f32.mrb[0].mxu0
    %v8951 = vadd.f32 %v8838, %v8950
    %v8952 = vpop.f32.mrb[0].mxu0
    %v8953 = vadd.f32 %v8840, %v8952
    %v8954 = vpop.f32.mrb[0].mxu0
    %v8955 = vadd.f32 %v8842, %v8954
    %8956 = vmatprep.mubr.bf16.mxu0 %v7722
    %8957 = vmatmul.mubr.bf16.gmra.mrb[0].mxu0 %v7721
    %v8958 = vpop.f32.mrb[0].mxu0
    %v8959 = vadd.f32 %v8846, %v8958
    %v8960 = vpop.f32.mrb[0].mxu0
    %v8961 = vadd.f32 %v8848, %v8960
    %v8962 = vpop.f32.mrb[0].mxu0
    %v8963 = vadd.f32 %v8850, %v8962
    %v8964 = vpop.f32.mrb[0].mxu0
    %v8965 = vadd.f32 %v8852, %v8964
    %8966 = vdwg.mxu0
    %v8967 = vmax.f32 %v8663, 0.0
    %v8968 = vmax.f32 %v8665, 0.0
    %v8969 = vmax.f32 %v8889, 0.0
    %v8970 = vmax.f32 %v8891, 0.0
    %v8971 = vmax.f32 %v8667, 0.0
    %v8972 = vmax.f32 %v8669, 0.0
    %v8973 = vmax.f32 %v8893, 0.0
    %v8974 = vmax.f32 %v8895, 0.0
    %v8975 = vmax.f32 %v8673, 0.0
    %v8976 = vmax.f32 %v8675, 0.0
    %v8977 = vmax.f32 %v8899, 0.0
    %v8978 = vmax.f32 %v8901, 0.0
    %v8979 = vmax.f32 %v8677, 0.0
    %v8980 = vmax.f32 %v8679, 0.0
    %v8981 = vmax.f32 %v8903, 0.0
    %v8982 = vmax.f32 %v8905, 0.0
    %v8983 = vmax.f32 %v8683, 0.0
    %v8984 = vmax.f32 %v8685, 0.0
    %v8985 = vmax.f32 %v8909, 0.0
    %v8986 = vmax.f32 %v8911, 0.0
    %v8987 = vmax.f32 %v8687, 0.0
    %v8988 = vmax.f32 %v8689, 0.0
    %v8989 = vmax.f32 %v8913, 0.0
    %v8990 = vmax.f32 %v8915, 0.0
    %v8991 = vmax.f32 %v8693, 0.0
    %v8992 = vmax.f32 %v8695, 0.0
    %v8993 = vmax.f32 %v8919, 0.0
    %v8994 = vmax.f32 %v8921, 0.0
    %v8995 = vmax.f32 %v8697, 0.0
    %v8996 = vmax.f32 %v8699, 0.0
    %v8997 = vmax.f32 %v8923, 0.0
    %v8998 = vmax.f32 %v8925, 0.0
    %v8999 = vmax.f32 %v8703, 0.0
    %v9000 = vmax.f32 %v8705, 0.0
    %v9001 = vmax.f32 %v8929, 0.0
    %v9002 = vmax.f32 %v8931, 0.0
    %v9003 = vmax.f32 %v8707, 0.0
    %v9004 = vmax.f32 %v8709, 0.0
    %v9005 = vmax.f32 %v8933, 0.0
    %v9006 = vmax.f32 %v8935, 0.0
    %v9007 = vmax.f32 %v8713, 0.0
    %v9008 = vmax.f32 %v8715, 0.0
    %v9009 = vmax.f32 %v8939, 0.0
    %v9010 = vmax.f32 %v8941, 0.0
    %v9011 = vmax.f32 %v8717, 0.0
    %v9012 = vmax.f32 %v8719, 0.0
    %v9013 = vmax.f32 %v8943, 0.0
    %v9014 = vmax.f32 %v8945, 0.0
    %v9015 = vmax.f32 %v8723, 0.0
    %v9016 = vmax.f32 %v8725, 0.0
    %v9017 = vmax.f32 %v8949, 0.0
    %v9018 = vmax.f32 %v8951, 0.0
    %v9019 = vmax.f32 %v8727, 0.0
    %v9020 = vmax.f32 %v8729, 0.0
    %v9021 = vmax.f32 %v8953, 0.0
    %v9022 = vmax.f32 %v8955, 0.0
    %v9023 = vmax.f32 %v8733, 0.0
    %v9024 = vmax.f32 %v8735, 0.0
    %v9025 = vmax.f32 %v8959, 0.0
    %v9026 = vmax.f32 %v8961, 0.0
    %v9027 = vmax.f32 %v8737, 0.0
    %v9028 = vmax.f32 %v8739, 0.0
    %v9029 = vmax.f32 %v8963, 0.0
    %v9030 = vmax.f32 %v8965, 0.0
    %v9031 = vadd.f32 %v7627, %v8967
    %v9032 = vadd.f32 %v7628, %v8968
    %v9033 = vadd.f32 %v7629, %v8969
    %v9034 = vadd.f32 %v7630, %v8970
    %v9035 = vadd.f32 %v7631, %v8971
    %v9036 = vadd.f32 %v7632, %v8972
    %v9037 = vadd.f32 %v7633, %v8973
    %v9038 = vadd.f32 %v7634, %v8974
    %v9039 = vadd.f32 %v7635, %v8975
    %v9040 = vadd.f32 %v7636, %v8976
    %v9041 = vadd.f32 %v7637, %v8977
    %v9042 = vadd.f32 %v7638, %v8978
    %v9043 = vadd.f32 %v7639, %v8979
    %v9044 = vadd.f32 %v7640, %v8980
    %v9045 = vadd.f32 %v7641, %v8981
    %v9046 = vadd.f32 %v7642, %v8982
    %v9047 = vadd.f32 %v7643, %v8983
    %v9048 = vadd.f32 %v7644, %v8984
    %v9049 = vadd.f32 %v7645, %v8985
    %v9050 = vadd.f32 %v7646, %v8986
    %v9051 = vadd.f32 %v7647, %v8987
    %v9052 = vadd.f32 %v7648, %v8988
    %v9053 = vadd.f32 %v7649, %v8989
    %v9054 = vadd.f32 %v7650, %v8990
    %v9055 = vadd.f32 %v7651, %v8991
    %v9056 = vadd.f32 %v7652, %v8992
    %v9057 = vadd.f32 %v7653, %v8993
    %v9058 = vadd.f32 %v7654, %v8994
    %v9059 = vadd.f32 %v7655, %v8995
    %v9060 = vadd.f32 %v7656, %v8996
    %v9061 = vadd.f32 %v7657, %v8997
    %v9062 = vadd.f32 %v7658, %v8998
    %v9063 = vadd.f32 %v7659, %v8999
    %v9064 = vadd.f32 %v7660, %v9000
    %v9065 = vadd.f32 %v7661, %v9001
    %v9066 = vadd.f32 %v7662, %v9002
    %v9067 = vadd.f32 %v7663, %v9003
    %v9068 = vadd.f32 %v7664, %v9004
    %v9069 = vadd.f32 %v7665, %v9005
    %v9070 = vadd.f32 %v7666, %v9006
    %v9071 = vadd.f32 %v7667, %v9007
    %v9072 = vadd.f32 %v7668, %v9008
    %v9073 = vadd.f32 %v7669, %v9009
    %v9074 = vadd.f32 %v7670, %v9010
    %v9075 = vadd.f32 %v7671, %v9011
    %v9076 = vadd.f32 %v7672, %v9012
    %v9077 = vadd.f32 %v7673, %v9013
    %v9078 = vadd.f32 %v7674, %v9014
    %v9079 = vadd.f32 %v7675, %v9015
    %v9080 = vadd.f32 %v7676, %v9016
    %v9081 = vadd.f32 %v7677, %v9017
    %v9082 = vadd.f32 %v7678, %v9018
    %v9083 = vadd.f32 %v7679, %v9019
    %v9084 = vadd.f32 %v7680, %v9020
    %v9085 = vadd.f32 %v7681, %v9021
    %v9086 = vadd.f32 %v7682, %v9022
    %v9087 = vadd.f32 %v7683, %v9023
    %v9088 = vadd.f32 %v7684, %v9024
    %v9089 = vadd.f32 %v7685, %v9025
    %v9090 = vadd.f32 %v7686, %v9026
    %v9091 = vadd.f32 %v7687, %v9027
    %v9092 = vadd.f32 %v7688, %v9028
    %v9093 = vadd.f32 %v7689, %v9029
    %v9094 = vadd.f32 %v7690, %v9030
    %v9095 = vpack.c.bf16 %v9035, %v9031
    %v9096 = vpack.c.bf16 %v9036, %v9032
    %v9097 = vpack.c.bf16 %v9037, %v9033
    %v9098 = vpack.c.bf16 %v9038, %v9034
    %v9099 = vpack.c.bf16 %v9043, %v9039
    %v9100 = vpack.c.bf16 %v9044, %v9040
    %v9101 = vpack.c.bf16 %v9045, %v9041
    %v9102 = vpack.c.bf16 %v9046, %v9042
    %v9103 = vpack.c.bf16 %v9051, %v9047
    %v9104 = vpack.c.bf16 %v9052, %v9048
    %v9105 = vpack.c.bf16 %v9053, %v9049
    %v9106 = vpack.c.bf16 %v9054, %v9050
    %v9107 = vpack.c.bf16 %v9059, %v9055
    %v9108 = vpack.c.bf16 %v9060, %v9056
    %v9109 = vpack.c.bf16 %v9061, %v9057
    %v9110 = vpack.c.bf16 %v9062, %v9058
    %v9111 = vpack.c.bf16 %v9067, %v9063
    %v9112 = vpack.c.bf16 %v9068, %v9064
    %v9113 = vpack.c.bf16 %v9069, %v9065
    %v9114 = vpack.c.bf16 %v9070, %v9066
    %v9115 = vpack.c.bf16 %v9075, %v9071
    %v9116 = vpack.c.bf16 %v9076, %v9072
    %v9117 = vpack.c.bf16 %v9077, %v9073
    %v9118 = vpack.c.bf16 %v9078, %v9074
    %v9119 = vpack.c.bf16 %v9083, %v9079
    %v9120 = vpack.c.bf16 %v9084, %v9080
    %v9121 = vpack.c.bf16 %v9085, %v9081
    %v9122 = vpack.c.bf16 %v9086, %v9082
    %v9123 = vpack.c.bf16 %v9091, %v9087
    %v9124 = vpack.c.bf16 %v9092, %v9088
    %v9125 = vpack.c.bf16 %v9093, %v9089
    %v9126 = vpack.c.bf16 %v9094, %v9090
    %s9127 = scalar_lea.vmem [#allocation6], 6144
    %v9128 = vld [vmem:[%s9127] sm:$0xff]
    %v9129 = vld [vmem:[%s9127 + $0x8] sm:$0xff]
    %v9130 = vld [vmem:[%s9127 + $0x10] sm:$0xff]
    %v9131 = vld [vmem:[%s9127 + $0x18] sm:$0xff]
    %v9132 = vld [vmem:[%s9127 + $0x20] sm:$0xff]
    %v9133 = vld [vmem:[%s9127 + $0x28] sm:$0xff]
    %v9134 = vld [vmem:[%s9127 + $0x30] sm:$0xff]
    %v9135 = vld [vmem:[%s9127 + $0x38] sm:$0xff]
    %v9136 = vld [vmem:[%s9127 + $0x40] sm:$0xff]
    %v9137 = vld [vmem:[%s9127 + $0x48] sm:$0xff]
    %v9138 = vld [vmem:[%s9127 + $0x50] sm:$0xff]
    %v9139 = vld [vmem:[%s9127 + $0x58] sm:$0xff]
    %v9140 = vld [vmem:[%s9127 + $0x60] sm:$0xff]
    %v9141 = vld [vmem:[%s9127 + $0x68] sm:$0xff]
    %v9142 = vld [vmem:[%s9127 + $0x70] sm:$0xff]
    %v9143 = vld [vmem:[%s9127 + $0x78] sm:$0xff]
    %v9144 = vld [vmem:[%s9127 + $0x80] sm:$0xff]
    %v9145 = vld [vmem:[%s9127 + $0x88] sm:$0xff]
    %v9146 = vld [vmem:[%s9127 + $0x90] sm:$0xff]
    %v9147 = vld [vmem:[%s9127 + $0x98] sm:$0xff]
    %v9148 = vld [vmem:[%s9127 + $0xa0] sm:$0xff]
    %v9149 = vld [vmem:[%s9127 + $0xa8] sm:$0xff]
    %v9150 = vld [vmem:[%s9127 + $0xb0] sm:$0xff]
    %v9151 = vld [vmem:[%s9127 + $0xb8] sm:$0xff]
    %v9152 = vld [vmem:[%s9127 + $0xc0] sm:$0xff]
    %v9153 = vld [vmem:[%s9127 + $0xc8] sm:$0xff]
    %v9154 = vld [vmem:[%s9127 + $0xd0] sm:$0xff]
    %v9155 = vld [vmem:[%s9127 + $0xd8] sm:$0xff]
    %v9156 = vld [vmem:[%s9127 + $0xe0] sm:$0xff]
    %v9157 = vld [vmem:[%s9127 + $0xe8] sm:$0xff]
    %v9158 = vld [vmem:[%s9127 + $0xf0] sm:$0xff]
    %v9159 = vld [vmem:[%s9127 + $0xf8] sm:$0xff]
    %v9160 = vld [vmem:[%s9127 + $0x100] sm:$0xff]
    %v9161 = vld [vmem:[%s9127 + $0x108] sm:$0xff]
    %v9162 = vld [vmem:[%s9127 + $0x110] sm:$0xff]
    %v9163 = vld [vmem:[%s9127 + $0x118] sm:$0xff]
    %v9164 = vld [vmem:[%s9127 + $0x120] sm:$0xff]
    %v9165 = vld [vmem:[%s9127 + $0x128] sm:$0xff]
    %v9166 = vld [vmem:[%s9127 + $0x130] sm:$0xff]
    %v9167 = vld [vmem:[%s9127 + $0x138] sm:$0xff]
    %v9168 = vld [vmem:[%s9127 + $0x140] sm:$0xff]
    %v9169 = vld [vmem:[%s9127 + $0x148] sm:$0xff]
    %v9170 = vld [vmem:[%s9127 + $0x150] sm:$0xff]
    %v9171 = vld [vmem:[%s9127 + $0x158] sm:$0xff]
    %v9172 = vld [vmem:[%s9127 + $0x160] sm:$0xff]
    %v9173 = vld [vmem:[%s9127 + $0x168] sm:$0xff]
    %v9174 = vld [vmem:[%s9127 + $0x170] sm:$0xff]
    %v9175 = vld [vmem:[%s9127 + $0x178] sm:$0xff]
    %v9176 = vld [vmem:[%s9127 + $0x180] sm:$0xff]
    %v9177 = vld [vmem:[%s9127 + $0x188] sm:$0xff]
    %v9178 = vld [vmem:[%s9127 + $0x190] sm:$0xff]
    %v9179 = vld [vmem:[%s9127 + $0x198] sm:$0xff]
    %v9180 = vld [vmem:[%s9127 + $0x1a0] sm:$0xff]
    %v9181 = vld [vmem:[%s9127 + $0x1a8] sm:$0xff]
    %v9182 = vld [vmem:[%s9127 + $0x1b0] sm:$0xff]
    %v9183 = vld [vmem:[%s9127 + $0x1b8] sm:$0xff]
    %v9184 = vld [vmem:[%s9127 + $0x1c0] sm:$0xff]
    %v9185 = vld [vmem:[%s9127 + $0x1c8] sm:$0xff]
    %v9186 = vld [vmem:[%s9127 + $0x1d0] sm:$0xff]
    %v9187 = vld [vmem:[%s9127 + $0x1d8] sm:$0xff]
    %v9188 = vld [vmem:[%s9127 + $0x1e0] sm:$0xff]
    %v9189 = vld [vmem:[%s9127 + $0x1e8] sm:$0xff]
    %v9190 = vld [vmem:[%s9127 + $0x1f0] sm:$0xff]
    %v9191 = vld [vmem:[%s9127 + $0x1f8] sm:$0xff]
    %v9192 = vld [vmem:[%s9127 + $0x200] sm:$0xff]
    %v9193 = vld [vmem:[%s9127 + $0x208] sm:$0xff]
    %v9194 = vld [vmem:[%s9127 + $0x210] sm:$0xff]
    %v9195 = vld [vmem:[%s9127 + $0x218] sm:$0xff]
    %v9196 = vld [vmem:[%s9127 + $0x220] sm:$0xff]
    %v9197 = vld [vmem:[%s9127 + $0x228] sm:$0xff]
    %v9198 = vld [vmem:[%s9127 + $0x230] sm:$0xff]
    %v9199 = vld [vmem:[%s9127 + $0x238] sm:$0xff]
    %v9200 = vld [vmem:[%s9127 + $0x240] sm:$0xff]
    %v9201 = vld [vmem:[%s9127 + $0x248] sm:$0xff]
    %v9202 = vld [vmem:[%s9127 + $0x250] sm:$0xff]
    %v9203 = vld [vmem:[%s9127 + $0x258] sm:$0xff]
    %v9204 = vld [vmem:[%s9127 + $0x260] sm:$0xff]
    %v9205 = vld [vmem:[%s9127 + $0x268] sm:$0xff]
    %v9206 = vld [vmem:[%s9127 + $0x270] sm:$0xff]
    %v9207 = vld [vmem:[%s9127 + $0x278] sm:$0xff]
    %v9208 = vld [vmem:[%s9127 + $0x280] sm:$0xff]
    %v9209 = vld [vmem:[%s9127 + $0x288] sm:$0xff]
    %v9210 = vld [vmem:[%s9127 + $0x290] sm:$0xff]
    %v9211 = vld [vmem:[%s9127 + $0x298] sm:$0xff]
    %v9212 = vld [vmem:[%s9127 + $0x2a0] sm:$0xff]
    %v9213 = vld [vmem:[%s9127 + $0x2a8] sm:$0xff]
    %v9214 = vld [vmem:[%s9127 + $0x2b0] sm:$0xff]
    %v9215 = vld [vmem:[%s9127 + $0x2b8] sm:$0xff]
    %v9216 = vld [vmem:[%s9127 + $0x2c0] sm:$0xff]
    %v9217 = vld [vmem:[%s9127 + $0x2c8] sm:$0xff]
    %v9218 = vld [vmem:[%s9127 + $0x2d0] sm:$0xff]
    %v9219 = vld [vmem:[%s9127 + $0x2d8] sm:$0xff]
    %v9220 = vld [vmem:[%s9127 + $0x2e0] sm:$0xff]
    %v9221 = vld [vmem:[%s9127 + $0x2e8] sm:$0xff]
    %v9222 = vld [vmem:[%s9127 + $0x2f0] sm:$0xff]
    %v9223 = vld [vmem:[%s9127 + $0x2f8] sm:$0xff]
    %v9224 = vld [vmem:[%s9127 + $0x300] sm:$0xff]
    %v9225 = vld [vmem:[%s9127 + $0x308] sm:$0xff]
    %v9226 = vld [vmem:[%s9127 + $0x310] sm:$0xff]
    %v9227 = vld [vmem:[%s9127 + $0x318] sm:$0xff]
    %v9228 = vld [vmem:[%s9127 + $0x320] sm:$0xff]
    %v9229 = vld [vmem:[%s9127 + $0x328] sm:$0xff]
    %v9230 = vld [vmem:[%s9127 + $0x330] sm:$0xff]
    %v9231 = vld [vmem:[%s9127 + $0x338] sm:$0xff]
    %v9232 = vld [vmem:[%s9127 + $0x340] sm:$0xff]
    %v9233 = vld [vmem:[%s9127 + $0x348] sm:$0xff]
    %v9234 = vld [vmem:[%s9127 + $0x350] sm:$0xff]
    %v9235 = vld [vmem:[%s9127 + $0x358] sm:$0xff]
    %v9236 = vld [vmem:[%s9127 + $0x360] sm:$0xff]
    %v9237 = vld [vmem:[%s9127 + $0x368] sm:$0xff]
    %v9238 = vld [vmem:[%s9127 + $0x370] sm:$0xff]
    %v9239 = vld [vmem:[%s9127 + $0x378] sm:$0xff]
    %v9240 = vld [vmem:[%s9127 + $0x380] sm:$0xff]
    %v9241 = vld [vmem:[%s9127 + $0x388] sm:$0xff]
    %v9242 = vld [vmem:[%s9127 + $0x390] sm:$0xff]
    %v9243 = vld [vmem:[%s9127 + $0x398] sm:$0xff]
    %v9244 = vld [vmem:[%s9127 + $0x3a0] sm:$0xff]
    %v9245 = vld [vmem:[%s9127 + $0x3a8] sm:$0xff]
    %v9246 = vld [vmem:[%s9127 + $0x3b0] sm:$0xff]
    %v9247 = vld [vmem:[%s9127 + $0x3b8] sm:$0xff]
    %v9248 = vld [vmem:[%s9127 + $0x3c0] sm:$0xff]
    %v9249 = vld [vmem:[%s9127 + $0x3c8] sm:$0xff]
    %v9250 = vld [vmem:[%s9127 + $0x3d0] sm:$0xff]
    %v9251 = vld [vmem:[%s9127 + $0x3d8] sm:$0xff]
    %v9252 = vld [vmem:[%s9127 + $0x3e0] sm:$0xff]
    %v9253 = vld [vmem:[%s9127 + $0x3e8] sm:$0xff]
    %v9254 = vld [vmem:[%s9127 + $0x3f0] sm:$0xff]
    %v9255 = vld [vmem:[%s9127 + $0x3f8] sm:$0xff]
    %s9256 = scalar_lea.vmem [#allocation7], 24
    %v9257 = vld [vmem:[%s9256] sm:$0xf]
    %v9259 = vlaneseq
    %v9260 = vshrl.u32 %v9259, 7
    %v9261 = vsub.s32 0, %v9260
    %v9262 = vrot.slane %v9257, %v9261
    %v9263 = vlaneseq
    %v9264 = vshrl.u32 %v9263, 7
    %v9265 = vsub.s32 1, %v9264
    %v9266 = vrot.slane %v9257, %v9265
    %v9267 = vlaneseq
    %v9268 = vshrl.u32 %v9267, 7
    %v9269 = vsub.s32 2, %v9268
    %v9270 = vrot.slane %v9257, %v9269
    %v9271 = vlaneseq
    %v9272 = vshrl.u32 %v9271, 7
    %v9273 = vsub.s32 3, %v9272
    %v9274 = vrot.slane %v9257, %v9273
    %v9407 = vunpack.c.l.b16 %v9128
    %v9408 = vunpack.c.h.b16 %v9128
    %v9409 = vunpack.c.l.b16 %v9129
    %v9410 = vunpack.c.h.b16 %v9129
    %v9411 = vunpack.c.l.b16 %v9130
    %v9412 = vunpack.c.h.b16 %v9130
    %v9413 = vunpack.c.l.b16 %v9131
    %v9414 = vunpack.c.h.b16 %v9131
    %v9415 = vunpack.c.l.b16 %v9132
    %v9416 = vunpack.c.h.b16 %v9132
    %v9417 = vunpack.c.l.b16 %v9133
    %v9418 = vunpack.c.h.b16 %v9133
    %v9419 = vunpack.c.l.b16 %v9134
    %v9420 = vunpack.c.h.b16 %v9134
    %v9421 = vunpack.c.l.b16 %v9135
    %v9422 = vunpack.c.h.b16 %v9135
    %v9423 = vunpack.c.l.b16 %v9136
    %v9424 = vunpack.c.h.b16 %v9136
    %v9425 = vunpack.c.l.b16 %v9137
    %v9426 = vunpack.c.h.b16 %v9137
    %v9427 = vunpack.c.l.b16 %v9138
    %v9428 = vunpack.c.h.b16 %v9138
    %v9429 = vunpack.c.l.b16 %v9139
    %v9430 = vunpack.c.h.b16 %v9139
    %v9431 = vunpack.c.l.b16 %v9140
    %v9432 = vunpack.c.h.b16 %v9140
    %v9433 = vunpack.c.l.b16 %v9141
    %v9434 = vunpack.c.h.b16 %v9141
    %v9435 = vunpack.c.l.b16 %v9142
    %v9436 = vunpack.c.h.b16 %v9142
    %v9437 = vunpack.c.l.b16 %v9143
    %v9438 = vunpack.c.h.b16 %v9143
    %v9439 = vunpack.c.l.b16 %v9144
    %v9440 = vunpack.c.h.b16 %v9144
    %v9441 = vunpack.c.l.b16 %v9145
    %v9442 = vunpack.c.h.b16 %v9145
    %v9443 = vunpack.c.l.b16 %v9146
    %v9444 = vunpack.c.h.b16 %v9146
    %v9445 = vunpack.c.l.b16 %v9147
    %v9446 = vunpack.c.h.b16 %v9147
    %v9447 = vunpack.c.l.b16 %v9148
    %v9448 = vunpack.c.h.b16 %v9148
    %v9449 = vunpack.c.l.b16 %v9149
    %v9450 = vunpack.c.h.b16 %v9149
    %v9451 = vunpack.c.l.b16 %v9150
    %v9452 = vunpack.c.h.b16 %v9150
    %v9453 = vunpack.c.l.b16 %v9151
    %v9454 = vunpack.c.h.b16 %v9151
    %v9455 = vunpack.c.l.b16 %v9152
    %v9456 = vunpack.c.h.b16 %v9152
    %v9457 = vunpack.c.l.b16 %v9153
    %v9458 = vunpack.c.h.b16 %v9153
    %v9459 = vunpack.c.l.b16 %v9154
    %v9460 = vunpack.c.h.b16 %v9154
    %v9461 = vunpack.c.l.b16 %v9155
    %v9462 = vunpack.c.h.b16 %v9155
    %v9463 = vunpack.c.l.b16 %v9156
    %v9464 = vunpack.c.h.b16 %v9156
    %v9465 = vunpack.c.l.b16 %v9157
    %v9466 = vunpack.c.h.b16 %v9157
    %v9467 = vunpack.c.l.b16 %v9158
    %v9468 = vunpack.c.h.b16 %v9158
    %v9469 = vunpack.c.l.b16 %v9159
    %v9470 = vunpack.c.h.b16 %v9159
    %v9471 = vunpack.c.l.b16 %v9160
    %v9472 = vunpack.c.h.b16 %v9160
    %v9473 = vunpack.c.l.b16 %v9161
    %v9474 = vunpack.c.h.b16 %v9161
    %v9475 = vunpack.c.l.b16 %v9162
    %v9476 = vunpack.c.h.b16 %v9162
    %v9477 = vunpack.c.l.b16 %v9163
    %v9478 = vunpack.c.h.b16 %v9163
    %v9479 = vunpack.c.l.b16 %v9164
    %v9480 = vunpack.c.h.b16 %v9164
    %v9481 = vunpack.c.l.b16 %v9165
    %v9482 = vunpack.c.h.b16 %v9165
    %v9483 = vunpack.c.l.b16 %v9166
    %v9484 = vunpack.c.h.b16 %v9166
    %v9485 = vunpack.c.l.b16 %v9167
    %v9486 = vunpack.c.h.b16 %v9167
    %v9487 = vunpack.c.l.b16 %v9168
    %v9488 = vunpack.c.h.b16 %v9168
    %v9489 = vunpack.c.l.b16 %v9169
    %v9490 = vunpack.c.h.b16 %v9169
    %v9491 = vunpack.c.l.b16 %v9170
    %v9492 = vunpack.c.h.b16 %v9170
    %v9493 = vunpack.c.l.b16 %v9171
    %v9494 = vunpack.c.h.b16 %v9171
    %v9495 = vunpack.c.l.b16 %v9172
    %v9496 = vunpack.c.h.b16 %v9172
    %v9497 = vunpack.c.l.b16 %v9173
    %v9498 = vunpack.c.h.b16 %v9173
    %v9499 = vunpack.c.l.b16 %v9174
    %v9500 = vunpack.c.h.b16 %v9174
    %v9501 = vunpack.c.l.b16 %v9175
    %v9502 = vunpack.c.h.b16 %v9175
    %v9503 = vunpack.c.l.b16 %v9176
    %v9504 = vunpack.c.h.b16 %v9176
    %v9505 = vunpack.c.l.b16 %v9177
    %v9506 = vunpack.c.h.b16 %v9177
    %v9507 = vunpack.c.l.b16 %v9178
    %v9508 = vunpack.c.h.b16 %v9178
    %v9509 = vunpack.c.l.b16 %v9179
    %v9510 = vunpack.c.h.b16 %v9179
    %v9511 = vunpack.c.l.b16 %v9180
    %v9512 = vunpack.c.h.b16 %v9180
    %v9513 = vunpack.c.l.b16 %v9181
    %v9514 = vunpack.c.h.b16 %v9181
    %v9515 = vunpack.c.l.b16 %v9182
    %v9516 = vunpack.c.h.b16 %v9182
    %v9517 = vunpack.c.l.b16 %v9183
    %v9518 = vunpack.c.h.b16 %v9183
    %v9519 = vunpack.c.l.b16 %v9184
    %v9520 = vunpack.c.h.b16 %v9184
    %v9521 = vunpack.c.l.b16 %v9185
    %v9522 = vunpack.c.h.b16 %v9185
    %v9523 = vunpack.c.l.b16 %v9186
    %v9524 = vunpack.c.h.b16 %v9186
    %v9525 = vunpack.c.l.b16 %v9187
    %v9526 = vunpack.c.h.b16 %v9187
    %v9527 = vunpack.c.l.b16 %v9188
    %v9528 = vunpack.c.h.b16 %v9188
    %v9529 = vunpack.c.l.b16 %v9189
    %v9530 = vunpack.c.h.b16 %v9189
    %v9531 = vunpack.c.l.b16 %v9190
    %v9532 = vunpack.c.h.b16 %v9190
    %v9533 = vunpack.c.l.b16 %v9191
    %v9534 = vunpack.c.h.b16 %v9191
    %v9535 = vunpack.c.l.b16 %v9192
    %v9536 = vunpack.c.h.b16 %v9192
    %v9537 = vunpack.c.l.b16 %v9193
    %v9538 = vunpack.c.h.b16 %v9193
    %v9539 = vunpack.c.l.b16 %v9194
    %v9540 = vunpack.c.h.b16 %v9194
    %v9541 = vunpack.c.l.b16 %v9195
    %v9542 = vunpack.c.h.b16 %v9195
    %v9543 = vunpack.c.l.b16 %v9196
    %v9544 = vunpack.c.h.b16 %v9196
    %v9545 = vunpack.c.l.b16 %v9197
    %v9546 = vunpack.c.h.b16 %v9197
    %v9547 = vunpack.c.l.b16 %v9198
    %v9548 = vunpack.c.h.b16 %v9198
    %v9549 = vunpack.c.l.b16 %v9199
    %v9550 = vunpack.c.h.b16 %v9199
    %v9551 = vunpack.c.l.b16 %v9200
    %v9552 = vunpack.c.h.b16 %v9200
    %v9553 = vunpack.c.l.b16 %v9201
    %v9554 = vunpack.c.h.b16 %v9201
    %v9555 = vunpack.c.l.b16 %v9202
    %v9556 = vunpack.c.h.b16 %v9202
    %v9557 = vunpack.c.l.b16 %v9203
    %v9558 = vunpack.c.h.b16 %v9203
    %v9559 = vunpack.c.l.b16 %v9204
    %v9560 = vunpack.c.h.b16 %v9204
    %v9561 = vunpack.c.l.b16 %v9205
    %v9562 = vunpack.c.h.b16 %v9205
    %v9563 = vunpack.c.l.b16 %v9206
    %v9564 = vunpack.c.h.b16 %v9206
    %v9565 = vunpack.c.l.b16 %v9207
    %v9566 = vunpack.c.h.b16 %v9207
    %v9567 = vunpack.c.l.b16 %v9208
    %v9568 = vunpack.c.h.b16 %v9208
    %v9569 = vunpack.c.l.b16 %v9209
    %v9570 = vunpack.c.h.b16 %v9209
    %v9571 = vunpack.c.l.b16 %v9210
    %v9572 = vunpack.c.h.b16 %v9210
    %v9573 = vunpack.c.l.b16 %v9211
    %v9574 = vunpack.c.h.b16 %v9211
    %v9575 = vunpack.c.l.b16 %v9212
    %v9576 = vunpack.c.h.b16 %v9212
    %v9577 = vunpack.c.l.b16 %v9213
    %v9578 = vunpack.c.h.b16 %v9213
    %v9579 = vunpack.c.l.b16 %v9214
    %v9580 = vunpack.c.h.b16 %v9214
    %v9581 = vunpack.c.l.b16 %v9215
    %v9582 = vunpack.c.h.b16 %v9215
    %v9583 = vunpack.c.l.b16 %v9216
    %v9584 = vunpack.c.h.b16 %v9216
    %v9585 = vunpack.c.l.b16 %v9217
    %v9586 = vunpack.c.h.b16 %v9217
    %v9587 = vunpack.c.l.b16 %v9218
    %v9588 = vunpack.c.h.b16 %v9218
    %v9589 = vunpack.c.l.b16 %v9219
    %v9590 = vunpack.c.h.b16 %v9219
    %v9591 = vunpack.c.l.b16 %v9220
    %v9592 = vunpack.c.h.b16 %v9220
    %v9593 = vunpack.c.l.b16 %v9221
    %v9594 = vunpack.c.h.b16 %v9221
    %v9595 = vunpack.c.l.b16 %v9222
    %v9596 = vunpack.c.h.b16 %v9222
    %v9597 = vunpack.c.l.b16 %v9223
    %v9598 = vunpack.c.h.b16 %v9223
    %v9599 = vunpack.c.l.b16 %v9224
    %v9600 = vunpack.c.h.b16 %v9224
    %v9601 = vunpack.c.l.b16 %v9225
    %v9602 = vunpack.c.h.b16 %v9225
    %v9603 = vunpack.c.l.b16 %v9226
    %v9604 = vunpack.c.h.b16 %v9226
    %v9605 = vunpack.c.l.b16 %v9227
    %v9606 = vunpack.c.h.b16 %v9227
    %v9607 = vunpack.c.l.b16 %v9228
    %v9608 = vunpack.c.h.b16 %v9228
    %v9609 = vunpack.c.l.b16 %v9229
    %v9610 = vunpack.c.h.b16 %v9229
    %v9611 = vunpack.c.l.b16 %v9230
    %v9612 = vunpack.c.h.b16 %v9230
    %v9613 = vunpack.c.l.b16 %v9231
    %v9614 = vunpack.c.h.b16 %v9231
    %v9615 = vunpack.c.l.b16 %v9232
    %v9616 = vunpack.c.h.b16 %v9232
    %v9617 = vunpack.c.l.b16 %v9233
    %v9618 = vunpack.c.h.b16 %v9233
    %v9619 = vunpack.c.l.b16 %v9234
    %v9620 = vunpack.c.h.b16 %v9234
    %v9621 = vunpack.c.l.b16 %v9235
    %v9622 = vunpack.c.h.b16 %v9235
    %v9623 = vunpack.c.l.b16 %v9236
    %v9624 = vunpack.c.h.b16 %v9236
    %v9625 = vunpack.c.l.b16 %v9237
    %v9626 = vunpack.c.h.b16 %v9237
    %v9627 = vunpack.c.l.b16 %v9238
    %v9628 = vunpack.c.h.b16 %v9238
    %v9629 = vunpack.c.l.b16 %v9239
    %v9630 = vunpack.c.h.b16 %v9239
    %v9631 = vunpack.c.l.b16 %v9240
    %v9632 = vunpack.c.h.b16 %v9240
    %v9633 = vunpack.c.l.b16 %v9241
    %v9634 = vunpack.c.h.b16 %v9241
    %v9635 = vunpack.c.l.b16 %v9242
    %v9636 = vunpack.c.h.b16 %v9242
    %v9637 = vunpack.c.l.b16 %v9243
    %v9638 = vunpack.c.h.b16 %v9243
    %v9639 = vunpack.c.l.b16 %v9244
    %v9640 = vunpack.c.h.b16 %v9244
    %v9641 = vunpack.c.l.b16 %v9245
    %v9642 = vunpack.c.h.b16 %v9245
    %v9643 = vunpack.c.l.b16 %v9246
    %v9644 = vunpack.c.h.b16 %v9246
    %v9645 = vunpack.c.l.b16 %v9247
    %v9646 = vunpack.c.h.b16 %v9247
    %v9647 = vunpack.c.l.b16 %v9248
    %v9648 = vunpack.c.h.b16 %v9248
    %v9649 = vunpack.c.l.b16 %v9249
    %v9650 = vunpack.c.h.b16 %v9249
    %v9651 = vunpack.c.l.b16 %v9250
    %v9652 = vunpack.c.h.b16 %v9250
    %v9653 = vunpack.c.l.b16 %v9251
    %v9654 = vunpack.c.h.b16 %v9251
    %v9655 = vunpack.c.l.b16 %v9252
    %v9656 = vunpack.c.h.b16 %v9252
    %v9657 = vunpack.c.l.b16 %v9253
    %v9658 = vunpack.c.h.b16 %v9253
    %v9659 = vunpack.c.l.b16 %v9254
    %v9660 = vunpack.c.h.b16 %v9254
    %v9661 = vunpack.c.l.b16 %v9255
    %v9662 = vunpack.c.h.b16 %v9255
    %v9663 = vpack.c.b16 %v9411, %v9407
    %v9664 = vpack.c.b16 %v9412, %v9408
    %v9665 = vpack.c.b16 %v9413, %v9409
    %v9666 = vpack.c.b16 %v9414, %v9410
    %v9667 = vpack.c.b16 %v9419, %v9415
    %v9668 = vpack.c.b16 %v9420, %v9416
    %v9669 = vpack.c.b16 %v9421, %v9417
    %v9670 = vpack.c.b16 %v9422, %v9418
    %v9671 = vpack.c.b16 %v9427, %v9423
    %v9672 = vpack.c.b16 %v9428, %v9424
    %v9673 = vpack.c.b16 %v9429, %v9425
    %v9674 = vpack.c.b16 %v9430, %v9426
    %v9675 = vpack.c.b16 %v9435, %v9431
    %v9676 = vpack.c.b16 %v9436, %v9432
    %v9677 = vpack.c.b16 %v9437, %v9433
    %v9678 = vpack.c.b16 %v9438, %v9434
    %v9679 = vpack.c.b16 %v9443, %v9439
    %v9680 = vpack.c.b16 %v9444, %v9440
    %v9681 = vpack.c.b16 %v9445, %v9441
    %v9682 = vpack.c.b16 %v9446, %v9442
    %v9683 = vpack.c.b16 %v9451, %v9447
    %v9684 = vpack.c.b16 %v9452, %v9448
    %v9685 = vpack.c.b16 %v9453, %v9449
    %v9686 = vpack.c.b16 %v9454, %v9450
    %v9687 = vpack.c.b16 %v9459, %v9455
    %v9688 = vpack.c.b16 %v9460, %v9456
    %v9689 = vpack.c.b16 %v9461, %v9457
    %v9690 = vpack.c.b16 %v9462, %v9458
    %v9691 = vpack.c.b16 %v9467, %v9463
    %v9692 = vpack.c.b16 %v9468, %v9464
    %v9693 = vpack.c.b16 %v9469, %v9465
    %v9694 = vpack.c.b16 %v9470, %v9466
    %v9695 = vpack.c.b16 %v9475, %v9471
    %v9696 = vpack.c.b16 %v9476, %v9472
    %v9697 = vpack.c.b16 %v9477, %v9473
    %v9698 = vpack.c.b16 %v9478, %v9474
    %v9699 = vpack.c.b16 %v9483, %v9479
    %v9700 = vpack.c.b16 %v9484, %v9480
    %v9701 = vpack.c.b16 %v9485, %v9481
    %v9702 = vpack.c.b16 %v9486, %v9482
    %v9703 = vpack.c.b16 %v9491, %v9487
    %v9704 = vpack.c.b16 %v9492, %v9488
    %v9705 = vpack.c.b16 %v9493, %v9489
    %v9706 = vpack.c.b16 %v9494, %v9490
    %v9707 = vpack.c.b16 %v9499, %v9495
    %v9708 = vpack.c.b16 %v9500, %v9496
    %v9709 = vpack.c.b16 %v9501, %v9497
    %v9710 = vpack.c.b16 %v9502, %v9498
    %v9711 = vpack.c.b16 %v9507, %v9503
    %v9712 = vpack.c.b16 %v9508, %v9504
    %v9713 = vpack.c.b16 %v9509, %v9505
    %v9714 = vpack.c.b16 %v9510, %v9506
    %v9715 = vpack.c.b16 %v9515, %v9511
    %v9716 = vpack.c.b16 %v9516, %v9512
    %v9717 = vpack.c.b16 %v9517, %v9513
    %v9718 = vpack.c.b16 %v9518, %v9514
    %v9719 = vpack.c.b16 %v9523, %v9519
    %v9720 = vpack.c.b16 %v9524, %v9520
    %v9721 = vpack.c.b16 %v9525, %v9521
    %v9722 = vpack.c.b16 %v9526, %v9522
    %v9723 = vpack.c.b16 %v9531, %v9527
    %v9724 = vpack.c.b16 %v9532, %v9528
    %v9725 = vpack.c.b16 %v9533, %v9529
    %v9726 = vpack.c.b16 %v9534, %v9530
    %v9727 = vpack.c.b16 %v9539, %v9535
    %v9728 = vpack.c.b16 %v9540, %v9536
    %v9729 = vpack.c.b16 %v9541, %v9537
    %v9730 = vpack.c.b16 %v9542, %v9538
    %v9731 = vpack.c.b16 %v9547, %v9543
    %v9732 = vpack.c.b16 %v9548, %v9544
    %v9733 = vpack.c.b16 %v9549, %v9545
    %v9734 = vpack.c.b16 %v9550, %v9546
    %v9735 = vpack.c.b16 %v9555, %v9551
    %v9736 = vpack.c.b16 %v9556, %v9552
    %v9737 = vpack.c.b16 %v9557, %v9553
    %v9738 = vpack.c.b16 %v9558, %v9554
    %v9739 = vpack.c.b16 %v9563, %v9559
    %v9740 = vpack.c.b16 %v9564, %v9560
    %v9741 = vpack.c.b16 %v9565, %v9561
    %v9742 = vpack.c.b16 %v9566, %v9562
    %v9743 = vpack.c.b16 %v9571, %v9567
    %v9744 = vpack.c.b16 %v9572, %v9568
    %v9745 = vpack.c.b16 %v9573, %v9569
    %v9746 = vpack.c.b16 %v9574, %v9570
    %v9747 = vpack.c.b16 %v9579, %v9575
    %v9748 = vpack.c.b16 %v9580, %v9576
    %v9749 = vpack.c.b16 %v9581, %v9577
    %v9750 = vpack.c.b16 %v9582, %v9578
    %v9751 = vpack.c.b16 %v9587, %v9583
    %v9752 = vpack.c.b16 %v9588, %v9584
    %v9753 = vpack.c.b16 %v9589, %v9585
    %v9754 = vpack.c.b16 %v9590, %v9586
    %v9755 = vpack.c.b16 %v9595, %v9591
    %v9756 = vpack.c.b16 %v9596, %v9592
    %v9757 = vpack.c.b16 %v9597, %v9593
    %v9758 = vpack.c.b16 %v9598, %v9594
    %v9759 = vpack.c.b16 %v9603, %v9599
    %v9760 = vpack.c.b16 %v9604, %v9600
    %v9761 = vpack.c.b16 %v9605, %v9601
    %v9762 = vpack.c.b16 %v9606, %v9602
    %v9763 = vpack.c.b16 %v9611, %v9607
    %v9764 = vpack.c.b16 %v9612, %v9608
    %v9765 = vpack.c.b16 %v9613, %v9609
    %v9766 = vpack.c.b16 %v9614, %v9610
    %v9767 = vpack.c.b16 %v9619, %v9615
    %v9768 = vpack.c.b16 %v9620, %v9616
    %v9769 = vpack.c.b16 %v9621, %v9617
    %v9770 = vpack.c.b16 %v9622, %v9618
    %v9771 = vpack.c.b16 %v9627, %v9623
    %v9772 = vpack.c.b16 %v9628, %v9624
    %v9773 = vpack.c.b16 %v9629, %v9625
    %v9774 = vpack.c.b16 %v9630, %v9626
    %v9775 = vpack.c.b16 %v9635, %v9631
    %v9776 = vpack.c.b16 %v9636, %v9632
    %v9777 = vpack.c.b16 %v9637, %v9633
    %v9778 = vpack.c.b16 %v9638, %v9634
    %v9779 = vpack.c.b16 %v9643, %v9639
    %v9780 = vpack.c.b16 %v9644, %v9640
    %v9781 = vpack.c.b16 %v9645, %v9641
    %v9782 = vpack.c.b16 %v9646, %v9642
    %v9783 = vpack.c.b16 %v9651, %v9647
    %v9784 = vpack.c.b16 %v9652, %v9648
    %v9785 = vpack.c.b16 %v9653, %v9649
    %v9786 = vpack.c.b16 %v9654, %v9650
    %v9787 = vpack.c.b16 %v9659, %v9655
    %v9788 = vpack.c.b16 %v9660, %v9656
    %v9789 = vpack.c.b16 %v9661, %v9657
    %v9790 = vpack.c.b16 %v9662, %v9658
    %9919 = vmatprep.subr.bf16.mxu0 %v9664
    %9920 = vmatpush1.bf16.msra.mxu0 %v9663
    %9921 = vmatprep.subr.bf16.mxu0 %v9668
    %9922 = vmatpush1.bf16.msra.mxu0 %v9667
    %9923 = vmatprep.subr.bf16.mxu0 %v9672
    %9924 = vmatpush1.bf16.msra.mxu0 %v9671
    %9925 = vmatprep.subr.bf16.mxu0 %v9676
    %9926 = vmatpush1.bf16.msra.mxu0 %v9675
    %9927 = vmatprep.subr.bf16.mxu0 %v9680
    %9928 = vmatpush1.bf16.msra.mxu0 %v9679
    %9929 = vmatprep.subr.bf16.mxu0 %v9684
    %9930 = vmatpush1.bf16.msra.mxu0 %v9683
    %9931 = vmatprep.subr.bf16.mxu0 %v9688
    %9932 = vmatpush1.bf16.msra.mxu0 %v9687
    %9933 = vmatprep.subr.bf16.mxu0 %v9692
    %9934 = vmatpush1.bf16.msra.mxu0 %v9691
    %9935 = vmatprep.subr.bf16.mxu0 %v9696
    %9936 = vmatpush1.bf16.msra.mxu0 %v9695
    %9937 = vmatprep.subr.bf16.mxu0 %v9700
    %9938 = vmatpush1.bf16.msra.mxu0 %v9699
    %9939 = vmatprep.subr.bf16.mxu0 %v9704
    %9940 = vmatpush1.bf16.msra.mxu0 %v9703
    %9941 = vmatprep.subr.bf16.mxu0 %v9708
    %9942 = vmatpush1.bf16.msra.mxu0 %v9707
    %9943 = vmatprep.subr.bf16.mxu0 %v9712
    %9944 = vmatpush1.bf16.msra.mxu0 %v9711
    %9945 = vmatprep.subr.bf16.mxu0 %v9716
    %9946 = vmatpush1.bf16.msra.mxu0 %v9715
    %9947 = vmatprep.subr.bf16.mxu0 %v9720
    %9948 = vmatpush1.bf16.msra.mxu0 %v9719
    %9949 = vmatprep.subr.bf16.mxu0 %v9724
    %9950 = vmatpush1.bf16.msra.mxu0 %v9723
    %9951 = vmatprep.mubr.bf16.mxu0 %v9096
    %9952 = vmatmul.mubr.bf16.gmra.mrb[0].mxu0 %v9095
    %v9953 = vpop.f32.mrb[0].mxu0
    %v9954 = vadd.f32 %v9262, %v9953
    %v9955 = vpop.f32.mrb[0].mxu0
    %v9956 = vadd.f32 %v9266, %v9955
    %v9957 = vpop.f32.mrb[0].mxu0
    %v9958 = vadd.f32 %v9262, %v9957
    %v9959 = vpop.f32.mrb[0].mxu0
    %v9960 = vadd.f32 %v9266, %v9959
    %9961 = vmatprep.mubr.bf16.mxu0 %v9100
    %9962 = vmatmul.mubr.bf16.gmra.mrb[0].mxu0 %v9099
    %v9963 = vpop.f32.mrb[0].mxu0
    %v9964 = vadd.f32 %v9262, %v9963
    %v9965 = vpop.f32.mrb[0].mxu0
    %v9966 = vadd.f32 %v9266, %v9965
    %v9967 = vpop.f32.mrb[0].mxu0
    %v9968 = vadd.f32 %v9262, %v9967
    %v9969 = vpop.f32.mrb[0].mxu0
    %v9970 = vadd.f32 %v9266, %v9969
    %9971 = vmatprep.mubr.bf16.mxu0 %v9104
    %9972 = vmatmul.mubr.bf16.gmra.mrb[0].mxu0 %v9103
    %v9973 = vpop.f32.mrb[0].mxu0
    %v9974 = vadd.f32 %v9262, %v9973
    %v9975 = vpop.f32.mrb[0].mxu0
    %v9976 = vadd.f32 %v9266, %v9975
    %v9977 = vpop.f32.mrb[0].mxu0
    %v9978 = vadd.f32 %v9262, %v9977
    %v9979 = vpop.f32.mrb[0].mxu0
    %v9980 = vadd.f32 %v9266, %v9979
    %9981 = vmatprep.mubr.bf16.mxu0 %v9108
    %9982 = vmatmul.mubr.bf16.gmra.mrb[0].mxu0 %v9107
    %v9983 = vpop.f32.mrb[0].mxu0
    %v9984 = vadd.f32 %v9262, %v9983
    %v9985 = vpop.f32.mrb[0].mxu0
    %v9986 = vadd.f32 %v9266, %v9985
    %v9987 = vpop.f32.mrb[0].mxu0
    %v9988 = vadd.f32 %v9262, %v9987
    %v9989 = vpop.f32.mrb[0].mxu0
    %v9990 = vadd.f32 %v9266, %v9989
    %9991 = vmatprep.mubr.bf16.mxu0 %v9112
    %9992 = vmatmul.mubr.bf16.gmra.mrb[0].mxu0 %v9111
    %v9993 = vpop.f32.mrb[0].mxu0
    %v9994 = vadd.f32 %v9262, %v9993
    %v9995 = vpop.f32.mrb[0].mxu0
    %v9996 = vadd.f32 %v9266, %v9995
    %v9997 = vpop.f32.mrb[0].mxu0
    %v9998 = vadd.f32 %v9262, %v9997
    %v9999 = vpop.f32.mrb[0].mxu0
    %v10000 = vadd.f32 %v9266, %v9999
    %10001 = vmatprep.mubr.bf16.mxu0 %v9116
    %10002 = vmatmul.mubr.bf16.gmra.mrb[0].mxu0 %v9115
    %v10003 = vpop.f32.mrb[0].mxu0
    %v10004 = vadd.f32 %v9262, %v10003
    %v10005 = vpop.f32.mrb[0].mxu0
    %v10006 = vadd.f32 %v9266, %v10005
    %v10007 = vpop.f32.mrb[0].mxu0
    %v10008 = vadd.f32 %v9262, %v10007
    %v10009 = vpop.f32.mrb[0].mxu0
    %v10010 = vadd.f32 %v9266, %v10009
    %10011 = vmatprep.mubr.bf16.mxu0 %v9120
    %10012 = vmatmul.mubr.bf16.gmra.mrb[0].mxu0 %v9119
    %v10013 = vpop.f32.mrb[0].mxu0
    %v10014 = vadd.f32 %v9262, %v10013
    %v10015 = vpop.f32.mrb[0].mxu0
    %v10016 = vadd.f32 %v9266, %v10015
    %v10017 = vpop.f32.mrb[0].mxu0
    %v10018 = vadd.f32 %v9262, %v10017
    %v10019 = vpop.f32.mrb[0].mxu0
    %v10020 = vadd.f32 %v9266, %v10019
    %10021 = vmatprep.mubr.bf16.mxu0 %v9124
    %10022 = vmatmul.mubr.bf16.gmra.mrb[0].mxu0 %v9123
    %v10023 = vpop.f32.mrb[0].mxu0
    %v10024 = vadd.f32 %v9262, %v10023
    %v10025 = vpop.f32.mrb[0].mxu0
    %v10026 = vadd.f32 %v9266, %v10025
    %v10027 = vpop.f32.mrb[0].mxu0
    %v10028 = vadd.f32 %v9262, %v10027
    %v10029 = vpop.f32.mrb[0].mxu0
    %v10030 = vadd.f32 %v9266, %v10029
    %10031 = vdwg.mxu0
    %10032 = vmatprep.subr.bf16.mxu0 %v9728
    %10033 = vmatpush1.bf16.msra.mxu0 %v9727
    %10034 = vmatprep.subr.bf16.mxu0 %v9732
    %10035 = vmatpush1.bf16.msra.mxu0 %v9731
    %10036 = vmatprep.subr.bf16.mxu0 %v9736
    %10037 = vmatpush1.bf16.msra.mxu0 %v9735
    %10038 = vmatprep.subr.bf16.mxu0 %v9740
    %10039 = vmatpush1.bf16.msra.mxu0 %v9739
    %10040 = vmatprep.subr.bf16.mxu0 %v9744
    %10041 = vmatpush1.bf16.msra.mxu0 %v9743
    %10042 = vmatprep.subr.bf16.mxu0 %v9748
    %10043 = vmatpush1.bf16.msra.mxu0 %v9747
    %10044 = vmatprep.subr.bf16.mxu0 %v9752
    %10045 = vmatpush1.bf16.msra.mxu0 %v9751
    %10046 = vmatprep.subr.bf16.mxu0 %v9756
    %10047 = vmatpush1.bf16.msra.mxu0 %v9755
    %10048 = vmatprep.subr.bf16.mxu0 %v9760
    %10049 = vmatpush1.bf16.msra.mxu0 %v9759
    %10050 = vmatprep.subr.bf16.mxu0 %v9764
    %10051 = vmatpush1.bf16.msra.mxu0 %v9763
    %10052 = vmatprep.subr.bf16.mxu0 %v9768
    %10053 = vmatpush1.bf16.msra.mxu0 %v9767
    %10054 = vmatprep.subr.bf16.mxu0 %v9772
    %10055 = vmatpush1.bf16.msra.mxu0 %v9771
    %10056 = vmatprep.subr.bf16.mxu0 %v9776
    %10057 = vmatpush1.bf16.msra.mxu0 %v9775
    %10058 = vmatprep.subr.bf16.mxu0 %v9780
    %10059 = vmatpush1.bf16.msra.mxu0 %v9779
    %10060 = vmatprep.subr.bf16.mxu0 %v9784
    %10061 = vmatpush1.bf16.msra.mxu0 %v9783
    %10062 = vmatprep.subr.bf16.mxu0 %v9788
    %10063 = vmatpush1.bf16.msra.mxu0 %v9787
    %10064 = vmatprep.mubr.bf16.mxu0 %v9098
    %10065 = vmatmul.mubr.bf16.gmra.mrb[0].mxu0 %v9097
    %v10066 = vpop.f32.mrb[0].mxu0
    %v10067 = vadd.f32 %v9954, %v10066
    %v10068 = vpop.f32.mrb[0].mxu0
    %v10069 = vadd.f32 %v9956, %v10068
    %v10070 = vpop.f32.mrb[0].mxu0
    %v10071 = vadd.f32 %v9958, %v10070
    %v10072 = vpop.f32.mrb[0].mxu0
    %v10073 = vadd.f32 %v9960, %v10072
    %10074 = vmatprep.mubr.bf16.mxu0 %v9102
    %10075 = vmatmul.mubr.bf16.gmra.mrb[0].mxu0 %v9101
    %v10076 = vpop.f32.mrb[0].mxu0
    %v10077 = vadd.f32 %v9964, %v10076
    %v10078 = vpop.f32.mrb[0].mxu0
    %v10079 = vadd.f32 %v9966, %v10078
    %v10080 = vpop.f32.mrb[0].mxu0
    %v10081 = vadd.f32 %v9968, %v10080
    %v10082 = vpop.f32.mrb[0].mxu0
    %v10083 = vadd.f32 %v9970, %v10082
    %10084 = vmatprep.mubr.bf16.mxu0 %v9106
    %10085 = vmatmul.mubr.bf16.gmra.mrb[0].mxu0 %v9105
    %v10086 = vpop.f32.mrb[0].mxu0
    %v10087 = vadd.f32 %v9974, %v10086
    %v10088 = vpop.f32.mrb[0].mxu0
    %v10089 = vadd.f32 %v9976, %v10088
    %v10090 = vpop.f32.mrb[0].mxu0
    %v10091 = vadd.f32 %v9978, %v10090
    %v10092 = vpop.f32.mrb[0].mxu0
    %v10093 = vadd.f32 %v9980, %v10092
    %10094 = vmatprep.mubr.bf16.mxu0 %v9110
    %10095 = vmatmul.mubr.bf16.gmra.mrb[0].mxu0 %v9109
    %v10096 = vpop.f32.mrb[0].mxu0
    %v10097 = vadd.f32 %v9984, %v10096
    %v10098 = vpop.f32.mrb[0].mxu0
    %v10099 = vadd.f32 %v9986, %v10098
    %v10100 = vpop.f32.mrb[0].mxu0
    %v10101 = vadd.f32 %v9988, %v10100
    %v10102 = vpop.f32.mrb[0].mxu0
    %v10103 = vadd.f32 %v9990, %v10102
    %10104 = vmatprep.mubr.bf16.mxu0 %v9114
    %10105 = vmatmul.mubr.bf16.gmra.mrb[0].mxu0 %v9113
    %v10106 = vpop.f32.mrb[0].mxu0
    %v10107 = vadd.f32 %v9994, %v10106
    %v10108 = vpop.f32.mrb[0].mxu0
    %v10109 = vadd.f32 %v9996, %v10108
    %v10110 = vpop.f32.mrb[0].mxu0
    %v10111 = vadd.f32 %v9998, %v10110
    %v10112 = vpop.f32.mrb[0].mxu0
    %v10113 = vadd.f32 %v10000, %v10112
    %10114 = vmatprep.mubr.bf16.mxu0 %v9118
    %10115 = vmatmul.mubr.bf16.gmra.mrb[0].mxu0 %v9117
    %v10116 = vpop.f32.mrb[0].mxu0
    %v10117 = vadd.f32 %v10004, %v10116
    %v10118 = vpop.f32.mrb[0].mxu0
    %v10119 = vadd.f32 %v10006, %v10118
    %v10120 = vpop.f32.mrb[0].mxu0
    %v10121 = vadd.f32 %v10008, %v10120
    %v10122 = vpop.f32.mrb[0].mxu0
    %v10123 = vadd.f32 %v10010, %v10122
    %10124 = vmatprep.mubr.bf16.mxu0 %v9122
    %10125 = vmatmul.mubr.bf16.gmra.mrb[0].mxu0 %v9121
    %v10126 = vpop.f32.mrb[0].mxu0
    %v10127 = vadd.f32 %v10014, %v10126
    %v10128 = vpop.f32.mrb[0].mxu0
    %v10129 = vadd.f32 %v10016, %v10128
    %v10130 = vpop.f32.mrb[0].mxu0
    %v10131 = vadd.f32 %v10018, %v10130
    %v10132 = vpop.f32.mrb[0].mxu0
    %v10133 = vadd.f32 %v10020, %v10132
    %10134 = vmatprep.mubr.bf16.mxu0 %v9126
    %10135 = vmatmul.mubr.bf16.gmra.mrb[0].mxu0 %v9125
    %v10136 = vpop.f32.mrb[0].mxu0
    %v10137 = vadd.f32 %v10024, %v10136
    %v10138 = vpop.f32.mrb[0].mxu0
    %v10139 = vadd.f32 %v10026, %v10138
    %v10140 = vpop.f32.mrb[0].mxu0
    %v10141 = vadd.f32 %v10028, %v10140
    %v10142 = vpop.f32.mrb[0].mxu0
    %v10143 = vadd.f32 %v10030, %v10142
    %10144 = vdwg.mxu0
    %10145 = vmatprep.subr.bf16.mxu0 %v9666
    %10146 = vmatpush1.bf16.msra.mxu0 %v9665
    %10147 = vmatprep.subr.bf16.mxu0 %v9670
    %10148 = vmatpush1.bf16.msra.mxu0 %v9669
    %10149 = vmatprep.subr.bf16.mxu0 %v9674
    %10150 = vmatpush1.bf16.msra.mxu0 %v9673
    %10151 = vmatprep.subr.bf16.mxu0 %v9678
    %10152 = vmatpush1.bf16.msra.mxu0 %v9677
    %10153 = vmatprep.subr.bf16.mxu0 %v9682
    %10154 = vmatpush1.bf16.msra.mxu0 %v9681
    %10155 = vmatprep.subr.bf16.mxu0 %v9686
    %10156 = vmatpush1.bf16.msra.mxu0 %v9685
    %10157 = vmatprep.subr.bf16.mxu0 %v9690
    %10158 = vmatpush1.bf16.msra.mxu0 %v9689
    %10159 = vmatprep.subr.bf16.mxu0 %v9694
    %10160 = vmatpush1.bf16.msra.mxu0 %v9693
    %10161 = vmatprep.subr.bf16.mxu0 %v9698
    %10162 = vmatpush1.bf16.msra.mxu0 %v9697
    %10163 = vmatprep.subr.bf16.mxu0 %v9702
    %10164 = vmatpush1.bf16.msra.mxu0 %v9701
    %10165 = vmatprep.subr.bf16.mxu0 %v9706
    %10166 = vmatpush1.bf16.msra.mxu0 %v9705
    %10167 = vmatprep.subr.bf16.mxu0 %v9710
    %10168 = vmatpush1.bf16.msra.mxu0 %v9709
    %10169 = vmatprep.subr.bf16.mxu0 %v9714
    %10170 = vmatpush1.bf16.msra.mxu0 %v9713
    %10171 = vmatprep.subr.bf16.mxu0 %v9718
    %10172 = vmatpush1.bf16.msra.mxu0 %v9717
    %10173 = vmatprep.subr.bf16.mxu0 %v9722
    %10174 = vmatpush1.bf16.msra.mxu0 %v9721
    %10175 = vmatprep.subr.bf16.mxu0 %v9726
    %10176 = vmatpush1.bf16.msra.mxu0 %v9725
    %10177 = vmatprep.mubr.bf16.mxu0 %v9096
    %10178 = vmatmul.mubr.bf16.gmra.mrb[0].mxu0 %v9095
    %v10179 = vpop.f32.mrb[0].mxu0
    %v10180 = vadd.f32 %v9270, %v10179
    %v10181 = vpop.f32.mrb[0].mxu0
    %v10182 = vadd.f32 %v9274, %v10181
    %v10183 = vpop.f32.mrb[0].mxu0
    %v10184 = vadd.f32 %v9270, %v10183
    %v10185 = vpop.f32.mrb[0].mxu0
    %v10186 = vadd.f32 %v9274, %v10185
    %10187 = vmatprep.mubr.bf16.mxu0 %v9100
    %10188 = vmatmul.mubr.bf16.gmra.mrb[0].mxu0 %v9099
    %v10189 = vpop.f32.mrb[0].mxu0
    %v10190 = vadd.f32 %v9270, %v10189
    %v10191 = vpop.f32.mrb[0].mxu0
    %v10192 = vadd.f32 %v9274, %v10191
    %v10193 = vpop.f32.mrb[0].mxu0
    %v10194 = vadd.f32 %v9270, %v10193
    %v10195 = vpop.f32.mrb[0].mxu0
    %v10196 = vadd.f32 %v9274, %v10195
    %10197 = vmatprep.mubr.bf16.mxu0 %v9104
    %10198 = vmatmul.mubr.bf16.gmra.mrb[0].mxu0 %v9103
    %v10199 = vpop.f32.mrb[0].mxu0
    %v10200 = vadd.f32 %v9270, %v10199
    %v10201 = vpop.f32.mrb[0].mxu0
    %v10202 = vadd.f32 %v9274, %v10201
    %v10203 = vpop.f32.mrb[0].mxu0
    %v10204 = vadd.f32 %v9270, %v10203
    %v10205 = vpop.f32.mrb[0].mxu0
    %v10206 = vadd.f32 %v9274, %v10205
    %10207 = vmatprep.mubr.bf16.mxu0 %v9108
    %10208 = vmatmul.mubr.bf16.gmra.mrb[0].mxu0 %v9107
    %v10209 = vpop.f32.mrb[0].mxu0
    %v10210 = vadd.f32 %v9270, %v10209
    %v10211 = vpop.f32.mrb[0].mxu0
    %v10212 = vadd.f32 %v9274, %v10211
    %v10213 = vpop.f32.mrb[0].mxu0
    %v10214 = vadd.f32 %v9270, %v10213
    %v10215 = vpop.f32.mrb[0].mxu0
    %v10216 = vadd.f32 %v9274, %v10215
    %10217 = vmatprep.mubr.bf16.mxu0 %v9112
    %10218 = vmatmul.mubr.bf16.gmra.mrb[0].mxu0 %v9111
    %v10219 = vpop.f32.mrb[0].mxu0
    %v10220 = vadd.f32 %v9270, %v10219
    %v10221 = vpop.f32.mrb[0].mxu0
    %v10222 = vadd.f32 %v9274, %v10221
    %v10223 = vpop.f32.mrb[0].mxu0
    %v10224 = vadd.f32 %v9270, %v10223
    %v10225 = vpop.f32.mrb[0].mxu0
    %v10226 = vadd.f32 %v9274, %v10225
    %10227 = vmatprep.mubr.bf16.mxu0 %v9116
    %10228 = vmatmul.mubr.bf16.gmra.mrb[0].mxu0 %v9115
    %v10229 = vpop.f32.mrb[0].mxu0
    %v10230 = vadd.f32 %v9270, %v10229
    %v10231 = vpop.f32.mrb[0].mxu0
    %v10232 = vadd.f32 %v9274, %v10231
    %v10233 = vpop.f32.mrb[0].mxu0
    %v10234 = vadd.f32 %v9270, %v10233
    %v10235 = vpop.f32.mrb[0].mxu0
    %v10236 = vadd.f32 %v9274, %v10235
    %10237 = vmatprep.mubr.bf16.mxu0 %v9120
    %10238 = vmatmul.mubr.bf16.gmra.mrb[0].mxu0 %v9119
    %v10239 = vpop.f32.mrb[0].mxu0
    %v10240 = vadd.f32 %v9270, %v10239
    %v10241 = vpop.f32.mrb[0].mxu0
    %v10242 = vadd.f32 %v9274, %v10241
    %v10243 = vpop.f32.mrb[0].mxu0
    %v10244 = vadd.f32 %v9270, %v10243
    %v10245 = vpop.f32.mrb[0].mxu0
    %v10246 = vadd.f32 %v9274, %v10245
    %10247 = vmatprep.mubr.bf16.mxu0 %v9124
    %10248 = vmatmul.mubr.bf16.gmra.mrb[0].mxu0 %v9123
    %v10249 = vpop.f32.mrb[0].mxu0
    %v10250 = vadd.f32 %v9270, %v10249
    %v10251 = vpop.f32.mrb[0].mxu0
    %v10252 = vadd.f32 %v9274, %v10251
    %v10253 = vpop.f32.mrb[0].mxu0
    %v10254 = vadd.f32 %v9270, %v10253
    %v10255 = vpop.f32.mrb[0].mxu0
    %v10256 = vadd.f32 %v9274, %v10255
    %10257 = vdwg.mxu0
    %10258 = vmatprep.subr.bf16.mxu0 %v9730
    %10259 = vmatpush1.bf16.msra.mxu0 %v9729
    %10260 = vmatprep.subr.bf16.mxu0 %v9734
    %10261 = vmatpush1.bf16.msra.mxu0 %v9733
    %10262 = vmatprep.subr.bf16.mxu0 %v9738
    %10263 = vmatpush1.bf16.msra.mxu0 %v9737
    %10264 = vmatprep.subr.bf16.mxu0 %v9742
    %10265 = vmatpush1.bf16.msra.mxu0 %v9741
    %10266 = vmatprep.subr.bf16.mxu0 %v9746
    %10267 = vmatpush1.bf16.msra.mxu0 %v9745
    %10268 = vmatprep.subr.bf16.mxu0 %v9750
    %10269 = vmatpush1.bf16.msra.mxu0 %v9749
    %10270 = vmatprep.subr.bf16.mxu0 %v9754
    %10271 = vmatpush1.bf16.msra.mxu0 %v9753
    %10272 = vmatprep.subr.bf16.mxu0 %v9758
    %10273 = vmatpush1.bf16.msra.mxu0 %v9757
    %10274 = vmatprep.subr.bf16.mxu0 %v9762
    %10275 = vmatpush1.bf16.msra.mxu0 %v9761
    %10276 = vmatprep.subr.bf16.mxu0 %v9766
    %10277 = vmatpush1.bf16.msra.mxu0 %v9765
    %10278 = vmatprep.subr.bf16.mxu0 %v9770
    %10279 = vmatpush1.bf16.msra.mxu0 %v9769
    %10280 = vmatprep.subr.bf16.mxu0 %v9774
    %10281 = vmatpush1.bf16.msra.mxu0 %v9773
    %10282 = vmatprep.subr.bf16.mxu0 %v9778
    %10283 = vmatpush1.bf16.msra.mxu0 %v9777
    %10284 = vmatprep.subr.bf16.mxu0 %v9782
    %10285 = vmatpush1.bf16.msra.mxu0 %v9781
    %10286 = vmatprep.subr.bf16.mxu0 %v9786
    %10287 = vmatpush1.bf16.msra.mxu0 %v9785
    %10288 = vmatprep.subr.bf16.mxu0 %v9790
    %10289 = vmatpush1.bf16.msra.mxu0 %v9789
    %10290 = vmatprep.mubr.bf16.mxu0 %v9098
    %10291 = vmatmul.mubr.bf16.gmra.mrb[0].mxu0 %v9097
    %v10292 = vpop.f32.mrb[0].mxu0
    %v10293 = vadd.f32 %v10180, %v10292
    %v10294 = vpop.f32.mrb[0].mxu0
    %v10295 = vadd.f32 %v10182, %v10294
    %v10296 = vpop.f32.mrb[0].mxu0
    %v10297 = vadd.f32 %v10184, %v10296
    %v10298 = vpop.f32.mrb[0].mxu0
    %v10299 = vadd.f32 %v10186, %v10298
    %10300 = vmatprep.mubr.bf16.mxu0 %v9102
    %10301 = vmatmul.mubr.bf16.gmra.mrb[0].mxu0 %v9101
    %v10302 = vpop.f32.mrb[0].mxu0
    %v10303 = vadd.f32 %v10190, %v10302
    %v10304 = vpop.f32.mrb[0].mxu0
    %v10305 = vadd.f32 %v10192, %v10304
    %v10306 = vpop.f32.mrb[0].mxu0
    %v10307 = vadd.f32 %v10194, %v10306
    %v10308 = vpop.f32.mrb[0].mxu0
    %v10309 = vadd.f32 %v10196, %v10308
    %10310 = vmatprep.mubr.bf16.mxu0 %v9106
    %10311 = vmatmul.mubr.bf16.gmra.mrb[0].mxu0 %v9105
    %v10312 = vpop.f32.mrb[0].mxu0
    %v10313 = vadd.f32 %v10200, %v10312
    %v10314 = vpop.f32.mrb[0].mxu0
    %v10315 = vadd.f32 %v10202, %v10314
    %v10316 = vpop.f32.mrb[0].mxu0
    %v10317 = vadd.f32 %v10204, %v10316
    %v10318 = vpop.f32.mrb[0].mxu0
    %v10319 = vadd.f32 %v10206, %v10318
    %10320 = vmatprep.mubr.bf16.mxu0 %v9110
    %10321 = vmatmul.mubr.bf16.gmra.mrb[0].mxu0 %v9109
    %v10322 = vpop.f32.mrb[0].mxu0
    %v10323 = vadd.f32 %v10210, %v10322
    %v10324 = vpop.f32.mrb[0].mxu0
    %v10325 = vadd.f32 %v10212, %v10324
    %v10326 = vpop.f32.mrb[0].mxu0
    %v10327 = vadd.f32 %v10214, %v10326
    %v10328 = vpop.f32.mrb[0].mxu0
    %v10329 = vadd.f32 %v10216, %v10328
    %10330 = vmatprep.mubr.bf16.mxu0 %v9114
    %10331 = vmatmul.mubr.bf16.gmra.mrb[0].mxu0 %v9113
    %v10332 = vpop.f32.mrb[0].mxu0
    %v10333 = vadd.f32 %v10220, %v10332
    %v10334 = vpop.f32.mrb[0].mxu0
    %v10335 = vadd.f32 %v10222, %v10334
    %v10336 = vpop.f32.mrb[0].mxu0
    %v10337 = vadd.f32 %v10224, %v10336
    %v10338 = vpop.f32.mrb[0].mxu0
    %v10339 = vadd.f32 %v10226, %v10338
    %10340 = vmatprep.mubr.bf16.mxu0 %v9118
    %10341 = vmatmul.mubr.bf16.gmra.mrb[0].mxu0 %v9117
    %v10342 = vpop.f32.mrb[0].mxu0
    %v10343 = vadd.f32 %v10230, %v10342
    %v10344 = vpop.f32.mrb[0].mxu0
    %v10345 = vadd.f32 %v10232, %v10344
    %v10346 = vpop.f32.mrb[0].mxu0
    %v10347 = vadd.f32 %v10234, %v10346
    %v10348 = vpop.f32.mrb[0].mxu0
    %v10349 = vadd.f32 %v10236, %v10348
    %10350 = vmatprep.mubr.bf16.mxu0 %v9122
    %10351 = vmatmul.mubr.bf16.gmra.mrb[0].mxu0 %v9121
    %v10352 = vpop.f32.mrb[0].mxu0
    %v10353 = vadd.f32 %v10240, %v10352
    %v10354 = vpop.f32.mrb[0].mxu0
    %v10355 = vadd.f32 %v10242, %v10354
    %v10356 = vpop.f32.mrb[0].mxu0
    %v10357 = vadd.f32 %v10244, %v10356
    %v10358 = vpop.f32.mrb[0].mxu0
    %v10359 = vadd.f32 %v10246, %v10358
    %10360 = vmatprep.mubr.bf16.mxu0 %v9126
    %10361 = vmatmul.mubr.bf16.gmra.mrb[0].mxu0 %v9125
    %v10362 = vpop.f32.mrb[0].mxu0
    %v10363 = vadd.f32 %v10250, %v10362
    %v10364 = vpop.f32.mrb[0].mxu0
    %v10365 = vadd.f32 %v10252, %v10364
    %v10366 = vpop.f32.mrb[0].mxu0
    %v10367 = vadd.f32 %v10254, %v10366
    %v10368 = vpop.f32.mrb[0].mxu0
    %v10369 = vadd.f32 %v10256, %v10368
    %10370 = vdwg.mxu0
    %v10371 = vmax.f32 %v10067, 0.0
    %v10372 = vmax.f32 %v10069, 0.0
    %v10373 = vmax.f32 %v10293, 0.0
    %v10374 = vmax.f32 %v10295, 0.0
    %v10375 = vmax.f32 %v10071, 0.0
    %v10376 = vmax.f32 %v10073, 0.0
    %v10377 = vmax.f32 %v10297, 0.0
    %v10378 = vmax.f32 %v10299, 0.0
    %v10379 = vmax.f32 %v10077, 0.0
    %v10380 = vmax.f32 %v10079, 0.0
    %v10381 = vmax.f32 %v10303, 0.0
    %v10382 = vmax.f32 %v10305, 0.0
    %v10383 = vmax.f32 %v10081, 0.0
    %v10384 = vmax.f32 %v10083, 0.0
    %v10385 = vmax.f32 %v10307, 0.0
    %v10386 = vmax.f32 %v10309, 0.0
    %v10387 = vmax.f32 %v10087, 0.0
    %v10388 = vmax.f32 %v10089, 0.0
    %v10389 = vmax.f32 %v10313, 0.0
    %v10390 = vmax.f32 %v10315, 0.0
    %v10391 = vmax.f32 %v10091, 0.0
    %v10392 = vmax.f32 %v10093, 0.0
    %v10393 = vmax.f32 %v10317, 0.0
    %v10394 = vmax.f32 %v10319, 0.0
    %v10395 = vmax.f32 %v10097, 0.0
    %v10396 = vmax.f32 %v10099, 0.0
    %v10397 = vmax.f32 %v10323, 0.0
    %v10398 = vmax.f32 %v10325, 0.0
    %v10399 = vmax.f32 %v10101, 0.0
    %v10400 = vmax.f32 %v10103, 0.0
    %v10401 = vmax.f32 %v10327, 0.0
    %v10402 = vmax.f32 %v10329, 0.0
    %v10403 = vmax.f32 %v10107, 0.0
    %v10404 = vmax.f32 %v10109, 0.0
    %v10405 = vmax.f32 %v10333, 0.0
    %v10406 = vmax.f32 %v10335, 0.0
    %v10407 = vmax.f32 %v10111, 0.0
    %v10408 = vmax.f32 %v10113, 0.0
    %v10409 = vmax.f32 %v10337, 0.0
    %v10410 = vmax.f32 %v10339, 0.0
    %v10411 = vmax.f32 %v10117, 0.0
    %v10412 = vmax.f32 %v10119, 0.0
    %v10413 = vmax.f32 %v10343, 0.0
    %v10414 = vmax.f32 %v10345, 0.0
    %v10415 = vmax.f32 %v10121, 0.0
    %v10416 = vmax.f32 %v10123, 0.0
    %v10417 = vmax.f32 %v10347, 0.0
    %v10418 = vmax.f32 %v10349, 0.0
    %v10419 = vmax.f32 %v10127, 0.0
    %v10420 = vmax.f32 %v10129, 0.0
    %v10421 = vmax.f32 %v10353, 0.0
    %v10422 = vmax.f32 %v10355, 0.0
    %v10423 = vmax.f32 %v10131, 0.0
    %v10424 = vmax.f32 %v10133, 0.0
    %v10425 = vmax.f32 %v10357, 0.0
    %v10426 = vmax.f32 %v10359, 0.0
    %v10427 = vmax.f32 %v10137, 0.0
    %v10428 = vmax.f32 %v10139, 0.0
    %v10429 = vmax.f32 %v10363, 0.0
    %v10430 = vmax.f32 %v10365, 0.0
    %v10431 = vmax.f32 %v10141, 0.0
    %v10432 = vmax.f32 %v10143, 0.0
    %v10433 = vmax.f32 %v10367, 0.0
    %v10434 = vmax.f32 %v10369, 0.0
    %v10435 = vadd.f32 %v9031, %v10371
    %v10436 = vadd.f32 %v9032, %v10372
    %v10437 = vadd.f32 %v9033, %v10373
    %v10438 = vadd.f32 %v9034, %v10374
    %v10439 = vadd.f32 %v9035, %v10375
    %v10440 = vadd.f32 %v9036, %v10376
    %v10441 = vadd.f32 %v9037, %v10377
    %v10442 = vadd.f32 %v9038, %v10378
    %v10443 = vadd.f32 %v9039, %v10379
    %v10444 = vadd.f32 %v9040, %v10380
    %v10445 = vadd.f32 %v9041, %v10381
    %v10446 = vadd.f32 %v9042, %v10382
    %v10447 = vadd.f32 %v9043, %v10383
    %v10448 = vadd.f32 %v9044, %v10384
    %v10449 = vadd.f32 %v9045, %v10385
    %v10450 = vadd.f32 %v9046, %v10386
    %v10451 = vadd.f32 %v9047, %v10387
    %v10452 = vadd.f32 %v9048, %v10388
    %v10453 = vadd.f32 %v9049, %v10389
    %v10454 = vadd.f32 %v9050, %v10390
    %v10455 = vadd.f32 %v9051, %v10391
    %v10456 = vadd.f32 %v9052, %v10392
    %v10457 = vadd.f32 %v9053, %v10393
    %v10458 = vadd.f32 %v9054, %v10394
    %v10459 = vadd.f32 %v9055, %v10395
    %v10460 = vadd.f32 %v9056, %v10396
    %v10461 = vadd.f32 %v9057, %v10397
    %v10462 = vadd.f32 %v9058, %v10398
    %v10463 = vadd.f32 %v9059, %v10399
    %v10464 = vadd.f32 %v9060, %v10400
    %v10465 = vadd.f32 %v9061, %v10401
    %v10466 = vadd.f32 %v9062, %v10402
    %v10467 = vadd.f32 %v9063, %v10403
    %v10468 = vadd.f32 %v9064, %v10404
    %v10469 = vadd.f32 %v9065, %v10405
    %v10470 = vadd.f32 %v9066, %v10406
    %v10471 = vadd.f32 %v9067, %v10407
    %v10472 = vadd.f32 %v9068, %v10408
    %v10473 = vadd.f32 %v9069, %v10409
    %v10474 = vadd.f32 %v9070, %v10410
    %v10475 = vadd.f32 %v9071, %v10411
    %v10476 = vadd.f32 %v9072, %v10412
    %v10477 = vadd.f32 %v9073, %v10413
    %v10478 = vadd.f32 %v9074, %v10414
    %v10479 = vadd.f32 %v9075, %v10415
    %v10480 = vadd.f32 %v9076, %v10416
    %v10481 = vadd.f32 %v9077, %v10417
    %v10482 = vadd.f32 %v9078, %v10418
    %v10483 = vadd.f32 %v9079, %v10419
    %v10484 = vadd.f32 %v9080, %v10420
    %v10485 = vadd.f32 %v9081, %v10421
    %v10486 = vadd.f32 %v9082, %v10422
    %v10487 = vadd.f32 %v9083, %v10423
    %v10488 = vadd.f32 %v9084, %v10424
    %v10489 = vadd.f32 %v9085, %v10425
    %v10490 = vadd.f32 %v9086, %v10426
    %v10491 = vadd.f32 %v9087, %v10427
    %v10492 = vadd.f32 %v9088, %v10428
    %v10493 = vadd.f32 %v9089, %v10429
    %v10494 = vadd.f32 %v9090, %v10430
    %v10495 = vadd.f32 %v9091, %v10431
    %v10496 = vadd.f32 %v9092, %v10432
    %v10497 = vadd.f32 %v9093, %v10433
    %v10498 = vadd.f32 %v9094, %v10434
    %v10499 = vpack.c.bf16 %v10439, %v10435
    %v10500 = vpack.c.bf16 %v10440, %v10436
    %v10501 = vpack.c.bf16 %v10441, %v10437
    %v10502 = vpack.c.bf16 %v10442, %v10438
    %v10503 = vpack.c.bf16 %v10447, %v10443
    %v10504 = vpack.c.bf16 %v10448, %v10444
    %v10505 = vpack.c.bf16 %v10449, %v10445
    %v10506 = vpack.c.bf16 %v10450, %v10446
    %v10507 = vpack.c.bf16 %v10455, %v10451
    %v10508 = vpack.c.bf16 %v10456, %v10452
    %v10509 = vpack.c.bf16 %v10457, %v10453
    %v10510 = vpack.c.bf16 %v10458, %v10454
    %v10511 = vpack.c.bf16 %v10463, %v10459
    %v10512 = vpack.c.bf16 %v10464, %v10460
    %v10513 = vpack.c.bf16 %v10465, %v10461
    %v10514 = vpack.c.bf16 %v10466, %v10462
    %v10515 = vpack.c.bf16 %v10471, %v10467
    %v10516 = vpack.c.bf16 %v10472, %v10468
    %v10517 = vpack.c.bf16 %v10473, %v10469
    %v10518 = vpack.c.bf16 %v10474, %v10470
    %v10519 = vpack.c.bf16 %v10479, %v10475
    %v10520 = vpack.c.bf16 %v10480, %v10476
    %v10521 = vpack.c.bf16 %v10481, %v10477
    %v10522 = vpack.c.bf16 %v10482, %v10478
    %v10523 = vpack.c.bf16 %v10487, %v10483
    %v10524 = vpack.c.bf16 %v10488, %v10484
    %v10525 = vpack.c.bf16 %v10489, %v10485
    %v10526 = vpack.c.bf16 %v10490, %v10486
    %v10527 = vpack.c.bf16 %v10495, %v10491
    %v10528 = vpack.c.bf16 %v10496, %v10492
    %v10529 = vpack.c.bf16 %v10497, %v10493
    %v10530 = vpack.c.bf16 %v10498, %v10494
    %s10531 = scalar_lea.vmem [#allocation6], 7168
    %v10532 = vld [vmem:[%s10531] sm:$0xff]
    %v10533 = vld [vmem:[%s10531 + $0x8] sm:$0xff]
    %v10534 = vld [vmem:[%s10531 + $0x10] sm:$0xff]
    %v10535 = vld [vmem:[%s10531 + $0x18] sm:$0xff]
    %v10536 = vld [vmem:[%s10531 + $0x20] sm:$0xff]
    %v10537 = vld [vmem:[%s10531 + $0x28] sm:$0xff]
    %v10538 = vld [vmem:[%s10531 + $0x30] sm:$0xff]
    %v10539 = vld [vmem:[%s10531 + $0x38] sm:$0xff]
    %v10540 = vld [vmem:[%s10531 + $0x40] sm:$0xff]
    %v10541 = vld [vmem:[%s10531 + $0x48] sm:$0xff]
    %v10542 = vld [vmem:[%s10531 + $0x50] sm:$0xff]
    %v10543 = vld [vmem:[%s10531 + $0x58] sm:$0xff]
    %v10544 = vld [vmem:[%s10531 + $0x60] sm:$0xff]
    %v10545 = vld [vmem:[%s10531 + $0x68] sm:$0xff]
    %v10546 = vld [vmem:[%s10531 + $0x70] sm:$0xff]
    %v10547 = vld [vmem:[%s10531 + $0x78] sm:$0xff]
    %v10548 = vld [vmem:[%s10531 + $0x80] sm:$0xff]
    %v10549 = vld [vmem:[%s10531 + $0x88] sm:$0xff]
    %v10550 = vld [vmem:[%s10531 + $0x90] sm:$0xff]
    %v10551 = vld [vmem:[%s10531 + $0x98] sm:$0xff]
    %v10552 = vld [vmem:[%s10531 + $0xa0] sm:$0xff]
    %v10553 = vld [vmem:[%s10531 + $0xa8] sm:$0xff]
    %v10554 = vld [vmem:[%s10531 + $0xb0] sm:$0xff]
    %v10555 = vld [vmem:[%s10531 + $0xb8] sm:$0xff]
    %v10556 = vld [vmem:[%s10531 + $0xc0] sm:$0xff]
    %v10557 = vld [vmem:[%s10531 + $0xc8] sm:$0xff]
    %v10558 = vld [vmem:[%s10531 + $0xd0] sm:$0xff]
    %v10559 = vld [vmem:[%s10531 + $0xd8] sm:$0xff]
    %v10560 = vld [vmem:[%s10531 + $0xe0] sm:$0xff]
    %v10561 = vld [vmem:[%s10531 + $0xe8] sm:$0xff]
    %v10562 = vld [vmem:[%s10531 + $0xf0] sm:$0xff]
    %v10563 = vld [vmem:[%s10531 + $0xf8] sm:$0xff]
    %v10564 = vld [vmem:[%s10531 + $0x100] sm:$0xff]
    %v10565 = vld [vmem:[%s10531 + $0x108] sm:$0xff]
    %v10566 = vld [vmem:[%s10531 + $0x110] sm:$0xff]
    %v10567 = vld [vmem:[%s10531 + $0x118] sm:$0xff]
    %v10568 = vld [vmem:[%s10531 + $0x120] sm:$0xff]
    %v10569 = vld [vmem:[%s10531 + $0x128] sm:$0xff]
    %v10570 = vld [vmem:[%s10531 + $0x130] sm:$0xff]
    %v10571 = vld [vmem:[%s10531 + $0x138] sm:$0xff]
    %v10572 = vld [vmem:[%s10531 + $0x140] sm:$0xff]
    %v10573 = vld [vmem:[%s10531 + $0x148] sm:$0xff]
    %v10574 = vld [vmem:[%s10531 + $0x150] sm:$0xff]
    %v10575 = vld [vmem:[%s10531 + $0x158] sm:$0xff]
    %v10576 = vld [vmem:[%s10531 + $0x160] sm:$0xff]
    %v10577 = vld [vmem:[%s10531 + $0x168] sm:$0xff]
    %v10578 = vld [vmem:[%s10531 + $0x170] sm:$0xff]
    %v10579 = vld [vmem:[%s10531 + $0x178] sm:$0xff]
    %v10580 = vld [vmem:[%s10531 + $0x180] sm:$0xff]
    %v10581 = vld [vmem:[%s10531 + $0x188] sm:$0xff]
    %v10582 = vld [vmem:[%s10531 + $0x190] sm:$0xff]
    %v10583 = vld [vmem:[%s10531 + $0x198] sm:$0xff]
    %v10584 = vld [vmem:[%s10531 + $0x1a0] sm:$0xff]
    %v10585 = vld [vmem:[%s10531 + $0x1a8] sm:$0xff]
    %v10586 = vld [vmem:[%s10531 + $0x1b0] sm:$0xff]
    %v10587 = vld [vmem:[%s10531 + $0x1b8] sm:$0xff]
    %v10588 = vld [vmem:[%s10531 + $0x1c0] sm:$0xff]
    %v10589 = vld [vmem:[%s10531 + $0x1c8] sm:$0xff]
    %v10590 = vld [vmem:[%s10531 + $0x1d0] sm:$0xff]
    %v10591 = vld [vmem:[%s10531 + $0x1d8] sm:$0xff]
    %v10592 = vld [vmem:[%s10531 + $0x1e0] sm:$0xff]
    %v10593 = vld [vmem:[%s10531 + $0x1e8] sm:$0xff]
    %v10594 = vld [vmem:[%s10531 + $0x1f0] sm:$0xff]
    %v10595 = vld [vmem:[%s10531 + $0x1f8] sm:$0xff]
    %v10596 = vld [vmem:[%s10531 + $0x200] sm:$0xff]
    %v10597 = vld [vmem:[%s10531 + $0x208] sm:$0xff]
    %v10598 = vld [vmem:[%s10531 + $0x210] sm:$0xff]
    %v10599 = vld [vmem:[%s10531 + $0x218] sm:$0xff]
    %v10600 = vld [vmem:[%s10531 + $0x220] sm:$0xff]
    %v10601 = vld [vmem:[%s10531 + $0x228] sm:$0xff]
    %v10602 = vld [vmem:[%s10531 + $0x230] sm:$0xff]
    %v10603 = vld [vmem:[%s10531 + $0x238] sm:$0xff]
    %v10604 = vld [vmem:[%s10531 + $0x240] sm:$0xff]
    %v10605 = vld [vmem:[%s10531 + $0x248] sm:$0xff]
    %v10606 = vld [vmem:[%s10531 + $0x250] sm:$0xff]
    %v10607 = vld [vmem:[%s10531 + $0x258] sm:$0xff]
    %v10608 = vld [vmem:[%s10531 + $0x260] sm:$0xff]
    %v10609 = vld [vmem:[%s10531 + $0x268] sm:$0xff]
    %v10610 = vld [vmem:[%s10531 + $0x270] sm:$0xff]
    %v10611 = vld [vmem:[%s10531 + $0x278] sm:$0xff]
    %v10612 = vld [vmem:[%s10531 + $0x280] sm:$0xff]
    %v10613 = vld [vmem:[%s10531 + $0x288] sm:$0xff]
    %v10614 = vld [vmem:[%s10531 + $0x290] sm:$0xff]
    %v10615 = vld [vmem:[%s10531 + $0x298] sm:$0xff]
    %v10616 = vld [vmem:[%s10531 + $0x2a0] sm:$0xff]
    %v10617 = vld [vmem:[%s10531 + $0x2a8] sm:$0xff]
    %v10618 = vld [vmem:[%s10531 + $0x2b0] sm:$0xff]
    %v10619 = vld [vmem:[%s10531 + $0x2b8] sm:$0xff]
    %v10620 = vld [vmem:[%s10531 + $0x2c0] sm:$0xff]
    %v10621 = vld [vmem:[%s10531 + $0x2c8] sm:$0xff]
    %v10622 = vld [vmem:[%s10531 + $0x2d0] sm:$0xff]
    %v10623 = vld [vmem:[%s10531 + $0x2d8] sm:$0xff]
    %v10624 = vld [vmem:[%s10531 + $0x2e0] sm:$0xff]
    %v10625 = vld [vmem:[%s10531 + $0x2e8] sm:$0xff]
    %v10626 = vld [vmem:[%s10531 + $0x2f0] sm:$0xff]
    %v10627 = vld [vmem:[%s10531 + $0x2f8] sm:$0xff]
    %v10628 = vld [vmem:[%s10531 + $0x300] sm:$0xff]
    %v10629 = vld [vmem:[%s10531 + $0x308] sm:$0xff]
    %v10630 = vld [vmem:[%s10531 + $0x310] sm:$0xff]
    %v10631 = vld [vmem:[%s10531 + $0x318] sm:$0xff]
    %v10632 = vld [vmem:[%s10531 + $0x320] sm:$0xff]
    %v10633 = vld [vmem:[%s10531 + $0x328] sm:$0xff]
    %v10634 = vld [vmem:[%s10531 + $0x330] sm:$0xff]
    %v10635 = vld [vmem:[%s10531 + $0x338] sm:$0xff]
    %v10636 = vld [vmem:[%s10531 + $0x340] sm:$0xff]
    %v10637 = vld [vmem:[%s10531 + $0x348] sm:$0xff]
    %v10638 = vld [vmem:[%s10531 + $0x350] sm:$0xff]
    %v10639 = vld [vmem:[%s10531 + $0x358] sm:$0xff]
    %v10640 = vld [vmem:[%s10531 + $0x360] sm:$0xff]
    %v10641 = vld [vmem:[%s10531 + $0x368] sm:$0xff]
    %v10642 = vld [vmem:[%s10531 + $0x370] sm:$0xff]
    %v10643 = vld [vmem:[%s10531 + $0x378] sm:$0xff]
    %v10644 = vld [vmem:[%s10531 + $0x380] sm:$0xff]
    %v10645 = vld [vmem:[%s10531 + $0x388] sm:$0xff]
    %v10646 = vld [vmem:[%s10531 + $0x390] sm:$0xff]
    %v10647 = vld [vmem:[%s10531 + $0x398] sm:$0xff]
    %v10648 = vld [vmem:[%s10531 + $0x3a0] sm:$0xff]
    %v10649 = vld [vmem:[%s10531 + $0x3a8] sm:$0xff]
    %v10650 = vld [vmem:[%s10531 + $0x3b0] sm:$0xff]
    %v10651 = vld [vmem:[%s10531 + $0x3b8] sm:$0xff]
    %v10652 = vld [vmem:[%s10531 + $0x3c0] sm:$0xff]
    %v10653 = vld [vmem:[%s10531 + $0x3c8] sm:$0xff]
    %v10654 = vld [vmem:[%s10531 + $0x3d0] sm:$0xff]
    %v10655 = vld [vmem:[%s10531 + $0x3d8] sm:$0xff]
    %v10656 = vld [vmem:[%s10531 + $0x3e0] sm:$0xff]
    %v10657 = vld [vmem:[%s10531 + $0x3e8] sm:$0xff]
    %v10658 = vld [vmem:[%s10531 + $0x3f0] sm:$0xff]
    %v10659 = vld [vmem:[%s10531 + $0x3f8] sm:$0xff]
    %s10660 = scalar_lea.vmem [#allocation7], 28
    %v10661 = vld [vmem:[%s10660] sm:$0xf]
    %v10663 = vlaneseq
    %v10664 = vshrl.u32 %v10663, 7
    %v10665 = vsub.s32 0, %v10664
    %v10666 = vrot.slane %v10661, %v10665
    %v10667 = vlaneseq
    %v10668 = vshrl.u32 %v10667, 7
    %v10669 = vsub.s32 1, %v10668
    %v10670 = vrot.slane %v10661, %v10669
    %v10671 = vlaneseq
    %v10672 = vshrl.u32 %v10671, 7
    %v10673 = vsub.s32 2, %v10672
    %v10674 = vrot.slane %v10661, %v10673
    %v10675 = vlaneseq
    %v10676 = vshrl.u32 %v10675, 7
    %v10677 = vsub.s32 3, %v10676
    %v10678 = vrot.slane %v10661, %v10677
    %v10811 = vunpack.c.l.b16 %v10532
    %v10812 = vunpack.c.h.b16 %v10532
    %v10813 = vunpack.c.l.b16 %v10533
    %v10814 = vunpack.c.h.b16 %v10533
    %v10815 = vunpack.c.l.b16 %v10534
    %v10816 = vunpack.c.h.b16 %v10534
    %v10817 = vunpack.c.l.b16 %v10535
    %v10818 = vunpack.c.h.b16 %v10535
    %v10819 = vunpack.c.l.b16 %v10536
    %v10820 = vunpack.c.h.b16 %v10536
    %v10821 = vunpack.c.l.b16 %v10537
    %v10822 = vunpack.c.h.b16 %v10537
    %v10823 = vunpack.c.l.b16 %v10538
    %v10824 = vunpack.c.h.b16 %v10538
    %v10825 = vunpack.c.l.b16 %v10539
    %v10826 = vunpack.c.h.b16 %v10539
    %v10827 = vunpack.c.l.b16 %v10540
    %v10828 = vunpack.c.h.b16 %v10540
    %v10829 = vunpack.c.l.b16 %v10541
    %v10830 = vunpack.c.h.b16 %v10541
    %v10831 = vunpack.c.l.b16 %v10542
    %v10832 = vunpack.c.h.b16 %v10542
    %v10833 = vunpack.c.l.b16 %v10543
    %v10834 = vunpack.c.h.b16 %v10543
    %v10835 = vunpack.c.l.b16 %v10544
    %v10836 = vunpack.c.h.b16 %v10544
    %v10837 = vunpack.c.l.b16 %v10545
    %v10838 = vunpack.c.h.b16 %v10545
    %v10839 = vunpack.c.l.b16 %v10546
    %v10840 = vunpack.c.h.b16 %v10546
    %v10841 = vunpack.c.l.b16 %v10547
    %v10842 = vunpack.c.h.b16 %v10547
    %v10843 = vunpack.c.l.b16 %v10548
    %v10844 = vunpack.c.h.b16 %v10548
    %v10845 = vunpack.c.l.b16 %v10549
    %v10846 = vunpack.c.h.b16 %v10549
    %v10847 = vunpack.c.l.b16 %v10550
    %v10848 = vunpack.c.h.b16 %v10550
    %v10849 = vunpack.c.l.b16 %v10551
    %v10850 = vunpack.c.h.b16 %v10551
    %v10851 = vunpack.c.l.b16 %v10552
    %v10852 = vunpack.c.h.b16 %v10552
    %v10853 = vunpack.c.l.b16 %v10553
    %v10854 = vunpack.c.h.b16 %v10553
    %v10855 = vunpack.c.l.b16 %v10554
    %v10856 = vunpack.c.h.b16 %v10554
    %v10857 = vunpack.c.l.b16 %v10555
    %v10858 = vunpack.c.h.b16 %v10555
    %v10859 = vunpack.c.l.b16 %v10556
    %v10860 = vunpack.c.h.b16 %v10556
    %v10861 = vunpack.c.l.b16 %v10557
    %v10862 = vunpack.c.h.b16 %v10557
    %v10863 = vunpack.c.l.b16 %v10558
    %v10864 = vunpack.c.h.b16 %v10558
    %v10865 = vunpack.c.l.b16 %v10559
    %v10866 = vunpack.c.h.b16 %v10559
    %v10867 = vunpack.c.l.b16 %v10560
    %v10868 = vunpack.c.h.b16 %v10560
    %v10869 = vunpack.c.l.b16 %v10561
    %v10870 = vunpack.c.h.b16 %v10561
    %v10871 = vunpack.c.l.b16 %v10562
    %v10872 = vunpack.c.h.b16 %v10562
    %v10873 = vunpack.c.l.b16 %v10563
    %v10874 = vunpack.c.h.b16 %v10563
    %v10875 = vunpack.c.l.b16 %v10564
    %v10876 = vunpack.c.h.b16 %v10564
    %v10877 = vunpack.c.l.b16 %v10565
    %v10878 = vunpack.c.h.b16 %v10565
    %v10879 = vunpack.c.l.b16 %v10566
    %v10880 = vunpack.c.h.b16 %v10566
    %v10881 = vunpack.c.l.b16 %v10567
    %v10882 = vunpack.c.h.b16 %v10567
    %v10883 = vunpack.c.l.b16 %v10568
    %v10884 = vunpack.c.h.b16 %v10568
    %v10885 = vunpack.c.l.b16 %v10569
    %v10886 = vunpack.c.h.b16 %v10569
    %v10887 = vunpack.c.l.b16 %v10570
    %v10888 = vunpack.c.h.b16 %v10570
    %v10889 = vunpack.c.l.b16 %v10571
    %v10890 = vunpack.c.h.b16 %v10571
    %v10891 = vunpack.c.l.b16 %v10572
    %v10892 = vunpack.c.h.b16 %v10572
    %v10893 = vunpack.c.l.b16 %v10573
    %v10894 = vunpack.c.h.b16 %v10573
    %v10895 = vunpack.c.l.b16 %v10574
    %v10896 = vunpack.c.h.b16 %v10574
    %v10897 = vunpack.c.l.b16 %v10575
    %v10898 = vunpack.c.h.b16 %v10575
    %v10899 = vunpack.c.l.b16 %v10576
    %v10900 = vunpack.c.h.b16 %v10576
    %v10901 = vunpack.c.l.b16 %v10577
    %v10902 = vunpack.c.h.b16 %v10577
    %v10903 = vunpack.c.l.b16 %v10578
    %v10904 = vunpack.c.h.b16 %v10578
    %v10905 = vunpack.c.l.b16 %v10579
    %v10906 = vunpack.c.h.b16 %v10579
    %v10907 = vunpack.c.l.b16 %v10580
    %v10908 = vunpack.c.h.b16 %v10580
    %v10909 = vunpack.c.l.b16 %v10581
    %v10910 = vunpack.c.h.b16 %v10581
    %v10911 = vunpack.c.l.b16 %v10582
    %v10912 = vunpack.c.h.b16 %v10582
    %v10913 = vunpack.c.l.b16 %v10583
    %v10914 = vunpack.c.h.b16 %v10583
    %v10915 = vunpack.c.l.b16 %v10584
    %v10916 = vunpack.c.h.b16 %v10584
    %v10917 = vunpack.c.l.b16 %v10585
    %v10918 = vunpack.c.h.b16 %v10585
    %v10919 = vunpack.c.l.b16 %v10586
    %v10920 = vunpack.c.h.b16 %v10586
    %v10921 = vunpack.c.l.b16 %v10587
    %v10922 = vunpack.c.h.b16 %v10587
    %v10923 = vunpack.c.l.b16 %v10588
    %v10924 = vunpack.c.h.b16 %v10588
    %v10925 = vunpack.c.l.b16 %v10589
    %v10926 = vunpack.c.h.b16 %v10589
    %v10927 = vunpack.c.l.b16 %v10590
    %v10928 = vunpack.c.h.b16 %v10590
    %v10929 = vunpack.c.l.b16 %v10591
    %v10930 = vunpack.c.h.b16 %v10591
    %v10931 = vunpack.c.l.b16 %v10592
    %v10932 = vunpack.c.h.b16 %v10592
    %v10933 = vunpack.c.l.b16 %v10593
    %v10934 = vunpack.c.h.b16 %v10593
    %v10935 = vunpack.c.l.b16 %v10594
    %v10936 = vunpack.c.h.b16 %v10594
    %v10937 = vunpack.c.l.b16 %v10595
    %v10938 = vunpack.c.h.b16 %v10595
    %v10939 = vunpack.c.l.b16 %v10596
    %v10940 = vunpack.c.h.b16 %v10596
    %v10941 = vunpack.c.l.b16 %v10597
    %v10942 = vunpack.c.h.b16 %v10597
    %v10943 = vunpack.c.l.b16 %v10598
    %v10944 = vunpack.c.h.b16 %v10598
    %v10945 = vunpack.c.l.b16 %v10599
    %v10946 = vunpack.c.h.b16 %v10599
    %v10947 = vunpack.c.l.b16 %v10600
    %v10948 = vunpack.c.h.b16 %v10600
    %v10949 = vunpack.c.l.b16 %v10601
    %v10950 = vunpack.c.h.b16 %v10601
    %v10951 = vunpack.c.l.b16 %v10602
    %v10952 = vunpack.c.h.b16 %v10602
    %v10953 = vunpack.c.l.b16 %v10603
    %v10954 = vunpack.c.h.b16 %v10603
    %v10955 = vunpack.c.l.b16 %v10604
    %v10956 = vunpack.c.h.b16 %v10604
    %v10957 = vunpack.c.l.b16 %v10605
    %v10958 = vunpack.c.h.b16 %v10605
    %v10959 = vunpack.c.l.b16 %v10606
    %v10960 = vunpack.c.h.b16 %v10606
    %v10961 = vunpack.c.l.b16 %v10607
    %v10962 = vunpack.c.h.b16 %v10607
    %v10963 = vunpack.c.l.b16 %v10608
    %v10964 = vunpack.c.h.b16 %v10608
    %v10965 = vunpack.c.l.b16 %v10609
    %v10966 = vunpack.c.h.b16 %v10609
    %v10967 = vunpack.c.l.b16 %v10610
    %v10968 = vunpack.c.h.b16 %v10610
    %v10969 = vunpack.c.l.b16 %v10611
    %v10970 = vunpack.c.h.b16 %v10611
    %v10971 = vunpack.c.l.b16 %v10612
    %v10972 = vunpack.c.h.b16 %v10612
    %v10973 = vunpack.c.l.b16 %v10613
    %v10974 = vunpack.c.h.b16 %v10613
    %v10975 = vunpack.c.l.b16 %v10614
    %v10976 = vunpack.c.h.b16 %v10614
    %v10977 = vunpack.c.l.b16 %v10615
    %v10978 = vunpack.c.h.b16 %v10615
    %v10979 = vunpack.c.l.b16 %v10616
    %v10980 = vunpack.c.h.b16 %v10616
    %v10981 = vunpack.c.l.b16 %v10617
    %v10982 = vunpack.c.h.b16 %v10617
    %v10983 = vunpack.c.l.b16 %v10618
    %v10984 = vunpack.c.h.b16 %v10618
    %v10985 = vunpack.c.l.b16 %v10619
    %v10986 = vunpack.c.h.b16 %v10619
    %v10987 = vunpack.c.l.b16 %v10620
    %v10988 = vunpack.c.h.b16 %v10620
    %v10989 = vunpack.c.l.b16 %v10621
    %v10990 = vunpack.c.h.b16 %v10621
    %v10991 = vunpack.c.l.b16 %v10622
    %v10992 = vunpack.c.h.b16 %v10622
    %v10993 = vunpack.c.l.b16 %v10623
    %v10994 = vunpack.c.h.b16 %v10623
    %v10995 = vunpack.c.l.b16 %v10624
    %v10996 = vunpack.c.h.b16 %v10624
    %v10997 = vunpack.c.l.b16 %v10625
    %v10998 = vunpack.c.h.b16 %v10625
    %v10999 = vunpack.c.l.b16 %v10626
    %v11000 = vunpack.c.h.b16 %v10626
    %v11001 = vunpack.c.l.b16 %v10627
    %v11002 = vunpack.c.h.b16 %v10627
    %v11003 = vunpack.c.l.b16 %v10628
    %v11004 = vunpack.c.h.b16 %v10628
    %v11005 = vunpack.c.l.b16 %v10629
    %v11006 = vunpack.c.h.b16 %v10629
    %v11007 = vunpack.c.l.b16 %v10630
    %v11008 = vunpack.c.h.b16 %v10630
    %v11009 = vunpack.c.l.b16 %v10631
    %v11010 = vunpack.c.h.b16 %v10631
    %v11011 = vunpack.c.l.b16 %v10632
    %v11012 = vunpack.c.h.b16 %v10632
    %v11013 = vunpack.c.l.b16 %v10633
    %v11014 = vunpack.c.h.b16 %v10633
    %v11015 = vunpack.c.l.b16 %v10634
    %v11016 = vunpack.c.h.b16 %v10634
    %v11017 = vunpack.c.l.b16 %v10635
    %v11018 = vunpack.c.h.b16 %v10635
    %v11019 = vunpack.c.l.b16 %v10636
    %v11020 = vunpack.c.h.b16 %v10636
    %v11021 = vunpack.c.l.b16 %v10637
    %v11022 = vunpack.c.h.b16 %v10637
    %v11023 = vunpack.c.l.b16 %v10638
    %v11024 = vunpack.c.h.b16 %v10638
    %v11025 = vunpack.c.l.b16 %v10639
    %v11026 = vunpack.c.h.b16 %v10639
    %v11027 = vunpack.c.l.b16 %v10640
    %v11028 = vunpack.c.h.b16 %v10640
    %v11029 = vunpack.c.l.b16 %v10641
    %v11030 = vunpack.c.h.b16 %v10641
    %v11031 = vunpack.c.l.b16 %v10642
    %v11032 = vunpack.c.h.b16 %v10642
    %v11033 = vunpack.c.l.b16 %v10643
    %v11034 = vunpack.c.h.b16 %v10643
    %v11035 = vunpack.c.l.b16 %v10644
    %v11036 = vunpack.c.h.b16 %v10644
    %v11037 = vunpack.c.l.b16 %v10645
    %v11038 = vunpack.c.h.b16 %v10645
    %v11039 = vunpack.c.l.b16 %v10646
    %v11040 = vunpack.c.h.b16 %v10646
    %v11041 = vunpack.c.l.b16 %v10647
    %v11042 = vunpack.c.h.b16 %v10647
    %v11043 = vunpack.c.l.b16 %v10648
    %v11044 = vunpack.c.h.b16 %v10648
    %v11045 = vunpack.c.l.b16 %v10649
    %v11046 = vunpack.c.h.b16 %v10649
    %v11047 = vunpack.c.l.b16 %v10650
    %v11048 = vunpack.c.h.b16 %v10650
    %v11049 = vunpack.c.l.b16 %v10651
    %v11050 = vunpack.c.h.b16 %v10651
    %v11051 = vunpack.c.l.b16 %v10652
    %v11052 = vunpack.c.h.b16 %v10652
    %v11053 = vunpack.c.l.b16 %v10653
    %v11054 = vunpack.c.h.b16 %v10653
    %v11055 = vunpack.c.l.b16 %v10654
    %v11056 = vunpack.c.h.b16 %v10654
    %v11057 = vunpack.c.l.b16 %v10655
    %v11058 = vunpack.c.h.b16 %v10655
    %v11059 = vunpack.c.l.b16 %v10656
    %v11060 = vunpack.c.h.b16 %v10656
    %v11061 = vunpack.c.l.b16 %v10657
    %v11062 = vunpack.c.h.b16 %v10657
    %v11063 = vunpack.c.l.b16 %v10658
    %v11064 = vunpack.c.h.b16 %v10658
    %v11065 = vunpack.c.l.b16 %v10659
    %v11066 = vunpack.c.h.b16 %v10659
    %v11067 = vpack.c.b16 %v10815, %v10811
    %v11068 = vpack.c.b16 %v10816, %v10812
    %v11069 = vpack.c.b16 %v10817, %v10813
    %v11070 = vpack.c.b16 %v10818, %v10814
    %v11071 = vpack.c.b16 %v10823, %v10819
    %v11072 = vpack.c.b16 %v10824, %v10820
    %v11073 = vpack.c.b16 %v10825, %v10821
    %v11074 = vpack.c.b16 %v10826, %v10822
    %v11075 = vpack.c.b16 %v10831, %v10827
    %v11076 = vpack.c.b16 %v10832, %v10828
    %v11077 = vpack.c.b16 %v10833, %v10829
    %v11078 = vpack.c.b16 %v10834, %v10830
    %v11079 = vpack.c.b16 %v10839, %v10835
    %v11080 = vpack.c.b16 %v10840, %v10836
    %v11081 = vpack.c.b16 %v10841, %v10837
    %v11082 = vpack.c.b16 %v10842, %v10838
    %v11083 = vpack.c.b16 %v10847, %v10843
    %v11084 = vpack.c.b16 %v10848, %v10844
    %v11085 = vpack.c.b16 %v10849, %v10845
    %v11086 = vpack.c.b16 %v10850, %v10846
    %v11087 = vpack.c.b16 %v10855, %v10851
    %v11088 = vpack.c.b16 %v10856, %v10852
    %v11089 = vpack.c.b16 %v10857, %v10853
    %v11090 = vpack.c.b16 %v10858, %v10854
    %v11091 = vpack.c.b16 %v10863, %v10859
    %v11092 = vpack.c.b16 %v10864, %v10860
    %v11093 = vpack.c.b16 %v10865, %v10861
    %v11094 = vpack.c.b16 %v10866, %v10862
    %v11095 = vpack.c.b16 %v10871, %v10867
    %v11096 = vpack.c.b16 %v10872, %v10868
    %v11097 = vpack.c.b16 %v10873, %v10869
    %v11098 = vpack.c.b16 %v10874, %v10870
    %v11099 = vpack.c.b16 %v10879, %v10875
    %v11100 = vpack.c.b16 %v10880, %v10876
    %v11101 = vpack.c.b16 %v10881, %v10877
    %v11102 = vpack.c.b16 %v10882, %v10878
    %v11103 = vpack.c.b16 %v10887, %v10883
    %v11104 = vpack.c.b16 %v10888, %v10884
    %v11105 = vpack.c.b16 %v10889, %v10885
    %v11106 = vpack.c.b16 %v10890, %v10886
    %v11107 = vpack.c.b16 %v10895, %v10891
    %v11108 = vpack.c.b16 %v10896, %v10892
    %v11109 = vpack.c.b16 %v10897, %v10893
    %v11110 = vpack.c.b16 %v10898, %v10894
    %v11111 = vpack.c.b16 %v10903, %v10899
    %v11112 = vpack.c.b16 %v10904, %v10900
    %v11113 = vpack.c.b16 %v10905, %v10901
    %v11114 = vpack.c.b16 %v10906, %v10902
    %v11115 = vpack.c.b16 %v10911, %v10907
    %v11116 = vpack.c.b16 %v10912, %v10908
    %v11117 = vpack.c.b16 %v10913, %v10909
    %v11118 = vpack.c.b16 %v10914, %v10910
    %v11119 = vpack.c.b16 %v10919, %v10915
    %v11120 = vpack.c.b16 %v10920, %v10916
    %v11121 = vpack.c.b16 %v10921, %v10917
    %v11122 = vpack.c.b16 %v10922, %v10918
    %v11123 = vpack.c.b16 %v10927, %v10923
    %v11124 = vpack.c.b16 %v10928, %v10924
    %v11125 = vpack.c.b16 %v10929, %v10925
    %v11126 = vpack.c.b16 %v10930, %v10926
    %v11127 = vpack.c.b16 %v10935, %v10931
    %v11128 = vpack.c.b16 %v10936, %v10932
    %v11129 = vpack.c.b16 %v10937, %v10933
    %v11130 = vpack.c.b16 %v10938, %v10934
    %v11131 = vpack.c.b16 %v10943, %v10939
    %v11132 = vpack.c.b16 %v10944, %v10940
    %v11133 = vpack.c.b16 %v10945, %v10941
    %v11134 = vpack.c.b16 %v10946, %v10942
    %v11135 = vpack.c.b16 %v10951, %v10947
    %v11136 = vpack.c.b16 %v10952, %v10948
    %v11137 = vpack.c.b16 %v10953, %v10949
    %v11138 = vpack.c.b16 %v10954, %v10950
    %v11139 = vpack.c.b16 %v10959, %v10955
    %v11140 = vpack.c.b16 %v10960, %v10956
    %v11141 = vpack.c.b16 %v10961, %v10957
    %v11142 = vpack.c.b16 %v10962, %v10958
    %v11143 = vpack.c.b16 %v10967, %v10963
    %v11144 = vpack.c.b16 %v10968, %v10964
    %v11145 = vpack.c.b16 %v10969, %v10965
    %v11146 = vpack.c.b16 %v10970, %v10966
    %v11147 = vpack.c.b16 %v10975, %v10971
    %v11148 = vpack.c.b16 %v10976, %v10972
    %v11149 = vpack.c.b16 %v10977, %v10973
    %v11150 = vpack.c.b16 %v10978, %v10974
    %v11151 = vpack.c.b16 %v10983, %v10979
    %v11152 = vpack.c.b16 %v10984, %v10980
    %v11153 = vpack.c.b16 %v10985, %v10981
    %v11154 = vpack.c.b16 %v10986, %v10982
    %v11155 = vpack.c.b16 %v10991, %v10987
    %v11156 = vpack.c.b16 %v10992, %v10988
    %v11157 = vpack.c.b16 %v10993, %v10989
    %v11158 = vpack.c.b16 %v10994, %v10990
    %v11159 = vpack.c.b16 %v10999, %v10995
    %v11160 = vpack.c.b16 %v11000, %v10996
    %v11161 = vpack.c.b16 %v11001, %v10997
    %v11162 = vpack.c.b16 %v11002, %v10998
    %v11163 = vpack.c.b16 %v11007, %v11003
    %v11164 = vpack.c.b16 %v11008, %v11004
    %v11165 = vpack.c.b16 %v11009, %v11005
    %v11166 = vpack.c.b16 %v11010, %v11006
    %v11167 = vpack.c.b16 %v11015, %v11011
    %v11168 = vpack.c.b16 %v11016, %v11012
    %v11169 = vpack.c.b16 %v11017, %v11013
    %v11170 = vpack.c.b16 %v11018, %v11014
    %v11171 = vpack.c.b16 %v11023, %v11019
    %v11172 = vpack.c.b16 %v11024, %v11020
    %v11173 = vpack.c.b16 %v11025, %v11021
    %v11174 = vpack.c.b16 %v11026, %v11022
    %v11175 = vpack.c.b16 %v11031, %v11027
    %v11176 = vpack.c.b16 %v11032, %v11028
    %v11177 = vpack.c.b16 %v11033, %v11029
    %v11178 = vpack.c.b16 %v11034, %v11030
    %v11179 = vpack.c.b16 %v11039, %v11035
    %v11180 = vpack.c.b16 %v11040, %v11036
    %v11181 = vpack.c.b16 %v11041, %v11037
    %v11182 = vpack.c.b16 %v11042, %v11038
    %v11183 = vpack.c.b16 %v11047, %v11043
    %v11184 = vpack.c.b16 %v11048, %v11044
    %v11185 = vpack.c.b16 %v11049, %v11045
    %v11186 = vpack.c.b16 %v11050, %v11046
    %v11187 = vpack.c.b16 %v11055, %v11051
    %v11188 = vpack.c.b16 %v11056, %v11052
    %v11189 = vpack.c.b16 %v11057, %v11053
    %v11190 = vpack.c.b16 %v11058, %v11054
    %v11191 = vpack.c.b16 %v11063, %v11059
    %v11192 = vpack.c.b16 %v11064, %v11060
    %v11193 = vpack.c.b16 %v11065, %v11061
    %v11194 = vpack.c.b16 %v11066, %v11062
    %11323 = vmatprep.subr.bf16.mxu0 %v11068
    %11324 = vmatpush1.bf16.msra.mxu0 %v11067
    %11325 = vmatprep.subr.bf16.mxu0 %v11072
    %11326 = vmatpush1.bf16.msra.mxu0 %v11071
    %11327 = vmatprep.subr.bf16.mxu0 %v11076
    %11328 = vmatpush1.bf16.msra.mxu0 %v11075
    %11329 = vmatprep.subr.bf16.mxu0 %v11080
    %11330 = vmatpush1.bf16.msra.mxu0 %v11079
    %11331 = vmatprep.subr.bf16.mxu0 %v11084
    %11332 = vmatpush1.bf16.msra.mxu0 %v11083
    %11333 = vmatprep.subr.bf16.mxu0 %v11088
    %11334 = vmatpush1.bf16.msra.mxu0 %v11087
    %11335 = vmatprep.subr.bf16.mxu0 %v11092
    %11336 = vmatpush1.bf16.msra.mxu0 %v11091
    %11337 = vmatprep.subr.bf16.mxu0 %v11096
    %11338 = vmatpush1.bf16.msra.mxu0 %v11095
    %11339 = vmatprep.subr.bf16.mxu0 %v11100
    %11340 = vmatpush1.bf16.msra.mxu0 %v11099
    %11341 = vmatprep.subr.bf16.mxu0 %v11104
    %11342 = vmatpush1.bf16.msra.mxu0 %v11103
    %11343 = vmatprep.subr.bf16.mxu0 %v11108
    %11344 = vmatpush1.bf16.msra.mxu0 %v11107
    %11345 = vmatprep.subr.bf16.mxu0 %v11112
    %11346 = vmatpush1.bf16.msra.mxu0 %v11111
    %11347 = vmatprep.subr.bf16.mxu0 %v11116
    %11348 = vmatpush1.bf16.msra.mxu0 %v11115
    %11349 = vmatprep.subr.bf16.mxu0 %v11120
    %11350 = vmatpush1.bf16.msra.mxu0 %v11119
    %11351 = vmatprep.subr.bf16.mxu0 %v11124
    %11352 = vmatpush1.bf16.msra.mxu0 %v11123
    %11353 = vmatprep.subr.bf16.mxu0 %v11128
    %11354 = vmatpush1.bf16.msra.mxu0 %v11127
    %11355 = vmatprep.mubr.bf16.mxu0 %v10500
    %11356 = vmatmul.mubr.bf16.gmra.mrb[0].mxu0 %v10499
    %v11357 = vpop.f32.mrb[0].mxu0
    %v11358 = vadd.f32 %v10666, %v11357
    %v11359 = vpop.f32.mrb[0].mxu0
    %v11360 = vadd.f32 %v10670, %v11359
    %v11361 = vpop.f32.mrb[0].mxu0
    %v11362 = vadd.f32 %v10666, %v11361
    %v11363 = vpop.f32.mrb[0].mxu0
    %v11364 = vadd.f32 %v10670, %v11363
    %11365 = vmatprep.mubr.bf16.mxu0 %v10504
    %11366 = vmatmul.mubr.bf16.gmra.mrb[0].mxu0 %v10503
    %v11367 = vpop.f32.mrb[0].mxu0
    %v11368 = vadd.f32 %v10666, %v11367
    %v11369 = vpop.f32.mrb[0].mxu0
    %v11370 = vadd.f32 %v10670, %v11369
    %v11371 = vpop.f32.mrb[0].mxu0
    %v11372 = vadd.f32 %v10666, %v11371
    %v11373 = vpop.f32.mrb[0].mxu0
    %v11374 = vadd.f32 %v10670, %v11373
    %11375 = vmatprep.mubr.bf16.mxu0 %v10508
    %11376 = vmatmul.mubr.bf16.gmra.mrb[0].mxu0 %v10507
    %v11377 = vpop.f32.mrb[0].mxu0
    %v11378 = vadd.f32 %v10666, %v11377
    %v11379 = vpop.f32.mrb[0].mxu0
    %v11380 = vadd.f32 %v10670, %v11379
    %v11381 = vpop.f32.mrb[0].mxu0
    %v11382 = vadd.f32 %v10666, %v11381
    %v11383 = vpop.f32.mrb[0].mxu0
    %v11384 = vadd.f32 %v10670, %v11383
    %11385 = vmatprep.mubr.bf16.mxu0 %v10512
    %11386 = vmatmul.mubr.bf16.gmra.mrb[0].mxu0 %v10511
    %v11387 = vpop.f32.mrb[0].mxu0
    %v11388 = vadd.f32 %v10666, %v11387
    %v11389 = vpop.f32.mrb[0].mxu0
    %v11390 = vadd.f32 %v10670, %v11389
    %v11391 = vpop.f32.mrb[0].mxu0
    %v11392 = vadd.f32 %v10666, %v11391
    %v11393 = vpop.f32.mrb[0].mxu0
    %v11394 = vadd.f32 %v10670, %v11393
    %11395 = vmatprep.mubr.bf16.mxu0 %v10516
    %11396 = vmatmul.mubr.bf16.gmra.mrb[0].mxu0 %v10515
    %v11397 = vpop.f32.mrb[0].mxu0
    %v11398 = vadd.f32 %v10666, %v11397
    %v11399 = vpop.f32.mrb[0].mxu0
    %v11400 = vadd.f32 %v10670, %v11399
    %v11401 = vpop.f32.mrb[0].mxu0
    %v11402 = vadd.f32 %v10666, %v11401
    %v11403 = vpop.f32.mrb[0].mxu0
    %v11404 = vadd.f32 %v10670, %v11403
    %11405 = vmatprep.mubr.bf16.mxu0 %v10520
    %11406 = vmatmul.mubr.bf16.gmra.mrb[0].mxu0 %v10519
    %v11407 = vpop.f32.mrb[0].mxu0
    %v11408 = vadd.f32 %v10666, %v11407
    %v11409 = vpop.f32.mrb[0].mxu0
    %v11410 = vadd.f32 %v10670, %v11409
    %v11411 = vpop.f32.mrb[0].mxu0
    %v11412 = vadd.f32 %v10666, %v11411
    %v11413 = vpop.f32.mrb[0].mxu0
    %v11414 = vadd.f32 %v10670, %v11413
    %11415 = vmatprep.mubr.bf16.mxu0 %v10524
    %11416 = vmatmul.mubr.bf16.gmra.mrb[0].mxu0 %v10523
    %v11417 = vpop.f32.mrb[0].mxu0
    %v11418 = vadd.f32 %v10666, %v11417
    %v11419 = vpop.f32.mrb[0].mxu0
    %v11420 = vadd.f32 %v10670, %v11419
    %v11421 = vpop.f32.mrb[0].mxu0
    %v11422 = vadd.f32 %v10666, %v11421
    %v11423 = vpop.f32.mrb[0].mxu0
    %v11424 = vadd.f32 %v10670, %v11423
    %11425 = vmatprep.mubr.bf16.mxu0 %v10528
    %11426 = vmatmul.mubr.bf16.gmra.mrb[0].mxu0 %v10527
    %v11427 = vpop.f32.mrb[0].mxu0
    %v11428 = vadd.f32 %v10666, %v11427
    %v11429 = vpop.f32.mrb[0].mxu0
    %v11430 = vadd.f32 %v10670, %v11429
    %v11431 = vpop.f32.mrb[0].mxu0
    %v11432 = vadd.f32 %v10666, %v11431
    %v11433 = vpop.f32.mrb[0].mxu0
    %v11434 = vadd.f32 %v10670, %v11433
    %11435 = vdwg.mxu0
    %11436 = vmatprep.subr.bf16.mxu0 %v11132
    %11437 = vmatpush1.bf16.msra.mxu0 %v11131
    %11438 = vmatprep.subr.bf16.mxu0 %v11136
    %11439 = vmatpush1.bf16.msra.mxu0 %v11135
    %11440 = vmatprep.subr.bf16.mxu0 %v11140
    %11441 = vmatpush1.bf16.msra.mxu0 %v11139
    %11442 = vmatprep.subr.bf16.mxu0 %v11144
    %11443 = vmatpush1.bf16.msra.mxu0 %v11143
    %11444 = vmatprep.subr.bf16.mxu0 %v11148
    %11445 = vmatpush1.bf16.msra.mxu0 %v11147
    %11446 = vmatprep.subr.bf16.mxu0 %v11152
    %11447 = vmatpush1.bf16.msra.mxu0 %v11151
    %11448 = vmatprep.subr.bf16.mxu0 %v11156
    %11449 = vmatpush1.bf16.msra.mxu0 %v11155
    %11450 = vmatprep.subr.bf16.mxu0 %v11160
    %11451 = vmatpush1.bf16.msra.mxu0 %v11159
    %11452 = vmatprep.subr.bf16.mxu0 %v11164
    %11453 = vmatpush1.bf16.msra.mxu0 %v11163
    %11454 = vmatprep.subr.bf16.mxu0 %v11168
    %11455 = vmatpush1.bf16.msra.mxu0 %v11167
    %11456 = vmatprep.subr.bf16.mxu0 %v11172
    %11457 = vmatpush1.bf16.msra.mxu0 %v11171
    %11458 = vmatprep.subr.bf16.mxu0 %v11176
    %11459 = vmatpush1.bf16.msra.mxu0 %v11175
    %11460 = vmatprep.subr.bf16.mxu0 %v11180
    %11461 = vmatpush1.bf16.msra.mxu0 %v11179
    %11462 = vmatprep.subr.bf16.mxu0 %v11184
    %11463 = vmatpush1.bf16.msra.mxu0 %v11183
    %11464 = vmatprep.subr.bf16.mxu0 %v11188
    %11465 = vmatpush1.bf16.msra.mxu0 %v11187
    %11466 = vmatprep.subr.bf16.mxu0 %v11192
    %11467 = vmatpush1.bf16.msra.mxu0 %v11191
    %11468 = vmatprep.mubr.bf16.mxu0 %v10502
    %11469 = vmatmul.mubr.bf16.gmra.mrb[0].mxu0 %v10501
    %v11470 = vpop.f32.mrb[0].mxu0
    %v11471 = vadd.f32 %v11358, %v11470
    %v11472 = vpop.f32.mrb[0].mxu0
    %v11473 = vadd.f32 %v11360, %v11472
    %v11474 = vpop.f32.mrb[0].mxu0
    %v11475 = vadd.f32 %v11362, %v11474
    %v11476 = vpop.f32.mrb[0].mxu0
    %v11477 = vadd.f32 %v11364, %v11476
    %11478 = vmatprep.mubr.bf16.mxu0 %v10506
    %11479 = vmatmul.mubr.bf16.gmra.mrb[0].mxu0 %v10505
    %v11480 = vpop.f32.mrb[0].mxu0
    %v11481 = vadd.f32 %v11368, %v11480
    %v11482 = vpop.f32.mrb[0].mxu0
    %v11483 = vadd.f32 %v11370, %v11482
    %v11484 = vpop.f32.mrb[0].mxu0
    %v11485 = vadd.f32 %v11372, %v11484
    %v11486 = vpop.f32.mrb[0].mxu0
    %v11487 = vadd.f32 %v11374, %v11486
    %11488 = vmatprep.mubr.bf16.mxu0 %v10510
    %11489 = vmatmul.mubr.bf16.gmra.mrb[0].mxu0 %v10509
    %v11490 = vpop.f32.mrb[0].mxu0
    %v11491 = vadd.f32 %v11378, %v11490
    %v11492 = vpop.f32.mrb[0].mxu0
    %v11493 = vadd.f32 %v11380, %v11492
    %v11494 = vpop.f32.mrb[0].mxu0
    %v11495 = vadd.f32 %v11382, %v11494
    %v11496 = vpop.f32.mrb[0].mxu0
    %v11497 = vadd.f32 %v11384, %v11496
    %11498 = vmatprep.mubr.bf16.mxu0 %v10514
    %11499 = vmatmul.mubr.bf16.gmra.mrb[0].mxu0 %v10513
    %v11500 = vpop.f32.mrb[0].mxu0
    %v11501 = vadd.f32 %v11388, %v11500
    %v11502 = vpop.f32.mrb[0].mxu0
    %v11503 = vadd.f32 %v11390, %v11502
    %v11504 = vpop.f32.mrb[0].mxu0
    %v11505 = vadd.f32 %v11392, %v11504
    %v11506 = vpop.f32.mrb[0].mxu0
    %v11507 = vadd.f32 %v11394, %v11506
    %11508 = vmatprep.mubr.bf16.mxu0 %v10518
    %11509 = vmatmul.mubr.bf16.gmra.mrb[0].mxu0 %v10517
    %v11510 = vpop.f32.mrb[0].mxu0
    %v11511 = vadd.f32 %v11398, %v11510
    %v11512 = vpop.f32.mrb[0].mxu0
    %v11513 = vadd.f32 %v11400, %v11512
    %v11514 = vpop.f32.mrb[0].mxu0
    %v11515 = vadd.f32 %v11402, %v11514
    %v11516 = vpop.f32.mrb[0].mxu0
    %v11517 = vadd.f32 %v11404, %v11516
    %11518 = vmatprep.mubr.bf16.mxu0 %v10522
    %11519 = vmatmul.mubr.bf16.gmra.mrb[0].mxu0 %v10521
    %v11520 = vpop.f32.mrb[0].mxu0
    %v11521 = vadd.f32 %v11408, %v11520
    %v11522 = vpop.f32.mrb[0].mxu0
    %v11523 = vadd.f32 %v11410, %v11522
    %v11524 = vpop.f32.mrb[0].mxu0
    %v11525 = vadd.f32 %v11412, %v11524
    %v11526 = vpop.f32.mrb[0].mxu0
    %v11527 = vadd.f32 %v11414, %v11526
    %11528 = vmatprep.mubr.bf16.mxu0 %v10526
    %11529 = vmatmul.mubr.bf16.gmra.mrb[0].mxu0 %v10525
    %v11530 = vpop.f32.mrb[0].mxu0
    %v11531 = vadd.f32 %v11418, %v11530
    %v11532 = vpop.f32.mrb[0].mxu0
    %v11533 = vadd.f32 %v11420, %v11532
    %v11534 = vpop.f32.mrb[0].mxu0
    %v11535 = vadd.f32 %v11422, %v11534
    %v11536 = vpop.f32.mrb[0].mxu0
    %v11537 = vadd.f32 %v11424, %v11536
    %11538 = vmatprep.mubr.bf16.mxu0 %v10530
    %11539 = vmatmul.mubr.bf16.gmra.mrb[0].mxu0 %v10529
    %v11540 = vpop.f32.mrb[0].mxu0
    %v11541 = vadd.f32 %v11428, %v11540
    %v11542 = vpop.f32.mrb[0].mxu0
    %v11543 = vadd.f32 %v11430, %v11542
    %v11544 = vpop.f32.mrb[0].mxu0
    %v11545 = vadd.f32 %v11432, %v11544
    %v11546 = vpop.f32.mrb[0].mxu0
    %v11547 = vadd.f32 %v11434, %v11546
    %11548 = vdwg.mxu0
    %11549 = vmatprep.subr.bf16.mxu0 %v11070
    %11550 = vmatpush1.bf16.msra.mxu0 %v11069
    %11551 = vmatprep.subr.bf16.mxu0 %v11074
    %11552 = vmatpush1.bf16.msra.mxu0 %v11073
    %11553 = vmatprep.subr.bf16.mxu0 %v11078
    %11554 = vmatpush1.bf16.msra.mxu0 %v11077
    %11555 = vmatprep.subr.bf16.mxu0 %v11082
    %11556 = vmatpush1.bf16.msra.mxu0 %v11081
    %11557 = vmatprep.subr.bf16.mxu0 %v11086
    %11558 = vmatpush1.bf16.msra.mxu0 %v11085
    %11559 = vmatprep.subr.bf16.mxu0 %v11090
    %11560 = vmatpush1.bf16.msra.mxu0 %v11089
    %11561 = vmatprep.subr.bf16.mxu0 %v11094
    %11562 = vmatpush1.bf16.msra.mxu0 %v11093
    %11563 = vmatprep.subr.bf16.mxu0 %v11098
    %11564 = vmatpush1.bf16.msra.mxu0 %v11097
    %11565 = vmatprep.subr.bf16.mxu0 %v11102
    %11566 = vmatpush1.bf16.msra.mxu0 %v11101
    %11567 = vmatprep.subr.bf16.mxu0 %v11106
    %11568 = vmatpush1.bf16.msra.mxu0 %v11105
    %11569 = vmatprep.subr.bf16.mxu0 %v11110
    %11570 = vmatpush1.bf16.msra.mxu0 %v11109
    %11571 = vmatprep.subr.bf16.mxu0 %v11114
    %11572 = vmatpush1.bf16.msra.mxu0 %v11113
    %11573 = vmatprep.subr.bf16.mxu0 %v11118
    %11574 = vmatpush1.bf16.msra.mxu0 %v11117
    %11575 = vmatprep.subr.bf16.mxu0 %v11122
    %11576 = vmatpush1.bf16.msra.mxu0 %v11121
    %11577 = vmatprep.subr.bf16.mxu0 %v11126
    %11578 = vmatpush1.bf16.msra.mxu0 %v11125
    %11579 = vmatprep.subr.bf16.mxu0 %v11130
    %11580 = vmatpush1.bf16.msra.mxu0 %v11129
    %11581 = vmatprep.mubr.bf16.mxu0 %v10500
    %11582 = vmatmul.mubr.bf16.gmra.mrb[0].mxu0 %v10499
    %v11583 = vpop.f32.mrb[0].mxu0
    %v11584 = vadd.f32 %v10674, %v11583
    %v11585 = vpop.f32.mrb[0].mxu0
    %v11586 = vadd.f32 %v10678, %v11585
    %v11587 = vpop.f32.mrb[0].mxu0
    %v11588 = vadd.f32 %v10674, %v11587
    %v11589 = vpop.f32.mrb[0].mxu0
    %v11590 = vadd.f32 %v10678, %v11589
    %11591 = vmatprep.mubr.bf16.mxu0 %v10504
    %11592 = vmatmul.mubr.bf16.gmra.mrb[0].mxu0 %v10503
    %v11593 = vpop.f32.mrb[0].mxu0
    %v11594 = vadd.f32 %v10674, %v11593
    %v11595 = vpop.f32.mrb[0].mxu0
    %v11596 = vadd.f32 %v10678, %v11595
    %v11597 = vpop.f32.mrb[0].mxu0
    %v11598 = vadd.f32 %v10674, %v11597
    %v11599 = vpop.f32.mrb[0].mxu0
    %v11600 = vadd.f32 %v10678, %v11599
    %11601 = vmatprep.mubr.bf16.mxu0 %v10508
    %11602 = vmatmul.mubr.bf16.gmra.mrb[0].mxu0 %v10507
    %v11603 = vpop.f32.mrb[0].mxu0
    %v11604 = vadd.f32 %v10674, %v11603
    %v11605 = vpop.f32.mrb[0].mxu0
    %v11606 = vadd.f32 %v10678, %v11605
    %v11607 = vpop.f32.mrb[0].mxu0
    %v11608 = vadd.f32 %v10674, %v11607
    %v11609 = vpop.f32.mrb[0].mxu0
    %v11610 = vadd.f32 %v10678, %v11609
    %11611 = vmatprep.mubr.bf16.mxu0 %v10512
    %11612 = vmatmul.mubr.bf16.gmra.mrb[0].mxu0 %v10511
    %v11613 = vpop.f32.mrb[0].mxu0
    %v11614 = vadd.f32 %v10674, %v11613
    %v11615 = vpop.f32.mrb[0].mxu0
    %v11616 = vadd.f32 %v10678, %v11615
    %v11617 = vpop.f32.mrb[0].mxu0
    %v11618 = vadd.f32 %v10674, %v11617
    %v11619 = vpop.f32.mrb[0].mxu0
    %v11620 = vadd.f32 %v10678, %v11619
    %11621 = vmatprep.mubr.bf16.mxu0 %v10516
    %11622 = vmatmul.mubr.bf16.gmra.mrb[0].mxu0 %v10515
    %v11623 = vpop.f32.mrb[0].mxu0
    %v11624 = vadd.f32 %v10674, %v11623
    %v11625 = vpop.f32.mrb[0].mxu0
    %v11626 = vadd.f32 %v10678, %v11625
    %v11627 = vpop.f32.mrb[0].mxu0
    %v11628 = vadd.f32 %v10674, %v11627
    %v11629 = vpop.f32.mrb[0].mxu0
    %v11630 = vadd.f32 %v10678, %v11629
    %11631 = vmatprep.mubr.bf16.mxu0 %v10520
    %11632 = vmatmul.mubr.bf16.gmra.mrb[0].mxu0 %v10519
    %v11633 = vpop.f32.mrb[0].mxu0
    %v11634 = vadd.f32 %v10674, %v11633
    %v11635 = vpop.f32.mrb[0].mxu0
    %v11636 = vadd.f32 %v10678, %v11635
    %v11637 = vpop.f32.mrb[0].mxu0
    %v11638 = vadd.f32 %v10674, %v11637
    %v11639 = vpop.f32.mrb[0].mxu0
    %v11640 = vadd.f32 %v10678, %v11639
    %11641 = vmatprep.mubr.bf16.mxu0 %v10524
    %11642 = vmatmul.mubr.bf16.gmra.mrb[0].mxu0 %v10523
    %v11643 = vpop.f32.mrb[0].mxu0
    %v11644 = vadd.f32 %v10674, %v11643
    %v11645 = vpop.f32.mrb[0].mxu0
    %v11646 = vadd.f32 %v10678, %v11645
    %v11647 = vpop.f32.mrb[0].mxu0
    %v11648 = vadd.f32 %v10674, %v11647
    %v11649 = vpop.f32.mrb[0].mxu0
    %v11650 = vadd.f32 %v10678, %v11649
    %11651 = vmatprep.mubr.bf16.mxu0 %v10528
    %11652 = vmatmul.mubr.bf16.gmra.mrb[0].mxu0 %v10527
    %v11653 = vpop.f32.mrb[0].mxu0
    %v11654 = vadd.f32 %v10674, %v11653
    %v11655 = vpop.f32.mrb[0].mxu0
    %v11656 = vadd.f32 %v10678, %v11655
    %v11657 = vpop.f32.mrb[0].mxu0
    %v11658 = vadd.f32 %v10674, %v11657
    %v11659 = vpop.f32.mrb[0].mxu0
    %v11660 = vadd.f32 %v10678, %v11659
    %11661 = vdwg.mxu0
    %11662 = vmatprep.subr.bf16.mxu0 %v11134
    %11663 = vmatpush1.bf16.msra.mxu0 %v11133
    %11664 = vmatprep.subr.bf16.mxu0 %v11138
    %11665 = vmatpush1.bf16.msra.mxu0 %v11137
    %11666 = vmatprep.subr.bf16.mxu0 %v11142
    %11667 = vmatpush1.bf16.msra.mxu0 %v11141
    %11668 = vmatprep.subr.bf16.mxu0 %v11146
    %11669 = vmatpush1.bf16.msra.mxu0 %v11145
    %11670 = vmatprep.subr.bf16.mxu0 %v11150
    %11671 = vmatpush1.bf16.msra.mxu0 %v11149
    %11672 = vmatprep.subr.bf16.mxu0 %v11154
    %11673 = vmatpush1.bf16.msra.mxu0 %v11153
    %11674 = vmatprep.subr.bf16.mxu0 %v11158
    %11675 = vmatpush1.bf16.msra.mxu0 %v11157
    %11676 = vmatprep.subr.bf16.mxu0 %v11162
    %11677 = vmatpush1.bf16.msra.mxu0 %v11161
    %11678 = vmatprep.subr.bf16.mxu0 %v11166
    %11679 = vmatpush1.bf16.msra.mxu0 %v11165
    %11680 = vmatprep.subr.bf16.mxu0 %v11170
    %11681 = vmatpush1.bf16.msra.mxu0 %v11169
    %11682 = vmatprep.subr.bf16.mxu0 %v11174
    %11683 = vmatpush1.bf16.msra.mxu0 %v11173
    %11684 = vmatprep.subr.bf16.mxu0 %v11178
    %11685 = vmatpush1.bf16.msra.mxu0 %v11177
    %11686 = vmatprep.subr.bf16.mxu0 %v11182
    %11687 = vmatpush1.bf16.msra.mxu0 %v11181
    %11688 = vmatprep.subr.bf16.mxu0 %v11186
    %11689 = vmatpush1.bf16.msra.mxu0 %v11185
    %11690 = vmatprep.subr.bf16.mxu0 %v11190
    %11691 = vmatpush1.bf16.msra.mxu0 %v11189
    %11692 = vmatprep.subr.bf16.mxu0 %v11194
    %11693 = vmatpush1.bf16.msra.mxu0 %v11193
    %11694 = vmatprep.mubr.bf16.mxu0 %v10502
    %11695 = vmatmul.mubr.bf16.gmra.mrb[0].mxu0 %v10501
    %v11696 = vpop.f32.mrb[0].mxu0
    %v11697 = vadd.f32 %v11584, %v11696
    %v11698 = vpop.f32.mrb[0].mxu0
    %v11699 = vadd.f32 %v11586, %v11698
    %v11700 = vpop.f32.mrb[0].mxu0
    %v11701 = vadd.f32 %v11588, %v11700
    %v11702 = vpop.f32.mrb[0].mxu0
    %v11703 = vadd.f32 %v11590, %v11702
    %11704 = vmatprep.mubr.bf16.mxu0 %v10506
    %11705 = vmatmul.mubr.bf16.gmra.mrb[0].mxu0 %v10505
    %v11706 = vpop.f32.mrb[0].mxu0
    %v11707 = vadd.f32 %v11594, %v11706
    %v11708 = vpop.f32.mrb[0].mxu0
    %v11709 = vadd.f32 %v11596, %v11708
    %v11710 = vpop.f32.mrb[0].mxu0
    %v11711 = vadd.f32 %v11598, %v11710
    %v11712 = vpop.f32.mrb[0].mxu0
    %v11713 = vadd.f32 %v11600, %v11712
    %11714 = vmatprep.mubr.bf16.mxu0 %v10510
    %11715 = vmatmul.mubr.bf16.gmra.mrb[0].mxu0 %v10509
    %v11716 = vpop.f32.mrb[0].mxu0
    %v11717 = vadd.f32 %v11604, %v11716
    %v11718 = vpop.f32.mrb[0].mxu0
    %v11719 = vadd.f32 %v11606, %v11718
    %v11720 = vpop.f32.mrb[0].mxu0
    %v11721 = vadd.f32 %v11608, %v11720
    %v11722 = vpop.f32.mrb[0].mxu0
    %v11723 = vadd.f32 %v11610, %v11722
    %11724 = vmatprep.mubr.bf16.mxu0 %v10514
    %11725 = vmatmul.mubr.bf16.gmra.mrb[0].mxu0 %v10513
    %v11726 = vpop.f32.mrb[0].mxu0
    %v11727 = vadd.f32 %v11614, %v11726
    %v11728 = vpop.f32.mrb[0].mxu0
    %v11729 = vadd.f32 %v11616, %v11728
    %v11730 = vpop.f32.mrb[0].mxu0
    %v11731 = vadd.f32 %v11618, %v11730
    %v11732 = vpop.f32.mrb[0].mxu0
    %v11733 = vadd.f32 %v11620, %v11732
    %11734 = vmatprep.mubr.bf16.mxu0 %v10518
    %11735 = vmatmul.mubr.bf16.gmra.mrb[0].mxu0 %v10517
    %v11736 = vpop.f32.mrb[0].mxu0
    %v11737 = vadd.f32 %v11624, %v11736
    %v11738 = vpop.f32.mrb[0].mxu0
    %v11739 = vadd.f32 %v11626, %v11738
    %v11740 = vpop.f32.mrb[0].mxu0
    %v11741 = vadd.f32 %v11628, %v11740
    %v11742 = vpop.f32.mrb[0].mxu0
    %v11743 = vadd.f32 %v11630, %v11742
    %11744 = vmatprep.mubr.bf16.mxu0 %v10522
    %11745 = vmatmul.mubr.bf16.gmra.mrb[0].mxu0 %v10521
    %v11746 = vpop.f32.mrb[0].mxu0
    %v11747 = vadd.f32 %v11634, %v11746
    %v11748 = vpop.f32.mrb[0].mxu0
    %v11749 = vadd.f32 %v11636, %v11748
    %v11750 = vpop.f32.mrb[0].mxu0
    %v11751 = vadd.f32 %v11638, %v11750
    %v11752 = vpop.f32.mrb[0].mxu0
    %v11753 = vadd.f32 %v11640, %v11752
    %11754 = vmatprep.mubr.bf16.mxu0 %v10526
    %11755 = vmatmul.mubr.bf16.gmra.mrb[0].mxu0 %v10525
    %v11756 = vpop.f32.mrb[0].mxu0
    %v11757 = vadd.f32 %v11644, %v11756
    %v11758 = vpop.f32.mrb[0].mxu0
    %v11759 = vadd.f32 %v11646, %v11758
    %v11760 = vpop.f32.mrb[0].mxu0
    %v11761 = vadd.f32 %v11648, %v11760
    %v11762 = vpop.f32.mrb[0].mxu0
    %v11763 = vadd.f32 %v11650, %v11762
    %11764 = vmatprep.mubr.bf16.mxu0 %v10530
    %11765 = vmatmul.mubr.bf16.gmra.mrb[0].mxu0 %v10529
    %v11766 = vpop.f32.mrb[0].mxu0
    %v11767 = vadd.f32 %v11654, %v11766
    %v11768 = vpop.f32.mrb[0].mxu0
    %v11769 = vadd.f32 %v11656, %v11768
    %v11770 = vpop.f32.mrb[0].mxu0
    %v11771 = vadd.f32 %v11658, %v11770
    %v11772 = vpop.f32.mrb[0].mxu0
    %v11773 = vadd.f32 %v11660, %v11772
    %11774 = vdwg.mxu0
    %v11775 = vmax.f32 %v11471, 0.0
    %v11776 = vmax.f32 %v11473, 0.0
    %v11777 = vmax.f32 %v11697, 0.0
    %v11778 = vmax.f32 %v11699, 0.0
    %v11779 = vmax.f32 %v11475, 0.0
    %v11780 = vmax.f32 %v11477, 0.0
    %v11781 = vmax.f32 %v11701, 0.0
    %v11782 = vmax.f32 %v11703, 0.0
    %v11783 = vmax.f32 %v11481, 0.0
    %v11784 = vmax.f32 %v11483, 0.0
    %v11785 = vmax.f32 %v11707, 0.0
    %v11786 = vmax.f32 %v11709, 0.0
    %v11787 = vmax.f32 %v11485, 0.0
    %v11788 = vmax.f32 %v11487, 0.0
    %v11789 = vmax.f32 %v11711, 0.0
    %v11790 = vmax.f32 %v11713, 0.0
    %v11791 = vmax.f32 %v11491, 0.0
    %v11792 = vmax.f32 %v11493, 0.0
    %v11793 = vmax.f32 %v11717, 0.0
    %v11794 = vmax.f32 %v11719, 0.0
    %v11795 = vmax.f32 %v11495, 0.0
    %v11796 = vmax.f32 %v11497, 0.0
    %v11797 = vmax.f32 %v11721, 0.0
    %v11798 = vmax.f32 %v11723, 0.0
    %v11799 = vmax.f32 %v11501, 0.0
    %v11800 = vmax.f32 %v11503, 0.0
    %v11801 = vmax.f32 %v11727, 0.0
    %v11802 = vmax.f32 %v11729, 0.0
    %v11803 = vmax.f32 %v11505, 0.0
    %v11804 = vmax.f32 %v11507, 0.0
    %v11805 = vmax.f32 %v11731, 0.0
    %v11806 = vmax.f32 %v11733, 0.0
    %v11807 = vmax.f32 %v11511, 0.0
    %v11808 = vmax.f32 %v11513, 0.0
    %v11809 = vmax.f32 %v11737, 0.0
    %v11810 = vmax.f32 %v11739, 0.0
    %v11811 = vmax.f32 %v11515, 0.0
    %v11812 = vmax.f32 %v11517, 0.0
    %v11813 = vmax.f32 %v11741, 0.0
    %v11814 = vmax.f32 %v11743, 0.0
    %v11815 = vmax.f32 %v11521, 0.0
    %v11816 = vmax.f32 %v11523, 0.0
    %v11817 = vmax.f32 %v11747, 0.0
    %v11818 = vmax.f32 %v11749, 0.0
    %v11819 = vmax.f32 %v11525, 0.0
    %v11820 = vmax.f32 %v11527, 0.0
    %v11821 = vmax.f32 %v11751, 0.0
    %v11822 = vmax.f32 %v11753, 0.0
    %v11823 = vmax.f32 %v11531, 0.0
    %v11824 = vmax.f32 %v11533, 0.0
    %v11825 = vmax.f32 %v11757, 0.0
    %v11826 = vmax.f32 %v11759, 0.0
    %v11827 = vmax.f32 %v11535, 0.0
    %v11828 = vmax.f32 %v11537, 0.0
    %v11829 = vmax.f32 %v11761, 0.0
    %v11830 = vmax.f32 %v11763, 0.0
    %v11831 = vmax.f32 %v11541, 0.0
    %v11832 = vmax.f32 %v11543, 0.0
    %v11833 = vmax.f32 %v11767, 0.0
    %v11834 = vmax.f32 %v11769, 0.0
    %v11835 = vmax.f32 %v11545, 0.0
    %v11836 = vmax.f32 %v11547, 0.0
    %v11837 = vmax.f32 %v11771, 0.0
    %v11838 = vmax.f32 %v11773, 0.0
    %v11839 = vadd.f32 %v10435, %v11775
    %v11840 = vadd.f32 %v10436, %v11776
    %v11841 = vadd.f32 %v10437, %v11777
    %v11842 = vadd.f32 %v10438, %v11778
    %v11843 = vadd.f32 %v10439, %v11779
    %v11844 = vadd.f32 %v10440, %v11780
    %v11845 = vadd.f32 %v10441, %v11781
    %v11846 = vadd.f32 %v10442, %v11782
    %v11847 = vadd.f32 %v10443, %v11783
    %v11848 = vadd.f32 %v10444, %v11784
    %v11849 = vadd.f32 %v10445, %v11785
    %v11850 = vadd.f32 %v10446, %v11786
    %v11851 = vadd.f32 %v10447, %v11787
    %v11852 = vadd.f32 %v10448, %v11788
    %v11853 = vadd.f32 %v10449, %v11789
    %v11854 = vadd.f32 %v10450, %v11790
    %v11855 = vadd.f32 %v10451, %v11791
    %v11856 = vadd.f32 %v10452, %v11792
    %v11857 = vadd.f32 %v10453, %v11793
    %v11858 = vadd.f32 %v10454, %v11794
    %v11859 = vadd.f32 %v10455, %v11795
    %v11860 = vadd.f32 %v10456, %v11796
    %v11861 = vadd.f32 %v10457, %v11797
    %v11862 = vadd.f32 %v10458, %v11798
    %v11863 = vadd.f32 %v10459, %v11799
    %v11864 = vadd.f32 %v10460, %v11800
    %v11865 = vadd.f32 %v10461, %v11801
    %v11866 = vadd.f32 %v10462, %v11802
    %v11867 = vadd.f32 %v10463, %v11803
    %v11868 = vadd.f32 %v10464, %v11804
    %v11869 = vadd.f32 %v10465, %v11805
    %v11870 = vadd.f32 %v10466, %v11806
    %v11871 = vadd.f32 %v10467, %v11807
    %v11872 = vadd.f32 %v10468, %v11808
    %v11873 = vadd.f32 %v10469, %v11809
    %v11874 = vadd.f32 %v10470, %v11810
    %v11875 = vadd.f32 %v10471, %v11811
    %v11876 = vadd.f32 %v10472, %v11812
    %v11877 = vadd.f32 %v10473, %v11813
    %v11878 = vadd.f32 %v10474, %v11814
    %v11879 = vadd.f32 %v10475, %v11815
    %v11880 = vadd.f32 %v10476, %v11816
    %v11881 = vadd.f32 %v10477, %v11817
    %v11882 = vadd.f32 %v10478, %v11818
    %v11883 = vadd.f32 %v10479, %v11819
    %v11884 = vadd.f32 %v10480, %v11820
    %v11885 = vadd.f32 %v10481, %v11821
    %v11886 = vadd.f32 %v10482, %v11822
    %v11887 = vadd.f32 %v10483, %v11823
    %v11888 = vadd.f32 %v10484, %v11824
    %v11889 = vadd.f32 %v10485, %v11825
    %v11890 = vadd.f32 %v10486, %v11826
    %v11891 = vadd.f32 %v10487, %v11827
    %v11892 = vadd.f32 %v10488, %v11828
    %v11893 = vadd.f32 %v10489, %v11829
    %v11894 = vadd.f32 %v10490, %v11830
    %v11895 = vadd.f32 %v10491, %v11831
    %v11896 = vadd.f32 %v10492, %v11832
    %v11897 = vadd.f32 %v10493, %v11833
    %v11898 = vadd.f32 %v10494, %v11834
    %v11899 = vadd.f32 %v10495, %v11835
    %v11900 = vadd.f32 %v10496, %v11836
    %v11901 = vadd.f32 %v10497, %v11837
    %v11902 = vadd.f32 %v10498, %v11838
    %v11903 = vpack.c.bf16 %v11843, %v11839
    %v11904 = vpack.c.bf16 %v11844, %v11840
    %v11905 = vpack.c.bf16 %v11845, %v11841
    %v11906 = vpack.c.bf16 %v11846, %v11842
    %v11907 = vpack.c.bf16 %v11851, %v11847
    %v11908 = vpack.c.bf16 %v11852, %v11848
    %v11909 = vpack.c.bf16 %v11853, %v11849
    %v11910 = vpack.c.bf16 %v11854, %v11850
    %v11911 = vpack.c.bf16 %v11859, %v11855
    %v11912 = vpack.c.bf16 %v11860, %v11856
    %v11913 = vpack.c.bf16 %v11861, %v11857
    %v11914 = vpack.c.bf16 %v11862, %v11858
    %v11915 = vpack.c.bf16 %v11867, %v11863
    %v11916 = vpack.c.bf16 %v11868, %v11864
    %v11917 = vpack.c.bf16 %v11869, %v11865
    %v11918 = vpack.c.bf16 %v11870, %v11866
    %v11919 = vpack.c.bf16 %v11875, %v11871
    %v11920 = vpack.c.bf16 %v11876, %v11872
    %v11921 = vpack.c.bf16 %v11877, %v11873
    %v11922 = vpack.c.bf16 %v11878, %v11874
    %v11923 = vpack.c.bf16 %v11883, %v11879
    %v11924 = vpack.c.bf16 %v11884, %v11880
    %v11925 = vpack.c.bf16 %v11885, %v11881
    %v11926 = vpack.c.bf16 %v11886, %v11882
    %v11927 = vpack.c.bf16 %v11891, %v11887
    %v11928 = vpack.c.bf16 %v11892, %v11888
    %v11929 = vpack.c.bf16 %v11893, %v11889
    %v11930 = vpack.c.bf16 %v11894, %v11890
    %v11931 = vpack.c.bf16 %v11899, %v11895
    %v11932 = vpack.c.bf16 %v11900, %v11896
    %v11933 = vpack.c.bf16 %v11901, %v11897
    %v11934 = vpack.c.bf16 %v11902, %v11898
    %v11935 = vld [vmem:[#allocation9] sm:$0xf]
    %v11936 = vld [vmem:[#allocation9 + $0x4] sm:$0xf]
    %v11937 = vld [vmem:[#allocation9 + $0x8] sm:$0xf]
    %v11938 = vld [vmem:[#allocation9 + $0xc] sm:$0xf]
    %v11939 = vld [vmem:[#allocation9 + $0x10] sm:$0xf]
    %v11940 = vld [vmem:[#allocation9 + $0x14] sm:$0xf]
    %v11941 = vld [vmem:[#allocation9 + $0x18] sm:$0xf]
    %v11942 = vld [vmem:[#allocation9 + $0x1c] sm:$0xf]
    %v11943 = vld [vmem:[#allocation9 + $0x20] sm:$0xf]
    %v11944 = vld [vmem:[#allocation9 + $0x24] sm:$0xf]
    %v11945 = vld [vmem:[#allocation9 + $0x28] sm:$0xf]
    %v11946 = vld [vmem:[#allocation9 + $0x2c] sm:$0xf]
    %v11947 = vld [vmem:[#allocation9 + $0x30] sm:$0xf]
    %v11948 = vld [vmem:[#allocation9 + $0x34] sm:$0xf]
    %v11949 = vld [vmem:[#allocation9 + $0x38] sm:$0xf]
    %v11950 = vld [vmem:[#allocation9 + $0x3c] sm:$0xf]
    %v11951 = vld [vmem:[#allocation9 + $0x40] sm:$0xf]
    %v11952 = vld [vmem:[#allocation9 + $0x44] sm:$0xf]
    %v11953 = vld [vmem:[#allocation9 + $0x48] sm:$0xf]
    %v11954 = vld [vmem:[#allocation9 + $0x4c] sm:$0xf]
    %v11955 = vld [vmem:[#allocation9 + $0x50] sm:$0xf]
    %v11956 = vld [vmem:[#allocation9 + $0x54] sm:$0xf]
    %v11957 = vld [vmem:[#allocation9 + $0x58] sm:$0xf]
    %v11958 = vld [vmem:[#allocation9 + $0x5c] sm:$0xf]
    %v11959 = vld [vmem:[#allocation9 + $0x60] sm:$0xf]
    %v11960 = vld [vmem:[#allocation9 + $0x64] sm:$0xf]
    %v11961 = vld [vmem:[#allocation9 + $0x68] sm:$0xf]
    %v11962 = vld [vmem:[#allocation9 + $0x6c] sm:$0xf]
    %v11963 = vld [vmem:[#allocation9 + $0x70] sm:$0xf]
    %v11964 = vld [vmem:[#allocation9 + $0x74] sm:$0xf]
    %v11965 = vld [vmem:[#allocation9 + $0x78] sm:$0xf]
    %v11966 = vld [vmem:[#allocation9 + $0x7c] sm:$0xf]
    %v11967 = vld [vmem:[#allocation9 + $0x80] sm:$0xf]
    %v11968 = vld [vmem:[#allocation9 + $0x84] sm:$0xf]
    %v11969 = vld [vmem:[#allocation9 + $0x88] sm:$0xf]
    %v11970 = vld [vmem:[#allocation9 + $0x8c] sm:$0xf]
    %v11971 = vld [vmem:[#allocation9 + $0x90] sm:$0xf]
    %v11972 = vld [vmem:[#allocation9 + $0x94] sm:$0xf]
    %v11973 = vld [vmem:[#allocation9 + $0x98] sm:$0xf]
    %v11974 = vld [vmem:[#allocation9 + $0x9c] sm:$0xf]
    %v11975 = vld [vmem:[#allocation9 + $0xa0] sm:$0xf]
    %v11976 = vld [vmem:[#allocation9 + $0xa4] sm:$0xf]
    %v11977 = vld [vmem:[#allocation9 + $0xa8] sm:$0xf]
    %v11978 = vld [vmem:[#allocation9 + $0xac] sm:$0xf]
    %v11979 = vld [vmem:[#allocation9 + $0xb0] sm:$0xf]
    %v11980 = vld [vmem:[#allocation9 + $0xb4] sm:$0xf]
    %v11981 = vld [vmem:[#allocation9 + $0xb8] sm:$0xf]
    %v11982 = vld [vmem:[#allocation9 + $0xbc] sm:$0xf]
    %v11983 = vld [vmem:[#allocation9 + $0xc0] sm:$0xf]
    %v11984 = vld [vmem:[#allocation9 + $0xc4] sm:$0xf]
    %v11985 = vld [vmem:[#allocation9 + $0xc8] sm:$0xf]
    %v11986 = vld [vmem:[#allocation9 + $0xcc] sm:$0xf]
    %v11987 = vld [vmem:[#allocation9 + $0xd0] sm:$0xf]
    %v11988 = vld [vmem:[#allocation9 + $0xd4] sm:$0xf]
    %v11989 = vld [vmem:[#allocation9 + $0xd8] sm:$0xf]
    %v11990 = vld [vmem:[#allocation9 + $0xdc] sm:$0xf]
    %v11991 = vld [vmem:[#allocation9 + $0xe0] sm:$0xf]
    %v11992 = vld [vmem:[#allocation9 + $0xe4] sm:$0xf]
    %v11993 = vld [vmem:[#allocation9 + $0xe8] sm:$0xf]
    %v11994 = vld [vmem:[#allocation9 + $0xec] sm:$0xf]
    %v11995 = vld [vmem:[#allocation9 + $0xf0] sm:$0xf]
    %v11996 = vld [vmem:[#allocation9 + $0xf4] sm:$0xf]
    %v11997 = vld [vmem:[#allocation9 + $0xf8] sm:$0xf]
    %v11998 = vld [vmem:[#allocation9 + $0xfc] sm:$0xf]
    %v11999 = vld [vmem:[#allocation10] sm:$0x1]
    %v12001 = vlaneseq
    %v12002 = vshrl.u32 %v12001, 7
    %v12003 = vsub.s32 0, %v12002
    %v12004 = vrot.slane %v11999, %v12003
    %v12070 = vunpack.c.l.b16 %v11935
    %v12071 = vunpack.c.l.b16 %v11936
    %v12072 = vunpack.c.l.b16 %v11937
    %v12073 = vunpack.c.l.b16 %v11938
    %v12074 = vunpack.c.l.b16 %v11939
    %v12075 = vunpack.c.l.b16 %v11940
    %v12076 = vunpack.c.l.b16 %v11941
    %v12077 = vunpack.c.l.b16 %v11942
    %v12078 = vunpack.c.l.b16 %v11943
    %v12079 = vunpack.c.l.b16 %v11944
    %v12080 = vunpack.c.l.b16 %v11945
    %v12081 = vunpack.c.l.b16 %v11946
    %v12082 = vunpack.c.l.b16 %v11947
    %v12083 = vunpack.c.l.b16 %v11948
    %v12084 = vunpack.c.l.b16 %v11949
    %v12085 = vunpack.c.l.b16 %v11950
    %v12086 = vunpack.c.l.b16 %v11951
    %v12087 = vunpack.c.l.b16 %v11952
    %v12088 = vunpack.c.l.b16 %v11953
    %v12089 = vunpack.c.l.b16 %v11954
    %v12090 = vunpack.c.l.b16 %v11955
    %v12091 = vunpack.c.l.b16 %v11956
    %v12092 = vunpack.c.l.b16 %v11957
    %v12093 = vunpack.c.l.b16 %v11958
    %v12094 = vunpack.c.l.b16 %v11959
    %v12095 = vunpack.c.l.b16 %v11960
    %v12096 = vunpack.c.l.b16 %v11961
    %v12097 = vunpack.c.l.b16 %v11962
    %v12098 = vunpack.c.l.b16 %v11963
    %v12099 = vunpack.c.l.b16 %v11964
    %v12100 = vunpack.c.l.b16 %v11965
    %v12101 = vunpack.c.l.b16 %v11966
    %v12102 = vunpack.c.l.b16 %v11967
    %v12103 = vunpack.c.l.b16 %v11968
    %v12104 = vunpack.c.l.b16 %v11969
    %v12105 = vunpack.c.l.b16 %v11970
    %v12106 = vunpack.c.l.b16 %v11971
    %v12107 = vunpack.c.l.b16 %v11972
    %v12108 = vunpack.c.l.b16 %v11973
    %v12109 = vunpack.c.l.b16 %v11974
    %v12110 = vunpack.c.l.b16 %v11975
    %v12111 = vunpack.c.l.b16 %v11976
    %v12112 = vunpack.c.l.b16 %v11977
    %v12113 = vunpack.c.l.b16 %v11978
    %v12114 = vunpack.c.l.b16 %v11979
    %v12115 = vunpack.c.l.b16 %v11980
    %v12116 = vunpack.c.l.b16 %v11981
    %v12117 = vunpack.c.l.b16 %v11982
    %v12118 = vunpack.c.l.b16 %v11983
    %v12119 = vunpack.c.l.b16 %v11984
    %v12120 = vunpack.c.l.b16 %v11985
    %v12121 = vunpack.c.l.b16 %v11986
    %v12122 = vunpack.c.l.b16 %v11987
    %v12123 = vunpack.c.l.b16 %v11988
    %v12124 = vunpack.c.l.b16 %v11989
    %v12125 = vunpack.c.l.b16 %v11990
    %v12126 = vunpack.c.l.b16 %v11991
    %v12127 = vunpack.c.l.b16 %v11992
    %v12128 = vunpack.c.l.b16 %v11993
    %v12129 = vunpack.c.l.b16 %v11994
    %v12130 = vunpack.c.l.b16 %v11995
    %v12131 = vunpack.c.l.b16 %v11996
    %v12132 = vunpack.c.l.b16 %v11997
    %v12133 = vunpack.c.l.b16 %v11998
    %v12134 = vpack.c.b16 %v12071, %v12070
    %v12135 = vpack.c.b16 %v12073, %v12072
    %v12136 = vpack.c.b16 %v12075, %v12074
    %v12137 = vpack.c.b16 %v12077, %v12076
    %v12138 = vpack.c.b16 %v12079, %v12078
    %v12139 = vpack.c.b16 %v12081, %v12080
    %v12140 = vpack.c.b16 %v12083, %v12082
    %v12141 = vpack.c.b16 %v12085, %v12084
    %v12142 = vpack.c.b16 %v12087, %v12086
    %v12143 = vpack.c.b16 %v12089, %v12088
    %v12144 = vpack.c.b16 %v12091, %v12090
    %v12145 = vpack.c.b16 %v12093, %v12092
    %v12146 = vpack.c.b16 %v12095, %v12094
    %v12147 = vpack.c.b16 %v12097, %v12096
    %v12148 = vpack.c.b16 %v12099, %v12098
    %v12149 = vpack.c.b16 %v12101, %v12100
    %v12150 = vpack.c.b16 %v12103, %v12102
    %v12151 = vpack.c.b16 %v12105, %v12104
    %v12152 = vpack.c.b16 %v12107, %v12106
    %v12153 = vpack.c.b16 %v12109, %v12108
    %v12154 = vpack.c.b16 %v12111, %v12110
    %v12155 = vpack.c.b16 %v12113, %v12112
    %v12156 = vpack.c.b16 %v12115, %v12114
    %v12157 = vpack.c.b16 %v12117, %v12116
    %v12158 = vpack.c.b16 %v12119, %v12118
    %v12159 = vpack.c.b16 %v12121, %v12120
    %v12160 = vpack.c.b16 %v12123, %v12122
    %v12161 = vpack.c.b16 %v12125, %v12124
    %v12162 = vpack.c.b16 %v12127, %v12126
    %v12163 = vpack.c.b16 %v12129, %v12128
    %v12164 = vpack.c.b16 %v12131, %v12130
    %v12165 = vpack.c.b16 %v12133, %v12132
    %12198 = vmatprep.subr.bf16.mxu0 0
    %12199 = vmatpush1.bf16.msra.mxu0 %v12134
    %12200 = vmatprep.subr.bf16.mxu0 0
    %12201 = vmatpush1.bf16.msra.mxu0 %v12135
    %12202 = vmatprep.subr.bf16.mxu0 0
    %12203 = vmatpush1.bf16.msra.mxu0 %v12136
    %12204 = vmatprep.subr.bf16.mxu0 0
    %12205 = vmatpush1.bf16.msra.mxu0 %v12137
    %12206 = vmatprep.subr.bf16.mxu0 0
    %12207 = vmatpush1.bf16.msra.mxu0 %v12138
    %12208 = vmatprep.subr.bf16.mxu0 0
    %12209 = vmatpush1.bf16.msra.mxu0 %v12139
    %12210 = vmatprep.subr.bf16.mxu0 0
    %12211 = vmatpush1.bf16.msra.mxu0 %v12140
    %12212 = vmatprep.subr.bf16.mxu0 0
    %12213 = vmatpush1.bf16.msra.mxu0 %v12141
    %12214 = vmatprep.subr.bf16.mxu0 0
    %12215 = vmatpush1.bf16.msra.mxu0 %v12142
    %12216 = vmatprep.subr.bf16.mxu0 0
    %12217 = vmatpush1.bf16.msra.mxu0 %v12143
    %12218 = vmatprep.subr.bf16.mxu0 0
    %12219 = vmatpush1.bf16.msra.mxu0 %v12144
    %12220 = vmatprep.subr.bf16.mxu0 0
    %12221 = vmatpush1.bf16.msra.mxu0 %v12145
    %12222 = vmatprep.subr.bf16.mxu0 0
    %12223 = vmatpush1.bf16.msra.mxu0 %v12146
    %12224 = vmatprep.subr.bf16.mxu0 0
    %12225 = vmatpush1.bf16.msra.mxu0 %v12147
    %12226 = vmatprep.subr.bf16.mxu0 0
    %12227 = vmatpush1.bf16.msra.mxu0 %v12148
    %12228 = vmatprep.subr.bf16.mxu0 0
    %12229 = vmatpush1.bf16.msra.mxu0 %v12149
    %12230 = vmatprep.mubr.bf16.mxu0 %v11904
    %12231 = vmatmul.mubr.bf16.gmra.mrb[0].mxu0 %v11903
    %v12232 = vpop.f32.mrb[0].mxu0
    %v12233 = vadd.f32 %v12004, %v12232
    %v12234 = vpop.f32.mrb[0].mxu0
    %v12235 = vpop.f32.mrb[0].mxu0
    %v12236 = vadd.f32 %v12004, %v12235
    %v12237 = vpop.f32.mrb[0].mxu0
    %12238 = vmatprep.mubr.bf16.mxu0 %v11908
    %12239 = vmatmul.mubr.bf16.gmra.mrb[0].mxu0 %v11907
    %v12240 = vpop.f32.mrb[0].mxu0
    %v12241 = vadd.f32 %v12004, %v12240
    %v12242 = vpop.f32.mrb[0].mxu0
    %v12243 = vpop.f32.mrb[0].mxu0
    %v12244 = vadd.f32 %v12004, %v12243
    %v12245 = vpop.f32.mrb[0].mxu0
    %12246 = vmatprep.mubr.bf16.mxu0 %v11912
    %12247 = vmatmul.mubr.bf16.gmra.mrb[0].mxu0 %v11911
    %v12248 = vpop.f32.mrb[0].mxu0
    %v12249 = vadd.f32 %v12004, %v12248
    %v12250 = vpop.f32.mrb[0].mxu0
    %v12251 = vpop.f32.mrb[0].mxu0
    %v12252 = vadd.f32 %v12004, %v12251
    %v12253 = vpop.f32.mrb[0].mxu0
    %12254 = vmatprep.mubr.bf16.mxu0 %v11916
    %12255 = vmatmul.mubr.bf16.gmra.mrb[0].mxu0 %v11915
    %v12256 = vpop.f32.mrb[0].mxu0
    %v12257 = vadd.f32 %v12004, %v12256
    %v12258 = vpop.f32.mrb[0].mxu0
    %v12259 = vpop.f32.mrb[0].mxu0
    %v12260 = vadd.f32 %v12004, %v12259
    %v12261 = vpop.f32.mrb[0].mxu0
    %12262 = vmatprep.mubr.bf16.mxu0 %v11920
    %12263 = vmatmul.mubr.bf16.gmra.mrb[0].mxu0 %v11919
    %v12264 = vpop.f32.mrb[0].mxu0
    %v12265 = vadd.f32 %v12004, %v12264
    %v12266 = vpop.f32.mrb[0].mxu0
    %v12267 = vpop.f32.mrb[0].mxu0
    %v12268 = vadd.f32 %v12004, %v12267
    %v12269 = vpop.f32.mrb[0].mxu0
    %12270 = vmatprep.mubr.bf16.mxu0 %v11924
    %12271 = vmatmul.mubr.bf16.gmra.mrb[0].mxu0 %v11923
    %v12272 = vpop.f32.mrb[0].mxu0
    %v12273 = vadd.f32 %v12004, %v12272
    %v12274 = vpop.f32.mrb[0].mxu0
    %v12275 = vpop.f32.mrb[0].mxu0
    %v12276 = vadd.f32 %v12004, %v12275
    %v12277 = vpop.f32.mrb[0].mxu0
    %12278 = vmatprep.mubr.bf16.mxu0 %v11928
    %12279 = vmatmul.mubr.bf16.gmra.mrb[0].mxu0 %v11927
    %v12280 = vpop.f32.mrb[0].mxu0
    %v12281 = vadd.f32 %v12004, %v12280
    %v12282 = vpop.f32.mrb[0].mxu0
    %v12283 = vpop.f32.mrb[0].mxu0
    %v12284 = vadd.f32 %v12004, %v12283
    %v12285 = vpop.f32.mrb[0].mxu0
    %12286 = vmatprep.mubr.bf16.mxu0 %v11932
    %12287 = vmatmul.mubr.bf16.gmra.mrb[0].mxu0 %v11931
    %v12288 = vpop.f32.mrb[0].mxu0
    %v12289 = vadd.f32 %v12004, %v12288
    %v12290 = vpop.f32.mrb[0].mxu0
    %v12291 = vpop.f32.mrb[0].mxu0
    %v12292 = vadd.f32 %v12004, %v12291
    %v12293 = vpop.f32.mrb[0].mxu0
    %12294 = vdwg.mxu0
    %12295 = vmatprep.subr.bf16.mxu0 0
    %12296 = vmatpush1.bf16.msra.mxu0 %v12150
    %12297 = vmatprep.subr.bf16.mxu0 0
    %12298 = vmatpush1.bf16.msra.mxu0 %v12151
    %12299 = vmatprep.subr.bf16.mxu0 0
    %12300 = vmatpush1.bf16.msra.mxu0 %v12152
    %12301 = vmatprep.subr.bf16.mxu0 0
    %12302 = vmatpush1.bf16.msra.mxu0 %v12153
    %12303 = vmatprep.subr.bf16.mxu0 0
    %12304 = vmatpush1.bf16.msra.mxu0 %v12154
    %12305 = vmatprep.subr.bf16.mxu0 0
    %12306 = vmatpush1.bf16.msra.mxu0 %v12155
    %12307 = vmatprep.subr.bf16.mxu0 0
    %12308 = vmatpush1.bf16.msra.mxu0 %v12156
    %12309 = vmatprep.subr.bf16.mxu0 0
    %12310 = vmatpush1.bf16.msra.mxu0 %v12157
    %12311 = vmatprep.subr.bf16.mxu0 0
    %12312 = vmatpush1.bf16.msra.mxu0 %v12158
    %12313 = vmatprep.subr.bf16.mxu0 0
    %12314 = vmatpush1.bf16.msra.mxu0 %v12159
    %12315 = vmatprep.subr.bf16.mxu0 0
    %12316 = vmatpush1.bf16.msra.mxu0 %v12160
    %12317 = vmatprep.subr.bf16.mxu0 0
    %12318 = vmatpush1.bf16.msra.mxu0 %v12161
    %12319 = vmatprep.subr.bf16.mxu0 0
    %12320 = vmatpush1.bf16.msra.mxu0 %v12162
    %12321 = vmatprep.subr.bf16.mxu0 0
    %12322 = vmatpush1.bf16.msra.mxu0 %v12163
    %12323 = vmatprep.subr.bf16.mxu0 0
    %12324 = vmatpush1.bf16.msra.mxu0 %v12164
    %12325 = vmatprep.subr.bf16.mxu0 0
    %12326 = vmatpush1.bf16.msra.mxu0 %v12165
    %12327 = vmatprep.mubr.bf16.mxu0 %v11906
    %12328 = vmatmul.mubr.bf16.gmra.mrb[0].mxu0 %v11905
    %v12329 = vpop.f32.mrb[0].mxu0
    %v12330 = vadd.f32 %v12233, %v12329
    %v12331 = vpop.f32.mrb[0].mxu0
    %v12332 = vpop.f32.mrb[0].mxu0
    %v12333 = vadd.f32 %v12236, %v12332
    %v12334 = vpop.f32.mrb[0].mxu0
    %12335 = vmatprep.mubr.bf16.mxu0 %v11910
    %12336 = vmatmul.mubr.bf16.gmra.mrb[0].mxu0 %v11909
    %v12337 = vpop.f32.mrb[0].mxu0
    %v12338 = vadd.f32 %v12241, %v12337
    %v12339 = vpop.f32.mrb[0].mxu0
    %v12340 = vpop.f32.mrb[0].mxu0
    %v12341 = vadd.f32 %v12244, %v12340
    %v12342 = vpop.f32.mrb[0].mxu0
    %12343 = vmatprep.mubr.bf16.mxu0 %v11914
    %12344 = vmatmul.mubr.bf16.gmra.mrb[0].mxu0 %v11913
    %v12345 = vpop.f32.mrb[0].mxu0
    %v12346 = vadd.f32 %v12249, %v12345
    %v12347 = vpop.f32.mrb[0].mxu0
    %v12348 = vpop.f32.mrb[0].mxu0
    %v12349 = vadd.f32 %v12252, %v12348
    %v12350 = vpop.f32.mrb[0].mxu0
    %12351 = vmatprep.mubr.bf16.mxu0 %v11918
    %12352 = vmatmul.mubr.bf16.gmra.mrb[0].mxu0 %v11917
    %v12353 = vpop.f32.mrb[0].mxu0
    %v12354 = vadd.f32 %v12257, %v12353
    %v12355 = vpop.f32.mrb[0].mxu0
    %v12356 = vpop.f32.mrb[0].mxu0
    %v12357 = vadd.f32 %v12260, %v12356
    %v12358 = vpop.f32.mrb[0].mxu0
    %12359 = vmatprep.mubr.bf16.mxu0 %v11922
    %12360 = vmatmul.mubr.bf16.gmra.mrb[0].mxu0 %v11921
    %v12361 = vpop.f32.mrb[0].mxu0
    %v12362 = vadd.f32 %v12265, %v12361
    %v12363 = vpop.f32.mrb[0].mxu0
    %v12364 = vpop.f32.mrb[0].mxu0
    %v12365 = vadd.f32 %v12268, %v12364
    %v12366 = vpop.f32.mrb[0].mxu0
    %12367 = vmatprep.mubr.bf16.mxu0 %v11926
    %12368 = vmatmul.mubr.bf16.gmra.mrb[0].mxu0 %v11925
    %v12369 = vpop.f32.mrb[0].mxu0
    %v12370 = vadd.f32 %v12273, %v12369
    %v12371 = vpop.f32.mrb[0].mxu0
    %v12372 = vpop.f32.mrb[0].mxu0
    %v12373 = vadd.f32 %v12276, %v12372
    %v12374 = vpop.f32.mrb[0].mxu0
    %12375 = vmatprep.mubr.bf16.mxu0 %v11930
    %12376 = vmatmul.mubr.bf16.gmra.mrb[0].mxu0 %v11929
    %v12377 = vpop.f32.mrb[0].mxu0
    %v12378 = vadd.f32 %v12281, %v12377
    %v12379 = vpop.f32.mrb[0].mxu0
    %v12380 = vpop.f32.mrb[0].mxu0
    %v12381 = vadd.f32 %v12284, %v12380
    %v12382 = vpop.f32.mrb[0].mxu0
    %12383 = vmatprep.mubr.bf16.mxu0 %v11934
    %12384 = vmatmul.mubr.bf16.gmra.mrb[0].mxu0 %v11933
    %v12385 = vpop.f32.mrb[0].mxu0
    %v12386 = vadd.f32 %v12289, %v12385
    %v12387 = vpop.f32.mrb[0].mxu0
    %v12388 = vpop.f32.mrb[0].mxu0
    %v12389 = vadd.f32 %v12292, %v12388
    %v12390 = vpop.f32.mrb[0].mxu0
    %12391 = vdwg.mxu0
    %12392 = vst [vmem:[%s7] sm:$0xff] %v12330
    %12393 = vst [vmem:[%s7 + $0x8] sm:$0xff] %v12333
    %12394 = vst [vmem:[%s7 + $0x10] sm:$0xff] %v12338
    %12395 = vst [vmem:[%s7 + $0x18] sm:$0xff] %v12341
    %12396 = vst [vmem:[%s7 + $0x20] sm:$0xff] %v12346
    %12397 = vst [vmem:[%s7 + $0x28] sm:$0xff] %v12349
    %12398 = vst [vmem:[%s7 + $0x30] sm:$0xff] %v12354
    %12399 = vst [vmem:[%s7 + $0x38] sm:$0xff] %v12357
    %12400 = vst [vmem:[%s7 + $0x40] sm:$0xff] %v12362
    %12401 = vst [vmem:[%s7 + $0x48] sm:$0xff] %v12365
    %12402 = vst [vmem:[%s7 + $0x50] sm:$0xff] %v12370
    %12403 = vst [vmem:[%s7 + $0x58] sm:$0xff] %v12373
    %12404 = vst [vmem:[%s7 + $0x60] sm:$0xff] %v12378
    %12405 = vst [vmem:[%s7 + $0x68] sm:$0xff] %v12381
    %12406 = vst [vmem:[%s7 + $0x70] sm:$0xff] %v12386
    %12407 = vst [vmem:[%s7 + $0x78] sm:$0xff] %v12389
    // Predicated region
    $region54: #{vector_denoiser_forward.1} parent=1 // pred_check
      _
    $region55: #{vector_denoiser_forward.1} parent=1 // pred_check_branch
      %12409 = sbr.rel (0) target = $region57
    $region56: #{vector_denoiser_forward.1} parent=1 // pred_region
      _
    $region57: #{vector_denoiser_forward.1} parent=1 // pred_fallthru
      _
    // Predicated region
    $region58: #{vector_denoiser_forward.1} parent=1 // pred_check
      _
    $region59: #{vector_denoiser_forward.1} parent=1 // pred_check_branch
      %12411 = sbr.rel (0) target = $region61
    $region60: #{vector_denoiser_forward.1} parent=1 // pred_region
      _
    $region61: #{vector_denoiser_forward.1} parent=1 // pred_fallthru
      _
    %12412 = vsyncpa [#allocation3], 1
    %12413 = vsyncpa [#allocation5], 1
    %12414 = vsyncpa [#allocation8], 1
    %12415 = vsyncpa [#allocation11], 1

</llo_original>
